<compile_context>
chip_gen: v6e
topology: v6e:2x2x1
jax: 0.10.0
libtpu: 0.0.40
codegen_flags: <defaults>
</compile_context>

<pallas_src>
import jax
import jax.numpy as jnp
from jax import lax
from jax.experimental import pallas as pl
from jax.experimental.pallas import tpu as pltpu


def _make_resnet_block_kernel(H, W, Cp):
    """Builds the per-image kernel body for static (H, W, Cp)."""
    HW = H * W
    P = (H + 2) * W          # flat row count of the H-halo'd activation buffer

    def kernel(x_ref, w1_ref, b1_ref, w2_ref, b2_ref, mask_ref, o_ref,
               act_ref, acc_ref):
        # x_ref   : (1, H, W, Cp) bf16   unpadded, channel-padded input image
        # w*_ref  : (9, Cp, Cp)   bf16   conv weights, [dy*3+dx, cin, cout]
        # b*_ref  : (1, Cp)       f32
        # mask_ref: (2, HW, 1)    f32    0/1 edge masks for the dx=0 / dx=2 taps
        # o_ref   : (1, H, W, Cp) f32
        # act_ref : (P, Cp)       f32    flat H-halo'd activation (conv input)
        # acc_ref : (HW, Cp)      f32    conv accumulator

        # Stage the activation: re-zero the two halo row-bands every grid step
        # (scratch persists across images), copy the image into the interior.
        # All offsets are multiples of W rows -> aligned, unmasked stores.
        zero_band = jnp.zeros((W, Cp), jnp.float32)
        act_ref[0:W, :] = zero_band
        act_ref[P - W:P, :] = zero_band
        act_ref[W:W + HW, :] = x_ref[0].reshape(HW, Cp).astype(jnp.float32)

        def conv3x3(w_ref, b_ref):
            # acc <- bias, then accumulate 9 per-tap MXU matmuls.
            #   dy taps: aligned row-window slices (offset dy*W) of act_ref.
            #   dx taps: XLU sublane roll of that slice + 0/1 edge-mask multiply
            #            (the rolled-in wrap rows are exactly the masked rows,
            #             so rolling the slice instead of the full plane is exact).
            acc_ref[...] = jnp.broadcast_to(b_ref[...], (HW, Cp))
            for dy in range(3):
                src = act_ref[dy * W:dy * W + HW, :]          # aligned load
                for dx in range(3):
                    if dx == 1:
                        tap = src
                    else:
                        tap = pltpu.roll(src, shift=(1 - dx) % HW, axis=0)
                        tap = tap * mask_ref[dx // 2]          # zero wrapped column
                    acc_ref[...] += jnp.dot(
                        tap.astype(jnp.bfloat16), w_ref[dy * 3 + dx],
                        preferred_element_type=jnp.float32)
            return acc_ref[...]

        # ---- conv1 + ReLU: interior-only rewrite, halo rows stay zero --------
        act_ref[W:W + HW, :] = jnp.maximum(conv3x3(w1_ref, b1_ref), 0.0)

        # ---- conv2 + bias + residual + ReLU ----------------------------------
        out2 = conv3x3(w2_ref, b2_ref)
        resid = x_ref[0].reshape(HW, Cp).astype(jnp.float32)   # aligned read
        o_ref[0] = jnp.maximum(out2 + resid, 0.0).reshape(H, W, Cp)

    return kernel


@jax.jit
def resnet_block(x_nchw, w1, b1, w2, b2):
    """x_nchw: (N, C, H, W); w*: (C, C, 3, 3) OIHW; b*: (C,).  Returns NCHW f32."""
    N, C, H, W = x_nchw.shape
    LANE = 128
    Cp = ((C + LANE - 1) // LANE) * LANE       # lane-dense channel count
    HW = H * W
    P = (H + 2) * W

    # NHWC + channel zero-pad; activations go to the kernel in bf16 (the MXU path
    # is bf16 anyway) -> half the input HBM traffic.
    # TODO(synk): if the surrounding model is NHWC these transposes disappear.
    x = jnp.transpose(x_nchw, (0, 2, 3, 1))
    x = jnp.pad(x, ((0, 0), (0, 0), (0, 0), (0, Cp - C))).astype(jnp.bfloat16)

    def prep_w(w):
        wh = jnp.transpose(w, (2, 3, 1, 0)).astype(jnp.float32)          # HWIO
        wh = jnp.pad(wh, ((0, 0), (0, 0), (0, Cp - C), (0, Cp - C)))
        return wh.reshape(9, Cp, Cp).astype(jnp.bfloat16)                # [tap, cin, cout]

    def prep_b(b):
        return jnp.pad(b.astype(jnp.float32), (0, Cp - C)).reshape(1, Cp)

    # 0/1 multiply-masks (indexed by flattened output row) that zero the single
    # column wrapped around by the dx=0 / dx=2 sublane rolls.  Precomputed here so
    # the kernel needs no in-kernel iota / rem / select.
    col = jnp.arange(HW, dtype=jnp.int32) % W
    dxmask = jnp.stack([col != 0, col != (W - 1)]).astype(jnp.float32)
    dxmask = dxmask.reshape(2, HW, 1)

    kernel = _make_resnet_block_kernel(H, W, Cp)

    out = pl.pallas_call(
        kernel,
        out_shape=jax.ShapeDtypeStruct((N, H, W, Cp), jnp.float32),
        grid_spec=pltpu.PrefetchScalarGridSpec(
            num_scalar_prefetch=0,
            grid=(N,),
            in_specs=[
                pl.BlockSpec((1, H, W, Cp), lambda n: (n, 0, 0, 0)),   # x (bf16)
                # Constant index_maps -> weights / biases / masks are fetched once
                # and stay resident across the whole grid.
                pl.BlockSpec((9, Cp, Cp), lambda n: (0, 0, 0)),        # w1
                pl.BlockSpec((1, Cp), lambda n: (0, 0)),               # b1
                pl.BlockSpec((9, Cp, Cp), lambda n: (0, 0, 0)),        # w2
                pl.BlockSpec((1, Cp), lambda n: (0, 0)),               # b2
                pl.BlockSpec((2, HW, 1), lambda n: (0, 0, 0)),         # dx edge masks
            ],
            out_specs=pl.BlockSpec((1, H, W, Cp), lambda n: (n, 0, 0, 0)),
            scratch_shapes=[
                pltpu.VMEM((P, Cp), jnp.float32),     # flat H-halo'd activation
                pltpu.VMEM((HW, Cp), jnp.float32),    # f32 conv accumulator
            ],
        ),
        compiler_params=pltpu.CompilerParams(
            dimension_semantics=("parallel",),
            # Conservative: also safe on v7x's 64 MiB physical VMEM.
            vmem_limit_bytes=32 * 1024 * 1024,
        ),
    )(x, prep_w(w1), prep_b(b1), prep_w(w2), prep_b(b2), dxmask)

    out = out[..., :C]                                # drop padded channels
    return jnp.transpose(out, (0, 3, 1, 2))           # back to NCHW


def reference_forward(x_nchw, w1, b1, w2, b2):
    """Plain-JAX f32 reference matching the PyTorch module."""
    dn = ("NCHW", "OIHW", "NCHW")
    out = lax.conv_general_dilated(x_nchw, w1, (1, 1), "SAME",
                                   dimension_numbers=dn) + b1.reshape(1, -1, 1, 1)
    out = jnp.maximum(out, 0.0)
    out = lax.conv_general_dilated(out, w2, (1, 1), "SAME",
                                   dimension_numbers=dn) + b2.reshape(1, -1, 1, 1)
    out = out + x_nchw
    return jnp.maximum(out, 0.0)


if __name__ == "__main__":
    N, C, H, W = 2, 4, 16, 16
    key = jax.random.PRNGKey(0)
    kx, k1, kb1, k2, kb2 = jax.random.split(key, 5)

    x = jax.random.normal(kx, (N, C, H, W), dtype=jnp.float32)

    # Deterministic parameter init (PyTorch Conv2d-style uniform bounds).
    fan_in = C * 3 * 3
    bound = 1.0 / (fan_in ** 0.5)
    w1 = jax.random.uniform(k1, (C, C, 3, 3), jnp.float32, -bound, bound)
    b1 = jax.random.uniform(kb1, (C,), jnp.float32, -bound, bound)
    w2 = jax.random.uniform(k2, (C, C, 3, 3), jnp.float32, -bound, bound)
    b2 = jax.random.uniform(kb2, (C,), jnp.float32, -bound, bound)

    out = jax.block_until_ready(resnet_block(x, w1, b1, w2, b2))
    ref = jax.block_until_ready(reference_forward(x, w1, b1, w2, b2))

    assert out.shape == (N, C, H, W)
    # bf16 MXU operands + bf16 activation DMA (incl. the residual path) with f32
    # accumulation, vs a pure-f32 reference -> slightly loose tolerance.
    assert jnp.allclose(out, ref, rtol=2e-2, atol=3e-2), "mismatch vs JAX reference"

    print("KERNEL_OK")
</pallas_src>

<mosaic_0001>
module attributes {stable_mosaic.version = 11 : i64} {
  func.func @kernel(%arg0: i32, %arg1: memref<1x16x16x128xbf16, #tpu.memory_space<vmem>>, %arg2: memref<9x128x128xbf16, #tpu.memory_space<vmem>>, %arg3: memref<1x128xf32, #tpu.memory_space<vmem>>, %arg4: memref<9x128x128xbf16, #tpu.memory_space<vmem>>, %arg5: memref<1x128xf32, #tpu.memory_space<vmem>>, %arg6: memref<2x256x1xf32, #tpu.memory_space<vmem>>, %arg7: memref<1x16x16x128xf32, #tpu.memory_space<vmem>>, %arg8: memref<288x128xf32, #tpu.memory_space<vmem>>, %arg9: memref<256x128xf32, #tpu.memory_space<vmem>>) attributes {dimension_semantics = [#tpu.dimension_semantics<parallel>], iteration_bounds = array<i64: 2>, scalar_prefetch = 0 : i64, scratch_operands = 2 : i64, tpu.core_type = #tpu.core_type<tc>, window_params = [{transform_indices = @transform_0, window_bounds = array<i64: 1, 16, 16, 128>}, {pipeline_mode = #tpu.pipeline_mode<synchronous>, transform_indices = @transform_1, window_bounds = array<i64: 9, 128, 128>}, {pipeline_mode = #tpu.pipeline_mode<synchronous>, transform_indices = @transform_2, window_bounds = array<i64: 1, 128>}, {pipeline_mode = #tpu.pipeline_mode<synchronous>, transform_indices = @transform_3, window_bounds = array<i64: 9, 128, 128>}, {pipeline_mode = #tpu.pipeline_mode<synchronous>, transform_indices = @transform_4, window_bounds = array<i64: 1, 128>}, {pipeline_mode = #tpu.pipeline_mode<synchronous>, transform_indices = @transform_5, window_bounds = array<i64: 2, 256, 1>}, {transform_indices = @transform_6, window_bounds = array<i64: 1, 16, 16, 128>}]} {
    %cst = arith.constant 0.000000e+00 : f32
    %0 = vector.broadcast %cst : f32 to vector<16x128xf32>
    %c0 = arith.constant 0 : index
    %c0_0 = arith.constant 0 : index
    %1 = vector.load %arg8[%c0, %c0_0] : memref<288x128xf32, #tpu.memory_space<vmem>>, vector<16x128xf32>
    tpu.vector_store %arg8[%c0, %c0_0], %0 {strides = array<i32>} : memref<288x128xf32, #tpu.memory_space<vmem>>, vector<16x128xf32>,
    %c272 = arith.constant 272 : index
    %c0_1 = arith.constant 0 : index
    %2 = vector.load %arg8[%c272, %c0_1] : memref<288x128xf32, #tpu.memory_space<vmem>>, vector<16x128xf32>
    tpu.vector_store %arg8[%c272, %c0_1], %0 {strides = array<i32>} : memref<288x128xf32, #tpu.memory_space<vmem>>, vector<16x128xf32>,
    %c0_2 = arith.constant 0 : index
    %c0_3 = arith.constant 0 : index
    %c0_4 = arith.constant 0 : index
    %c0_5 = arith.constant 0 : index
    %3 = vector.load %arg1[%c0_2, %c0_3, %c0_4, %c0_5] : memref<1x16x16x128xbf16, #tpu.memory_space<vmem>>, vector<1x16x16x128xbf16>
    %4 = vector.shape_cast %3 : vector<1x16x16x128xbf16> to vector<16x16x128xbf16>
    %5 = vector.shape_cast %4 : vector<16x16x128xbf16> to vector<256x128xbf16>
    %6 = arith.extf %5 : vector<256x128xbf16> to vector<256x128xf32>
    %c16 = arith.constant 16 : index
    %c0_6 = arith.constant 0 : index
    %7 = vector.load %arg8[%c16, %c0_6] : memref<288x128xf32, #tpu.memory_space<vmem>>, vector<256x128xf32>
    tpu.vector_store %arg8[%c16, %c0_6], %6 {strides = array<i32>} : memref<288x128xf32, #tpu.memory_space<vmem>>, vector<256x128xf32>,
    %c0_7 = arith.constant 0 : index
    %c0_8 = arith.constant 0 : index
    %8 = vector.load %arg3[%c0_7, %c0_8] : memref<1x128xf32, #tpu.memory_space<vmem>>, vector<1x128xf32>
    %9 = vector.shape_cast %8 : vector<1x128xf32> to vector<1x128xf32>
    %10 = vector.broadcast %9 : vector<1x128xf32> to vector<256x128xf32>
    %c0_9 = arith.constant 0 : index
    %c0_10 = arith.constant 0 : index
    %11 = vector.load %arg9[%c0_9, %c0_10] : memref<256x128xf32, #tpu.memory_space<vmem>>, vector<256x128xf32>
    tpu.vector_store %arg9[%c0_9, %c0_10], %10 {strides = array<i32>} : memref<256x128xf32, #tpu.memory_space<vmem>>, vector<256x128xf32>,
    %c0_11 = arith.constant 0 : index
    %c0_12 = arith.constant 0 : index
    %12 = vector.load %arg8[%c0_11, %c0_12] : memref<288x128xf32, #tpu.memory_space<vmem>>, vector<256x128xf32>
    %c1_i32 = arith.constant 1 : i32
    %13 = tpu.dynamic_rotate %12 by %c1_i32 dim 0 : vector<256x128xf32>, i32 -> vector<256x128xf32>
    %c0_13 = arith.constant 0 : index
    %c0_14 = arith.constant 0 : index
    %c0_15 = arith.constant 0 : index
    %14 = vector.load %arg6[%c0_13, %c0_14, %c0_15] : memref<2x256x1xf32, #tpu.memory_space<vmem>>, vector<1x256x1xf32>
    %15 = vector.shape_cast %14 : vector<1x256x1xf32> to vector<256x1xf32>
    %16 = vector.broadcast %15 : vector<256x1xf32> to vector<256x128xf32>
    %17 = arith.mulf %13, %16 : vector<256x128xf32>
    %c0_16 = arith.constant 0 : index
    %c0_17 = arith.constant 0 : index
    %18 = vector.load %arg9[%c0_16, %c0_17] : memref<256x128xf32, #tpu.memory_space<vmem>>, vector<256x128xf32>
    %19 = arith.truncf %17 : vector<256x128xf32> to vector<256x128xbf16>
    %c0_18 = arith.constant 0 : index
    %c0_19 = arith.constant 0 : index
    %c0_20 = arith.constant 0 : index
    %20 = vector.load %arg2[%c0_18, %c0_19, %c0_20] : memref<9x128x128xbf16, #tpu.memory_space<vmem>>, vector<1x128x128xbf16>
    %21 = vector.shape_cast %20 : vector<1x128x128xbf16> to vector<128x128xbf16>
    %cst_21 = arith.constant dense<0.000000e+00> : vector<256x128xf32>
    %22 = tpu.matmul %19, %21, %cst_21 {dimension_numbers = #tpu.dot_dimension_numbers<[1], [0], [0], [1], [0, 0, 1, 1], [], []>} : vector<256x128xbf16>, vector<128x128xbf16>, vector<256x128xf32> -> vector<256x128xf32>
    %23 = arith.addf %18, %22 : vector<256x128xf32>
    %c0_22 = arith.constant 0 : index
    %c0_23 = arith.constant 0 : index
    %24 = vector.load %arg9[%c0_22, %c0_23] : memref<256x128xf32, #tpu.memory_space<vmem>>, vector<256x128xf32>
    tpu.vector_store %arg9[%c0_22, %c0_23], %23 {strides = array<i32>} : memref<256x128xf32, #tpu.memory_space<vmem>>, vector<256x128xf32>,
    %c0_24 = arith.constant 0 : index
    %c0_25 = arith.constant 0 : index
    %25 = vector.load %arg9[%c0_24, %c0_25] : memref<256x128xf32, #tpu.memory_space<vmem>>, vector<256x128xf32>
    %26 = arith.truncf %12 : vector<256x128xf32> to vector<256x128xbf16>
    %c1 = arith.constant 1 : index
    %c0_26 = arith.constant 0 : index
    %c0_27 = arith.constant 0 : index
    %27 = vector.load %arg2[%c1, %c0_26, %c0_27] : memref<9x128x128xbf16, #tpu.memory_space<vmem>>, vector<1x128x128xbf16>
    %28 = vector.shape_cast %27 : vector<1x128x128xbf16> to vector<128x128xbf16>
    %cst_28 = arith.constant dense<0.000000e+00> : vector<256x128xf32>
    %29 = tpu.matmul %26, %28, %cst_28 {dimension_numbers = #tpu.dot_dimension_numbers<[1], [0], [0], [1], [0, 0, 1, 1], [], []>} : vector<256x128xbf16>, vector<128x128xbf16>, vector<256x128xf32> -> vector<256x128xf32>
    %30 = arith.addf %25, %29 : vector<256x128xf32>
    %c0_29 = arith.constant 0 : index
    %c0_30 = arith.constant 0 : index
    %31 = vector.load %arg9[%c0_29, %c0_30] : memref<256x128xf32, #tpu.memory_space<vmem>>, vector<256x128xf32>
    tpu.vector_store %arg9[%c0_29, %c0_30], %30 {strides = array<i32>} : memref<256x128xf32, #tpu.memory_space<vmem>>, vector<256x128xf32>,
    %c255_i32 = arith.constant 255 : i32
    %32 = tpu.dynamic_rotate %12 by %c255_i32 dim 0 : vector<256x128xf32>, i32 -> vector<256x128xf32>
    %c1_31 = arith.constant 1 : index
    %c0_32 = arith.constant 0 : index
    %c0_33 = arith.constant 0 : index
    %33 = vector.load %arg6[%c1_31, %c0_32, %c0_33] : memref<2x256x1xf32, #tpu.memory_space<vmem>>, vector<1x256x1xf32>
    %34 = vector.shape_cast %33 : vector<1x256x1xf32> to vector<256x1xf32>
    %35 = vector.broadcast %34 : vector<256x1xf32> to vector<256x128xf32>
    %36 = arith.mulf %32, %35 : vector<256x128xf32>
    %c0_34 = arith.constant 0 : index
    %c0_35 = arith.constant 0 : index
    %37 = vector.load %arg9[%c0_34, %c0_35] : memref<256x128xf32, #tpu.memory_space<vmem>>, vector<256x128xf32>
    %38 = arith.truncf %36 : vector<256x128xf32> to vector<256x128xbf16>
    %c2 = arith.constant 2 : index
    %c0_36 = arith.constant 0 : index
    %c0_37 = arith.constant 0 : index
    %39 = vector.load %arg2[%c2, %c0_36, %c0_37] : memref<9x128x128xbf16, #tpu.memory_space<vmem>>, vector<1x128x128xbf16>
    %40 = vector.shape_cast %39 : vector<1x128x128xbf16> to vector<128x128xbf16>
    %cst_38 = arith.constant dense<0.000000e+00> : vector<256x128xf32>
    %41 = tpu.matmul %38, %40, %cst_38 {dimension_numbers = #tpu.dot_dimension_numbers<[1], [0], [0], [1], [0, 0, 1, 1], [], []>} : vector<256x128xbf16>, vector<128x128xbf16>, vector<256x128xf32> -> vector<256x128xf32>
    %42 = arith.addf %37, %41 : vector<256x128xf32>
    %c0_39 = arith.constant 0 : index
    %c0_40 = arith.constant 0 : index
    %43 = vector.load %arg9[%c0_39, %c0_40] : memref<256x128xf32, #tpu.memory_space<vmem>>, vector<256x128xf32>
    tpu.vector_store %arg9[%c0_39, %c0_40], %42 {strides = array<i32>} : memref<256x128xf32, #tpu.memory_space<vmem>>, vector<256x128xf32>,
    %c16_41 = arith.constant 16 : index
    %c0_42 = arith.constant 0 : index
    %44 = vector.load %arg8[%c16_41, %c0_42] : memref<288x128xf32, #tpu.memory_space<vmem>>, vector<256x128xf32>
    %c1_i32_43 = arith.constant 1 : i32
    %45 = tpu.dynamic_rotate %44 by %c1_i32_43 dim 0 : vector<256x128xf32>, i32 -> vector<256x128xf32>
    %c0_44 = arith.constant 0 : index
    %c0_45 = arith.constant 0 : index
    %c0_46 = arith.constant 0 : index
    %46 = vector.load %arg6[%c0_44, %c0_45, %c0_46] : memref<2x256x1xf32, #tpu.memory_space<vmem>>, vector<1x256x1xf32>
    %47 = vector.shape_cast %46 : vector<1x256x1xf32> to vector<256x1xf32>
    %48 = vector.broadcast %47 : vector<256x1xf32> to vector<256x128xf32>
    %49 = arith.mulf %45, %48 : vector<256x128xf32>
    %c0_47 = arith.constant 0 : index
    %c0_48 = arith.constant 0 : index
    %50 = vector.load %arg9[%c0_47, %c0_48] : memref<256x128xf32, #tpu.memory_space<vmem>>, vector<256x128xf32>
    %51 = arith.truncf %49 : vector<256x128xf32> to vector<256x128xbf16>
    %c3 = arith.constant 3 : index
    %c0_49 = arith.constant 0 : index
    %c0_50 = arith.constant 0 : index
    %52 = vector.load %arg2[%c3, %c0_49, %c0_50] : memref<9x128x128xbf16, #tpu.memory_space<vmem>>, vector<1x128x128xbf16>
    %53 = vector.shape_cast %52 : vector<1x128x128xbf16> to vector<128x128xbf16>
    %cst_51 = arith.constant dense<0.000000e+00> : vector<256x128xf32>
    %54 = tpu.matmul %51, %53, %cst_51 {dimension_numbers = #tpu.dot_dimension_numbers<[1], [0], [0], [1], [0, 0, 1, 1], [], []>} : vector<256x128xbf16>, vector<128x128xbf16>, vector<256x128xf32> -> vector<256x128xf32>
    %55 = arith.addf %50, %54 : vector<256x128xf32>
    %c0_52 = arith.constant 0 : index
    %c0_53 = arith.constant 0 : index
    %56 = vector.load %arg9[%c0_52, %c0_53] : memref<256x128xf32, #tpu.memory_space<vmem>>, vector<256x128xf32>
    tpu.vector_store %arg9[%c0_52, %c0_53], %55 {strides = array<i32>} : memref<256x128xf32, #tpu.memory_space<vmem>>, vector<256x128xf32>,
    %c0_54 = arith.constant 0 : index
    %c0_55 = arith.constant 0 : index
    %57 = vector.load %arg9[%c0_54, %c0_55] : memref<256x128xf32, #tpu.memory_space<vmem>>, vector<256x128xf32>
    %58 = arith.truncf %44 : vector<256x128xf32> to vector<256x128xbf16>
    %c4 = arith.constant 4 : index
    %c0_56 = arith.constant 0 : index
    %c0_57 = arith.constant 0 : index
    %59 = vector.load %arg2[%c4, %c0_56, %c0_57] : memref<9x128x128xbf16, #tpu.memory_space<vmem>>, vector<1x128x128xbf16>
    %60 = vector.shape_cast %59 : vector<1x128x128xbf16> to vector<128x128xbf16>
    %cst_58 = arith.constant dense<0.000000e+00> : vector<256x128xf32>
    %61 = tpu.matmul %58, %60, %cst_58 {dimension_numbers = #tpu.dot_dimension_numbers<[1], [0], [0], [1], [0, 0, 1, 1], [], []>} : vector<256x128xbf16>, vector<128x128xbf16>, vector<256x128xf32> -> vector<256x128xf32>
    %62 = arith.addf %57, %61 : vector<256x128xf32>
    %c0_59 = arith.constant 0 : index
    %c0_60 = arith.constant 0 : index
    %63 = vector.load %arg9[%c0_59, %c0_60] : memref<256x128xf32, #tpu.memory_space<vmem>>, vector<256x128xf32>
    tpu.vector_store %arg9[%c0_59, %c0_60], %62 {strides = array<i32>} : memref<256x128xf32, #tpu.memory_space<vmem>>, vector<256x128xf32>,
    %c255_i32_61 = arith.constant 255 : i32
    %64 = tpu.dynamic_rotate %44 by %c255_i32_61 dim 0 : vector<256x128xf32>, i32 -> vector<256x128xf32>
    %c1_62 = arith.constant 1 : index
    %c0_63 = arith.constant 0 : index
    %c0_64 = arith.constant 0 : index
    %65 = vector.load %arg6[%c1_62, %c0_63, %c0_64] : memref<2x256x1xf32, #tpu.memory_space<vmem>>, vector<1x256x1xf32>
    %66 = vector.shape_cast %65 : vector<1x256x1xf32> to vector<256x1xf32>
    %67 = vector.broadcast %66 : vector<256x1xf32> to vector<256x128xf32>
    %68 = arith.mulf %64, %67 : vector<256x128xf32>
    %c0_65 = arith.constant 0 : index
    %c0_66 = arith.constant 0 : index
    %69 = vector.load %arg9[%c0_65, %c0_66] : memref<256x128xf32, #tpu.memory_space<vmem>>, vector<256x128xf32>
    %70 = arith.truncf %68 : vector<256x128xf32> to vector<256x128xbf16>
    %c5 = arith.constant 5 : index
    %c0_67 = arith.constant 0 : index
    %c0_68 = arith.constant 0 : index
    %71 = vector.load %arg2[%c5, %c0_67, %c0_68] : memref<9x128x128xbf16, #tpu.memory_space<vmem>>, vector<1x128x128xbf16>
    %72 = vector.shape_cast %71 : vector<1x128x128xbf16> to vector<128x128xbf16>
    %cst_69 = arith.constant dense<0.000000e+00> : vector<256x128xf32>
    %73 = tpu.matmul %70, %72, %cst_69 {dimension_numbers = #tpu.dot_dimension_numbers<[1], [0], [0], [1], [0, 0, 1, 1], [], []>} : vector<256x128xbf16>, vector<128x128xbf16>, vector<256x128xf32> -> vector<256x128xf32>
    %74 = arith.addf %69, %73 : vector<256x128xf32>
    %c0_70 = arith.constant 0 : index
    %c0_71 = arith.constant 0 : index
    %75 = vector.load %arg9[%c0_70, %c0_71] : memref<256x128xf32, #tpu.memory_space<vmem>>, vector<256x128xf32>
    tpu.vector_store %arg9[%c0_70, %c0_71], %74 {strides = array<i32>} : memref<256x128xf32, #tpu.memory_space<vmem>>, vector<256x128xf32>,
    %c32 = arith.constant 32 : index
    %c0_72 = arith.constant 0 : index
    %76 = vector.load %arg8[%c32, %c0_72] : memref<288x128xf32, #tpu.memory_space<vmem>>, vector<256x128xf32>
    %c1_i32_73 = arith.constant 1 : i32
    %77 = tpu.dynamic_rotate %76 by %c1_i32_73 dim 0 : vector<256x128xf32>, i32 -> vector<256x128xf32>
    %c0_74 = arith.constant 0 : index
    %c0_75 = arith.constant 0 : index
    %c0_76 = arith.constant 0 : index
    %78 = vector.load %arg6[%c0_74, %c0_75, %c0_76] : memref<2x256x1xf32, #tpu.memory_space<vmem>>, vector<1x256x1xf32>
    %79 = vector.shape_cast %78 : vector<1x256x1xf32> to vector<256x1xf32>
    %80 = vector.broadcast %79 : vector<256x1xf32> to vector<256x128xf32>
    %81 = arith.mulf %77, %80 : vector<256x128xf32>
    %c0_77 = arith.constant 0 : index
    %c0_78 = arith.constant 0 : index
    %82 = vector.load %arg9[%c0_77, %c0_78] : memref<256x128xf32, #tpu.memory_space<vmem>>, vector<256x128xf32>
    %83 = arith.truncf %81 : vector<256x128xf32> to vector<256x128xbf16>
    %c6 = arith.constant 6 : index
    %c0_79 = arith.constant 0 : index
    %c0_80 = arith.constant 0 : index
    %84 = vector.load %arg2[%c6, %c0_79, %c0_80] : memref<9x128x128xbf16, #tpu.memory_space<vmem>>, vector<1x128x128xbf16>
    %85 = vector.shape_cast %84 : vector<1x128x128xbf16> to vector<128x128xbf16>
    %cst_81 = arith.constant dense<0.000000e+00> : vector<256x128xf32>
    %86 = tpu.matmul %83, %85, %cst_81 {dimension_numbers = #tpu.dot_dimension_numbers<[1], [0], [0], [1], [0, 0, 1, 1], [], []>} : vector<256x128xbf16>, vector<128x128xbf16>, vector<256x128xf32> -> vector<256x128xf32>
    %87 = arith.addf %82, %86 : vector<256x128xf32>
    %c0_82 = arith.constant 0 : index
    %c0_83 = arith.constant 0 : index
    %88 = vector.load %arg9[%c0_82, %c0_83] : memref<256x128xf32, #tpu.memory_space<vmem>>, vector<256x128xf32>
    tpu.vector_store %arg9[%c0_82, %c0_83], %87 {strides = array<i32>} : memref<256x128xf32, #tpu.memory_space<vmem>>, vector<256x128xf32>,
    %c0_84 = arith.constant 0 : index
    %c0_85 = arith.constant 0 : index
    %89 = vector.load %arg9[%c0_84, %c0_85] : memref<256x128xf32, #tpu.memory_space<vmem>>, vector<256x128xf32>
    %90 = arith.truncf %76 : vector<256x128xf32> to vector<256x128xbf16>
    %c7 = arith.constant 7 : index
    %c0_86 = arith.constant 0 : index
    %c0_87 = arith.constant 0 : index
    %91 = vector.load %arg2[%c7, %c0_86, %c0_87] : memref<9x128x128xbf16, #tpu.memory_space<vmem>>, vector<1x128x128xbf16>
    %92 = vector.shape_cast %91 : vector<1x128x128xbf16> to vector<128x128xbf16>
    %cst_88 = arith.constant dense<0.000000e+00> : vector<256x128xf32>
    %93 = tpu.matmul %90, %92, %cst_88 {dimension_numbers = #tpu.dot_dimension_numbers<[1], [0], [0], [1], [0, 0, 1, 1], [], []>} : vector<256x128xbf16>, vector<128x128xbf16>, vector<256x128xf32> -> vector<256x128xf32>
    %94 = arith.addf %89, %93 : vector<256x128xf32>
    %c0_89 = arith.constant 0 : index
    %c0_90 = arith.constant 0 : index
    %95 = vector.load %arg9[%c0_89, %c0_90] : memref<256x128xf32, #tpu.memory_space<vmem>>, vector<256x128xf32>
    tpu.vector_store %arg9[%c0_89, %c0_90], %94 {strides = array<i32>} : memref<256x128xf32, #tpu.memory_space<vmem>>, vector<256x128xf32>,
    %c255_i32_91 = arith.constant 255 : i32
    %96 = tpu.dynamic_rotate %76 by %c255_i32_91 dim 0 : vector<256x128xf32>, i32 -> vector<256x128xf32>
    %c1_92 = arith.constant 1 : index
    %c0_93 = arith.constant 0 : index
    %c0_94 = arith.constant 0 : index
    %97 = vector.load %arg6[%c1_92, %c0_93, %c0_94] : memref<2x256x1xf32, #tpu.memory_space<vmem>>, vector<1x256x1xf32>
    %98 = vector.shape_cast %97 : vector<1x256x1xf32> to vector<256x1xf32>
    %99 = vector.broadcast %98 : vector<256x1xf32> to vector<256x128xf32>
    %100 = arith.mulf %96, %99 : vector<256x128xf32>
    %c0_95 = arith.constant 0 : index
    %c0_96 = arith.constant 0 : index
    %101 = vector.load %arg9[%c0_95, %c0_96] : memref<256x128xf32, #tpu.memory_space<vmem>>, vector<256x128xf32>
    %102 = arith.truncf %100 : vector<256x128xf32> to vector<256x128xbf16>
    %c8 = arith.constant 8 : index
    %c0_97 = arith.constant 0 : index
    %c0_98 = arith.constant 0 : index
    %103 = vector.load %arg2[%c8, %c0_97, %c0_98] : memref<9x128x128xbf16, #tpu.memory_space<vmem>>, vector<1x128x128xbf16>
    %104 = vector.shape_cast %103 : vector<1x128x128xbf16> to vector<128x128xbf16>
    %cst_99 = arith.constant dense<0.000000e+00> : vector<256x128xf32>
    %105 = tpu.matmul %102, %104, %cst_99 {dimension_numbers = #tpu.dot_dimension_numbers<[1], [0], [0], [1], [0, 0, 1, 1], [], []>} : vector<256x128xbf16>, vector<128x128xbf16>, vector<256x128xf32> -> vector<256x128xf32>
    %106 = arith.addf %101, %105 : vector<256x128xf32>
    %c0_100 = arith.constant 0 : index
    %c0_101 = arith.constant 0 : index
    %107 = vector.load %arg9[%c0_100, %c0_101] : memref<256x128xf32, #tpu.memory_space<vmem>>, vector<256x128xf32>
    tpu.vector_store %arg9[%c0_100, %c0_101], %106 {strides = array<i32>} : memref<256x128xf32, #tpu.memory_space<vmem>>, vector<256x128xf32>,
    %c0_102 = arith.constant 0 : index
    %c0_103 = arith.constant 0 : index
    %108 = vector.load %arg9[%c0_102, %c0_103] : memref<256x128xf32, #tpu.memory_space<vmem>>, vector<256x128xf32>
    %cst_104 = arith.constant 0.000000e+00 : f32
    %109 = vector.broadcast %cst_104 : f32 to vector<256x128xf32>
    %110 = arith.maximumf %108, %109 : vector<256x128xf32>
    %c16_105 = arith.constant 16 : index
    %c0_106 = arith.constant 0 : index
    %111 = vector.load %arg8[%c16_105, %c0_106] : memref<288x128xf32, #tpu.memory_space<vmem>>, vector<256x128xf32>
    tpu.vector_store %arg8[%c16_105, %c0_106], %110 {strides = array<i32>} : memref<288x128xf32, #tpu.memory_space<vmem>>, vector<256x128xf32>,
    %c0_107 = arith.constant 0 : index
    %c0_108 = arith.constant 0 : index
    %112 = vector.load %arg5[%c0_107, %c0_108] : memref<1x128xf32, #tpu.memory_space<vmem>>, vector<1x128xf32>
    %113 = vector.shape_cast %112 : vector<1x128xf32> to vector<1x128xf32>
    %114 = vector.broadcast %113 : vector<1x128xf32> to vector<256x128xf32>
    %c0_109 = arith.constant 0 : index
    %c0_110 = arith.constant 0 : index
    %115 = vector.load %arg9[%c0_109, %c0_110] : memref<256x128xf32, #tpu.memory_space<vmem>>, vector<256x128xf32>
    tpu.vector_store %arg9[%c0_109, %c0_110], %114 {strides = array<i32>} : memref<256x128xf32, #tpu.memory_space<vmem>>, vector<256x128xf32>,
    %c0_111 = arith.constant 0 : index
    %c0_112 = arith.constant 0 : index
    %116 = vector.load %arg8[%c0_111, %c0_112] : memref<288x128xf32, #tpu.memory_space<vmem>>, vector<256x128xf32>
    %c1_i32_113 = arith.constant 1 : i32
    %117 = tpu.dynamic_rotate %116 by %c1_i32_113 dim 0 : vector<256x128xf32>, i32 -> vector<256x128xf32>
    %c0_114 = arith.constant 0 : index
    %c0_115 = arith.constant 0 : index
    %c0_116 = arith.constant 0 : index
    %118 = vector.load %arg6[%c0_114, %c0_115, %c0_116] : memref<2x256x1xf32, #tpu.memory_space<vmem>>, vector<1x256x1xf32>
    %119 = vector.shape_cast %118 : vector<1x256x1xf32> to vector<256x1xf32>
    %120 = vector.broadcast %119 : vector<256x1xf32> to vector<256x128xf32>
    %121 = arith.mulf %117, %120 : vector<256x128xf32>
    %c0_117 = arith.constant 0 : index
    %c0_118 = arith.constant 0 : index
    %122 = vector.load %arg9[%c0_117, %c0_118] : memref<256x128xf32, #tpu.memory_space<vmem>>, vector<256x128xf32>
    %123 = arith.truncf %121 : vector<256x128xf32> to vector<256x128xbf16>
    %c0_119 = arith.constant 0 : index
    %c0_120 = arith.constant 0 : index
    %c0_121 = arith.constant 0 : index
    %124 = vector.load %arg4[%c0_119, %c0_120, %c0_121] : memref<9x128x128xbf16, #tpu.memory_space<vmem>>, vector<1x128x128xbf16>
    %125 = vector.shape_cast %124 : vector<1x128x128xbf16> to vector<128x128xbf16>
    %cst_122 = arith.constant dense<0.000000e+00> : vector<256x128xf32>
    %126 = tpu.matmul %123, %125, %cst_122 {dimension_numbers = #tpu.dot_dimension_numbers<[1], [0], [0], [1], [0, 0, 1, 1], [], []>} : vector<256x128xbf16>, vector<128x128xbf16>, vector<256x128xf32> -> vector<256x128xf32>
    %127 = arith.addf %122, %126 : vector<256x128xf32>
    %c0_123 = arith.constant 0 : index
    %c0_124 = arith.constant 0 : index
    %128 = vector.load %arg9[%c0_123, %c0_124] : memref<256x128xf32, #tpu.memory_space<vmem>>, vector<256x128xf32>
    tpu.vector_store %arg9[%c0_123, %c0_124], %127 {strides = array<i32>} : memref<256x128xf32, #tpu.memory_space<vmem>>, vector<256x128xf32>,
    %c0_125 = arith.constant 0 : index
    %c0_126 = arith.constant 0 : index
    %129 = vector.load %arg9[%c0_125, %c0_126] : memref<256x128xf32, #tpu.memory_space<vmem>>, vector<256x128xf32>
    %130 = arith.truncf %116 : vector<256x128xf32> to vector<256x128xbf16>
    %c1_127 = arith.constant 1 : index
    %c0_128 = arith.constant 0 : index
    %c0_129 = arith.constant 0 : index
    %131 = vector.load %arg4[%c1_127, %c0_128, %c0_129] : memref<9x128x128xbf16, #tpu.memory_space<vmem>>, vector<1x128x128xbf16>
    %132 = vector.shape_cast %131 : vector<1x128x128xbf16> to vector<128x128xbf16>
    %cst_130 = arith.constant dense<0.000000e+00> : vector<256x128xf32>
    %133 = tpu.matmul %130, %132, %cst_130 {dimension_numbers = #tpu.dot_dimension_numbers<[1], [0], [0], [1], [0, 0, 1, 1], [], []>} : vector<256x128xbf16>, vector<128x128xbf16>, vector<256x128xf32> -> vector<256x128xf32>
    %134 = arith.addf %129, %133 : vector<256x128xf32>
    %c0_131 = arith.constant 0 : index
    %c0_132 = arith.constant 0 : index
    %135 = vector.load %arg9[%c0_131, %c0_132] : memref<256x128xf32, #tpu.memory_space<vmem>>, vector<256x128xf32>
    tpu.vector_store %arg9[%c0_131, %c0_132], %134 {strides = array<i32>} : memref<256x128xf32, #tpu.memory_space<vmem>>, vector<256x128xf32>,
    %c255_i32_133 = arith.constant 255 : i32
    %136 = tpu.dynamic_rotate %116 by %c255_i32_133 dim 0 : vector<256x128xf32>, i32 -> vector<256x128xf32>
    %c1_134 = arith.constant 1 : index
    %c0_135 = arith.constant 0 : index
    %c0_136 = arith.constant 0 : index
    %137 = vector.load %arg6[%c1_134, %c0_135, %c0_136] : memref<2x256x1xf32, #tpu.memory_space<vmem>>, vector<1x256x1xf32>
    %138 = vector.shape_cast %137 : vector<1x256x1xf32> to vector<256x1xf32>
    %139 = vector.broadcast %138 : vector<256x1xf32> to vector<256x128xf32>
    %140 = arith.mulf %136, %139 : vector<256x128xf32>
    %c0_137 = arith.constant 0 : index
    %c0_138 = arith.constant 0 : index
    %141 = vector.load %arg9[%c0_137, %c0_138] : memref<256x128xf32, #tpu.memory_space<vmem>>, vector<256x128xf32>
    %142 = arith.truncf %140 : vector<256x128xf32> to vector<256x128xbf16>
    %c2_139 = arith.constant 2 : index
    %c0_140 = arith.constant 0 : index
    %c0_141 = arith.constant 0 : index
    %143 = vector.load %arg4[%c2_139, %c0_140, %c0_141] : memref<9x128x128xbf16, #tpu.memory_space<vmem>>, vector<1x128x128xbf16>
    %144 = vector.shape_cast %143 : vector<1x128x128xbf16> to vector<128x128xbf16>
    %cst_142 = arith.constant dense<0.000000e+00> : vector<256x128xf32>
    %145 = tpu.matmul %142, %144, %cst_142 {dimension_numbers = #tpu.dot_dimension_numbers<[1], [0], [0], [1], [0, 0, 1, 1], [], []>} : vector<256x128xbf16>, vector<128x128xbf16>, vector<256x128xf32> -> vector<256x128xf32>
    %146 = arith.addf %141, %145 : vector<256x128xf32>
    %c0_143 = arith.constant 0 : index
    %c0_144 = arith.constant 0 : index
    %147 = vector.load %arg9[%c0_143, %c0_144] : memref<256x128xf32, #tpu.memory_space<vmem>>, vector<256x128xf32>
    tpu.vector_store %arg9[%c0_143, %c0_144], %146 {strides = array<i32>} : memref<256x128xf32, #tpu.memory_space<vmem>>, vector<256x128xf32>,
    %c16_145 = arith.constant 16 : index
    %c0_146 = arith.constant 0 : index
    %148 = vector.load %arg8[%c16_145, %c0_146] : memref<288x128xf32, #tpu.memory_space<vmem>>, vector<256x128xf32>
    %c1_i32_147 = arith.constant 1 : i32
    %149 = tpu.dynamic_rotate %148 by %c1_i32_147 dim 0 : vector<256x128xf32>, i32 -> vector<256x128xf32>
    %c0_148 = arith.constant 0 : index
    %c0_149 = arith.constant 0 : index
    %c0_150 = arith.constant 0 : index
    %150 = vector.load %arg6[%c0_148, %c0_149, %c0_150] : memref<2x256x1xf32, #tpu.memory_space<vmem>>, vector<1x256x1xf32>
    %151 = vector.shape_cast %150 : vector<1x256x1xf32> to vector<256x1xf32>
    %152 = vector.broadcast %151 : vector<256x1xf32> to vector<256x128xf32>
    %153 = arith.mulf %149, %152 : vector<256x128xf32>
    %c0_151 = arith.constant 0 : index
    %c0_152 = arith.constant 0 : index
    %154 = vector.load %arg9[%c0_151, %c0_152] : memref<256x128xf32, #tpu.memory_space<vmem>>, vector<256x128xf32>
    %155 = arith.truncf %153 : vector<256x128xf32> to vector<256x128xbf16>
    %c3_153 = arith.constant 3 : index
    %c0_154 = arith.constant 0 : index
    %c0_155 = arith.constant 0 : index
    %156 = vector.load %arg4[%c3_153, %c0_154, %c0_155] : memref<9x128x128xbf16, #tpu.memory_space<vmem>>, vector<1x128x128xbf16>
    %157 = vector.shape_cast %156 : vector<1x128x128xbf16> to vector<128x128xbf16>
    %cst_156 = arith.constant dense<0.000000e+00> : vector<256x128xf32>
    %158 = tpu.matmul %155, %157, %cst_156 {dimension_numbers = #tpu.dot_dimension_numbers<[1], [0], [0], [1], [0, 0, 1, 1], [], []>} : vector<256x128xbf16>, vector<128x128xbf16>, vector<256x128xf32> -> vector<256x128xf32>
    %159 = arith.addf %154, %158 : vector<256x128xf32>
    %c0_157 = arith.constant 0 : index
    %c0_158 = arith.constant 0 : index
    %160 = vector.load %arg9[%c0_157, %c0_158] : memref<256x128xf32, #tpu.memory_space<vmem>>, vector<256x128xf32>
    tpu.vector_store %arg9[%c0_157, %c0_158], %159 {strides = array<i32>} : memref<256x128xf32, #tpu.memory_space<vmem>>, vector<256x128xf32>,
    %c0_159 = arith.constant 0 : index
    %c0_160 = arith.constant 0 : index
    %161 = vector.load %arg9[%c0_159, %c0_160] : memref<256x128xf32, #tpu.memory_space<vmem>>, vector<256x128xf32>
    %162 = arith.truncf %148 : vector<256x128xf32> to vector<256x128xbf16>
    %c4_161 = arith.constant 4 : index
    %c0_162 = arith.constant 0 : index
    %c0_163 = arith.constant 0 : index
    %163 = vector.load %arg4[%c4_161, %c0_162, %c0_163] : memref<9x128x128xbf16, #tpu.memory_space<vmem>>, vector<1x128x128xbf16>
    %164 = vector.shape_cast %163 : vector<1x128x128xbf16> to vector<128x128xbf16>
    %cst_164 = arith.constant dense<0.000000e+00> : vector<256x128xf32>
    %165 = tpu.matmul %162, %164, %cst_164 {dimension_numbers = #tpu.dot_dimension_numbers<[1], [0], [0], [1], [0, 0, 1, 1], [], []>} : vector<256x128xbf16>, vector<128x128xbf16>, vector<256x128xf32> -> vector<256x128xf32>
    %166 = arith.addf %161, %165 : vector<256x128xf32>
    %c0_165 = arith.constant 0 : index
    %c0_166 = arith.constant 0 : index
    %167 = vector.load %arg9[%c0_165, %c0_166] : memref<256x128xf32, #tpu.memory_space<vmem>>, vector<256x128xf32>
    tpu.vector_store %arg9[%c0_165, %c0_166], %166 {strides = array<i32>} : memref<256x128xf32, #tpu.memory_space<vmem>>, vector<256x128xf32>,
    %c255_i32_167 = arith.constant 255 : i32
    %168 = tpu.dynamic_rotate %148 by %c255_i32_167 dim 0 : vector<256x128xf32>, i32 -> vector<256x128xf32>
    %c1_168 = arith.constant 1 : index
    %c0_169 = arith.constant 0 : index
    %c0_170 = arith.constant 0 : index
    %169 = vector.load %arg6[%c1_168, %c0_169, %c0_170] : memref<2x256x1xf32, #tpu.memory_space<vmem>>, vector<1x256x1xf32>
    %170 = vector.shape_cast %169 : vector<1x256x1xf32> to vector<256x1xf32>
    %171 = vector.broadcast %170 : vector<256x1xf32> to vector<256x128xf32>
    %172 = arith.mulf %168, %171 : vector<256x128xf32>
    %c0_171 = arith.constant 0 : index
    %c0_172 = arith.constant 0 : index
    %173 = vector.load %arg9[%c0_171, %c0_172] : memref<256x128xf32, #tpu.memory_space<vmem>>, vector<256x128xf32>
    %174 = arith.truncf %172 : vector<256x128xf32> to vector<256x128xbf16>
    %c5_173 = arith.constant 5 : index
    %c0_174 = arith.constant 0 : index
    %c0_175 = arith.constant 0 : index
    %175 = vector.load %arg4[%c5_173, %c0_174, %c0_175] : memref<9x128x128xbf16, #tpu.memory_space<vmem>>, vector<1x128x128xbf16>
    %176 = vector.shape_cast %175 : vector<1x128x128xbf16> to vector<128x128xbf16>
    %cst_176 = arith.constant dense<0.000000e+00> : vector<256x128xf32>
    %177 = tpu.matmul %174, %176, %cst_176 {dimension_numbers = #tpu.dot_dimension_numbers<[1], [0], [0], [1], [0, 0, 1, 1], [], []>} : vector<256x128xbf16>, vector<128x128xbf16>, vector<256x128xf32> -> vector<256x128xf32>
    %178 = arith.addf %173, %177 : vector<256x128xf32>
    %c0_177 = arith.constant 0 : index
    %c0_178 = arith.constant 0 : index
    %179 = vector.load %arg9[%c0_177, %c0_178] : memref<256x128xf32, #tpu.memory_space<vmem>>, vector<256x128xf32>
    tpu.vector_store %arg9[%c0_177, %c0_178], %178 {strides = array<i32>} : memref<256x128xf32, #tpu.memory_space<vmem>>, vector<256x128xf32>,
    %c32_179 = arith.constant 32 : index
    %c0_180 = arith.constant 0 : index
    %180 = vector.load %arg8[%c32_179, %c0_180] : memref<288x128xf32, #tpu.memory_space<vmem>>, vector<256x128xf32>
    %c1_i32_181 = arith.constant 1 : i32
    %181 = tpu.dynamic_rotate %180 by %c1_i32_181 dim 0 : vector<256x128xf32>, i32 -> vector<256x128xf32>
    %c0_182 = arith.constant 0 : index
    %c0_183 = arith.constant 0 : index
    %c0_184 = arith.constant 0 : index
    %182 = vector.load %arg6[%c0_182, %c0_183, %c0_184] : memref<2x256x1xf32, #tpu.memory_space<vmem>>, vector<1x256x1xf32>
    %183 = vector.shape_cast %182 : vector<1x256x1xf32> to vector<256x1xf32>
    %184 = vector.broadcast %183 : vector<256x1xf32> to vector<256x128xf32>
    %185 = arith.mulf %181, %184 : vector<256x128xf32>
    %c0_185 = arith.constant 0 : index
    %c0_186 = arith.constant 0 : index
    %186 = vector.load %arg9[%c0_185, %c0_186] : memref<256x128xf32, #tpu.memory_space<vmem>>, vector<256x128xf32>
    %187 = arith.truncf %185 : vector<256x128xf32> to vector<256x128xbf16>
    %c6_187 = arith.constant 6 : index
    %c0_188 = arith.constant 0 : index
    %c0_189 = arith.constant 0 : index
    %188 = vector.load %arg4[%c6_187, %c0_188, %c0_189] : memref<9x128x128xbf16, #tpu.memory_space<vmem>>, vector<1x128x128xbf16>
    %189 = vector.shape_cast %188 : vector<1x128x128xbf16> to vector<128x128xbf16>
    %cst_190 = arith.constant dense<0.000000e+00> : vector<256x128xf32>
    %190 = tpu.matmul %187, %189, %cst_190 {dimension_numbers = #tpu.dot_dimension_numbers<[1], [0], [0], [1], [0, 0, 1, 1], [], []>} : vector<256x128xbf16>, vector<128x128xbf16>, vector<256x128xf32> -> vector<256x128xf32>
    %191 = arith.addf %186, %190 : vector<256x128xf32>
    %c0_191 = arith.constant 0 : index
    %c0_192 = arith.constant 0 : index
    %192 = vector.load %arg9[%c0_191, %c0_192] : memref<256x128xf32, #tpu.memory_space<vmem>>, vector<256x128xf32>
    tpu.vector_store %arg9[%c0_191, %c0_192], %191 {strides = array<i32>} : memref<256x128xf32, #tpu.memory_space<vmem>>, vector<256x128xf32>,
    %c0_193 = arith.constant 0 : index
    %c0_194 = arith.constant 0 : index
    %193 = vector.load %arg9[%c0_193, %c0_194] : memref<256x128xf32, #tpu.memory_space<vmem>>, vector<256x128xf32>
    %194 = arith.truncf %180 : vector<256x128xf32> to vector<256x128xbf16>
    %c7_195 = arith.constant 7 : index
    %c0_196 = arith.constant 0 : index
    %c0_197 = arith.constant 0 : index
    %195 = vector.load %arg4[%c7_195, %c0_196, %c0_197] : memref<9x128x128xbf16, #tpu.memory_space<vmem>>, vector<1x128x128xbf16>
    %196 = vector.shape_cast %195 : vector<1x128x128xbf16> to vector<128x128xbf16>
    %cst_198 = arith.constant dense<0.000000e+00> : vector<256x128xf32>
    %197 = tpu.matmul %194, %196, %cst_198 {dimension_numbers = #tpu.dot_dimension_numbers<[1], [0], [0], [1], [0, 0, 1, 1], [], []>} : vector<256x128xbf16>, vector<128x128xbf16>, vector<256x128xf32> -> vector<256x128xf32>
    %198 = arith.addf %193, %197 : vector<256x128xf32>
    %c0_199 = arith.constant 0 : index
    %c0_200 = arith.constant 0 : index
    %199 = vector.load %arg9[%c0_199, %c0_200] : memref<256x128xf32, #tpu.memory_space<vmem>>, vector<256x128xf32>
    tpu.vector_store %arg9[%c0_199, %c0_200], %198 {strides = array<i32>} : memref<256x128xf32, #tpu.memory_space<vmem>>, vector<256x128xf32>,
    %c255_i32_201 = arith.constant 255 : i32
    %200 = tpu.dynamic_rotate %180 by %c255_i32_201 dim 0 : vector<256x128xf32>, i32 -> vector<256x128xf32>
    %c1_202 = arith.constant 1 : index
    %c0_203 = arith.constant 0 : index
    %c0_204 = arith.constant 0 : index
    %201 = vector.load %arg6[%c1_202, %c0_203, %c0_204] : memref<2x256x1xf32, #tpu.memory_space<vmem>>, vector<1x256x1xf32>
    %202 = vector.shape_cast %201 : vector<1x256x1xf32> to vector<256x1xf32>
    %203 = vector.broadcast %202 : vector<256x1xf32> to vector<256x128xf32>
    %204 = arith.mulf %200, %203 : vector<256x128xf32>
    %c0_205 = arith.constant 0 : index
    %c0_206 = arith.constant 0 : index
    %205 = vector.load %arg9[%c0_205, %c0_206] : memref<256x128xf32, #tpu.memory_space<vmem>>, vector<256x128xf32>
    %206 = arith.truncf %204 : vector<256x128xf32> to vector<256x128xbf16>
    %c8_207 = arith.constant 8 : index
    %c0_208 = arith.constant 0 : index
    %c0_209 = arith.constant 0 : index
    %207 = vector.load %arg4[%c8_207, %c0_208, %c0_209] : memref<9x128x128xbf16, #tpu.memory_space<vmem>>, vector<1x128x128xbf16>
    %208 = vector.shape_cast %207 : vector<1x128x128xbf16> to vector<128x128xbf16>
    %cst_210 = arith.constant dense<0.000000e+00> : vector<256x128xf32>
    %209 = tpu.matmul %206, %208, %cst_210 {dimension_numbers = #tpu.dot_dimension_numbers<[1], [0], [0], [1], [0, 0, 1, 1], [], []>} : vector<256x128xbf16>, vector<128x128xbf16>, vector<256x128xf32> -> vector<256x128xf32>
    %210 = arith.addf %205, %209 : vector<256x128xf32>
    %c0_211 = arith.constant 0 : index
    %c0_212 = arith.constant 0 : index
    %211 = vector.load %arg9[%c0_211, %c0_212] : memref<256x128xf32, #tpu.memory_space<vmem>>, vector<256x128xf32>
    tpu.vector_store %arg9[%c0_211, %c0_212], %210 {strides = array<i32>} : memref<256x128xf32, #tpu.memory_space<vmem>>, vector<256x128xf32>,
    %c0_213 = arith.constant 0 : index
    %c0_214 = arith.constant 0 : index
    %212 = vector.load %arg9[%c0_213, %c0_214] : memref<256x128xf32, #tpu.memory_space<vmem>>, vector<256x128xf32>
    %c0_215 = arith.constant 0 : index
    %c0_216 = arith.constant 0 : index
    %c0_217 = arith.constant 0 : index
    %c0_218 = arith.constant 0 : index
    %213 = vector.load %arg1[%c0_215, %c0_216, %c0_217, %c0_218] : memref<1x16x16x128xbf16, #tpu.memory_space<vmem>>, vector<1x16x16x128xbf16>
    %214 = vector.shape_cast %213 : vector<1x16x16x128xbf16> to vector<16x16x128xbf16>
    %215 = vector.shape_cast %214 : vector<16x16x128xbf16> to vector<256x128xbf16>
    %216 = arith.extf %215 : vector<256x128xbf16> to vector<256x128xf32>
    %217 = arith.addf %212, %216 : vector<256x128xf32>
    %cst_219 = arith.constant 0.000000e+00 : f32
    %218 = vector.broadcast %cst_219 : f32 to vector<256x128xf32>
    %219 = arith.maximumf %217, %218 : vector<256x128xf32>
    %220 = vector.shape_cast %219 : vector<256x128xf32> to vector<16x16x128xf32>
    %c0_220 = arith.constant 0 : index
    %c0_221 = arith.constant 0 : index
    %c0_222 = arith.constant 0 : index
    %c0_223 = arith.constant 0 : index
    %221 = vector.load %arg7[%c0_220, %c0_221, %c0_222, %c0_223] : memref<1x16x16x128xf32, #tpu.memory_space<vmem>>, vector<1x16x16x128xf32>
    %222 = vector.shape_cast %221 : vector<1x16x16x128xf32> to vector<16x16x128xf32>
    %223 = vector.shape_cast %220 : vector<16x16x128xf32> to vector<1x16x16x128xf32>
    tpu.vector_store %arg7[%c0_220, %c0_221, %c0_222, %c0_223], %223 {strides = array<i32>} : memref<1x16x16x128xf32, #tpu.memory_space<vmem>>, vector<1x16x16x128xf32>,
    return
  }
  func.func @transform_0(%arg0: i32) -> (i32, i32, i32, i32) {
    %c0_i32 = arith.constant 0 : i32
    %c0_i32_0 = arith.constant 0 : i32
    %c0_i32_1 = arith.constant 0 : i32
    %c0_i32_2 = arith.constant 0 : i32
    return %arg0, %c0_i32, %c0_i32_0, %c0_i32_1 : i32, i32, i32, i32
  }
  func.func @transform_1(%arg0: i32) -> (i32, i32, i32) {
    %c0_i32 = arith.constant 0 : i32
    %c0_i32_0 = arith.constant 0 : i32
    %c0_i32_1 = arith.constant 0 : i32
    %c0_i32_2 = arith.constant 0 : i32
    return %c0_i32, %c0_i32_0, %c0_i32_1 : i32, i32, i32
  }
  func.func @transform_2(%arg0: i32) -> (i32, i32) {
    %c0_i32 = arith.constant 0 : i32
    %c0_i32_0 = arith.constant 0 : i32
    %c0_i32_1 = arith.constant 0 : i32
    return %c0_i32, %c0_i32_0 : i32, i32
  }
  func.func @transform_3(%arg0: i32) -> (i32, i32, i32) {
    %c0_i32 = arith.constant 0 : i32
    %c0_i32_0 = arith.constant 0 : i32
    %c0_i32_1 = arith.constant 0 : i32
    %c0_i32_2 = arith.constant 0 : i32
    return %c0_i32, %c0_i32_0, %c0_i32_1 : i32, i32, i32
  }
  func.func @transform_4(%arg0: i32) -> (i32, i32) {
    %c0_i32 = arith.constant 0 : i32
    %c0_i32_0 = arith.constant 0 : i32
    %c0_i32_1 = arith.constant 0 : i32
    return %c0_i32, %c0_i32_0 : i32, i32
  }
  func.func @transform_5(%arg0: i32) -> (i32, i32, i32) {
    %c0_i32 = arith.constant 0 : i32
    %c0_i32_0 = arith.constant 0 : i32
    %c0_i32_1 = arith.constant 0 : i32
    %c0_i32_2 = arith.constant 0 : i32
    return %c0_i32, %c0_i32_0, %c0_i32_1 : i32, i32, i32
  }
  func.func @transform_6(%arg0: i32) -> (i32, i32, i32, i32) {
    %c0_i32 = arith.constant 0 : i32
    %c0_i32_0 = arith.constant 0 : i32
    %c0_i32_1 = arith.constant 0 : i32
    %c0_i32_2 = arith.constant 0 : i32
    return %arg0, %c0_i32, %c0_i32_0, %c0_i32_1 : i32, i32, i32, i32
  }
}

</mosaic_0001>

<llo_original>
// kernel: resnet_block.1
$region0: #{resnet_block.1}
  #allocation0 [shape = 'u32[]', space=smem, size = 0x4, offset = 0x4, fixed_abs, tag = 'smem constant byte address 0x4 - core index']
  #allocation1 [shape = 'u32[144,128]{1,0:T(1,128)}', space=vmem, size = 0x12000, scoped, tag = 'internal scratch']
  #allocation2 [shape = 'f32[288,128]{1,0:T(8,128)}', space=vmem, size = 0x24000, scoped, tag = 'scratch operand']
  #allocation3 [shape = 'f32[256,128]{1,0:T(8,128)}', space=vmem, size = 0x20000, scoped, tag = 'scratch operand']
  %s0 = inlined_call_operand.vmem [shape: bf16[2,16,16,128], index: 0, kind: input, shape index: {}]
  %s1 = inlined_call_operand.vmem [shape: bf16[9,128,128], index: 1, kind: input, shape index: {}]
  %s2 = inlined_call_operand.vmem [shape: f32[1,128], index: 2, kind: input, shape index: {}]
  %s3 = inlined_call_operand.vmem [shape: bf16[9,128,128], index: 3, kind: input, shape index: {}]
  %s4 = inlined_call_operand.vmem [shape: f32[1,128], index: 4, kind: input, shape index: {}]
  %s5 = inlined_call_operand.vmem [shape: f32[2,256,1], index: 5, kind: input, shape index: {}]
  %s6 = inlined_call_operand.vmem [shape: f32[2,16,16,128], index: 6, kind: output, shape index: {}]
  %s7 = sld [smem:[#allocation0]]
  $region57: #{resnet_block.1} parent=0
    _
  %s9 = ssub.s32 1, %s7
  %s10 = scalar_select 0, %s9, %s7
  loop: start=0, step=1, limit=4
  $region2: #{resnet_block.1} parent=0 // loop_pre_header
    _
  $region3: #{resnet_block.1} parent=0 // loop_header
    %s12 = sphi 0, %s16
    %p13 = scmp.ge.s32.totalorder %s12, 4
    %s22 = sphi 0, %s24
    %s25 = sphi 0, %s22
    %s26 = sphi 0, %s25
    %s42 = sphi 0, %s26
    %s46 = sphi 0, %s46
    %s48 = sphi 0, %s46
    %s49 = sphi 0, %s48
    %s63 = sphi 0, %s49
    %s67 = sphi 0, %s67
    %s69 = sphi 0, %s67
    %s70 = sphi 0, %s69
    %s84 = sphi 0, %s70
    %s88 = sphi 0, %s88
    %s90 = sphi 0, %s88
    %s91 = sphi 0, %s90
    %s105 = sphi 0, %s91
    %s109 = sphi 0, %s109
    %s111 = sphi 0, %s109
    %s112 = sphi 0, %s111
    %s126 = sphi 0, %s112
    %s130 = sphi 0, %s130
    %s132 = sphi 0, %s130
    %s133 = sphi 0, %s132
    %s147 = sphi 0, %s133
    %s153 = sphi 0, %s155
    %s156 = sphi 0, %s153
    %s157 = sphi 0, %s156
    %s173 = sphi 0, %s157
  $region4: #{resnet_block.1} parent=0 // loop_header_branch
    %15 = sbr.rel (%p13) target = $region8
  $region5: #{resnet_block.1} parent=0 // loop_body
    %s17 = ssub.s32 %s12, 1
    %s18 = ssub.s32 %s12, 2
    %s19 = sadd.s32 %s12, 1
    %s20 = ssub.s32 %s12, %s19
    %p21 = scmp.eq.s32.totalorder %s20, 0
    %s23 = sadd.s32 %s22, 1
    %s24 = scalar_select %p21, %s22, %s23
    %p27 = pneg %p21
    %p28 = scmp.eq.s32.totalorder %s12, 1
    %p29 = por %p27, %p28
    %p30 = scmp.ne.s32.totalorder %s22, %s25
    %p31 = scmp.eq.s32.totalorder %s12, 0
    %p32 = por %p30, %p31
    %p33 = scmp.ne.s32.totalorder %s22, %s25
    %p34 = scmp.eq.s32.totalorder %s17, 1
    %p35 = por %p33, %p34
    %p36 = scmp.ne.s32.totalorder %s25, %s26
    %p37 = scmp.eq.s32.totalorder %s17, 0
    %p38 = por %p36, %p37
    %p39 = scmp.ne.s32.totalorder %s25, %s26
    %p40 = scmp.eq.s32.totalorder %s18, 1
    %p41 = por %p39, %p40
    %p43 = scmp.ne.s32.totalorder %s26, %s42
    %p44 = scmp.eq.s32.totalorder %s18, 0
    %p45 = por %p43, %p44
    %s47 = sadd.s32 %s46, 1
    %p50 = scmp.eq.s32.totalorder %s12, 1
    %p51 = scmp.ne.s32.totalorder %s46, %s48
    %p52 = scmp.eq.s32.totalorder %s12, 0
    %p53 = por %p51, %p52
    %p54 = scmp.ne.s32.totalorder %s46, %s48
    %p55 = scmp.eq.s32.totalorder %s17, 1
    %p56 = por %p54, %p55
    %p57 = scmp.ne.s32.totalorder %s48, %s49
    %p58 = scmp.eq.s32.totalorder %s17, 0
    %p59 = por %p57, %p58
    %p60 = scmp.ne.s32.totalorder %s48, %s49
    %p61 = scmp.eq.s32.totalorder %s18, 1
    %p62 = por %p60, %p61
    %p64 = scmp.ne.s32.totalorder %s49, %s63
    %p65 = scmp.eq.s32.totalorder %s18, 0
    %p66 = por %p64, %p65
    %s68 = sadd.s32 %s67, 1
    %p71 = scmp.eq.s32.totalorder %s12, 1
    %p72 = scmp.ne.s32.totalorder %s67, %s69
    %p73 = scmp.eq.s32.totalorder %s12, 0
    %p74 = por %p72, %p73
    %p75 = scmp.ne.s32.totalorder %s67, %s69
    %p76 = scmp.eq.s32.totalorder %s17, 1
    %p77 = por %p75, %p76
    %p78 = scmp.ne.s32.totalorder %s69, %s70
    %p79 = scmp.eq.s32.totalorder %s17, 0
    %p80 = por %p78, %p79
    %p81 = scmp.ne.s32.totalorder %s69, %s70
    %p82 = scmp.eq.s32.totalorder %s18, 1
    %p83 = por %p81, %p82
    %p85 = scmp.ne.s32.totalorder %s70, %s84
    %p86 = scmp.eq.s32.totalorder %s18, 0
    %p87 = por %p85, %p86
    %s89 = sadd.s32 %s88, 1
    %p92 = scmp.eq.s32.totalorder %s12, 1
    %p93 = scmp.ne.s32.totalorder %s88, %s90
    %p94 = scmp.eq.s32.totalorder %s12, 0
    %p95 = por %p93, %p94
    %p96 = scmp.ne.s32.totalorder %s88, %s90
    %p97 = scmp.eq.s32.totalorder %s17, 1
    %p98 = por %p96, %p97
    %p99 = scmp.ne.s32.totalorder %s90, %s91
    %p100 = scmp.eq.s32.totalorder %s17, 0
    %p101 = por %p99, %p100
    %p102 = scmp.ne.s32.totalorder %s90, %s91
    %p103 = scmp.eq.s32.totalorder %s18, 1
    %p104 = por %p102, %p103
    %p106 = scmp.ne.s32.totalorder %s91, %s105
    %p107 = scmp.eq.s32.totalorder %s18, 0
    %p108 = por %p106, %p107
    %s110 = sadd.s32 %s109, 1
    %p113 = scmp.eq.s32.totalorder %s12, 1
    %p114 = scmp.ne.s32.totalorder %s109, %s111
    %p115 = scmp.eq.s32.totalorder %s12, 0
    %p116 = por %p114, %p115
    %p117 = scmp.ne.s32.totalorder %s109, %s111
    %p118 = scmp.eq.s32.totalorder %s17, 1
    %p119 = por %p117, %p118
    %p120 = scmp.ne.s32.totalorder %s111, %s112
    %p121 = scmp.eq.s32.totalorder %s17, 0
    %p122 = por %p120, %p121
    %p123 = scmp.ne.s32.totalorder %s111, %s112
    %p124 = scmp.eq.s32.totalorder %s18, 1
    %p125 = por %p123, %p124
    %p127 = scmp.ne.s32.totalorder %s112, %s126
    %p128 = scmp.eq.s32.totalorder %s18, 0
    %p129 = por %p127, %p128
    %s131 = sadd.s32 %s130, 1
    %p134 = scmp.eq.s32.totalorder %s12, 1
    %p135 = scmp.ne.s32.totalorder %s130, %s132
    %p136 = scmp.eq.s32.totalorder %s12, 0
    %p137 = por %p135, %p136
    %p138 = scmp.ne.s32.totalorder %s130, %s132
    %p139 = scmp.eq.s32.totalorder %s17, 1
    %p140 = por %p138, %p139
    %p141 = scmp.ne.s32.totalorder %s132, %s133
    %p142 = scmp.eq.s32.totalorder %s17, 0
    %p143 = por %p141, %p142
    %p144 = scmp.ne.s32.totalorder %s132, %s133
    %p145 = scmp.eq.s32.totalorder %s18, 1
    %p146 = por %p144, %p145
    %p148 = scmp.ne.s32.totalorder %s133, %s147
    %p149 = scmp.eq.s32.totalorder %s18, 0
    %p150 = por %p148, %p149
    %s151 = ssub.s32 %s12, %s19
    %p152 = scmp.eq.s32.totalorder %s151, 0
    %s154 = sadd.s32 %s153, 1
    %s155 = scalar_select %p152, %s153, %s154
    %p158 = pneg %p152
    %p159 = scmp.eq.s32.totalorder %s12, 1
    %p160 = por %p158, %p159
    %p161 = scmp.ne.s32.totalorder %s153, %s156
    %p162 = scmp.eq.s32.totalorder %s12, 0
    %p163 = por %p161, %p162
    %p164 = scmp.ne.s32.totalorder %s153, %s156
    %p165 = scmp.eq.s32.totalorder %s17, 1
    %p166 = por %p164, %p165
    %p167 = scmp.ne.s32.totalorder %s156, %s157
    %p168 = scmp.eq.s32.totalorder %s17, 0
    %p169 = por %p167, %p168
    %p170 = scmp.ne.s32.totalorder %s156, %s157
    %p171 = scmp.eq.s32.totalorder %s18, 1
    %p172 = por %p170, %p171
    %p174 = scmp.ne.s32.totalorder %s157, %s173
    %p175 = scmp.eq.s32.totalorder %s18, 0
    %p176 = por %p174, %p175
    %p177 = scmp.le.s32.totalorder 1, %s12
    %p178 = scmp.lt.s32.totalorder %s12, 3
    %p179 = pnand %p177, %p178
    %p180 = pneg %p179
    // Predicated region
    $region9: #{resnet_block.1} parent=5 // pred_check
      _
    $region10: #{resnet_block.1} parent=5 // pred_check_branch
      %182 = sbr.rel (%p179) target = $region12
    $region11: #{resnet_block.1} parent=5 // pred_region
      %s183 = ssub.s32 %s12, 1
      // Predicated region
      $region13: #{resnet_block.1} parent=11 // pred_check
        %p184 = pneg %p59
      $region14: #{resnet_block.1} parent=11 // pred_check_branch
        %186 = sbr.rel (%p184) target = $region16
      $region15: #{resnet_block.1} parent=11 // pred_region
        _
      $region16: #{resnet_block.1} parent=11 // pred_fallthru
        _
      // Predicated region
      $region17: #{resnet_block.1} parent=11 // pred_check
        %p187 = pneg %p80
      $region18: #{resnet_block.1} parent=11 // pred_check_branch
        %189 = sbr.rel (%p187) target = $region20
      $region19: #{resnet_block.1} parent=11 // pred_region
        _
      $region20: #{resnet_block.1} parent=11 // pred_fallthru
        _
      // Predicated region
      $region21: #{resnet_block.1} parent=11 // pred_check
        %p190 = pneg %p101
      $region22: #{resnet_block.1} parent=11 // pred_check_branch
        %192 = sbr.rel (%p190) target = $region24
      $region23: #{resnet_block.1} parent=11 // pred_region
        _
      $region24: #{resnet_block.1} parent=11 // pred_fallthru
        _
      // Predicated region
      $region25: #{resnet_block.1} parent=11 // pred_check
        %p193 = pneg %p122
      $region26: #{resnet_block.1} parent=11 // pred_check_branch
        %195 = sbr.rel (%p193) target = $region28
      $region27: #{resnet_block.1} parent=11 // pred_region
        _
      $region28: #{resnet_block.1} parent=11 // pred_fallthru
        _
      // Predicated region
      $region29: #{resnet_block.1} parent=11 // pred_check
        %p196 = pneg %p143
      $region30: #{resnet_block.1} parent=11 // pred_check_branch
        %198 = sbr.rel (%p196) target = $region32
      $region31: #{resnet_block.1} parent=11 // pred_region
        _
      $region32: #{resnet_block.1} parent=11 // pred_fallthru
        _
    $region12: #{resnet_block.1} parent=5 // pred_fallthru
      _
    %p199 = scmp.lt.s32.totalorder %s12, 2
    // Predicated region
    $region33: #{resnet_block.1} parent=5 // pred_check
      %p200 = pneg %p199
    $region34: #{resnet_block.1} parent=5 // pred_check_branch
      %202 = sbr.rel (%p200) target = $region36
    $region35: #{resnet_block.1} parent=5 // pred_region
      // Predicated region
      $region37: #{resnet_block.1} parent=35 // pred_check
        %p203 = pneg %p32
      $region38: #{resnet_block.1} parent=35 // pred_check_branch
        %205 = sbr.rel (%p203) target = $region40
      $region39: #{resnet_block.1} parent=35 // pred_region
        %p206 = scmp.lt.s32.totalorder %s12, 1
        %s207 = scalar_select %p206, %s12, 1
        %s208 = smul.addr %s207, 32
        %s209 = smul.addr %s208, 4
        %s210 = scalar_lea.vmem %s0, %s209
      $region40: #{resnet_block.1} parent=35 // pred_fallthru
        _
    $region36: #{resnet_block.1} parent=5 // pred_fallthru
      _
    %p211 = scmp.le.s32.totalorder 1, %s12
    %p212 = scmp.lt.s32.totalorder %s12, 3
    %p213 = pnand %p211, %p212
    %p214 = pneg %p213
    // Predicated region
    $region41: #{resnet_block.1} parent=5 // pred_check
      _
    $region42: #{resnet_block.1} parent=5 // pred_check_branch
      %216 = sbr.rel (%p213) target = $region44
    $region43: #{resnet_block.1} parent=5 // pred_region
      %s217 = ssub.s32 %s12, 1
      %p218 = scmp.lt.s32.totalorder %s17, 1
      %s219 = scalar_select %p218, %s17, 1
      %s220 = smul.addr %s219, 32
      %s221 = smul.addr %s220, 4
      %s222 = scalar_lea.vmem %s0, %s221
      %p223 = pneg %p38
      %p224 = pneg %p35
      %p225 = pneg %p59
      %p226 = pneg %p56
      %p227 = pneg %p80
      %p228 = pneg %p77
      %p229 = pneg %p101
      %p230 = pneg %p98
      %p231 = pneg %p122
      %p232 = pneg %p119
      %p233 = pneg %p143
      %p234 = pneg %p140
      %p235 = pneg %p169
      %p236 = pneg %p166
      %p237 = scmp.lt.s32.totalorder %s17, 1
      %s238 = scalar_select %p237, %s17, 1
      %s239 = smul.addr %s238, 32
      %s240 = smul.addr %s239, 8
      %s241 = scalar_lea.vmem %s6, %s240
      %p242 = scmp.lt.s32.totalorder %s17, 1
      %s243 = scalar_select %p242, %s17, 1
      %s244 = smul.addr %s243, 32
      %s245 = smul.addr %s244, 4
      %s246 = scalar_lea.vmem %s0, %s245
      %p247 = scmp.lt.s32.totalorder %s17, 1
      %s248 = scalar_select %p247, %s17, 1
      %s249 = smul.addr %s248, 32
      %s250 = smul.addr %s249, 8
      %s251 = scalar_lea.vmem %s6, %s250
      %253 = vst [vmem:[#allocation2] sm:$0xff] 0.0
      %254 = vst [vmem:[#allocation2 + $0x8] sm:$0xff] 0.0
      %255 = vst [vmem:[#allocation2 + $0x110] sm:$0xff] 0.0
      %256 = vst [vmem:[#allocation2 + $0x118] sm:$0xff] 0.0
      %v257 = vld [vmem:[%s246] sm:$0xf]
      %v258 = vld [vmem:[%s246 + $0x4] sm:$0xf]
      %v259 = vld [vmem:[%s246 + $0x8] sm:$0xf]
      %v260 = vld [vmem:[%s246 + $0xc] sm:$0xf]
      %v261 = vld [vmem:[%s246 + $0x10] sm:$0xf]
      %v262 = vld [vmem:[%s246 + $0x14] sm:$0xf]
      %v263 = vld [vmem:[%s246 + $0x18] sm:$0xf]
      %v264 = vld [vmem:[%s246 + $0x1c] sm:$0xf]
      %v265 = vld [vmem:[%s246 + $0x20] sm:$0xf]
      %v266 = vld [vmem:[%s246 + $0x24] sm:$0xf]
      %v267 = vld [vmem:[%s246 + $0x28] sm:$0xf]
      %v268 = vld [vmem:[%s246 + $0x2c] sm:$0xf]
      %v269 = vld [vmem:[%s246 + $0x30] sm:$0xf]
      %v270 = vld [vmem:[%s246 + $0x34] sm:$0xf]
      %v271 = vld [vmem:[%s246 + $0x38] sm:$0xf]
      %v272 = vld [vmem:[%s246 + $0x3c] sm:$0xf]
      %v273 = vld [vmem:[%s246 + $0x40] sm:$0xf]
      %v274 = vld [vmem:[%s246 + $0x44] sm:$0xf]
      %v275 = vld [vmem:[%s246 + $0x48] sm:$0xf]
      %v276 = vld [vmem:[%s246 + $0x4c] sm:$0xf]
      %v277 = vld [vmem:[%s246 + $0x50] sm:$0xf]
      %v278 = vld [vmem:[%s246 + $0x54] sm:$0xf]
      %v279 = vld [vmem:[%s246 + $0x58] sm:$0xf]
      %v280 = vld [vmem:[%s246 + $0x5c] sm:$0xf]
      %v281 = vld [vmem:[%s246 + $0x60] sm:$0xf]
      %v282 = vld [vmem:[%s246 + $0x64] sm:$0xf]
      %v283 = vld [vmem:[%s246 + $0x68] sm:$0xf]
      %v284 = vld [vmem:[%s246 + $0x6c] sm:$0xf]
      %v285 = vld [vmem:[%s246 + $0x70] sm:$0xf]
      %v286 = vld [vmem:[%s246 + $0x74] sm:$0xf]
      %v287 = vld [vmem:[%s246 + $0x78] sm:$0xf]
      %v288 = vld [vmem:[%s246 + $0x7c] sm:$0xf]
      %v289 = vunpack.c.l.bf16 %v257
      %v290 = vunpack.c.l.bf16 %v258
      %v291 = vunpack.c.l.bf16 %v259
      %v292 = vunpack.c.l.bf16 %v260
      %v293 = vunpack.c.l.bf16 %v261
      %v294 = vunpack.c.l.bf16 %v262
      %v295 = vunpack.c.l.bf16 %v263
      %v296 = vunpack.c.l.bf16 %v264
      %v297 = vunpack.c.l.bf16 %v265
      %v298 = vunpack.c.l.bf16 %v266
      %v299 = vunpack.c.l.bf16 %v267
      %v300 = vunpack.c.l.bf16 %v268
      %v301 = vunpack.c.l.bf16 %v269
      %v302 = vunpack.c.l.bf16 %v270
      %v303 = vunpack.c.l.bf16 %v271
      %v304 = vunpack.c.l.bf16 %v272
      %v305 = vunpack.c.l.bf16 %v273
      %v306 = vunpack.c.l.bf16 %v274
      %v307 = vunpack.c.l.bf16 %v275
      %v308 = vunpack.c.l.bf16 %v276
      %v309 = vunpack.c.l.bf16 %v277
      %v310 = vunpack.c.l.bf16 %v278
      %v311 = vunpack.c.l.bf16 %v279
      %v312 = vunpack.c.l.bf16 %v280
      %v313 = vunpack.c.l.bf16 %v281
      %v314 = vunpack.c.l.bf16 %v282
      %v315 = vunpack.c.l.bf16 %v283
      %v316 = vunpack.c.l.bf16 %v284
      %v317 = vunpack.c.l.bf16 %v285
      %v318 = vunpack.c.l.bf16 %v286
      %v319 = vunpack.c.l.bf16 %v287
      %v320 = vunpack.c.l.bf16 %v288
      %321 = vst [vmem:[#allocation2 + $0x10] sm:$0xff] %v289
      %322 = vst [vmem:[#allocation2 + $0x18] sm:$0xff] %v290
      %323 = vst [vmem:[#allocation2 + $0x20] sm:$0xff] %v291
      %324 = vst [vmem:[#allocation2 + $0x28] sm:$0xff] %v292
      %325 = vst [vmem:[#allocation2 + $0x30] sm:$0xff] %v293
      %326 = vst [vmem:[#allocation2 + $0x38] sm:$0xff] %v294
      %327 = vst [vmem:[#allocation2 + $0x40] sm:$0xff] %v295
      %328 = vst [vmem:[#allocation2 + $0x48] sm:$0xff] %v296
      %329 = vst [vmem:[#allocation2 + $0x50] sm:$0xff] %v297
      %330 = vst [vmem:[#allocation2 + $0x58] sm:$0xff] %v298
      %331 = vst [vmem:[#allocation2 + $0x60] sm:$0xff] %v299
      %332 = vst [vmem:[#allocation2 + $0x68] sm:$0xff] %v300
      %333 = vst [vmem:[#allocation2 + $0x70] sm:$0xff] %v301
      %334 = vst [vmem:[#allocation2 + $0x78] sm:$0xff] %v302
      %335 = vst [vmem:[#allocation2 + $0x80] sm:$0xff] %v303
      %336 = vst [vmem:[#allocation2 + $0x88] sm:$0xff] %v304
      %337 = vst [vmem:[#allocation2 + $0x90] sm:$0xff] %v305
      %338 = vst [vmem:[#allocation2 + $0x98] sm:$0xff] %v306
      %339 = vst [vmem:[#allocation2 + $0xa0] sm:$0xff] %v307
      %340 = vst [vmem:[#allocation2 + $0xa8] sm:$0xff] %v308
      %341 = vst [vmem:[#allocation2 + $0xb0] sm:$0xff] %v309
      %342 = vst [vmem:[#allocation2 + $0xb8] sm:$0xff] %v310
      %343 = vst [vmem:[#allocation2 + $0xc0] sm:$0xff] %v311
      %344 = vst [vmem:[#allocation2 + $0xc8] sm:$0xff] %v312
      %345 = vst [vmem:[#allocation2 + $0xd0] sm:$0xff] %v313
      %346 = vst [vmem:[#allocation2 + $0xd8] sm:$0xff] %v314
      %347 = vst [vmem:[#allocation2 + $0xe0] sm:$0xff] %v315
      %348 = vst [vmem:[#allocation2 + $0xe8] sm:$0xff] %v316
      %349 = vst [vmem:[#allocation2 + $0xf0] sm:$0xff] %v317
      %350 = vst [vmem:[#allocation2 + $0xf8] sm:$0xff] %v318
      %351 = vst [vmem:[#allocation2 + $0x100] sm:$0xff] %v319
      %352 = vst [vmem:[#allocation2 + $0x108] sm:$0xff] %v320
      %v353 = vld [vmem:[%s2] sm:$0x1]
      %v355 = vlaneseq
      %v356 = vshrl.u32 %v355, 7
      %v357 = vsub.s32 0, %v356
      %v358 = vrot.slane %v353, %v357
      %360 = vst [vmem:[#allocation3] sm:$0xff] %v358
      %361 = vst [vmem:[#allocation3 + $0x8] sm:$0xff] %v358
      %362 = vst [vmem:[#allocation3 + $0x10] sm:$0xff] %v358
      %363 = vst [vmem:[#allocation3 + $0x18] sm:$0xff] %v358
      %364 = vst [vmem:[#allocation3 + $0x20] sm:$0xff] %v358
      %365 = vst [vmem:[#allocation3 + $0x28] sm:$0xff] %v358
      %366 = vst [vmem:[#allocation3 + $0x30] sm:$0xff] %v358
      %367 = vst [vmem:[#allocation3 + $0x38] sm:$0xff] %v358
      %368 = vst [vmem:[#allocation3 + $0x40] sm:$0xff] %v358
      %369 = vst [vmem:[#allocation3 + $0x48] sm:$0xff] %v358
      %370 = vst [vmem:[#allocation3 + $0x50] sm:$0xff] %v358
      %371 = vst [vmem:[#allocation3 + $0x58] sm:$0xff] %v358
      %372 = vst [vmem:[#allocation3 + $0x60] sm:$0xff] %v358
      %373 = vst [vmem:[#allocation3 + $0x68] sm:$0xff] %v358
      %374 = vst [vmem:[#allocation3 + $0x70] sm:$0xff] %v358
      %375 = vst [vmem:[#allocation3 + $0x78] sm:$0xff] %v358
      %376 = vst [vmem:[#allocation3 + $0x80] sm:$0xff] %v358
      %377 = vst [vmem:[#allocation3 + $0x88] sm:$0xff] %v358
      %378 = vst [vmem:[#allocation3 + $0x90] sm:$0xff] %v358
      %379 = vst [vmem:[#allocation3 + $0x98] sm:$0xff] %v358
      %380 = vst [vmem:[#allocation3 + $0xa0] sm:$0xff] %v358
      %381 = vst [vmem:[#allocation3 + $0xa8] sm:$0xff] %v358
      %382 = vst [vmem:[#allocation3 + $0xb0] sm:$0xff] %v358
      %383 = vst [vmem:[#allocation3 + $0xb8] sm:$0xff] %v358
      %384 = vst [vmem:[#allocation3 + $0xc0] sm:$0xff] %v358
      %385 = vst [vmem:[#allocation3 + $0xc8] sm:$0xff] %v358
      %386 = vst [vmem:[#allocation3 + $0xd0] sm:$0xff] %v358
      %387 = vst [vmem:[#allocation3 + $0xd8] sm:$0xff] %v358
      %388 = vst [vmem:[#allocation3 + $0xe0] sm:$0xff] %v358
      %389 = vst [vmem:[#allocation3 + $0xe8] sm:$0xff] %v358
      %390 = vst [vmem:[#allocation3 + $0xf0] sm:$0xff] %v358
      %391 = vst [vmem:[#allocation3 + $0xf8] sm:$0xff] %v358
      %v392 = vld [vmem:[#allocation2] sm:$0xff]
      %v393 = vld [vmem:[#allocation2 + $0x8] sm:$0xff]
      %v394 = vld [vmem:[#allocation2 + $0x10] sm:$0xff]
      %v395 = vld [vmem:[#allocation2 + $0x18] sm:$0xff]
      %v396 = vld [vmem:[#allocation2 + $0x20] sm:$0xff]
      %v397 = vld [vmem:[#allocation2 + $0x28] sm:$0xff]
      %v398 = vld [vmem:[#allocation2 + $0x30] sm:$0xff]
      %v399 = vld [vmem:[#allocation2 + $0x38] sm:$0xff]
      %v400 = vld [vmem:[#allocation2 + $0x40] sm:$0xff]
      %v401 = vld [vmem:[#allocation2 + $0x48] sm:$0xff]
      %v402 = vld [vmem:[#allocation2 + $0x50] sm:$0xff]
      %v403 = vld [vmem:[#allocation2 + $0x58] sm:$0xff]
      %v404 = vld [vmem:[#allocation2 + $0x60] sm:$0xff]
      %v405 = vld [vmem:[#allocation2 + $0x68] sm:$0xff]
      %v406 = vld [vmem:[#allocation2 + $0x70] sm:$0xff]
      %v407 = vld [vmem:[#allocation2 + $0x78] sm:$0xff]
      %v408 = vld [vmem:[#allocation2 + $0x80] sm:$0xff]
      %v409 = vld [vmem:[#allocation2 + $0x88] sm:$0xff]
      %v410 = vld [vmem:[#allocation2 + $0x90] sm:$0xff]
      %v411 = vld [vmem:[#allocation2 + $0x98] sm:$0xff]
      %v412 = vld [vmem:[#allocation2 + $0xa0] sm:$0xff]
      %v413 = vld [vmem:[#allocation2 + $0xa8] sm:$0xff]
      %v414 = vld [vmem:[#allocation2 + $0xb0] sm:$0xff]
      %v415 = vld [vmem:[#allocation2 + $0xb8] sm:$0xff]
      %v416 = vld [vmem:[#allocation2 + $0xc0] sm:$0xff]
      %v417 = vld [vmem:[#allocation2 + $0xc8] sm:$0xff]
      %v418 = vld [vmem:[#allocation2 + $0xd0] sm:$0xff]
      %v419 = vld [vmem:[#allocation2 + $0xd8] sm:$0xff]
      %v420 = vld [vmem:[#allocation2 + $0xe0] sm:$0xff]
      %v421 = vld [vmem:[#allocation2 + $0xe8] sm:$0xff]
      %v422 = vld [vmem:[#allocation2 + $0xf0] sm:$0xff]
      %v423 = vld [vmem:[#allocation2 + $0xf8] sm:$0xff]
      %v424 = vrot.slane %v392, 7
      %v425 = vrot.slane %v393, 7
      %v426 = vrot.slane %v394, 7
      %v427 = vrot.slane %v395, 7
      %v428 = vrot.slane %v396, 7
      %v429 = vrot.slane %v397, 7
      %v430 = vrot.slane %v398, 7
      %v431 = vrot.slane %v399, 7
      %v432 = vrot.slane %v400, 7
      %v433 = vrot.slane %v401, 7
      %v434 = vrot.slane %v402, 7
      %v435 = vrot.slane %v403, 7
      %v436 = vrot.slane %v404, 7
      %v437 = vrot.slane %v405, 7
      %v438 = vrot.slane %v406, 7
      %v439 = vrot.slane %v407, 7
      %v440 = vrot.slane %v408, 7
      %v441 = vrot.slane %v409, 7
      %v442 = vrot.slane %v410, 7
      %v443 = vrot.slane %v411, 7
      %v444 = vrot.slane %v412, 7
      %v445 = vrot.slane %v413, 7
      %v446 = vrot.slane %v414, 7
      %v447 = vrot.slane %v415, 7
      %v448 = vrot.slane %v416, 7
      %v449 = vrot.slane %v417, 7
      %v450 = vrot.slane %v418, 7
      %v451 = vrot.slane %v419, 7
      %v452 = vrot.slane %v420, 7
      %v453 = vrot.slane %v421, 7
      %v454 = vrot.slane %v422, 7
      %v455 = vrot.slane %v423, 7
      %v456 = vlaneseq
      %v457 = vshrl.u32 %v456, 7
      %vm458 = vcmp.lt.s32.totalorder %v457, 1
      %v459 = vsel %vm458, %v454, %v455
      %v460 = vsel %vm458, %v453, %v454
      %v461 = vsel %vm458, %v452, %v453
      %v462 = vsel %vm458, %v451, %v452
      %v463 = vsel %vm458, %v450, %v451
      %v464 = vsel %vm458, %v449, %v450
      %v465 = vsel %vm458, %v448, %v449
      %v466 = vsel %vm458, %v447, %v448
      %v467 = vsel %vm458, %v446, %v447
      %v468 = vsel %vm458, %v445, %v446
      %v469 = vsel %vm458, %v444, %v445
      %v470 = vsel %vm458, %v443, %v444
      %v471 = vsel %vm458, %v442, %v443
      %v472 = vsel %vm458, %v441, %v442
      %v473 = vsel %vm458, %v440, %v441
      %v474 = vsel %vm458, %v439, %v440
      %v475 = vsel %vm458, %v438, %v439
      %v476 = vsel %vm458, %v437, %v438
      %v477 = vsel %vm458, %v436, %v437
      %v478 = vsel %vm458, %v435, %v436
      %v479 = vsel %vm458, %v434, %v435
      %v480 = vsel %vm458, %v433, %v434
      %v481 = vsel %vm458, %v432, %v433
      %v482 = vsel %vm458, %v431, %v432
      %v483 = vsel %vm458, %v430, %v431
      %v484 = vsel %vm458, %v429, %v430
      %v485 = vsel %vm458, %v428, %v429
      %v486 = vsel %vm458, %v427, %v428
      %v487 = vsel %vm458, %v426, %v427
      %v488 = vsel %vm458, %v425, %v426
      %v489 = vsel %vm458, %v424, %v425
      %v490 = vsel %vm458, %v455, %v424
      %v491 = vld [vmem:[%s5] sm:$0xff]
      %v492 = vld [vmem:[%s5 + $0x8] sm:$0xff]
      %v493 = vld [vmem:[%s5 + $0x10] sm:$0xff]
      %v494 = vld [vmem:[%s5 + $0x18] sm:$0xff]
      %v495 = vld [vmem:[%s5 + $0x20] sm:$0xff]
      %v496 = vld [vmem:[%s5 + $0x28] sm:$0xff]
      %v497 = vld [vmem:[%s5 + $0x30] sm:$0xff]
      %v498 = vld [vmem:[%s5 + $0x38] sm:$0xff]
      %v499 = vld [vmem:[%s5 + $0x40] sm:$0xff]
      %v500 = vld [vmem:[%s5 + $0x48] sm:$0xff]
      %v501 = vld [vmem:[%s5 + $0x50] sm:$0xff]
      %v502 = vld [vmem:[%s5 + $0x58] sm:$0xff]
      %v503 = vld [vmem:[%s5 + $0x60] sm:$0xff]
      %v504 = vld [vmem:[%s5 + $0x68] sm:$0xff]
      %v505 = vld [vmem:[%s5 + $0x70] sm:$0xff]
      %v506 = vld [vmem:[%s5 + $0x78] sm:$0xff]
      %v507 = vld [vmem:[%s5 + $0x80] sm:$0xff]
      %v508 = vld [vmem:[%s5 + $0x88] sm:$0xff]
      %v509 = vld [vmem:[%s5 + $0x90] sm:$0xff]
      %v510 = vld [vmem:[%s5 + $0x98] sm:$0xff]
      %v511 = vld [vmem:[%s5 + $0xa0] sm:$0xff]
      %v512 = vld [vmem:[%s5 + $0xa8] sm:$0xff]
      %v513 = vld [vmem:[%s5 + $0xb0] sm:$0xff]
      %v514 = vld [vmem:[%s5 + $0xb8] sm:$0xff]
      %v515 = vld [vmem:[%s5 + $0xc0] sm:$0xff]
      %v516 = vld [vmem:[%s5 + $0xc8] sm:$0xff]
      %v517 = vld [vmem:[%s5 + $0xd0] sm:$0xff]
      %v518 = vld [vmem:[%s5 + $0xd8] sm:$0xff]
      %v519 = vld [vmem:[%s5 + $0xe0] sm:$0xff]
      %v520 = vld [vmem:[%s5 + $0xe8] sm:$0xff]
      %v521 = vld [vmem:[%s5 + $0xf0] sm:$0xff]
      %v522 = vld [vmem:[%s5 + $0xf8] sm:$0xff]
      %524 = vset.pattern.permute.xlu0 0
      %525 = vperm.xlu0 %524, %v491
      %v526 = vpop.permute.xlu0 %525
      %529 = vset.pattern.permute.xlu0 0
      %530 = vperm.xlu0 %529, %v492
      %v531 = vpop.permute.xlu0 %530
      %534 = vset.pattern.permute.xlu0 0
      %535 = vperm.xlu0 %534, %v493
      %v536 = vpop.permute.xlu0 %535
      %539 = vset.pattern.permute.xlu0 0
      %540 = vperm.xlu0 %539, %v494
      %v541 = vpop.permute.xlu0 %540
      %544 = vset.pattern.permute.xlu0 0
      %545 = vperm.xlu0 %544, %v495
      %v546 = vpop.permute.xlu0 %545
      %549 = vset.pattern.permute.xlu0 0
      %550 = vperm.xlu0 %549, %v496
      %v551 = vpop.permute.xlu0 %550
      %554 = vset.pattern.permute.xlu0 0
      %555 = vperm.xlu0 %554, %v497
      %v556 = vpop.permute.xlu0 %555
      %559 = vset.pattern.permute.xlu0 0
      %560 = vperm.xlu0 %559, %v498
      %v561 = vpop.permute.xlu0 %560
      %564 = vset.pattern.permute.xlu0 0
      %565 = vperm.xlu0 %564, %v499
      %v566 = vpop.permute.xlu0 %565
      %569 = vset.pattern.permute.xlu0 0
      %570 = vperm.xlu0 %569, %v500
      %v571 = vpop.permute.xlu0 %570
      %574 = vset.pattern.permute.xlu0 0
      %575 = vperm.xlu0 %574, %v501
      %v576 = vpop.permute.xlu0 %575
      %579 = vset.pattern.permute.xlu0 0
      %580 = vperm.xlu0 %579, %v502
      %v581 = vpop.permute.xlu0 %580
      %584 = vset.pattern.permute.xlu0 0
      %585 = vperm.xlu0 %584, %v503
      %v586 = vpop.permute.xlu0 %585
      %589 = vset.pattern.permute.xlu0 0
      %590 = vperm.xlu0 %589, %v504
      %v591 = vpop.permute.xlu0 %590
      %594 = vset.pattern.permute.xlu0 0
      %595 = vperm.xlu0 %594, %v505
      %v596 = vpop.permute.xlu0 %595
      %599 = vset.pattern.permute.xlu0 0
      %600 = vperm.xlu0 %599, %v506
      %v601 = vpop.permute.xlu0 %600
      %604 = vset.pattern.permute.xlu0 0
      %605 = vperm.xlu0 %604, %v507
      %v606 = vpop.permute.xlu0 %605
      %609 = vset.pattern.permute.xlu0 0
      %610 = vperm.xlu0 %609, %v508
      %v611 = vpop.permute.xlu0 %610
      %614 = vset.pattern.permute.xlu0 0
      %615 = vperm.xlu0 %614, %v509
      %v616 = vpop.permute.xlu0 %615
      %619 = vset.pattern.permute.xlu0 0
      %620 = vperm.xlu0 %619, %v510
      %v621 = vpop.permute.xlu0 %620
      %624 = vset.pattern.permute.xlu0 0
      %625 = vperm.xlu0 %624, %v511
      %v626 = vpop.permute.xlu0 %625
      %629 = vset.pattern.permute.xlu0 0
      %630 = vperm.xlu0 %629, %v512
      %v631 = vpop.permute.xlu0 %630
      %634 = vset.pattern.permute.xlu0 0
      %635 = vperm.xlu0 %634, %v513
      %v636 = vpop.permute.xlu0 %635
      %639 = vset.pattern.permute.xlu0 0
      %640 = vperm.xlu0 %639, %v514
      %v641 = vpop.permute.xlu0 %640
      %644 = vset.pattern.permute.xlu0 0
      %645 = vperm.xlu0 %644, %v515
      %v646 = vpop.permute.xlu0 %645
      %649 = vset.pattern.permute.xlu0 0
      %650 = vperm.xlu0 %649, %v516
      %v651 = vpop.permute.xlu0 %650
      %654 = vset.pattern.permute.xlu0 0
      %655 = vperm.xlu0 %654, %v517
      %v656 = vpop.permute.xlu0 %655
      %659 = vset.pattern.permute.xlu0 0
      %660 = vperm.xlu0 %659, %v518
      %v661 = vpop.permute.xlu0 %660
      %664 = vset.pattern.permute.xlu0 0
      %665 = vperm.xlu0 %664, %v519
      %v666 = vpop.permute.xlu0 %665
      %669 = vset.pattern.permute.xlu0 0
      %670 = vperm.xlu0 %669, %v520
      %v671 = vpop.permute.xlu0 %670
      %674 = vset.pattern.permute.xlu0 0
      %675 = vperm.xlu0 %674, %v521
      %v676 = vpop.permute.xlu0 %675
      %679 = vset.pattern.permute.xlu0 0
      %680 = vperm.xlu0 %679, %v522
      %v681 = vpop.permute.xlu0 %680
      %v683 = vmul.f32 %v490, %v526
      %v684 = vmul.f32 %v489, %v531
      %v685 = vmul.f32 %v488, %v536
      %v686 = vmul.f32 %v487, %v541
      %v687 = vmul.f32 %v486, %v546
      %v688 = vmul.f32 %v485, %v551
      %v689 = vmul.f32 %v484, %v556
      %v690 = vmul.f32 %v483, %v561
      %v691 = vmul.f32 %v482, %v566
      %v692 = vmul.f32 %v481, %v571
      %v693 = vmul.f32 %v480, %v576
      %v694 = vmul.f32 %v479, %v581
      %v695 = vmul.f32 %v478, %v586
      %v696 = vmul.f32 %v477, %v591
      %v697 = vmul.f32 %v476, %v596
      %v698 = vmul.f32 %v475, %v601
      %v699 = vmul.f32 %v474, %v606
      %v700 = vmul.f32 %v473, %v611
      %v701 = vmul.f32 %v472, %v616
      %v702 = vmul.f32 %v471, %v621
      %v703 = vmul.f32 %v470, %v626
      %v704 = vmul.f32 %v469, %v631
      %v705 = vmul.f32 %v468, %v636
      %v706 = vmul.f32 %v467, %v641
      %v707 = vmul.f32 %v466, %v646
      %v708 = vmul.f32 %v465, %v651
      %v709 = vmul.f32 %v464, %v656
      %v710 = vmul.f32 %v463, %v661
      %v711 = vmul.f32 %v462, %v666
      %v712 = vmul.f32 %v461, %v671
      %v713 = vmul.f32 %v460, %v676
      %v714 = vmul.f32 %v459, %v681
      %v715 = vld [vmem:[#allocation3] sm:$0xff]
      %v716 = vld [vmem:[#allocation3 + $0x8] sm:$0xff]
      %v717 = vld [vmem:[#allocation3 + $0x10] sm:$0xff]
      %v718 = vld [vmem:[#allocation3 + $0x18] sm:$0xff]
      %v719 = vld [vmem:[#allocation3 + $0x20] sm:$0xff]
      %v720 = vld [vmem:[#allocation3 + $0x28] sm:$0xff]
      %v721 = vld [vmem:[#allocation3 + $0x30] sm:$0xff]
      %v722 = vld [vmem:[#allocation3 + $0x38] sm:$0xff]
      %v723 = vld [vmem:[#allocation3 + $0x40] sm:$0xff]
      %v724 = vld [vmem:[#allocation3 + $0x48] sm:$0xff]
      %v725 = vld [vmem:[#allocation3 + $0x50] sm:$0xff]
      %v726 = vld [vmem:[#allocation3 + $0x58] sm:$0xff]
      %v727 = vld [vmem:[#allocation3 + $0x60] sm:$0xff]
      %v728 = vld [vmem:[#allocation3 + $0x68] sm:$0xff]
      %v729 = vld [vmem:[#allocation3 + $0x70] sm:$0xff]
      %v730 = vld [vmem:[#allocation3 + $0x78] sm:$0xff]
      %v731 = vld [vmem:[#allocation3 + $0x80] sm:$0xff]
      %v732 = vld [vmem:[#allocation3 + $0x88] sm:$0xff]
      %v733 = vld [vmem:[#allocation3 + $0x90] sm:$0xff]
      %v734 = vld [vmem:[#allocation3 + $0x98] sm:$0xff]
      %v735 = vld [vmem:[#allocation3 + $0xa0] sm:$0xff]
      %v736 = vld [vmem:[#allocation3 + $0xa8] sm:$0xff]
      %v737 = vld [vmem:[#allocation3 + $0xb0] sm:$0xff]
      %v738 = vld [vmem:[#allocation3 + $0xb8] sm:$0xff]
      %v739 = vld [vmem:[#allocation3 + $0xc0] sm:$0xff]
      %v740 = vld [vmem:[#allocation3 + $0xc8] sm:$0xff]
      %v741 = vld [vmem:[#allocation3 + $0xd0] sm:$0xff]
      %v742 = vld [vmem:[#allocation3 + $0xd8] sm:$0xff]
      %v743 = vld [vmem:[#allocation3 + $0xe0] sm:$0xff]
      %v744 = vld [vmem:[#allocation3 + $0xe8] sm:$0xff]
      %v745 = vld [vmem:[#allocation3 + $0xf0] sm:$0xff]
      %v746 = vld [vmem:[#allocation3 + $0xf8] sm:$0xff]
      %v747 = vpack.c.bf16 %v684, %v683
      %v748 = vpack.c.bf16 %v686, %v685
      %v749 = vpack.c.bf16 %v688, %v687
      %v750 = vpack.c.bf16 %v690, %v689
      %v751 = vpack.c.bf16 %v692, %v691
      %v752 = vpack.c.bf16 %v694, %v693
      %v753 = vpack.c.bf16 %v696, %v695
      %v754 = vpack.c.bf16 %v698, %v697
      %v755 = vpack.c.bf16 %v700, %v699
      %v756 = vpack.c.bf16 %v702, %v701
      %v757 = vpack.c.bf16 %v704, %v703
      %v758 = vpack.c.bf16 %v706, %v705
      %v759 = vpack.c.bf16 %v708, %v707
      %v760 = vpack.c.bf16 %v710, %v709
      %v761 = vpack.c.bf16 %v712, %v711
      %v762 = vpack.c.bf16 %v714, %v713
      %v763 = vld [vmem:[%s1] sm:$0xf]
      %v764 = vld [vmem:[%s1 + $0x4] sm:$0xf]
      %v765 = vld [vmem:[%s1 + $0x8] sm:$0xf]
      %v766 = vld [vmem:[%s1 + $0xc] sm:$0xf]
      %v767 = vld [vmem:[%s1 + $0x10] sm:$0xf]
      %v768 = vld [vmem:[%s1 + $0x14] sm:$0xf]
      %v769 = vld [vmem:[%s1 + $0x18] sm:$0xf]
      %v770 = vld [vmem:[%s1 + $0x1c] sm:$0xf]
      %v771 = vld [vmem:[%s1 + $0x20] sm:$0xf]
      %v772 = vld [vmem:[%s1 + $0x24] sm:$0xf]
      %v773 = vld [vmem:[%s1 + $0x28] sm:$0xf]
      %v774 = vld [vmem:[%s1 + $0x2c] sm:$0xf]
      %v775 = vld [vmem:[%s1 + $0x30] sm:$0xf]
      %v776 = vld [vmem:[%s1 + $0x34] sm:$0xf]
      %v777 = vld [vmem:[%s1 + $0x38] sm:$0xf]
      %v778 = vld [vmem:[%s1 + $0x3c] sm:$0xf]
      %v795 = vunpack.c.l.b16 %v763
      %v796 = vunpack.c.l.b16 %v764
      %v797 = vunpack.c.l.b16 %v765
      %v798 = vunpack.c.l.b16 %v766
      %v799 = vunpack.c.l.b16 %v767
      %v800 = vunpack.c.l.b16 %v768
      %v801 = vunpack.c.l.b16 %v769
      %v802 = vunpack.c.l.b16 %v770
      %v803 = vunpack.c.l.b16 %v771
      %v804 = vunpack.c.l.b16 %v772
      %v805 = vunpack.c.l.b16 %v773
      %v806 = vunpack.c.l.b16 %v774
      %v807 = vunpack.c.l.b16 %v775
      %v808 = vunpack.c.l.b16 %v776
      %v809 = vunpack.c.l.b16 %v777
      %v810 = vunpack.c.l.b16 %v778
      %v811 = vpack.c.b16 %v796, %v795
      %v812 = vpack.c.b16 %v798, %v797
      %v813 = vpack.c.b16 %v800, %v799
      %v814 = vpack.c.b16 %v802, %v801
      %v815 = vpack.c.b16 %v804, %v803
      %v816 = vpack.c.b16 %v806, %v805
      %v817 = vpack.c.b16 %v808, %v807
      %v818 = vpack.c.b16 %v810, %v809
      %827 = vmatprep.subr.bf16.mxu0 0
      %828 = vmatpush1.bf16.msra.mxu0 %v818
      %829 = vmatprep.subr.bf16.mxu0 0
      %830 = vmatpush1.bf16.msra.mxu0 %v817
      %831 = vmatprep.subr.bf16.mxu0 0
      %832 = vmatpush1.bf16.msra.mxu0 %v816
      %833 = vmatprep.subr.bf16.mxu0 0
      %834 = vmatpush1.bf16.msra.mxu0 %v815
      %835 = vmatprep.subr.bf16.mxu0 0
      %836 = vmatpush1.bf16.msra.mxu0 %v814
      %837 = vmatprep.subr.bf16.mxu0 0
      %838 = vmatpush1.bf16.msra.mxu0 %v813
      %839 = vmatprep.subr.bf16.mxu0 0
      %840 = vmatpush1.bf16.msra.mxu0 %v812
      %841 = vmatprep.subr.bf16.mxu0 0
      %842 = vmatpush1.bf16.msra.mxu0 %v811
      %843 = vmatprep.subr.bf16.mxu0 0
      %844 = vmatpush2.bf16.msra.mxu0 0
      %845 = vmatprep.subr.bf16.mxu0 0
      %846 = vmatpush2.bf16.msra.mxu0 0
      %847 = vmatprep.subr.bf16.mxu0 0
      %848 = vmatpush2.bf16.msra.mxu0 0
      %849 = vmatprep.subr.bf16.mxu0 0
      %850 = vmatpush2.bf16.msra.mxu0 0
      %851 = vmatprep.subr.bf16.mxu0 0
      %852 = vmatpush2.bf16.msra.mxu0 0
      %853 = vmatprep.subr.bf16.mxu0 0
      %854 = vmatpush2.bf16.msra.mxu0 0
      %855 = vmatprep.subr.bf16.mxu0 0
      %856 = vmatpush2.bf16.msra.mxu0 0
      %857 = vmatprep.subr.bf16.mxu0 0
      %858 = vmatpush2.bf16.msra.mxu0 0
      %859 = vmatprep.mubr.bf16.mxu0 0
      %860 = vmatmul.mubr.bf16.gmra.mxu0 %v747
      %v861 = vpop.f32.mrf.mxu0
      %v862 = vadd.f32 0.0, %v861
      %v863 = vpop.f32.mrf.mxu0
      %v864 = vpop.f32.mrf.mxu0
      %v865 = vadd.f32 0.0, %v864
      %v866 = vpop.f32.mrf.mxu0
      %867 = vmatprep.mubr.bf16.mxu0 0
      %868 = vmatmul.mubr.bf16.gmra.mxu0 %v748
      %v869 = vpop.f32.mrf.mxu0
      %v870 = vadd.f32 0.0, %v869
      %v871 = vpop.f32.mrf.mxu0
      %v872 = vpop.f32.mrf.mxu0
      %v873 = vadd.f32 0.0, %v872
      %v874 = vpop.f32.mrf.mxu0
      %875 = vmatprep.mubr.bf16.mxu0 0
      %876 = vmatmul.mubr.bf16.gmra.mxu0 %v749
      %v877 = vpop.f32.mrf.mxu0
      %v878 = vadd.f32 0.0, %v877
      %v879 = vpop.f32.mrf.mxu0
      %v880 = vpop.f32.mrf.mxu0
      %v881 = vadd.f32 0.0, %v880
      %v882 = vpop.f32.mrf.mxu0
      %883 = vmatprep.mubr.bf16.mxu0 0
      %884 = vmatmul.mubr.bf16.gmra.mxu0 %v750
      %v885 = vpop.f32.mrf.mxu0
      %v886 = vadd.f32 0.0, %v885
      %v887 = vpop.f32.mrf.mxu0
      %v888 = vpop.f32.mrf.mxu0
      %v889 = vadd.f32 0.0, %v888
      %v890 = vpop.f32.mrf.mxu0
      %891 = vmatprep.mubr.bf16.mxu0 0
      %892 = vmatmul.mubr.bf16.gmra.mxu0 %v751
      %v893 = vpop.f32.mrf.mxu0
      %v894 = vadd.f32 0.0, %v893
      %v895 = vpop.f32.mrf.mxu0
      %v896 = vpop.f32.mrf.mxu0
      %v897 = vadd.f32 0.0, %v896
      %v898 = vpop.f32.mrf.mxu0
      %899 = vmatprep.mubr.bf16.mxu0 0
      %900 = vmatmul.mubr.bf16.gmra.mxu0 %v752
      %v901 = vpop.f32.mrf.mxu0
      %v902 = vadd.f32 0.0, %v901
      %v903 = vpop.f32.mrf.mxu0
      %v904 = vpop.f32.mrf.mxu0
      %v905 = vadd.f32 0.0, %v904
      %v906 = vpop.f32.mrf.mxu0
      %907 = vmatprep.mubr.bf16.mxu0 0
      %908 = vmatmul.mubr.bf16.gmra.mxu0 %v753
      %v909 = vpop.f32.mrf.mxu0
      %v910 = vadd.f32 0.0, %v909
      %v911 = vpop.f32.mrf.mxu0
      %v912 = vpop.f32.mrf.mxu0
      %v913 = vadd.f32 0.0, %v912
      %v914 = vpop.f32.mrf.mxu0
      %915 = vmatprep.mubr.bf16.mxu0 0
      %916 = vmatmul.mubr.bf16.gmra.mxu0 %v754
      %v917 = vpop.f32.mrf.mxu0
      %v918 = vadd.f32 0.0, %v917
      %v919 = vpop.f32.mrf.mxu0
      %v920 = vpop.f32.mrf.mxu0
      %v921 = vadd.f32 0.0, %v920
      %v922 = vpop.f32.mrf.mxu0
      %923 = vmatprep.mubr.bf16.mxu0 0
      %924 = vmatmul.mubr.bf16.gmra.mxu0 %v755
      %v925 = vpop.f32.mrf.mxu0
      %v926 = vadd.f32 0.0, %v925
      %v927 = vpop.f32.mrf.mxu0
      %v928 = vpop.f32.mrf.mxu0
      %v929 = vadd.f32 0.0, %v928
      %v930 = vpop.f32.mrf.mxu0
      %931 = vmatprep.mubr.bf16.mxu0 0
      %932 = vmatmul.mubr.bf16.gmra.mxu0 %v756
      %v933 = vpop.f32.mrf.mxu0
      %v934 = vadd.f32 0.0, %v933
      %v935 = vpop.f32.mrf.mxu0
      %v936 = vpop.f32.mrf.mxu0
      %v937 = vadd.f32 0.0, %v936
      %v938 = vpop.f32.mrf.mxu0
      %939 = vmatprep.mubr.bf16.mxu0 0
      %940 = vmatmul.mubr.bf16.gmra.mxu0 %v757
      %v941 = vpop.f32.mrf.mxu0
      %v942 = vadd.f32 0.0, %v941
      %v943 = vpop.f32.mrf.mxu0
      %v944 = vpop.f32.mrf.mxu0
      %v945 = vadd.f32 0.0, %v944
      %v946 = vpop.f32.mrf.mxu0
      %947 = vmatprep.mubr.bf16.mxu0 0
      %948 = vmatmul.mubr.bf16.gmra.mxu0 %v758
      %v949 = vpop.f32.mrf.mxu0
      %v950 = vadd.f32 0.0, %v949
      %v951 = vpop.f32.mrf.mxu0
      %v952 = vpop.f32.mrf.mxu0
      %v953 = vadd.f32 0.0, %v952
      %v954 = vpop.f32.mrf.mxu0
      %955 = vmatprep.mubr.bf16.mxu0 0
      %956 = vmatmul.mubr.bf16.gmra.mxu0 %v759
      %v957 = vpop.f32.mrf.mxu0
      %v958 = vadd.f32 0.0, %v957
      %v959 = vpop.f32.mrf.mxu0
      %v960 = vpop.f32.mrf.mxu0
      %v961 = vadd.f32 0.0, %v960
      %v962 = vpop.f32.mrf.mxu0
      %963 = vmatprep.mubr.bf16.mxu0 0
      %964 = vmatmul.mubr.bf16.gmra.mxu0 %v760
      %v965 = vpop.f32.mrf.mxu0
      %v966 = vadd.f32 0.0, %v965
      %v967 = vpop.f32.mrf.mxu0
      %v968 = vpop.f32.mrf.mxu0
      %v969 = vadd.f32 0.0, %v968
      %v970 = vpop.f32.mrf.mxu0
      %971 = vmatprep.mubr.bf16.mxu0 0
      %972 = vmatmul.mubr.bf16.gmra.mxu0 %v761
      %v973 = vpop.f32.mrf.mxu0
      %v974 = vadd.f32 0.0, %v973
      %v975 = vpop.f32.mrf.mxu0
      %v976 = vpop.f32.mrf.mxu0
      %v977 = vadd.f32 0.0, %v976
      %v978 = vpop.f32.mrf.mxu0
      %979 = vmatprep.mubr.bf16.mxu0 0
      %980 = vmatmul.mubr.bf16.gmra.mxu0 %v762
      %v981 = vpop.f32.mrf.mxu0
      %v982 = vadd.f32 0.0, %v981
      %v983 = vpop.f32.mrf.mxu0
      %v984 = vpop.f32.mrf.mxu0
      %v985 = vadd.f32 0.0, %v984
      %v986 = vpop.f32.mrf.mxu0
      %987 = vdwg.mxu0
      %v988 = vadd.f32 %v715, %v862
      %v989 = vadd.f32 %v716, %v865
      %v990 = vadd.f32 %v717, %v870
      %v991 = vadd.f32 %v718, %v873
      %v992 = vadd.f32 %v719, %v878
      %v993 = vadd.f32 %v720, %v881
      %v994 = vadd.f32 %v721, %v886
      %v995 = vadd.f32 %v722, %v889
      %v996 = vadd.f32 %v723, %v894
      %v997 = vadd.f32 %v724, %v897
      %v998 = vadd.f32 %v725, %v902
      %v999 = vadd.f32 %v726, %v905
      %v1000 = vadd.f32 %v727, %v910
      %v1001 = vadd.f32 %v728, %v913
      %v1002 = vadd.f32 %v729, %v918
      %v1003 = vadd.f32 %v730, %v921
      %v1004 = vadd.f32 %v731, %v926
      %v1005 = vadd.f32 %v732, %v929
      %v1006 = vadd.f32 %v733, %v934
      %v1007 = vadd.f32 %v734, %v937
      %v1008 = vadd.f32 %v735, %v942
      %v1009 = vadd.f32 %v736, %v945
      %v1010 = vadd.f32 %v737, %v950
      %v1011 = vadd.f32 %v738, %v953
      %v1012 = vadd.f32 %v739, %v958
      %v1013 = vadd.f32 %v740, %v961
      %v1014 = vadd.f32 %v741, %v966
      %v1015 = vadd.f32 %v742, %v969
      %v1016 = vadd.f32 %v743, %v974
      %v1017 = vadd.f32 %v744, %v977
      %v1018 = vadd.f32 %v745, %v982
      %v1019 = vadd.f32 %v746, %v985
      %1020 = vst [vmem:[#allocation3] sm:$0xff] %v988
      %1021 = vst [vmem:[#allocation3 + $0x8] sm:$0xff] %v989
      %1022 = vst [vmem:[#allocation3 + $0x10] sm:$0xff] %v990
      %1023 = vst [vmem:[#allocation3 + $0x18] sm:$0xff] %v991
      %1024 = vst [vmem:[#allocation3 + $0x20] sm:$0xff] %v992
      %1025 = vst [vmem:[#allocation3 + $0x28] sm:$0xff] %v993
      %1026 = vst [vmem:[#allocation3 + $0x30] sm:$0xff] %v994
      %1027 = vst [vmem:[#allocation3 + $0x38] sm:$0xff] %v995
      %1028 = vst [vmem:[#allocation3 + $0x40] sm:$0xff] %v996
      %1029 = vst [vmem:[#allocation3 + $0x48] sm:$0xff] %v997
      %1030 = vst [vmem:[#allocation3 + $0x50] sm:$0xff] %v998
      %1031 = vst [vmem:[#allocation3 + $0x58] sm:$0xff] %v999
      %1032 = vst [vmem:[#allocation3 + $0x60] sm:$0xff] %v1000
      %1033 = vst [vmem:[#allocation3 + $0x68] sm:$0xff] %v1001
      %1034 = vst [vmem:[#allocation3 + $0x70] sm:$0xff] %v1002
      %1035 = vst [vmem:[#allocation3 + $0x78] sm:$0xff] %v1003
      %1036 = vst [vmem:[#allocation3 + $0x80] sm:$0xff] %v1004
      %1037 = vst [vmem:[#allocation3 + $0x88] sm:$0xff] %v1005
      %1038 = vst [vmem:[#allocation3 + $0x90] sm:$0xff] %v1006
      %1039 = vst [vmem:[#allocation3 + $0x98] sm:$0xff] %v1007
      %1040 = vst [vmem:[#allocation3 + $0xa0] sm:$0xff] %v1008
      %1041 = vst [vmem:[#allocation3 + $0xa8] sm:$0xff] %v1009
      %1042 = vst [vmem:[#allocation3 + $0xb0] sm:$0xff] %v1010
      %1043 = vst [vmem:[#allocation3 + $0xb8] sm:$0xff] %v1011
      %1044 = vst [vmem:[#allocation3 + $0xc0] sm:$0xff] %v1012
      %1045 = vst [vmem:[#allocation3 + $0xc8] sm:$0xff] %v1013
      %1046 = vst [vmem:[#allocation3 + $0xd0] sm:$0xff] %v1014
      %1047 = vst [vmem:[#allocation3 + $0xd8] sm:$0xff] %v1015
      %1048 = vst [vmem:[#allocation3 + $0xe0] sm:$0xff] %v1016
      %1049 = vst [vmem:[#allocation3 + $0xe8] sm:$0xff] %v1017
      %1050 = vst [vmem:[#allocation3 + $0xf0] sm:$0xff] %v1018
      %1051 = vst [vmem:[#allocation3 + $0xf8] sm:$0xff] %v1019
      %v1052 = vld [vmem:[#allocation3] sm:$0xff]
      %v1053 = vld [vmem:[#allocation3 + $0x8] sm:$0xff]
      %v1054 = vld [vmem:[#allocation3 + $0x10] sm:$0xff]
      %v1055 = vld [vmem:[#allocation3 + $0x18] sm:$0xff]
      %v1056 = vld [vmem:[#allocation3 + $0x20] sm:$0xff]
      %v1057 = vld [vmem:[#allocation3 + $0x28] sm:$0xff]
      %v1058 = vld [vmem:[#allocation3 + $0x30] sm:$0xff]
      %v1059 = vld [vmem:[#allocation3 + $0x38] sm:$0xff]
      %v1060 = vld [vmem:[#allocation3 + $0x40] sm:$0xff]
      %v1061 = vld [vmem:[#allocation3 + $0x48] sm:$0xff]
      %v1062 = vld [vmem:[#allocation3 + $0x50] sm:$0xff]
      %v1063 = vld [vmem:[#allocation3 + $0x58] sm:$0xff]
      %v1064 = vld [vmem:[#allocation3 + $0x60] sm:$0xff]
      %v1065 = vld [vmem:[#allocation3 + $0x68] sm:$0xff]
      %v1066 = vld [vmem:[#allocation3 + $0x70] sm:$0xff]
      %v1067 = vld [vmem:[#allocation3 + $0x78] sm:$0xff]
      %v1068 = vld [vmem:[#allocation3 + $0x80] sm:$0xff]
      %v1069 = vld [vmem:[#allocation3 + $0x88] sm:$0xff]
      %v1070 = vld [vmem:[#allocation3 + $0x90] sm:$0xff]
      %v1071 = vld [vmem:[#allocation3 + $0x98] sm:$0xff]
      %v1072 = vld [vmem:[#allocation3 + $0xa0] sm:$0xff]
      %v1073 = vld [vmem:[#allocation3 + $0xa8] sm:$0xff]
      %v1074 = vld [vmem:[#allocation3 + $0xb0] sm:$0xff]
      %v1075 = vld [vmem:[#allocation3 + $0xb8] sm:$0xff]
      %v1076 = vld [vmem:[#allocation3 + $0xc0] sm:$0xff]
      %v1077 = vld [vmem:[#allocation3 + $0xc8] sm:$0xff]
      %v1078 = vld [vmem:[#allocation3 + $0xd0] sm:$0xff]
      %v1079 = vld [vmem:[#allocation3 + $0xd8] sm:$0xff]
      %v1080 = vld [vmem:[#allocation3 + $0xe0] sm:$0xff]
      %v1081 = vld [vmem:[#allocation3 + $0xe8] sm:$0xff]
      %v1082 = vld [vmem:[#allocation3 + $0xf0] sm:$0xff]
      %v1083 = vld [vmem:[#allocation3 + $0xf8] sm:$0xff]
      %v1084 = vpack.c.bf16 %v393, %v392
      %v1085 = vpack.c.bf16 %v395, %v394
      %v1086 = vpack.c.bf16 %v397, %v396
      %v1087 = vpack.c.bf16 %v399, %v398
      %v1088 = vpack.c.bf16 %v401, %v400
      %v1089 = vpack.c.bf16 %v403, %v402
      %v1090 = vpack.c.bf16 %v405, %v404
      %v1091 = vpack.c.bf16 %v407, %v406
      %v1092 = vpack.c.bf16 %v409, %v408
      %v1093 = vpack.c.bf16 %v411, %v410
      %v1094 = vpack.c.bf16 %v413, %v412
      %v1095 = vpack.c.bf16 %v415, %v414
      %v1096 = vpack.c.bf16 %v417, %v416
      %v1097 = vpack.c.bf16 %v419, %v418
      %v1098 = vpack.c.bf16 %v421, %v420
      %v1099 = vpack.c.bf16 %v423, %v422
      %s1100 = scalar_lea.vmem %s1, 64
      %v1101 = vld [vmem:[%s1100] sm:$0xf]
      %v1102 = vld [vmem:[%s1100 + $0x4] sm:$0xf]
      %v1103 = vld [vmem:[%s1100 + $0x8] sm:$0xf]
      %v1104 = vld [vmem:[%s1100 + $0xc] sm:$0xf]
      %v1105 = vld [vmem:[%s1100 + $0x10] sm:$0xf]
      %v1106 = vld [vmem:[%s1100 + $0x14] sm:$0xf]
      %v1107 = vld [vmem:[%s1100 + $0x18] sm:$0xf]
      %v1108 = vld [vmem:[%s1100 + $0x1c] sm:$0xf]
      %v1109 = vld [vmem:[%s1100 + $0x20] sm:$0xf]
      %v1110 = vld [vmem:[%s1100 + $0x24] sm:$0xf]
      %v1111 = vld [vmem:[%s1100 + $0x28] sm:$0xf]
      %v1112 = vld [vmem:[%s1100 + $0x2c] sm:$0xf]
      %v1113 = vld [vmem:[%s1100 + $0x30] sm:$0xf]
      %v1114 = vld [vmem:[%s1100 + $0x34] sm:$0xf]
      %v1115 = vld [vmem:[%s1100 + $0x38] sm:$0xf]
      %v1116 = vld [vmem:[%s1100 + $0x3c] sm:$0xf]
      %v1133 = vunpack.c.l.b16 %v1101
      %v1134 = vunpack.c.l.b16 %v1102
      %v1135 = vunpack.c.l.b16 %v1103
      %v1136 = vunpack.c.l.b16 %v1104
      %v1137 = vunpack.c.l.b16 %v1105
      %v1138 = vunpack.c.l.b16 %v1106
      %v1139 = vunpack.c.l.b16 %v1107
      %v1140 = vunpack.c.l.b16 %v1108
      %v1141 = vunpack.c.l.b16 %v1109
      %v1142 = vunpack.c.l.b16 %v1110
      %v1143 = vunpack.c.l.b16 %v1111
      %v1144 = vunpack.c.l.b16 %v1112
      %v1145 = vunpack.c.l.b16 %v1113
      %v1146 = vunpack.c.l.b16 %v1114
      %v1147 = vunpack.c.l.b16 %v1115
      %v1148 = vunpack.c.l.b16 %v1116
      %v1149 = vpack.c.b16 %v1134, %v1133
      %v1150 = vpack.c.b16 %v1136, %v1135
      %v1151 = vpack.c.b16 %v1138, %v1137
      %v1152 = vpack.c.b16 %v1140, %v1139
      %v1153 = vpack.c.b16 %v1142, %v1141
      %v1154 = vpack.c.b16 %v1144, %v1143
      %v1155 = vpack.c.b16 %v1146, %v1145
      %v1156 = vpack.c.b16 %v1148, %v1147
      %1165 = vmatprep.subr.bf16.mxu0 0
      %1166 = vmatpush1.bf16.msra.mxu0 %v1156
      %1167 = vmatprep.subr.bf16.mxu0 0
      %1168 = vmatpush1.bf16.msra.mxu0 %v1155
      %1169 = vmatprep.subr.bf16.mxu0 0
      %1170 = vmatpush1.bf16.msra.mxu0 %v1154
      %1171 = vmatprep.subr.bf16.mxu0 0
      %1172 = vmatpush1.bf16.msra.mxu0 %v1153
      %1173 = vmatprep.subr.bf16.mxu0 0
      %1174 = vmatpush1.bf16.msra.mxu0 %v1152
      %1175 = vmatprep.subr.bf16.mxu0 0
      %1176 = vmatpush1.bf16.msra.mxu0 %v1151
      %1177 = vmatprep.subr.bf16.mxu0 0
      %1178 = vmatpush1.bf16.msra.mxu0 %v1150
      %1179 = vmatprep.subr.bf16.mxu0 0
      %1180 = vmatpush1.bf16.msra.mxu0 %v1149
      %1181 = vmatprep.subr.bf16.mxu0 0
      %1182 = vmatpush2.bf16.msra.mxu0 0
      %1183 = vmatprep.subr.bf16.mxu0 0
      %1184 = vmatpush2.bf16.msra.mxu0 0
      %1185 = vmatprep.subr.bf16.mxu0 0
      %1186 = vmatpush2.bf16.msra.mxu0 0
      %1187 = vmatprep.subr.bf16.mxu0 0
      %1188 = vmatpush2.bf16.msra.mxu0 0
      %1189 = vmatprep.subr.bf16.mxu0 0
      %1190 = vmatpush2.bf16.msra.mxu0 0
      %1191 = vmatprep.subr.bf16.mxu0 0
      %1192 = vmatpush2.bf16.msra.mxu0 0
      %1193 = vmatprep.subr.bf16.mxu0 0
      %1194 = vmatpush2.bf16.msra.mxu0 0
      %1195 = vmatprep.subr.bf16.mxu0 0
      %1196 = vmatpush2.bf16.msra.mxu0 0
      %1197 = vmatprep.mubr.bf16.mxu0 0
      %1198 = vmatmul.mubr.bf16.gmra.mxu0 %v1084
      %v1199 = vpop.f32.mrf.mxu0
      %v1200 = vadd.f32 0.0, %v1199
      %v1201 = vpop.f32.mrf.mxu0
      %v1202 = vpop.f32.mrf.mxu0
      %v1203 = vadd.f32 0.0, %v1202
      %v1204 = vpop.f32.mrf.mxu0
      %1205 = vmatprep.mubr.bf16.mxu0 0
      %1206 = vmatmul.mubr.bf16.gmra.mxu0 %v1085
      %v1207 = vpop.f32.mrf.mxu0
      %v1208 = vadd.f32 0.0, %v1207
      %v1209 = vpop.f32.mrf.mxu0
      %v1210 = vpop.f32.mrf.mxu0
      %v1211 = vadd.f32 0.0, %v1210
      %v1212 = vpop.f32.mrf.mxu0
      %1213 = vmatprep.mubr.bf16.mxu0 0
      %1214 = vmatmul.mubr.bf16.gmra.mxu0 %v1086
      %v1215 = vpop.f32.mrf.mxu0
      %v1216 = vadd.f32 0.0, %v1215
      %v1217 = vpop.f32.mrf.mxu0
      %v1218 = vpop.f32.mrf.mxu0
      %v1219 = vadd.f32 0.0, %v1218
      %v1220 = vpop.f32.mrf.mxu0
      %1221 = vmatprep.mubr.bf16.mxu0 0
      %1222 = vmatmul.mubr.bf16.gmra.mxu0 %v1087
      %v1223 = vpop.f32.mrf.mxu0
      %v1224 = vadd.f32 0.0, %v1223
      %v1225 = vpop.f32.mrf.mxu0
      %v1226 = vpop.f32.mrf.mxu0
      %v1227 = vadd.f32 0.0, %v1226
      %v1228 = vpop.f32.mrf.mxu0
      %1229 = vmatprep.mubr.bf16.mxu0 0
      %1230 = vmatmul.mubr.bf16.gmra.mxu0 %v1088
      %v1231 = vpop.f32.mrf.mxu0
      %v1232 = vadd.f32 0.0, %v1231
      %v1233 = vpop.f32.mrf.mxu0
      %v1234 = vpop.f32.mrf.mxu0
      %v1235 = vadd.f32 0.0, %v1234
      %v1236 = vpop.f32.mrf.mxu0
      %1237 = vmatprep.mubr.bf16.mxu0 0
      %1238 = vmatmul.mubr.bf16.gmra.mxu0 %v1089
      %v1239 = vpop.f32.mrf.mxu0
      %v1240 = vadd.f32 0.0, %v1239
      %v1241 = vpop.f32.mrf.mxu0
      %v1242 = vpop.f32.mrf.mxu0
      %v1243 = vadd.f32 0.0, %v1242
      %v1244 = vpop.f32.mrf.mxu0
      %1245 = vmatprep.mubr.bf16.mxu0 0
      %1246 = vmatmul.mubr.bf16.gmra.mxu0 %v1090
      %v1247 = vpop.f32.mrf.mxu0
      %v1248 = vadd.f32 0.0, %v1247
      %v1249 = vpop.f32.mrf.mxu0
      %v1250 = vpop.f32.mrf.mxu0
      %v1251 = vadd.f32 0.0, %v1250
      %v1252 = vpop.f32.mrf.mxu0
      %1253 = vmatprep.mubr.bf16.mxu0 0
      %1254 = vmatmul.mubr.bf16.gmra.mxu0 %v1091
      %v1255 = vpop.f32.mrf.mxu0
      %v1256 = vadd.f32 0.0, %v1255
      %v1257 = vpop.f32.mrf.mxu0
      %v1258 = vpop.f32.mrf.mxu0
      %v1259 = vadd.f32 0.0, %v1258
      %v1260 = vpop.f32.mrf.mxu0
      %1261 = vmatprep.mubr.bf16.mxu0 0
      %1262 = vmatmul.mubr.bf16.gmra.mxu0 %v1092
      %v1263 = vpop.f32.mrf.mxu0
      %v1264 = vadd.f32 0.0, %v1263
      %v1265 = vpop.f32.mrf.mxu0
      %v1266 = vpop.f32.mrf.mxu0
      %v1267 = vadd.f32 0.0, %v1266
      %v1268 = vpop.f32.mrf.mxu0
      %1269 = vmatprep.mubr.bf16.mxu0 0
      %1270 = vmatmul.mubr.bf16.gmra.mxu0 %v1093
      %v1271 = vpop.f32.mrf.mxu0
      %v1272 = vadd.f32 0.0, %v1271
      %v1273 = vpop.f32.mrf.mxu0
      %v1274 = vpop.f32.mrf.mxu0
      %v1275 = vadd.f32 0.0, %v1274
      %v1276 = vpop.f32.mrf.mxu0
      %1277 = vmatprep.mubr.bf16.mxu0 0
      %1278 = vmatmul.mubr.bf16.gmra.mxu0 %v1094
      %v1279 = vpop.f32.mrf.mxu0
      %v1280 = vadd.f32 0.0, %v1279
      %v1281 = vpop.f32.mrf.mxu0
      %v1282 = vpop.f32.mrf.mxu0
      %v1283 = vadd.f32 0.0, %v1282
      %v1284 = vpop.f32.mrf.mxu0
      %1285 = vmatprep.mubr.bf16.mxu0 0
      %1286 = vmatmul.mubr.bf16.gmra.mxu0 %v1095
      %v1287 = vpop.f32.mrf.mxu0
      %v1288 = vadd.f32 0.0, %v1287
      %v1289 = vpop.f32.mrf.mxu0
      %v1290 = vpop.f32.mrf.mxu0
      %v1291 = vadd.f32 0.0, %v1290
      %v1292 = vpop.f32.mrf.mxu0
      %1293 = vmatprep.mubr.bf16.mxu0 0
      %1294 = vmatmul.mubr.bf16.gmra.mxu0 %v1096
      %v1295 = vpop.f32.mrf.mxu0
      %v1296 = vadd.f32 0.0, %v1295
      %v1297 = vpop.f32.mrf.mxu0
      %v1298 = vpop.f32.mrf.mxu0
      %v1299 = vadd.f32 0.0, %v1298
      %v1300 = vpop.f32.mrf.mxu0
      %1301 = vmatprep.mubr.bf16.mxu0 0
      %1302 = vmatmul.mubr.bf16.gmra.mxu0 %v1097
      %v1303 = vpop.f32.mrf.mxu0
      %v1304 = vadd.f32 0.0, %v1303
      %v1305 = vpop.f32.mrf.mxu0
      %v1306 = vpop.f32.mrf.mxu0
      %v1307 = vadd.f32 0.0, %v1306
      %v1308 = vpop.f32.mrf.mxu0
      %1309 = vmatprep.mubr.bf16.mxu0 0
      %1310 = vmatmul.mubr.bf16.gmra.mxu0 %v1098
      %v1311 = vpop.f32.mrf.mxu0
      %v1312 = vadd.f32 0.0, %v1311
      %v1313 = vpop.f32.mrf.mxu0
      %v1314 = vpop.f32.mrf.mxu0
      %v1315 = vadd.f32 0.0, %v1314
      %v1316 = vpop.f32.mrf.mxu0
      %1317 = vmatprep.mubr.bf16.mxu0 0
      %1318 = vmatmul.mubr.bf16.gmra.mxu0 %v1099
      %v1319 = vpop.f32.mrf.mxu0
      %v1320 = vadd.f32 0.0, %v1319
      %v1321 = vpop.f32.mrf.mxu0
      %v1322 = vpop.f32.mrf.mxu0
      %v1323 = vadd.f32 0.0, %v1322
      %v1324 = vpop.f32.mrf.mxu0
      %1325 = vdwg.mxu0
      %v1326 = vadd.f32 %v1052, %v1200
      %v1327 = vadd.f32 %v1053, %v1203
      %v1328 = vadd.f32 %v1054, %v1208
      %v1329 = vadd.f32 %v1055, %v1211
      %v1330 = vadd.f32 %v1056, %v1216
      %v1331 = vadd.f32 %v1057, %v1219
      %v1332 = vadd.f32 %v1058, %v1224
      %v1333 = vadd.f32 %v1059, %v1227
      %v1334 = vadd.f32 %v1060, %v1232
      %v1335 = vadd.f32 %v1061, %v1235
      %v1336 = vadd.f32 %v1062, %v1240
      %v1337 = vadd.f32 %v1063, %v1243
      %v1338 = vadd.f32 %v1064, %v1248
      %v1339 = vadd.f32 %v1065, %v1251
      %v1340 = vadd.f32 %v1066, %v1256
      %v1341 = vadd.f32 %v1067, %v1259
      %v1342 = vadd.f32 %v1068, %v1264
      %v1343 = vadd.f32 %v1069, %v1267
      %v1344 = vadd.f32 %v1070, %v1272
      %v1345 = vadd.f32 %v1071, %v1275
      %v1346 = vadd.f32 %v1072, %v1280
      %v1347 = vadd.f32 %v1073, %v1283
      %v1348 = vadd.f32 %v1074, %v1288
      %v1349 = vadd.f32 %v1075, %v1291
      %v1350 = vadd.f32 %v1076, %v1296
      %v1351 = vadd.f32 %v1077, %v1299
      %v1352 = vadd.f32 %v1078, %v1304
      %v1353 = vadd.f32 %v1079, %v1307
      %v1354 = vadd.f32 %v1080, %v1312
      %v1355 = vadd.f32 %v1081, %v1315
      %v1356 = vadd.f32 %v1082, %v1320
      %v1357 = vadd.f32 %v1083, %v1323
      %1358 = vst [vmem:[#allocation3] sm:$0xff] %v1326
      %1359 = vst [vmem:[#allocation3 + $0x8] sm:$0xff] %v1327
      %1360 = vst [vmem:[#allocation3 + $0x10] sm:$0xff] %v1328
      %1361 = vst [vmem:[#allocation3 + $0x18] sm:$0xff] %v1329
      %1362 = vst [vmem:[#allocation3 + $0x20] sm:$0xff] %v1330
      %1363 = vst [vmem:[#allocation3 + $0x28] sm:$0xff] %v1331
      %1364 = vst [vmem:[#allocation3 + $0x30] sm:$0xff] %v1332
      %1365 = vst [vmem:[#allocation3 + $0x38] sm:$0xff] %v1333
      %1366 = vst [vmem:[#allocation3 + $0x40] sm:$0xff] %v1334
      %1367 = vst [vmem:[#allocation3 + $0x48] sm:$0xff] %v1335
      %1368 = vst [vmem:[#allocation3 + $0x50] sm:$0xff] %v1336
      %1369 = vst [vmem:[#allocation3 + $0x58] sm:$0xff] %v1337
      %1370 = vst [vmem:[#allocation3 + $0x60] sm:$0xff] %v1338
      %1371 = vst [vmem:[#allocation3 + $0x68] sm:$0xff] %v1339
      %1372 = vst [vmem:[#allocation3 + $0x70] sm:$0xff] %v1340
      %1373 = vst [vmem:[#allocation3 + $0x78] sm:$0xff] %v1341
      %1374 = vst [vmem:[#allocation3 + $0x80] sm:$0xff] %v1342
      %1375 = vst [vmem:[#allocation3 + $0x88] sm:$0xff] %v1343
      %1376 = vst [vmem:[#allocation3 + $0x90] sm:$0xff] %v1344
      %1377 = vst [vmem:[#allocation3 + $0x98] sm:$0xff] %v1345
      %1378 = vst [vmem:[#allocation3 + $0xa0] sm:$0xff] %v1346
      %1379 = vst [vmem:[#allocation3 + $0xa8] sm:$0xff] %v1347
      %1380 = vst [vmem:[#allocation3 + $0xb0] sm:$0xff] %v1348
      %1381 = vst [vmem:[#allocation3 + $0xb8] sm:$0xff] %v1349
      %1382 = vst [vmem:[#allocation3 + $0xc0] sm:$0xff] %v1350
      %1383 = vst [vmem:[#allocation3 + $0xc8] sm:$0xff] %v1351
      %1384 = vst [vmem:[#allocation3 + $0xd0] sm:$0xff] %v1352
      %1385 = vst [vmem:[#allocation3 + $0xd8] sm:$0xff] %v1353
      %1386 = vst [vmem:[#allocation3 + $0xe0] sm:$0xff] %v1354
      %1387 = vst [vmem:[#allocation3 + $0xe8] sm:$0xff] %v1355
      %1388 = vst [vmem:[#allocation3 + $0xf0] sm:$0xff] %v1356
      %1389 = vst [vmem:[#allocation3 + $0xf8] sm:$0xff] %v1357
      %v1390 = vrot.slane %v392, 1
      %v1391 = vrot.slane %v393, 1
      %v1392 = vrot.slane %v394, 1
      %v1393 = vrot.slane %v395, 1
      %v1394 = vrot.slane %v396, 1
      %v1395 = vrot.slane %v397, 1
      %v1396 = vrot.slane %v398, 1
      %v1397 = vrot.slane %v399, 1
      %v1398 = vrot.slane %v400, 1
      %v1399 = vrot.slane %v401, 1
      %v1400 = vrot.slane %v402, 1
      %v1401 = vrot.slane %v403, 1
      %v1402 = vrot.slane %v404, 1
      %v1403 = vrot.slane %v405, 1
      %v1404 = vrot.slane %v406, 1
      %v1405 = vrot.slane %v407, 1
      %v1406 = vrot.slane %v408, 1
      %v1407 = vrot.slane %v409, 1
      %v1408 = vrot.slane %v410, 1
      %v1409 = vrot.slane %v411, 1
      %v1410 = vrot.slane %v412, 1
      %v1411 = vrot.slane %v413, 1
      %v1412 = vrot.slane %v414, 1
      %v1413 = vrot.slane %v415, 1
      %v1414 = vrot.slane %v416, 1
      %v1415 = vrot.slane %v417, 1
      %v1416 = vrot.slane %v418, 1
      %v1417 = vrot.slane %v419, 1
      %v1418 = vrot.slane %v420, 1
      %v1419 = vrot.slane %v421, 1
      %v1420 = vrot.slane %v422, 1
      %v1421 = vrot.slane %v423, 1
      %vm1422 = vcmp.lt.s32.totalorder %v457, 7
      %v1423 = vsel %vm1422, %v1420, %v1421
      %v1424 = vsel %vm1422, %v1419, %v1420
      %v1425 = vsel %vm1422, %v1418, %v1419
      %v1426 = vsel %vm1422, %v1417, %v1418
      %v1427 = vsel %vm1422, %v1416, %v1417
      %v1428 = vsel %vm1422, %v1415, %v1416
      %v1429 = vsel %vm1422, %v1414, %v1415
      %v1430 = vsel %vm1422, %v1413, %v1414
      %v1431 = vsel %vm1422, %v1412, %v1413
      %v1432 = vsel %vm1422, %v1411, %v1412
      %v1433 = vsel %vm1422, %v1410, %v1411
      %v1434 = vsel %vm1422, %v1409, %v1410
      %v1435 = vsel %vm1422, %v1408, %v1409
      %v1436 = vsel %vm1422, %v1407, %v1408
      %v1437 = vsel %vm1422, %v1406, %v1407
      %v1438 = vsel %vm1422, %v1405, %v1406
      %v1439 = vsel %vm1422, %v1404, %v1405
      %v1440 = vsel %vm1422, %v1403, %v1404
      %v1441 = vsel %vm1422, %v1402, %v1403
      %v1442 = vsel %vm1422, %v1401, %v1402
      %v1443 = vsel %vm1422, %v1400, %v1401
      %v1444 = vsel %vm1422, %v1399, %v1400
      %v1445 = vsel %vm1422, %v1398, %v1399
      %v1446 = vsel %vm1422, %v1397, %v1398
      %v1447 = vsel %vm1422, %v1396, %v1397
      %v1448 = vsel %vm1422, %v1395, %v1396
      %v1449 = vsel %vm1422, %v1394, %v1395
      %v1450 = vsel %vm1422, %v1393, %v1394
      %v1451 = vsel %vm1422, %v1392, %v1393
      %v1452 = vsel %vm1422, %v1391, %v1392
      %v1453 = vsel %vm1422, %v1390, %v1391
      %v1454 = vsel %vm1422, %v1421, %v1390
      %s1455 = scalar_lea.vmem %s5, 256
      %v1456 = vld [vmem:[%s1455] sm:$0xff]
      %v1457 = vld [vmem:[%s1455 + $0x8] sm:$0xff]
      %v1458 = vld [vmem:[%s1455 + $0x10] sm:$0xff]
      %v1459 = vld [vmem:[%s1455 + $0x18] sm:$0xff]
      %v1460 = vld [vmem:[%s1455 + $0x20] sm:$0xff]
      %v1461 = vld [vmem:[%s1455 + $0x28] sm:$0xff]
      %v1462 = vld [vmem:[%s1455 + $0x30] sm:$0xff]
      %v1463 = vld [vmem:[%s1455 + $0x38] sm:$0xff]
      %v1464 = vld [vmem:[%s1455 + $0x40] sm:$0xff]
      %v1465 = vld [vmem:[%s1455 + $0x48] sm:$0xff]
      %v1466 = vld [vmem:[%s1455 + $0x50] sm:$0xff]
      %v1467 = vld [vmem:[%s1455 + $0x58] sm:$0xff]
      %v1468 = vld [vmem:[%s1455 + $0x60] sm:$0xff]
      %v1469 = vld [vmem:[%s1455 + $0x68] sm:$0xff]
      %v1470 = vld [vmem:[%s1455 + $0x70] sm:$0xff]
      %v1471 = vld [vmem:[%s1455 + $0x78] sm:$0xff]
      %v1472 = vld [vmem:[%s1455 + $0x80] sm:$0xff]
      %v1473 = vld [vmem:[%s1455 + $0x88] sm:$0xff]
      %v1474 = vld [vmem:[%s1455 + $0x90] sm:$0xff]
      %v1475 = vld [vmem:[%s1455 + $0x98] sm:$0xff]
      %v1476 = vld [vmem:[%s1455 + $0xa0] sm:$0xff]
      %v1477 = vld [vmem:[%s1455 + $0xa8] sm:$0xff]
      %v1478 = vld [vmem:[%s1455 + $0xb0] sm:$0xff]
      %v1479 = vld [vmem:[%s1455 + $0xb8] sm:$0xff]
      %v1480 = vld [vmem:[%s1455 + $0xc0] sm:$0xff]
      %v1481 = vld [vmem:[%s1455 + $0xc8] sm:$0xff]
      %v1482 = vld [vmem:[%s1455 + $0xd0] sm:$0xff]
      %v1483 = vld [vmem:[%s1455 + $0xd8] sm:$0xff]
      %v1484 = vld [vmem:[%s1455 + $0xe0] sm:$0xff]
      %v1485 = vld [vmem:[%s1455 + $0xe8] sm:$0xff]
      %v1486 = vld [vmem:[%s1455 + $0xf0] sm:$0xff]
      %v1487 = vld [vmem:[%s1455 + $0xf8] sm:$0xff]
      %1489 = vset.pattern.permute.xlu0 0
      %1490 = vperm.xlu0 %1489, %v1456
      %v1491 = vpop.permute.xlu0 %1490
      %1494 = vset.pattern.permute.xlu0 0
      %1495 = vperm.xlu0 %1494, %v1457
      %v1496 = vpop.permute.xlu0 %1495
      %1499 = vset.pattern.permute.xlu0 0
      %1500 = vperm.xlu0 %1499, %v1458
      %v1501 = vpop.permute.xlu0 %1500
      %1504 = vset.pattern.permute.xlu0 0
      %1505 = vperm.xlu0 %1504, %v1459
      %v1506 = vpop.permute.xlu0 %1505
      %1509 = vset.pattern.permute.xlu0 0
      %1510 = vperm.xlu0 %1509, %v1460
      %v1511 = vpop.permute.xlu0 %1510
      %1514 = vset.pattern.permute.xlu0 0
      %1515 = vperm.xlu0 %1514, %v1461
      %v1516 = vpop.permute.xlu0 %1515
      %1519 = vset.pattern.permute.xlu0 0
      %1520 = vperm.xlu0 %1519, %v1462
      %v1521 = vpop.permute.xlu0 %1520
      %1524 = vset.pattern.permute.xlu0 0
      %1525 = vperm.xlu0 %1524, %v1463
      %v1526 = vpop.permute.xlu0 %1525
      %1529 = vset.pattern.permute.xlu0 0
      %1530 = vperm.xlu0 %1529, %v1464
      %v1531 = vpop.permute.xlu0 %1530
      %1534 = vset.pattern.permute.xlu0 0
      %1535 = vperm.xlu0 %1534, %v1465
      %v1536 = vpop.permute.xlu0 %1535
      %1539 = vset.pattern.permute.xlu0 0
      %1540 = vperm.xlu0 %1539, %v1466
      %v1541 = vpop.permute.xlu0 %1540
      %1544 = vset.pattern.permute.xlu0 0
      %1545 = vperm.xlu0 %1544, %v1467
      %v1546 = vpop.permute.xlu0 %1545
      %1549 = vset.pattern.permute.xlu0 0
      %1550 = vperm.xlu0 %1549, %v1468
      %v1551 = vpop.permute.xlu0 %1550
      %1554 = vset.pattern.permute.xlu0 0
      %1555 = vperm.xlu0 %1554, %v1469
      %v1556 = vpop.permute.xlu0 %1555
      %1559 = vset.pattern.permute.xlu0 0
      %1560 = vperm.xlu0 %1559, %v1470
      %v1561 = vpop.permute.xlu0 %1560
      %1564 = vset.pattern.permute.xlu0 0
      %1565 = vperm.xlu0 %1564, %v1471
      %v1566 = vpop.permute.xlu0 %1565
      %1569 = vset.pattern.permute.xlu0 0
      %1570 = vperm.xlu0 %1569, %v1472
      %v1571 = vpop.permute.xlu0 %1570
      %1574 = vset.pattern.permute.xlu0 0
      %1575 = vperm.xlu0 %1574, %v1473
      %v1576 = vpop.permute.xlu0 %1575
      %1579 = vset.pattern.permute.xlu0 0
      %1580 = vperm.xlu0 %1579, %v1474
      %v1581 = vpop.permute.xlu0 %1580
      %1584 = vset.pattern.permute.xlu0 0
      %1585 = vperm.xlu0 %1584, %v1475
      %v1586 = vpop.permute.xlu0 %1585
      %1589 = vset.pattern.permute.xlu0 0
      %1590 = vperm.xlu0 %1589, %v1476
      %v1591 = vpop.permute.xlu0 %1590
      %1594 = vset.pattern.permute.xlu0 0
      %1595 = vperm.xlu0 %1594, %v1477
      %v1596 = vpop.permute.xlu0 %1595
      %1599 = vset.pattern.permute.xlu0 0
      %1600 = vperm.xlu0 %1599, %v1478
      %v1601 = vpop.permute.xlu0 %1600
      %1604 = vset.pattern.permute.xlu0 0
      %1605 = vperm.xlu0 %1604, %v1479
      %v1606 = vpop.permute.xlu0 %1605
      %1609 = vset.pattern.permute.xlu0 0
      %1610 = vperm.xlu0 %1609, %v1480
      %v1611 = vpop.permute.xlu0 %1610
      %1614 = vset.pattern.permute.xlu0 0
      %1615 = vperm.xlu0 %1614, %v1481
      %v1616 = vpop.permute.xlu0 %1615
      %1619 = vset.pattern.permute.xlu0 0
      %1620 = vperm.xlu0 %1619, %v1482
      %v1621 = vpop.permute.xlu0 %1620
      %1624 = vset.pattern.permute.xlu0 0
      %1625 = vperm.xlu0 %1624, %v1483
      %v1626 = vpop.permute.xlu0 %1625
      %1629 = vset.pattern.permute.xlu0 0
      %1630 = vperm.xlu0 %1629, %v1484
      %v1631 = vpop.permute.xlu0 %1630
      %1634 = vset.pattern.permute.xlu0 0
      %1635 = vperm.xlu0 %1634, %v1485
      %v1636 = vpop.permute.xlu0 %1635
      %1639 = vset.pattern.permute.xlu0 0
      %1640 = vperm.xlu0 %1639, %v1486
      %v1641 = vpop.permute.xlu0 %1640
      %1644 = vset.pattern.permute.xlu0 0
      %1645 = vperm.xlu0 %1644, %v1487
      %v1646 = vpop.permute.xlu0 %1645
      %v1648 = vmul.f32 %v1453, %v1491
      %v1649 = vmul.f32 %v1452, %v1496
      %v1650 = vmul.f32 %v1451, %v1501
      %v1651 = vmul.f32 %v1450, %v1506
      %v1652 = vmul.f32 %v1449, %v1511
      %v1653 = vmul.f32 %v1448, %v1516
      %v1654 = vmul.f32 %v1447, %v1521
      %v1655 = vmul.f32 %v1446, %v1526
      %v1656 = vmul.f32 %v1445, %v1531
      %v1657 = vmul.f32 %v1444, %v1536
      %v1658 = vmul.f32 %v1443, %v1541
      %v1659 = vmul.f32 %v1442, %v1546
      %v1660 = vmul.f32 %v1441, %v1551
      %v1661 = vmul.f32 %v1440, %v1556
      %v1662 = vmul.f32 %v1439, %v1561
      %v1663 = vmul.f32 %v1438, %v1566
      %v1664 = vmul.f32 %v1437, %v1571
      %v1665 = vmul.f32 %v1436, %v1576
      %v1666 = vmul.f32 %v1435, %v1581
      %v1667 = vmul.f32 %v1434, %v1586
      %v1668 = vmul.f32 %v1433, %v1591
      %v1669 = vmul.f32 %v1432, %v1596
      %v1670 = vmul.f32 %v1431, %v1601
      %v1671 = vmul.f32 %v1430, %v1606
      %v1672 = vmul.f32 %v1429, %v1611
      %v1673 = vmul.f32 %v1428, %v1616
      %v1674 = vmul.f32 %v1427, %v1621
      %v1675 = vmul.f32 %v1426, %v1626
      %v1676 = vmul.f32 %v1425, %v1631
      %v1677 = vmul.f32 %v1424, %v1636
      %v1678 = vmul.f32 %v1423, %v1641
      %v1679 = vmul.f32 %v1454, %v1646
      %v1680 = vld [vmem:[#allocation3] sm:$0xff]
      %v1681 = vld [vmem:[#allocation3 + $0x8] sm:$0xff]
      %v1682 = vld [vmem:[#allocation3 + $0x10] sm:$0xff]
      %v1683 = vld [vmem:[#allocation3 + $0x18] sm:$0xff]
      %v1684 = vld [vmem:[#allocation3 + $0x20] sm:$0xff]
      %v1685 = vld [vmem:[#allocation3 + $0x28] sm:$0xff]
      %v1686 = vld [vmem:[#allocation3 + $0x30] sm:$0xff]
      %v1687 = vld [vmem:[#allocation3 + $0x38] sm:$0xff]
      %v1688 = vld [vmem:[#allocation3 + $0x40] sm:$0xff]
      %v1689 = vld [vmem:[#allocation3 + $0x48] sm:$0xff]
      %v1690 = vld [vmem:[#allocation3 + $0x50] sm:$0xff]
      %v1691 = vld [vmem:[#allocation3 + $0x58] sm:$0xff]
      %v1692 = vld [vmem:[#allocation3 + $0x60] sm:$0xff]
      %v1693 = vld [vmem:[#allocation3 + $0x68] sm:$0xff]
      %v1694 = vld [vmem:[#allocation3 + $0x70] sm:$0xff]
      %v1695 = vld [vmem:[#allocation3 + $0x78] sm:$0xff]
      %v1696 = vld [vmem:[#allocation3 + $0x80] sm:$0xff]
      %v1697 = vld [vmem:[#allocation3 + $0x88] sm:$0xff]
      %v1698 = vld [vmem:[#allocation3 + $0x90] sm:$0xff]
      %v1699 = vld [vmem:[#allocation3 + $0x98] sm:$0xff]
      %v1700 = vld [vmem:[#allocation3 + $0xa0] sm:$0xff]
      %v1701 = vld [vmem:[#allocation3 + $0xa8] sm:$0xff]
      %v1702 = vld [vmem:[#allocation3 + $0xb0] sm:$0xff]
      %v1703 = vld [vmem:[#allocation3 + $0xb8] sm:$0xff]
      %v1704 = vld [vmem:[#allocation3 + $0xc0] sm:$0xff]
      %v1705 = vld [vmem:[#allocation3 + $0xc8] sm:$0xff]
      %v1706 = vld [vmem:[#allocation3 + $0xd0] sm:$0xff]
      %v1707 = vld [vmem:[#allocation3 + $0xd8] sm:$0xff]
      %v1708 = vld [vmem:[#allocation3 + $0xe0] sm:$0xff]
      %v1709 = vld [vmem:[#allocation3 + $0xe8] sm:$0xff]
      %v1710 = vld [vmem:[#allocation3 + $0xf0] sm:$0xff]
      %v1711 = vld [vmem:[#allocation3 + $0xf8] sm:$0xff]
      %v1712 = vpack.c.bf16 %v1649, %v1648
      %v1713 = vpack.c.bf16 %v1651, %v1650
      %v1714 = vpack.c.bf16 %v1653, %v1652
      %v1715 = vpack.c.bf16 %v1655, %v1654
      %v1716 = vpack.c.bf16 %v1657, %v1656
      %v1717 = vpack.c.bf16 %v1659, %v1658
      %v1718 = vpack.c.bf16 %v1661, %v1660
      %v1719 = vpack.c.bf16 %v1663, %v1662
      %v1720 = vpack.c.bf16 %v1665, %v1664
      %v1721 = vpack.c.bf16 %v1667, %v1666
      %v1722 = vpack.c.bf16 %v1669, %v1668
      %v1723 = vpack.c.bf16 %v1671, %v1670
      %v1724 = vpack.c.bf16 %v1673, %v1672
      %v1725 = vpack.c.bf16 %v1675, %v1674
      %v1726 = vpack.c.bf16 %v1677, %v1676
      %v1727 = vpack.c.bf16 %v1679, %v1678
      %s1728 = scalar_lea.vmem %s1, 128
      %v1729 = vld [vmem:[%s1728] sm:$0xf]
      %v1730 = vld [vmem:[%s1728 + $0x4] sm:$0xf]
      %v1731 = vld [vmem:[%s1728 + $0x8] sm:$0xf]
      %v1732 = vld [vmem:[%s1728 + $0xc] sm:$0xf]
      %v1733 = vld [vmem:[%s1728 + $0x10] sm:$0xf]
      %v1734 = vld [vmem:[%s1728 + $0x14] sm:$0xf]
      %v1735 = vld [vmem:[%s1728 + $0x18] sm:$0xf]
      %v1736 = vld [vmem:[%s1728 + $0x1c] sm:$0xf]
      %v1737 = vld [vmem:[%s1728 + $0x20] sm:$0xf]
      %v1738 = vld [vmem:[%s1728 + $0x24] sm:$0xf]
      %v1739 = vld [vmem:[%s1728 + $0x28] sm:$0xf]
      %v1740 = vld [vmem:[%s1728 + $0x2c] sm:$0xf]
      %v1741 = vld [vmem:[%s1728 + $0x30] sm:$0xf]
      %v1742 = vld [vmem:[%s1728 + $0x34] sm:$0xf]
      %v1743 = vld [vmem:[%s1728 + $0x38] sm:$0xf]
      %v1744 = vld [vmem:[%s1728 + $0x3c] sm:$0xf]
      %v1761 = vunpack.c.l.b16 %v1729
      %v1762 = vunpack.c.l.b16 %v1730
      %v1763 = vunpack.c.l.b16 %v1731
      %v1764 = vunpack.c.l.b16 %v1732
      %v1765 = vunpack.c.l.b16 %v1733
      %v1766 = vunpack.c.l.b16 %v1734
      %v1767 = vunpack.c.l.b16 %v1735
      %v1768 = vunpack.c.l.b16 %v1736
      %v1769 = vunpack.c.l.b16 %v1737
      %v1770 = vunpack.c.l.b16 %v1738
      %v1771 = vunpack.c.l.b16 %v1739
      %v1772 = vunpack.c.l.b16 %v1740
      %v1773 = vunpack.c.l.b16 %v1741
      %v1774 = vunpack.c.l.b16 %v1742
      %v1775 = vunpack.c.l.b16 %v1743
      %v1776 = vunpack.c.l.b16 %v1744
      %v1777 = vpack.c.b16 %v1762, %v1761
      %v1778 = vpack.c.b16 %v1764, %v1763
      %v1779 = vpack.c.b16 %v1766, %v1765
      %v1780 = vpack.c.b16 %v1768, %v1767
      %v1781 = vpack.c.b16 %v1770, %v1769
      %v1782 = vpack.c.b16 %v1772, %v1771
      %v1783 = vpack.c.b16 %v1774, %v1773
      %v1784 = vpack.c.b16 %v1776, %v1775
      %1793 = vmatprep.subr.bf16.mxu0 0
      %1794 = vmatpush1.bf16.msra.mxu0 %v1784
      %1795 = vmatprep.subr.bf16.mxu0 0
      %1796 = vmatpush1.bf16.msra.mxu0 %v1783
      %1797 = vmatprep.subr.bf16.mxu0 0
      %1798 = vmatpush1.bf16.msra.mxu0 %v1782
      %1799 = vmatprep.subr.bf16.mxu0 0
      %1800 = vmatpush1.bf16.msra.mxu0 %v1781
      %1801 = vmatprep.subr.bf16.mxu0 0
      %1802 = vmatpush1.bf16.msra.mxu0 %v1780
      %1803 = vmatprep.subr.bf16.mxu0 0
      %1804 = vmatpush1.bf16.msra.mxu0 %v1779
      %1805 = vmatprep.subr.bf16.mxu0 0
      %1806 = vmatpush1.bf16.msra.mxu0 %v1778
      %1807 = vmatprep.subr.bf16.mxu0 0
      %1808 = vmatpush1.bf16.msra.mxu0 %v1777
      %1809 = vmatprep.subr.bf16.mxu0 0
      %1810 = vmatpush2.bf16.msra.mxu0 0
      %1811 = vmatprep.subr.bf16.mxu0 0
      %1812 = vmatpush2.bf16.msra.mxu0 0
      %1813 = vmatprep.subr.bf16.mxu0 0
      %1814 = vmatpush2.bf16.msra.mxu0 0
      %1815 = vmatprep.subr.bf16.mxu0 0
      %1816 = vmatpush2.bf16.msra.mxu0 0
      %1817 = vmatprep.subr.bf16.mxu0 0
      %1818 = vmatpush2.bf16.msra.mxu0 0
      %1819 = vmatprep.subr.bf16.mxu0 0
      %1820 = vmatpush2.bf16.msra.mxu0 0
      %1821 = vmatprep.subr.bf16.mxu0 0
      %1822 = vmatpush2.bf16.msra.mxu0 0
      %1823 = vmatprep.subr.bf16.mxu0 0
      %1824 = vmatpush2.bf16.msra.mxu0 0
      %1825 = vmatprep.mubr.bf16.mxu0 0
      %1826 = vmatmul.mubr.bf16.gmra.mxu0 %v1712
      %v1827 = vpop.f32.mrf.mxu0
      %v1828 = vadd.f32 0.0, %v1827
      %v1829 = vpop.f32.mrf.mxu0
      %v1830 = vpop.f32.mrf.mxu0
      %v1831 = vadd.f32 0.0, %v1830
      %v1832 = vpop.f32.mrf.mxu0
      %1833 = vmatprep.mubr.bf16.mxu0 0
      %1834 = vmatmul.mubr.bf16.gmra.mxu0 %v1713
      %v1835 = vpop.f32.mrf.mxu0
      %v1836 = vadd.f32 0.0, %v1835
      %v1837 = vpop.f32.mrf.mxu0
      %v1838 = vpop.f32.mrf.mxu0
      %v1839 = vadd.f32 0.0, %v1838
      %v1840 = vpop.f32.mrf.mxu0
      %1841 = vmatprep.mubr.bf16.mxu0 0
      %1842 = vmatmul.mubr.bf16.gmra.mxu0 %v1714
      %v1843 = vpop.f32.mrf.mxu0
      %v1844 = vadd.f32 0.0, %v1843
      %v1845 = vpop.f32.mrf.mxu0
      %v1846 = vpop.f32.mrf.mxu0
      %v1847 = vadd.f32 0.0, %v1846
      %v1848 = vpop.f32.mrf.mxu0
      %1849 = vmatprep.mubr.bf16.mxu0 0
      %1850 = vmatmul.mubr.bf16.gmra.mxu0 %v1715
      %v1851 = vpop.f32.mrf.mxu0
      %v1852 = vadd.f32 0.0, %v1851
      %v1853 = vpop.f32.mrf.mxu0
      %v1854 = vpop.f32.mrf.mxu0
      %v1855 = vadd.f32 0.0, %v1854
      %v1856 = vpop.f32.mrf.mxu0
      %1857 = vmatprep.mubr.bf16.mxu0 0
      %1858 = vmatmul.mubr.bf16.gmra.mxu0 %v1716
      %v1859 = vpop.f32.mrf.mxu0
      %v1860 = vadd.f32 0.0, %v1859
      %v1861 = vpop.f32.mrf.mxu0
      %v1862 = vpop.f32.mrf.mxu0
      %v1863 = vadd.f32 0.0, %v1862
      %v1864 = vpop.f32.mrf.mxu0
      %1865 = vmatprep.mubr.bf16.mxu0 0
      %1866 = vmatmul.mubr.bf16.gmra.mxu0 %v1717
      %v1867 = vpop.f32.mrf.mxu0
      %v1868 = vadd.f32 0.0, %v1867
      %v1869 = vpop.f32.mrf.mxu0
      %v1870 = vpop.f32.mrf.mxu0
      %v1871 = vadd.f32 0.0, %v1870
      %v1872 = vpop.f32.mrf.mxu0
      %1873 = vmatprep.mubr.bf16.mxu0 0
      %1874 = vmatmul.mubr.bf16.gmra.mxu0 %v1718
      %v1875 = vpop.f32.mrf.mxu0
      %v1876 = vadd.f32 0.0, %v1875
      %v1877 = vpop.f32.mrf.mxu0
      %v1878 = vpop.f32.mrf.mxu0
      %v1879 = vadd.f32 0.0, %v1878
      %v1880 = vpop.f32.mrf.mxu0
      %1881 = vmatprep.mubr.bf16.mxu0 0
      %1882 = vmatmul.mubr.bf16.gmra.mxu0 %v1719
      %v1883 = vpop.f32.mrf.mxu0
      %v1884 = vadd.f32 0.0, %v1883
      %v1885 = vpop.f32.mrf.mxu0
      %v1886 = vpop.f32.mrf.mxu0
      %v1887 = vadd.f32 0.0, %v1886
      %v1888 = vpop.f32.mrf.mxu0
      %1889 = vmatprep.mubr.bf16.mxu0 0
      %1890 = vmatmul.mubr.bf16.gmra.mxu0 %v1720
      %v1891 = vpop.f32.mrf.mxu0
      %v1892 = vadd.f32 0.0, %v1891
      %v1893 = vpop.f32.mrf.mxu0
      %v1894 = vpop.f32.mrf.mxu0
      %v1895 = vadd.f32 0.0, %v1894
      %v1896 = vpop.f32.mrf.mxu0
      %1897 = vmatprep.mubr.bf16.mxu0 0
      %1898 = vmatmul.mubr.bf16.gmra.mxu0 %v1721
      %v1899 = vpop.f32.mrf.mxu0
      %v1900 = vadd.f32 0.0, %v1899
      %v1901 = vpop.f32.mrf.mxu0
      %v1902 = vpop.f32.mrf.mxu0
      %v1903 = vadd.f32 0.0, %v1902
      %v1904 = vpop.f32.mrf.mxu0
      %1905 = vmatprep.mubr.bf16.mxu0 0
      %1906 = vmatmul.mubr.bf16.gmra.mxu0 %v1722
      %v1907 = vpop.f32.mrf.mxu0
      %v1908 = vadd.f32 0.0, %v1907
      %v1909 = vpop.f32.mrf.mxu0
      %v1910 = vpop.f32.mrf.mxu0
      %v1911 = vadd.f32 0.0, %v1910
      %v1912 = vpop.f32.mrf.mxu0
      %1913 = vmatprep.mubr.bf16.mxu0 0
      %1914 = vmatmul.mubr.bf16.gmra.mxu0 %v1723
      %v1915 = vpop.f32.mrf.mxu0
      %v1916 = vadd.f32 0.0, %v1915
      %v1917 = vpop.f32.mrf.mxu0
      %v1918 = vpop.f32.mrf.mxu0
      %v1919 = vadd.f32 0.0, %v1918
      %v1920 = vpop.f32.mrf.mxu0
      %1921 = vmatprep.mubr.bf16.mxu0 0
      %1922 = vmatmul.mubr.bf16.gmra.mxu0 %v1724
      %v1923 = vpop.f32.mrf.mxu0
      %v1924 = vadd.f32 0.0, %v1923
      %v1925 = vpop.f32.mrf.mxu0
      %v1926 = vpop.f32.mrf.mxu0
      %v1927 = vadd.f32 0.0, %v1926
      %v1928 = vpop.f32.mrf.mxu0
      %1929 = vmatprep.mubr.bf16.mxu0 0
      %1930 = vmatmul.mubr.bf16.gmra.mxu0 %v1725
      %v1931 = vpop.f32.mrf.mxu0
      %v1932 = vadd.f32 0.0, %v1931
      %v1933 = vpop.f32.mrf.mxu0
      %v1934 = vpop.f32.mrf.mxu0
      %v1935 = vadd.f32 0.0, %v1934
      %v1936 = vpop.f32.mrf.mxu0
      %1937 = vmatprep.mubr.bf16.mxu0 0
      %1938 = vmatmul.mubr.bf16.gmra.mxu0 %v1726
      %v1939 = vpop.f32.mrf.mxu0
      %v1940 = vadd.f32 0.0, %v1939
      %v1941 = vpop.f32.mrf.mxu0
      %v1942 = vpop.f32.mrf.mxu0
      %v1943 = vadd.f32 0.0, %v1942
      %v1944 = vpop.f32.mrf.mxu0
      %1945 = vmatprep.mubr.bf16.mxu0 0
      %1946 = vmatmul.mubr.bf16.gmra.mxu0 %v1727
      %v1947 = vpop.f32.mrf.mxu0
      %v1948 = vadd.f32 0.0, %v1947
      %v1949 = vpop.f32.mrf.mxu0
      %v1950 = vpop.f32.mrf.mxu0
      %v1951 = vadd.f32 0.0, %v1950
      %v1952 = vpop.f32.mrf.mxu0
      %1953 = vdwg.mxu0
      %v1954 = vadd.f32 %v1680, %v1828
      %v1955 = vadd.f32 %v1681, %v1831
      %v1956 = vadd.f32 %v1682, %v1836
      %v1957 = vadd.f32 %v1683, %v1839
      %v1958 = vadd.f32 %v1684, %v1844
      %v1959 = vadd.f32 %v1685, %v1847
      %v1960 = vadd.f32 %v1686, %v1852
      %v1961 = vadd.f32 %v1687, %v1855
      %v1962 = vadd.f32 %v1688, %v1860
      %v1963 = vadd.f32 %v1689, %v1863
      %v1964 = vadd.f32 %v1690, %v1868
      %v1965 = vadd.f32 %v1691, %v1871
      %v1966 = vadd.f32 %v1692, %v1876
      %v1967 = vadd.f32 %v1693, %v1879
      %v1968 = vadd.f32 %v1694, %v1884
      %v1969 = vadd.f32 %v1695, %v1887
      %v1970 = vadd.f32 %v1696, %v1892
      %v1971 = vadd.f32 %v1697, %v1895
      %v1972 = vadd.f32 %v1698, %v1900
      %v1973 = vadd.f32 %v1699, %v1903
      %v1974 = vadd.f32 %v1700, %v1908
      %v1975 = vadd.f32 %v1701, %v1911
      %v1976 = vadd.f32 %v1702, %v1916
      %v1977 = vadd.f32 %v1703, %v1919
      %v1978 = vadd.f32 %v1704, %v1924
      %v1979 = vadd.f32 %v1705, %v1927
      %v1980 = vadd.f32 %v1706, %v1932
      %v1981 = vadd.f32 %v1707, %v1935
      %v1982 = vadd.f32 %v1708, %v1940
      %v1983 = vadd.f32 %v1709, %v1943
      %v1984 = vadd.f32 %v1710, %v1948
      %v1985 = vadd.f32 %v1711, %v1951
      %1986 = vst [vmem:[#allocation3] sm:$0xff] %v1954
      %1987 = vst [vmem:[#allocation3 + $0x8] sm:$0xff] %v1955
      %1988 = vst [vmem:[#allocation3 + $0x10] sm:$0xff] %v1956
      %1989 = vst [vmem:[#allocation3 + $0x18] sm:$0xff] %v1957
      %1990 = vst [vmem:[#allocation3 + $0x20] sm:$0xff] %v1958
      %1991 = vst [vmem:[#allocation3 + $0x28] sm:$0xff] %v1959
      %1992 = vst [vmem:[#allocation3 + $0x30] sm:$0xff] %v1960
      %1993 = vst [vmem:[#allocation3 + $0x38] sm:$0xff] %v1961
      %1994 = vst [vmem:[#allocation3 + $0x40] sm:$0xff] %v1962
      %1995 = vst [vmem:[#allocation3 + $0x48] sm:$0xff] %v1963
      %1996 = vst [vmem:[#allocation3 + $0x50] sm:$0xff] %v1964
      %1997 = vst [vmem:[#allocation3 + $0x58] sm:$0xff] %v1965
      %1998 = vst [vmem:[#allocation3 + $0x60] sm:$0xff] %v1966
      %1999 = vst [vmem:[#allocation3 + $0x68] sm:$0xff] %v1967
      %2000 = vst [vmem:[#allocation3 + $0x70] sm:$0xff] %v1968
      %2001 = vst [vmem:[#allocation3 + $0x78] sm:$0xff] %v1969
      %2002 = vst [vmem:[#allocation3 + $0x80] sm:$0xff] %v1970
      %2003 = vst [vmem:[#allocation3 + $0x88] sm:$0xff] %v1971
      %2004 = vst [vmem:[#allocation3 + $0x90] sm:$0xff] %v1972
      %2005 = vst [vmem:[#allocation3 + $0x98] sm:$0xff] %v1973
      %2006 = vst [vmem:[#allocation3 + $0xa0] sm:$0xff] %v1974
      %2007 = vst [vmem:[#allocation3 + $0xa8] sm:$0xff] %v1975
      %2008 = vst [vmem:[#allocation3 + $0xb0] sm:$0xff] %v1976
      %2009 = vst [vmem:[#allocation3 + $0xb8] sm:$0xff] %v1977
      %2010 = vst [vmem:[#allocation3 + $0xc0] sm:$0xff] %v1978
      %2011 = vst [vmem:[#allocation3 + $0xc8] sm:$0xff] %v1979
      %2012 = vst [vmem:[#allocation3 + $0xd0] sm:$0xff] %v1980
      %2013 = vst [vmem:[#allocation3 + $0xd8] sm:$0xff] %v1981
      %2014 = vst [vmem:[#allocation3 + $0xe0] sm:$0xff] %v1982
      %2015 = vst [vmem:[#allocation3 + $0xe8] sm:$0xff] %v1983
      %2016 = vst [vmem:[#allocation3 + $0xf0] sm:$0xff] %v1984
      %2017 = vst [vmem:[#allocation3 + $0xf8] sm:$0xff] %v1985
      %v2018 = vld [vmem:[#allocation2 + $0x10] sm:$0xff]
      %v2019 = vld [vmem:[#allocation2 + $0x18] sm:$0xff]
      %v2020 = vld [vmem:[#allocation2 + $0x20] sm:$0xff]
      %v2021 = vld [vmem:[#allocation2 + $0x28] sm:$0xff]
      %v2022 = vld [vmem:[#allocation2 + $0x30] sm:$0xff]
      %v2023 = vld [vmem:[#allocation2 + $0x38] sm:$0xff]
      %v2024 = vld [vmem:[#allocation2 + $0x40] sm:$0xff]
      %v2025 = vld [vmem:[#allocation2 + $0x48] sm:$0xff]
      %v2026 = vld [vmem:[#allocation2 + $0x50] sm:$0xff]
      %v2027 = vld [vmem:[#allocation2 + $0x58] sm:$0xff]
      %v2028 = vld [vmem:[#allocation2 + $0x60] sm:$0xff]
      %v2029 = vld [vmem:[#allocation2 + $0x68] sm:$0xff]
      %v2030 = vld [vmem:[#allocation2 + $0x70] sm:$0xff]
      %v2031 = vld [vmem:[#allocation2 + $0x78] sm:$0xff]
      %v2032 = vld [vmem:[#allocation2 + $0x80] sm:$0xff]
      %v2033 = vld [vmem:[#allocation2 + $0x88] sm:$0xff]
      %v2034 = vld [vmem:[#allocation2 + $0x90] sm:$0xff]
      %v2035 = vld [vmem:[#allocation2 + $0x98] sm:$0xff]
      %v2036 = vld [vmem:[#allocation2 + $0xa0] sm:$0xff]
      %v2037 = vld [vmem:[#allocation2 + $0xa8] sm:$0xff]
      %v2038 = vld [vmem:[#allocation2 + $0xb0] sm:$0xff]
      %v2039 = vld [vmem:[#allocation2 + $0xb8] sm:$0xff]
      %v2040 = vld [vmem:[#allocation2 + $0xc0] sm:$0xff]
      %v2041 = vld [vmem:[#allocation2 + $0xc8] sm:$0xff]
      %v2042 = vld [vmem:[#allocation2 + $0xd0] sm:$0xff]
      %v2043 = vld [vmem:[#allocation2 + $0xd8] sm:$0xff]
      %v2044 = vld [vmem:[#allocation2 + $0xe0] sm:$0xff]
      %v2045 = vld [vmem:[#allocation2 + $0xe8] sm:$0xff]
      %v2046 = vld [vmem:[#allocation2 + $0xf0] sm:$0xff]
      %v2047 = vld [vmem:[#allocation2 + $0xf8] sm:$0xff]
      %v2048 = vld [vmem:[#allocation2 + $0x100] sm:$0xff]
      %v2049 = vld [vmem:[#allocation2 + $0x108] sm:$0xff]
      %v2050 = vrot.slane %v2018, 7
      %v2051 = vrot.slane %v2019, 7
      %v2052 = vrot.slane %v2020, 7
      %v2053 = vrot.slane %v2021, 7
      %v2054 = vrot.slane %v2022, 7
      %v2055 = vrot.slane %v2023, 7
      %v2056 = vrot.slane %v2024, 7
      %v2057 = vrot.slane %v2025, 7
      %v2058 = vrot.slane %v2026, 7
      %v2059 = vrot.slane %v2027, 7
      %v2060 = vrot.slane %v2028, 7
      %v2061 = vrot.slane %v2029, 7
      %v2062 = vrot.slane %v2030, 7
      %v2063 = vrot.slane %v2031, 7
      %v2064 = vrot.slane %v2032, 7
      %v2065 = vrot.slane %v2033, 7
      %v2066 = vrot.slane %v2034, 7
      %v2067 = vrot.slane %v2035, 7
      %v2068 = vrot.slane %v2036, 7
      %v2069 = vrot.slane %v2037, 7
      %v2070 = vrot.slane %v2038, 7
      %v2071 = vrot.slane %v2039, 7
      %v2072 = vrot.slane %v2040, 7
      %v2073 = vrot.slane %v2041, 7
      %v2074 = vrot.slane %v2042, 7
      %v2075 = vrot.slane %v2043, 7
      %v2076 = vrot.slane %v2044, 7
      %v2077 = vrot.slane %v2045, 7
      %v2078 = vrot.slane %v2046, 7
      %v2079 = vrot.slane %v2047, 7
      %v2080 = vrot.slane %v2048, 7
      %v2081 = vrot.slane %v2049, 7
      %v2082 = vsel %vm458, %v2080, %v2081
      %v2083 = vsel %vm458, %v2079, %v2080
      %v2084 = vsel %vm458, %v2078, %v2079
      %v2085 = vsel %vm458, %v2077, %v2078
      %v2086 = vsel %vm458, %v2076, %v2077
      %v2087 = vsel %vm458, %v2075, %v2076
      %v2088 = vsel %vm458, %v2074, %v2075
      %v2089 = vsel %vm458, %v2073, %v2074
      %v2090 = vsel %vm458, %v2072, %v2073
      %v2091 = vsel %vm458, %v2071, %v2072
      %v2092 = vsel %vm458, %v2070, %v2071
      %v2093 = vsel %vm458, %v2069, %v2070
      %v2094 = vsel %vm458, %v2068, %v2069
      %v2095 = vsel %vm458, %v2067, %v2068
      %v2096 = vsel %vm458, %v2066, %v2067
      %v2097 = vsel %vm458, %v2065, %v2066
      %v2098 = vsel %vm458, %v2064, %v2065
      %v2099 = vsel %vm458, %v2063, %v2064
      %v2100 = vsel %vm458, %v2062, %v2063
      %v2101 = vsel %vm458, %v2061, %v2062
      %v2102 = vsel %vm458, %v2060, %v2061
      %v2103 = vsel %vm458, %v2059, %v2060
      %v2104 = vsel %vm458, %v2058, %v2059
      %v2105 = vsel %vm458, %v2057, %v2058
      %v2106 = vsel %vm458, %v2056, %v2057
      %v2107 = vsel %vm458, %v2055, %v2056
      %v2108 = vsel %vm458, %v2054, %v2055
      %v2109 = vsel %vm458, %v2053, %v2054
      %v2110 = vsel %vm458, %v2052, %v2053
      %v2111 = vsel %vm458, %v2051, %v2052
      %v2112 = vsel %vm458, %v2050, %v2051
      %v2113 = vsel %vm458, %v2081, %v2050
      %v2114 = vld [vmem:[%s5] sm:$0xff]
      %v2115 = vld [vmem:[%s5 + $0x8] sm:$0xff]
      %v2116 = vld [vmem:[%s5 + $0x10] sm:$0xff]
      %v2117 = vld [vmem:[%s5 + $0x18] sm:$0xff]
      %v2118 = vld [vmem:[%s5 + $0x20] sm:$0xff]
      %v2119 = vld [vmem:[%s5 + $0x28] sm:$0xff]
      %v2120 = vld [vmem:[%s5 + $0x30] sm:$0xff]
      %v2121 = vld [vmem:[%s5 + $0x38] sm:$0xff]
      %v2122 = vld [vmem:[%s5 + $0x40] sm:$0xff]
      %v2123 = vld [vmem:[%s5 + $0x48] sm:$0xff]
      %v2124 = vld [vmem:[%s5 + $0x50] sm:$0xff]
      %v2125 = vld [vmem:[%s5 + $0x58] sm:$0xff]
      %v2126 = vld [vmem:[%s5 + $0x60] sm:$0xff]
      %v2127 = vld [vmem:[%s5 + $0x68] sm:$0xff]
      %v2128 = vld [vmem:[%s5 + $0x70] sm:$0xff]
      %v2129 = vld [vmem:[%s5 + $0x78] sm:$0xff]
      %v2130 = vld [vmem:[%s5 + $0x80] sm:$0xff]
      %v2131 = vld [vmem:[%s5 + $0x88] sm:$0xff]
      %v2132 = vld [vmem:[%s5 + $0x90] sm:$0xff]
      %v2133 = vld [vmem:[%s5 + $0x98] sm:$0xff]
      %v2134 = vld [vmem:[%s5 + $0xa0] sm:$0xff]
      %v2135 = vld [vmem:[%s5 + $0xa8] sm:$0xff]
      %v2136 = vld [vmem:[%s5 + $0xb0] sm:$0xff]
      %v2137 = vld [vmem:[%s5 + $0xb8] sm:$0xff]
      %v2138 = vld [vmem:[%s5 + $0xc0] sm:$0xff]
      %v2139 = vld [vmem:[%s5 + $0xc8] sm:$0xff]
      %v2140 = vld [vmem:[%s5 + $0xd0] sm:$0xff]
      %v2141 = vld [vmem:[%s5 + $0xd8] sm:$0xff]
      %v2142 = vld [vmem:[%s5 + $0xe0] sm:$0xff]
      %v2143 = vld [vmem:[%s5 + $0xe8] sm:$0xff]
      %v2144 = vld [vmem:[%s5 + $0xf0] sm:$0xff]
      %v2145 = vld [vmem:[%s5 + $0xf8] sm:$0xff]
      %2147 = vset.pattern.permute.xlu0 0
      %2148 = vperm.xlu0 %2147, %v2114
      %v2149 = vpop.permute.xlu0 %2148
      %2152 = vset.pattern.permute.xlu0 0
      %2153 = vperm.xlu0 %2152, %v2115
      %v2154 = vpop.permute.xlu0 %2153
      %2157 = vset.pattern.permute.xlu0 0
      %2158 = vperm.xlu0 %2157, %v2116
      %v2159 = vpop.permute.xlu0 %2158
      %2162 = vset.pattern.permute.xlu0 0
      %2163 = vperm.xlu0 %2162, %v2117
      %v2164 = vpop.permute.xlu0 %2163
      %2167 = vset.pattern.permute.xlu0 0
      %2168 = vperm.xlu0 %2167, %v2118
      %v2169 = vpop.permute.xlu0 %2168
      %2172 = vset.pattern.permute.xlu0 0
      %2173 = vperm.xlu0 %2172, %v2119
      %v2174 = vpop.permute.xlu0 %2173
      %2177 = vset.pattern.permute.xlu0 0
      %2178 = vperm.xlu0 %2177, %v2120
      %v2179 = vpop.permute.xlu0 %2178
      %2182 = vset.pattern.permute.xlu0 0
      %2183 = vperm.xlu0 %2182, %v2121
      %v2184 = vpop.permute.xlu0 %2183
      %2187 = vset.pattern.permute.xlu0 0
      %2188 = vperm.xlu0 %2187, %v2122
      %v2189 = vpop.permute.xlu0 %2188
      %2192 = vset.pattern.permute.xlu0 0
      %2193 = vperm.xlu0 %2192, %v2123
      %v2194 = vpop.permute.xlu0 %2193
      %2197 = vset.pattern.permute.xlu0 0
      %2198 = vperm.xlu0 %2197, %v2124
      %v2199 = vpop.permute.xlu0 %2198
      %2202 = vset.pattern.permute.xlu0 0
      %2203 = vperm.xlu0 %2202, %v2125
      %v2204 = vpop.permute.xlu0 %2203
      %2207 = vset.pattern.permute.xlu0 0
      %2208 = vperm.xlu0 %2207, %v2126
      %v2209 = vpop.permute.xlu0 %2208
      %2212 = vset.pattern.permute.xlu0 0
      %2213 = vperm.xlu0 %2212, %v2127
      %v2214 = vpop.permute.xlu0 %2213
      %2217 = vset.pattern.permute.xlu0 0
      %2218 = vperm.xlu0 %2217, %v2128
      %v2219 = vpop.permute.xlu0 %2218
      %2222 = vset.pattern.permute.xlu0 0
      %2223 = vperm.xlu0 %2222, %v2129
      %v2224 = vpop.permute.xlu0 %2223
      %2227 = vset.pattern.permute.xlu0 0
      %2228 = vperm.xlu0 %2227, %v2130
      %v2229 = vpop.permute.xlu0 %2228
      %2232 = vset.pattern.permute.xlu0 0
      %2233 = vperm.xlu0 %2232, %v2131
      %v2234 = vpop.permute.xlu0 %2233
      %2237 = vset.pattern.permute.xlu0 0
      %2238 = vperm.xlu0 %2237, %v2132
      %v2239 = vpop.permute.xlu0 %2238
      %2242 = vset.pattern.permute.xlu0 0
      %2243 = vperm.xlu0 %2242, %v2133
      %v2244 = vpop.permute.xlu0 %2243
      %2247 = vset.pattern.permute.xlu0 0
      %2248 = vperm.xlu0 %2247, %v2134
      %v2249 = vpop.permute.xlu0 %2248
      %2252 = vset.pattern.permute.xlu0 0
      %2253 = vperm.xlu0 %2252, %v2135
      %v2254 = vpop.permute.xlu0 %2253
      %2257 = vset.pattern.permute.xlu0 0
      %2258 = vperm.xlu0 %2257, %v2136
      %v2259 = vpop.permute.xlu0 %2258
      %2262 = vset.pattern.permute.xlu0 0
      %2263 = vperm.xlu0 %2262, %v2137
      %v2264 = vpop.permute.xlu0 %2263
      %2267 = vset.pattern.permute.xlu0 0
      %2268 = vperm.xlu0 %2267, %v2138
      %v2269 = vpop.permute.xlu0 %2268
      %2272 = vset.pattern.permute.xlu0 0
      %2273 = vperm.xlu0 %2272, %v2139
      %v2274 = vpop.permute.xlu0 %2273
      %2277 = vset.pattern.permute.xlu0 0
      %2278 = vperm.xlu0 %2277, %v2140
      %v2279 = vpop.permute.xlu0 %2278
      %2282 = vset.pattern.permute.xlu0 0
      %2283 = vperm.xlu0 %2282, %v2141
      %v2284 = vpop.permute.xlu0 %2283
      %2287 = vset.pattern.permute.xlu0 0
      %2288 = vperm.xlu0 %2287, %v2142
      %v2289 = vpop.permute.xlu0 %2288
      %2292 = vset.pattern.permute.xlu0 0
      %2293 = vperm.xlu0 %2292, %v2143
      %v2294 = vpop.permute.xlu0 %2293
      %2297 = vset.pattern.permute.xlu0 0
      %2298 = vperm.xlu0 %2297, %v2144
      %v2299 = vpop.permute.xlu0 %2298
      %2302 = vset.pattern.permute.xlu0 0
      %2303 = vperm.xlu0 %2302, %v2145
      %v2304 = vpop.permute.xlu0 %2303
      %v2306 = vmul.f32 %v2113, %v2149
      %v2307 = vmul.f32 %v2112, %v2154
      %v2308 = vmul.f32 %v2111, %v2159
      %v2309 = vmul.f32 %v2110, %v2164
      %v2310 = vmul.f32 %v2109, %v2169
      %v2311 = vmul.f32 %v2108, %v2174
      %v2312 = vmul.f32 %v2107, %v2179
      %v2313 = vmul.f32 %v2106, %v2184
      %v2314 = vmul.f32 %v2105, %v2189
      %v2315 = vmul.f32 %v2104, %v2194
      %v2316 = vmul.f32 %v2103, %v2199
      %v2317 = vmul.f32 %v2102, %v2204
      %v2318 = vmul.f32 %v2101, %v2209
      %v2319 = vmul.f32 %v2100, %v2214
      %v2320 = vmul.f32 %v2099, %v2219
      %v2321 = vmul.f32 %v2098, %v2224
      %v2322 = vmul.f32 %v2097, %v2229
      %v2323 = vmul.f32 %v2096, %v2234
      %v2324 = vmul.f32 %v2095, %v2239
      %v2325 = vmul.f32 %v2094, %v2244
      %v2326 = vmul.f32 %v2093, %v2249
      %v2327 = vmul.f32 %v2092, %v2254
      %v2328 = vmul.f32 %v2091, %v2259
      %v2329 = vmul.f32 %v2090, %v2264
      %v2330 = vmul.f32 %v2089, %v2269
      %v2331 = vmul.f32 %v2088, %v2274
      %v2332 = vmul.f32 %v2087, %v2279
      %v2333 = vmul.f32 %v2086, %v2284
      %v2334 = vmul.f32 %v2085, %v2289
      %v2335 = vmul.f32 %v2084, %v2294
      %v2336 = vmul.f32 %v2083, %v2299
      %v2337 = vmul.f32 %v2082, %v2304
      %v2338 = vld [vmem:[#allocation3] sm:$0xff]
      %v2339 = vld [vmem:[#allocation3 + $0x8] sm:$0xff]
      %v2340 = vld [vmem:[#allocation3 + $0x10] sm:$0xff]
      %v2341 = vld [vmem:[#allocation3 + $0x18] sm:$0xff]
      %v2342 = vld [vmem:[#allocation3 + $0x20] sm:$0xff]
      %v2343 = vld [vmem:[#allocation3 + $0x28] sm:$0xff]
      %v2344 = vld [vmem:[#allocation3 + $0x30] sm:$0xff]
      %v2345 = vld [vmem:[#allocation3 + $0x38] sm:$0xff]
      %v2346 = vld [vmem:[#allocation3 + $0x40] sm:$0xff]
      %v2347 = vld [vmem:[#allocation3 + $0x48] sm:$0xff]
      %v2348 = vld [vmem:[#allocation3 + $0x50] sm:$0xff]
      %v2349 = vld [vmem:[#allocation3 + $0x58] sm:$0xff]
      %v2350 = vld [vmem:[#allocation3 + $0x60] sm:$0xff]
      %v2351 = vld [vmem:[#allocation3 + $0x68] sm:$0xff]
      %v2352 = vld [vmem:[#allocation3 + $0x70] sm:$0xff]
      %v2353 = vld [vmem:[#allocation3 + $0x78] sm:$0xff]
      %v2354 = vld [vmem:[#allocation3 + $0x80] sm:$0xff]
      %v2355 = vld [vmem:[#allocation3 + $0x88] sm:$0xff]
      %v2356 = vld [vmem:[#allocation3 + $0x90] sm:$0xff]
      %v2357 = vld [vmem:[#allocation3 + $0x98] sm:$0xff]
      %v2358 = vld [vmem:[#allocation3 + $0xa0] sm:$0xff]
      %v2359 = vld [vmem:[#allocation3 + $0xa8] sm:$0xff]
      %v2360 = vld [vmem:[#allocation3 + $0xb0] sm:$0xff]
      %v2361 = vld [vmem:[#allocation3 + $0xb8] sm:$0xff]
      %v2362 = vld [vmem:[#allocation3 + $0xc0] sm:$0xff]
      %v2363 = vld [vmem:[#allocation3 + $0xc8] sm:$0xff]
      %v2364 = vld [vmem:[#allocation3 + $0xd0] sm:$0xff]
      %v2365 = vld [vmem:[#allocation3 + $0xd8] sm:$0xff]
      %v2366 = vld [vmem:[#allocation3 + $0xe0] sm:$0xff]
      %v2367 = vld [vmem:[#allocation3 + $0xe8] sm:$0xff]
      %v2368 = vld [vmem:[#allocation3 + $0xf0] sm:$0xff]
      %v2369 = vld [vmem:[#allocation3 + $0xf8] sm:$0xff]
      %v2370 = vpack.c.bf16 %v2307, %v2306
      %v2371 = vpack.c.bf16 %v2309, %v2308
      %v2372 = vpack.c.bf16 %v2311, %v2310
      %v2373 = vpack.c.bf16 %v2313, %v2312
      %v2374 = vpack.c.bf16 %v2315, %v2314
      %v2375 = vpack.c.bf16 %v2317, %v2316
      %v2376 = vpack.c.bf16 %v2319, %v2318
      %v2377 = vpack.c.bf16 %v2321, %v2320
      %v2378 = vpack.c.bf16 %v2323, %v2322
      %v2379 = vpack.c.bf16 %v2325, %v2324
      %v2380 = vpack.c.bf16 %v2327, %v2326
      %v2381 = vpack.c.bf16 %v2329, %v2328
      %v2382 = vpack.c.bf16 %v2331, %v2330
      %v2383 = vpack.c.bf16 %v2333, %v2332
      %v2384 = vpack.c.bf16 %v2335, %v2334
      %v2385 = vpack.c.bf16 %v2337, %v2336
      %s2386 = scalar_lea.vmem %s1, 192
      %v2387 = vld [vmem:[%s2386] sm:$0xf]
      %v2388 = vld [vmem:[%s2386 + $0x4] sm:$0xf]
      %v2389 = vld [vmem:[%s2386 + $0x8] sm:$0xf]
      %v2390 = vld [vmem:[%s2386 + $0xc] sm:$0xf]
      %v2391 = vld [vmem:[%s2386 + $0x10] sm:$0xf]
      %v2392 = vld [vmem:[%s2386 + $0x14] sm:$0xf]
      %v2393 = vld [vmem:[%s2386 + $0x18] sm:$0xf]
      %v2394 = vld [vmem:[%s2386 + $0x1c] sm:$0xf]
      %v2395 = vld [vmem:[%s2386 + $0x20] sm:$0xf]
      %v2396 = vld [vmem:[%s2386 + $0x24] sm:$0xf]
      %v2397 = vld [vmem:[%s2386 + $0x28] sm:$0xf]
      %v2398 = vld [vmem:[%s2386 + $0x2c] sm:$0xf]
      %v2399 = vld [vmem:[%s2386 + $0x30] sm:$0xf]
      %v2400 = vld [vmem:[%s2386 + $0x34] sm:$0xf]
      %v2401 = vld [vmem:[%s2386 + $0x38] sm:$0xf]
      %v2402 = vld [vmem:[%s2386 + $0x3c] sm:$0xf]
      %v2419 = vunpack.c.l.b16 %v2387
      %v2420 = vunpack.c.l.b16 %v2388
      %v2421 = vunpack.c.l.b16 %v2389
      %v2422 = vunpack.c.l.b16 %v2390
      %v2423 = vunpack.c.l.b16 %v2391
      %v2424 = vunpack.c.l.b16 %v2392
      %v2425 = vunpack.c.l.b16 %v2393
      %v2426 = vunpack.c.l.b16 %v2394
      %v2427 = vunpack.c.l.b16 %v2395
      %v2428 = vunpack.c.l.b16 %v2396
      %v2429 = vunpack.c.l.b16 %v2397
      %v2430 = vunpack.c.l.b16 %v2398
      %v2431 = vunpack.c.l.b16 %v2399
      %v2432 = vunpack.c.l.b16 %v2400
      %v2433 = vunpack.c.l.b16 %v2401
      %v2434 = vunpack.c.l.b16 %v2402
      %v2435 = vpack.c.b16 %v2420, %v2419
      %v2436 = vpack.c.b16 %v2422, %v2421
      %v2437 = vpack.c.b16 %v2424, %v2423
      %v2438 = vpack.c.b16 %v2426, %v2425
      %v2439 = vpack.c.b16 %v2428, %v2427
      %v2440 = vpack.c.b16 %v2430, %v2429
      %v2441 = vpack.c.b16 %v2432, %v2431
      %v2442 = vpack.c.b16 %v2434, %v2433
      %2451 = vmatprep.subr.bf16.mxu0 0
      %2452 = vmatpush1.bf16.msra.mxu0 %v2442
      %2453 = vmatprep.subr.bf16.mxu0 0
      %2454 = vmatpush1.bf16.msra.mxu0 %v2441
      %2455 = vmatprep.subr.bf16.mxu0 0
      %2456 = vmatpush1.bf16.msra.mxu0 %v2440
      %2457 = vmatprep.subr.bf16.mxu0 0
      %2458 = vmatpush1.bf16.msra.mxu0 %v2439
      %2459 = vmatprep.subr.bf16.mxu0 0
      %2460 = vmatpush1.bf16.msra.mxu0 %v2438
      %2461 = vmatprep.subr.bf16.mxu0 0
      %2462 = vmatpush1.bf16.msra.mxu0 %v2437
      %2463 = vmatprep.subr.bf16.mxu0 0
      %2464 = vmatpush1.bf16.msra.mxu0 %v2436
      %2465 = vmatprep.subr.bf16.mxu0 0
      %2466 = vmatpush1.bf16.msra.mxu0 %v2435
      %2467 = vmatprep.subr.bf16.mxu0 0
      %2468 = vmatpush2.bf16.msra.mxu0 0
      %2469 = vmatprep.subr.bf16.mxu0 0
      %2470 = vmatpush2.bf16.msra.mxu0 0
      %2471 = vmatprep.subr.bf16.mxu0 0
      %2472 = vmatpush2.bf16.msra.mxu0 0
      %2473 = vmatprep.subr.bf16.mxu0 0
      %2474 = vmatpush2.bf16.msra.mxu0 0
      %2475 = vmatprep.subr.bf16.mxu0 0
      %2476 = vmatpush2.bf16.msra.mxu0 0
      %2477 = vmatprep.subr.bf16.mxu0 0
      %2478 = vmatpush2.bf16.msra.mxu0 0
      %2479 = vmatprep.subr.bf16.mxu0 0
      %2480 = vmatpush2.bf16.msra.mxu0 0
      %2481 = vmatprep.subr.bf16.mxu0 0
      %2482 = vmatpush2.bf16.msra.mxu0 0
      %2483 = vmatprep.mubr.bf16.mxu0 0
      %2484 = vmatmul.mubr.bf16.gmra.mxu0 %v2370
      %v2485 = vpop.f32.mrf.mxu0
      %v2486 = vadd.f32 0.0, %v2485
      %v2487 = vpop.f32.mrf.mxu0
      %v2488 = vpop.f32.mrf.mxu0
      %v2489 = vadd.f32 0.0, %v2488
      %v2490 = vpop.f32.mrf.mxu0
      %2491 = vmatprep.mubr.bf16.mxu0 0
      %2492 = vmatmul.mubr.bf16.gmra.mxu0 %v2371
      %v2493 = vpop.f32.mrf.mxu0
      %v2494 = vadd.f32 0.0, %v2493
      %v2495 = vpop.f32.mrf.mxu0
      %v2496 = vpop.f32.mrf.mxu0
      %v2497 = vadd.f32 0.0, %v2496
      %v2498 = vpop.f32.mrf.mxu0
      %2499 = vmatprep.mubr.bf16.mxu0 0
      %2500 = vmatmul.mubr.bf16.gmra.mxu0 %v2372
      %v2501 = vpop.f32.mrf.mxu0
      %v2502 = vadd.f32 0.0, %v2501
      %v2503 = vpop.f32.mrf.mxu0
      %v2504 = vpop.f32.mrf.mxu0
      %v2505 = vadd.f32 0.0, %v2504
      %v2506 = vpop.f32.mrf.mxu0
      %2507 = vmatprep.mubr.bf16.mxu0 0
      %2508 = vmatmul.mubr.bf16.gmra.mxu0 %v2373
      %v2509 = vpop.f32.mrf.mxu0
      %v2510 = vadd.f32 0.0, %v2509
      %v2511 = vpop.f32.mrf.mxu0
      %v2512 = vpop.f32.mrf.mxu0
      %v2513 = vadd.f32 0.0, %v2512
      %v2514 = vpop.f32.mrf.mxu0
      %2515 = vmatprep.mubr.bf16.mxu0 0
      %2516 = vmatmul.mubr.bf16.gmra.mxu0 %v2374
      %v2517 = vpop.f32.mrf.mxu0
      %v2518 = vadd.f32 0.0, %v2517
      %v2519 = vpop.f32.mrf.mxu0
      %v2520 = vpop.f32.mrf.mxu0
      %v2521 = vadd.f32 0.0, %v2520
      %v2522 = vpop.f32.mrf.mxu0
      %2523 = vmatprep.mubr.bf16.mxu0 0
      %2524 = vmatmul.mubr.bf16.gmra.mxu0 %v2375
      %v2525 = vpop.f32.mrf.mxu0
      %v2526 = vadd.f32 0.0, %v2525
      %v2527 = vpop.f32.mrf.mxu0
      %v2528 = vpop.f32.mrf.mxu0
      %v2529 = vadd.f32 0.0, %v2528
      %v2530 = vpop.f32.mrf.mxu0
      %2531 = vmatprep.mubr.bf16.mxu0 0
      %2532 = vmatmul.mubr.bf16.gmra.mxu0 %v2376
      %v2533 = vpop.f32.mrf.mxu0
      %v2534 = vadd.f32 0.0, %v2533
      %v2535 = vpop.f32.mrf.mxu0
      %v2536 = vpop.f32.mrf.mxu0
      %v2537 = vadd.f32 0.0, %v2536
      %v2538 = vpop.f32.mrf.mxu0
      %2539 = vmatprep.mubr.bf16.mxu0 0
      %2540 = vmatmul.mubr.bf16.gmra.mxu0 %v2377
      %v2541 = vpop.f32.mrf.mxu0
      %v2542 = vadd.f32 0.0, %v2541
      %v2543 = vpop.f32.mrf.mxu0
      %v2544 = vpop.f32.mrf.mxu0
      %v2545 = vadd.f32 0.0, %v2544
      %v2546 = vpop.f32.mrf.mxu0
      %2547 = vmatprep.mubr.bf16.mxu0 0
      %2548 = vmatmul.mubr.bf16.gmra.mxu0 %v2378
      %v2549 = vpop.f32.mrf.mxu0
      %v2550 = vadd.f32 0.0, %v2549
      %v2551 = vpop.f32.mrf.mxu0
      %v2552 = vpop.f32.mrf.mxu0
      %v2553 = vadd.f32 0.0, %v2552
      %v2554 = vpop.f32.mrf.mxu0
      %2555 = vmatprep.mubr.bf16.mxu0 0
      %2556 = vmatmul.mubr.bf16.gmra.mxu0 %v2379
      %v2557 = vpop.f32.mrf.mxu0
      %v2558 = vadd.f32 0.0, %v2557
      %v2559 = vpop.f32.mrf.mxu0
      %v2560 = vpop.f32.mrf.mxu0
      %v2561 = vadd.f32 0.0, %v2560
      %v2562 = vpop.f32.mrf.mxu0
      %2563 = vmatprep.mubr.bf16.mxu0 0
      %2564 = vmatmul.mubr.bf16.gmra.mxu0 %v2380
      %v2565 = vpop.f32.mrf.mxu0
      %v2566 = vadd.f32 0.0, %v2565
      %v2567 = vpop.f32.mrf.mxu0
      %v2568 = vpop.f32.mrf.mxu0
      %v2569 = vadd.f32 0.0, %v2568
      %v2570 = vpop.f32.mrf.mxu0
      %2571 = vmatprep.mubr.bf16.mxu0 0
      %2572 = vmatmul.mubr.bf16.gmra.mxu0 %v2381
      %v2573 = vpop.f32.mrf.mxu0
      %v2574 = vadd.f32 0.0, %v2573
      %v2575 = vpop.f32.mrf.mxu0
      %v2576 = vpop.f32.mrf.mxu0
      %v2577 = vadd.f32 0.0, %v2576
      %v2578 = vpop.f32.mrf.mxu0
      %2579 = vmatprep.mubr.bf16.mxu0 0
      %2580 = vmatmul.mubr.bf16.gmra.mxu0 %v2382
      %v2581 = vpop.f32.mrf.mxu0
      %v2582 = vadd.f32 0.0, %v2581
      %v2583 = vpop.f32.mrf.mxu0
      %v2584 = vpop.f32.mrf.mxu0
      %v2585 = vadd.f32 0.0, %v2584
      %v2586 = vpop.f32.mrf.mxu0
      %2587 = vmatprep.mubr.bf16.mxu0 0
      %2588 = vmatmul.mubr.bf16.gmra.mxu0 %v2383
      %v2589 = vpop.f32.mrf.mxu0
      %v2590 = vadd.f32 0.0, %v2589
      %v2591 = vpop.f32.mrf.mxu0
      %v2592 = vpop.f32.mrf.mxu0
      %v2593 = vadd.f32 0.0, %v2592
      %v2594 = vpop.f32.mrf.mxu0
      %2595 = vmatprep.mubr.bf16.mxu0 0
      %2596 = vmatmul.mubr.bf16.gmra.mxu0 %v2384
      %v2597 = vpop.f32.mrf.mxu0
      %v2598 = vadd.f32 0.0, %v2597
      %v2599 = vpop.f32.mrf.mxu0
      %v2600 = vpop.f32.mrf.mxu0
      %v2601 = vadd.f32 0.0, %v2600
      %v2602 = vpop.f32.mrf.mxu0
      %2603 = vmatprep.mubr.bf16.mxu0 0
      %2604 = vmatmul.mubr.bf16.gmra.mxu0 %v2385
      %v2605 = vpop.f32.mrf.mxu0
      %v2606 = vadd.f32 0.0, %v2605
      %v2607 = vpop.f32.mrf.mxu0
      %v2608 = vpop.f32.mrf.mxu0
      %v2609 = vadd.f32 0.0, %v2608
      %v2610 = vpop.f32.mrf.mxu0
      %2611 = vdwg.mxu0
      %v2612 = vadd.f32 %v2338, %v2486
      %v2613 = vadd.f32 %v2339, %v2489
      %v2614 = vadd.f32 %v2340, %v2494
      %v2615 = vadd.f32 %v2341, %v2497
      %v2616 = vadd.f32 %v2342, %v2502
      %v2617 = vadd.f32 %v2343, %v2505
      %v2618 = vadd.f32 %v2344, %v2510
      %v2619 = vadd.f32 %v2345, %v2513
      %v2620 = vadd.f32 %v2346, %v2518
      %v2621 = vadd.f32 %v2347, %v2521
      %v2622 = vadd.f32 %v2348, %v2526
      %v2623 = vadd.f32 %v2349, %v2529
      %v2624 = vadd.f32 %v2350, %v2534
      %v2625 = vadd.f32 %v2351, %v2537
      %v2626 = vadd.f32 %v2352, %v2542
      %v2627 = vadd.f32 %v2353, %v2545
      %v2628 = vadd.f32 %v2354, %v2550
      %v2629 = vadd.f32 %v2355, %v2553
      %v2630 = vadd.f32 %v2356, %v2558
      %v2631 = vadd.f32 %v2357, %v2561
      %v2632 = vadd.f32 %v2358, %v2566
      %v2633 = vadd.f32 %v2359, %v2569
      %v2634 = vadd.f32 %v2360, %v2574
      %v2635 = vadd.f32 %v2361, %v2577
      %v2636 = vadd.f32 %v2362, %v2582
      %v2637 = vadd.f32 %v2363, %v2585
      %v2638 = vadd.f32 %v2364, %v2590
      %v2639 = vadd.f32 %v2365, %v2593
      %v2640 = vadd.f32 %v2366, %v2598
      %v2641 = vadd.f32 %v2367, %v2601
      %v2642 = vadd.f32 %v2368, %v2606
      %v2643 = vadd.f32 %v2369, %v2609
      %2644 = vst [vmem:[#allocation3] sm:$0xff] %v2612
      %2645 = vst [vmem:[#allocation3 + $0x8] sm:$0xff] %v2613
      %2646 = vst [vmem:[#allocation3 + $0x10] sm:$0xff] %v2614
      %2647 = vst [vmem:[#allocation3 + $0x18] sm:$0xff] %v2615
      %2648 = vst [vmem:[#allocation3 + $0x20] sm:$0xff] %v2616
      %2649 = vst [vmem:[#allocation3 + $0x28] sm:$0xff] %v2617
      %2650 = vst [vmem:[#allocation3 + $0x30] sm:$0xff] %v2618
      %2651 = vst [vmem:[#allocation3 + $0x38] sm:$0xff] %v2619
      %2652 = vst [vmem:[#allocation3 + $0x40] sm:$0xff] %v2620
      %2653 = vst [vmem:[#allocation3 + $0x48] sm:$0xff] %v2621
      %2654 = vst [vmem:[#allocation3 + $0x50] sm:$0xff] %v2622
      %2655 = vst [vmem:[#allocation3 + $0x58] sm:$0xff] %v2623
      %2656 = vst [vmem:[#allocation3 + $0x60] sm:$0xff] %v2624
      %2657 = vst [vmem:[#allocation3 + $0x68] sm:$0xff] %v2625
      %2658 = vst [vmem:[#allocation3 + $0x70] sm:$0xff] %v2626
      %2659 = vst [vmem:[#allocation3 + $0x78] sm:$0xff] %v2627
      %2660 = vst [vmem:[#allocation3 + $0x80] sm:$0xff] %v2628
      %2661 = vst [vmem:[#allocation3 + $0x88] sm:$0xff] %v2629
      %2662 = vst [vmem:[#allocation3 + $0x90] sm:$0xff] %v2630
      %2663 = vst [vmem:[#allocation3 + $0x98] sm:$0xff] %v2631
      %2664 = vst [vmem:[#allocation3 + $0xa0] sm:$0xff] %v2632
      %2665 = vst [vmem:[#allocation3 + $0xa8] sm:$0xff] %v2633
      %2666 = vst [vmem:[#allocation3 + $0xb0] sm:$0xff] %v2634
      %2667 = vst [vmem:[#allocation3 + $0xb8] sm:$0xff] %v2635
      %2668 = vst [vmem:[#allocation3 + $0xc0] sm:$0xff] %v2636
      %2669 = vst [vmem:[#allocation3 + $0xc8] sm:$0xff] %v2637
      %2670 = vst [vmem:[#allocation3 + $0xd0] sm:$0xff] %v2638
      %2671 = vst [vmem:[#allocation3 + $0xd8] sm:$0xff] %v2639
      %2672 = vst [vmem:[#allocation3 + $0xe0] sm:$0xff] %v2640
      %2673 = vst [vmem:[#allocation3 + $0xe8] sm:$0xff] %v2641
      %2674 = vst [vmem:[#allocation3 + $0xf0] sm:$0xff] %v2642
      %2675 = vst [vmem:[#allocation3 + $0xf8] sm:$0xff] %v2643
      %v2676 = vld [vmem:[#allocation3] sm:$0xff]
      %v2677 = vld [vmem:[#allocation3 + $0x8] sm:$0xff]
      %v2678 = vld [vmem:[#allocation3 + $0x10] sm:$0xff]
      %v2679 = vld [vmem:[#allocation3 + $0x18] sm:$0xff]
      %v2680 = vld [vmem:[#allocation3 + $0x20] sm:$0xff]
      %v2681 = vld [vmem:[#allocation3 + $0x28] sm:$0xff]
      %v2682 = vld [vmem:[#allocation3 + $0x30] sm:$0xff]
      %v2683 = vld [vmem:[#allocation3 + $0x38] sm:$0xff]
      %v2684 = vld [vmem:[#allocation3 + $0x40] sm:$0xff]
      %v2685 = vld [vmem:[#allocation3 + $0x48] sm:$0xff]
      %v2686 = vld [vmem:[#allocation3 + $0x50] sm:$0xff]
      %v2687 = vld [vmem:[#allocation3 + $0x58] sm:$0xff]
      %v2688 = vld [vmem:[#allocation3 + $0x60] sm:$0xff]
      %v2689 = vld [vmem:[#allocation3 + $0x68] sm:$0xff]
      %v2690 = vld [vmem:[#allocation3 + $0x70] sm:$0xff]
      %v2691 = vld [vmem:[#allocation3 + $0x78] sm:$0xff]
      %v2692 = vld [vmem:[#allocation3 + $0x80] sm:$0xff]
      %v2693 = vld [vmem:[#allocation3 + $0x88] sm:$0xff]
      %v2694 = vld [vmem:[#allocation3 + $0x90] sm:$0xff]
      %v2695 = vld [vmem:[#allocation3 + $0x98] sm:$0xff]
      %v2696 = vld [vmem:[#allocation3 + $0xa0] sm:$0xff]
      %v2697 = vld [vmem:[#allocation3 + $0xa8] sm:$0xff]
      %v2698 = vld [vmem:[#allocation3 + $0xb0] sm:$0xff]
      %v2699 = vld [vmem:[#allocation3 + $0xb8] sm:$0xff]
      %v2700 = vld [vmem:[#allocation3 + $0xc0] sm:$0xff]
      %v2701 = vld [vmem:[#allocation3 + $0xc8] sm:$0xff]
      %v2702 = vld [vmem:[#allocation3 + $0xd0] sm:$0xff]
      %v2703 = vld [vmem:[#allocation3 + $0xd8] sm:$0xff]
      %v2704 = vld [vmem:[#allocation3 + $0xe0] sm:$0xff]
      %v2705 = vld [vmem:[#allocation3 + $0xe8] sm:$0xff]
      %v2706 = vld [vmem:[#allocation3 + $0xf0] sm:$0xff]
      %v2707 = vld [vmem:[#allocation3 + $0xf8] sm:$0xff]
      %v2708 = vpack.c.bf16 %v2019, %v2018
      %v2709 = vpack.c.bf16 %v2021, %v2020
      %v2710 = vpack.c.bf16 %v2023, %v2022
      %v2711 = vpack.c.bf16 %v2025, %v2024
      %v2712 = vpack.c.bf16 %v2027, %v2026
      %v2713 = vpack.c.bf16 %v2029, %v2028
      %v2714 = vpack.c.bf16 %v2031, %v2030
      %v2715 = vpack.c.bf16 %v2033, %v2032
      %v2716 = vpack.c.bf16 %v2035, %v2034
      %v2717 = vpack.c.bf16 %v2037, %v2036
      %v2718 = vpack.c.bf16 %v2039, %v2038
      %v2719 = vpack.c.bf16 %v2041, %v2040
      %v2720 = vpack.c.bf16 %v2043, %v2042
      %v2721 = vpack.c.bf16 %v2045, %v2044
      %v2722 = vpack.c.bf16 %v2047, %v2046
      %v2723 = vpack.c.bf16 %v2049, %v2048
      %s2724 = scalar_lea.vmem %s1, 256
      %v2725 = vld [vmem:[%s2724] sm:$0xf]
      %v2726 = vld [vmem:[%s2724 + $0x4] sm:$0xf]
      %v2727 = vld [vmem:[%s2724 + $0x8] sm:$0xf]
      %v2728 = vld [vmem:[%s2724 + $0xc] sm:$0xf]
      %v2729 = vld [vmem:[%s2724 + $0x10] sm:$0xf]
      %v2730 = vld [vmem:[%s2724 + $0x14] sm:$0xf]
      %v2731 = vld [vmem:[%s2724 + $0x18] sm:$0xf]
      %v2732 = vld [vmem:[%s2724 + $0x1c] sm:$0xf]
      %v2733 = vld [vmem:[%s2724 + $0x20] sm:$0xf]
      %v2734 = vld [vmem:[%s2724 + $0x24] sm:$0xf]
      %v2735 = vld [vmem:[%s2724 + $0x28] sm:$0xf]
      %v2736 = vld [vmem:[%s2724 + $0x2c] sm:$0xf]
      %v2737 = vld [vmem:[%s2724 + $0x30] sm:$0xf]
      %v2738 = vld [vmem:[%s2724 + $0x34] sm:$0xf]
      %v2739 = vld [vmem:[%s2724 + $0x38] sm:$0xf]
      %v2740 = vld [vmem:[%s2724 + $0x3c] sm:$0xf]
      %v2757 = vunpack.c.l.b16 %v2725
      %v2758 = vunpack.c.l.b16 %v2726
      %v2759 = vunpack.c.l.b16 %v2727
      %v2760 = vunpack.c.l.b16 %v2728
      %v2761 = vunpack.c.l.b16 %v2729
      %v2762 = vunpack.c.l.b16 %v2730
      %v2763 = vunpack.c.l.b16 %v2731
      %v2764 = vunpack.c.l.b16 %v2732
      %v2765 = vunpack.c.l.b16 %v2733
      %v2766 = vunpack.c.l.b16 %v2734
      %v2767 = vunpack.c.l.b16 %v2735
      %v2768 = vunpack.c.l.b16 %v2736
      %v2769 = vunpack.c.l.b16 %v2737
      %v2770 = vunpack.c.l.b16 %v2738
      %v2771 = vunpack.c.l.b16 %v2739
      %v2772 = vunpack.c.l.b16 %v2740
      %v2773 = vpack.c.b16 %v2758, %v2757
      %v2774 = vpack.c.b16 %v2760, %v2759
      %v2775 = vpack.c.b16 %v2762, %v2761
      %v2776 = vpack.c.b16 %v2764, %v2763
      %v2777 = vpack.c.b16 %v2766, %v2765
      %v2778 = vpack.c.b16 %v2768, %v2767
      %v2779 = vpack.c.b16 %v2770, %v2769
      %v2780 = vpack.c.b16 %v2772, %v2771
      %2789 = vmatprep.subr.bf16.mxu0 0
      %2790 = vmatpush1.bf16.msra.mxu0 %v2780
      %2791 = vmatprep.subr.bf16.mxu0 0
      %2792 = vmatpush1.bf16.msra.mxu0 %v2779
      %2793 = vmatprep.subr.bf16.mxu0 0
      %2794 = vmatpush1.bf16.msra.mxu0 %v2778
      %2795 = vmatprep.subr.bf16.mxu0 0
      %2796 = vmatpush1.bf16.msra.mxu0 %v2777
      %2797 = vmatprep.subr.bf16.mxu0 0
      %2798 = vmatpush1.bf16.msra.mxu0 %v2776
      %2799 = vmatprep.subr.bf16.mxu0 0
      %2800 = vmatpush1.bf16.msra.mxu0 %v2775
      %2801 = vmatprep.subr.bf16.mxu0 0
      %2802 = vmatpush1.bf16.msra.mxu0 %v2774
      %2803 = vmatprep.subr.bf16.mxu0 0
      %2804 = vmatpush1.bf16.msra.mxu0 %v2773
      %2805 = vmatprep.subr.bf16.mxu0 0
      %2806 = vmatpush2.bf16.msra.mxu0 0
      %2807 = vmatprep.subr.bf16.mxu0 0
      %2808 = vmatpush2.bf16.msra.mxu0 0
      %2809 = vmatprep.subr.bf16.mxu0 0
      %2810 = vmatpush2.bf16.msra.mxu0 0
      %2811 = vmatprep.subr.bf16.mxu0 0
      %2812 = vmatpush2.bf16.msra.mxu0 0
      %2813 = vmatprep.subr.bf16.mxu0 0
      %2814 = vmatpush2.bf16.msra.mxu0 0
      %2815 = vmatprep.subr.bf16.mxu0 0
      %2816 = vmatpush2.bf16.msra.mxu0 0
      %2817 = vmatprep.subr.bf16.mxu0 0
      %2818 = vmatpush2.bf16.msra.mxu0 0
      %2819 = vmatprep.subr.bf16.mxu0 0
      %2820 = vmatpush2.bf16.msra.mxu0 0
      %2821 = vmatprep.mubr.bf16.mxu0 0
      %2822 = vmatmul.mubr.bf16.gmra.mxu0 %v2708
      %v2823 = vpop.f32.mrf.mxu0
      %v2824 = vadd.f32 0.0, %v2823
      %v2825 = vpop.f32.mrf.mxu0
      %v2826 = vpop.f32.mrf.mxu0
      %v2827 = vadd.f32 0.0, %v2826
      %v2828 = vpop.f32.mrf.mxu0
      %2829 = vmatprep.mubr.bf16.mxu0 0
      %2830 = vmatmul.mubr.bf16.gmra.mxu0 %v2709
      %v2831 = vpop.f32.mrf.mxu0
      %v2832 = vadd.f32 0.0, %v2831
      %v2833 = vpop.f32.mrf.mxu0
      %v2834 = vpop.f32.mrf.mxu0
      %v2835 = vadd.f32 0.0, %v2834
      %v2836 = vpop.f32.mrf.mxu0
      %2837 = vmatprep.mubr.bf16.mxu0 0
      %2838 = vmatmul.mubr.bf16.gmra.mxu0 %v2710
      %v2839 = vpop.f32.mrf.mxu0
      %v2840 = vadd.f32 0.0, %v2839
      %v2841 = vpop.f32.mrf.mxu0
      %v2842 = vpop.f32.mrf.mxu0
      %v2843 = vadd.f32 0.0, %v2842
      %v2844 = vpop.f32.mrf.mxu0
      %2845 = vmatprep.mubr.bf16.mxu0 0
      %2846 = vmatmul.mubr.bf16.gmra.mxu0 %v2711
      %v2847 = vpop.f32.mrf.mxu0
      %v2848 = vadd.f32 0.0, %v2847
      %v2849 = vpop.f32.mrf.mxu0
      %v2850 = vpop.f32.mrf.mxu0
      %v2851 = vadd.f32 0.0, %v2850
      %v2852 = vpop.f32.mrf.mxu0
      %2853 = vmatprep.mubr.bf16.mxu0 0
      %2854 = vmatmul.mubr.bf16.gmra.mxu0 %v2712
      %v2855 = vpop.f32.mrf.mxu0
      %v2856 = vadd.f32 0.0, %v2855
      %v2857 = vpop.f32.mrf.mxu0
      %v2858 = vpop.f32.mrf.mxu0
      %v2859 = vadd.f32 0.0, %v2858
      %v2860 = vpop.f32.mrf.mxu0
      %2861 = vmatprep.mubr.bf16.mxu0 0
      %2862 = vmatmul.mubr.bf16.gmra.mxu0 %v2713
      %v2863 = vpop.f32.mrf.mxu0
      %v2864 = vadd.f32 0.0, %v2863
      %v2865 = vpop.f32.mrf.mxu0
      %v2866 = vpop.f32.mrf.mxu0
      %v2867 = vadd.f32 0.0, %v2866
      %v2868 = vpop.f32.mrf.mxu0
      %2869 = vmatprep.mubr.bf16.mxu0 0
      %2870 = vmatmul.mubr.bf16.gmra.mxu0 %v2714
      %v2871 = vpop.f32.mrf.mxu0
      %v2872 = vadd.f32 0.0, %v2871
      %v2873 = vpop.f32.mrf.mxu0
      %v2874 = vpop.f32.mrf.mxu0
      %v2875 = vadd.f32 0.0, %v2874
      %v2876 = vpop.f32.mrf.mxu0
      %2877 = vmatprep.mubr.bf16.mxu0 0
      %2878 = vmatmul.mubr.bf16.gmra.mxu0 %v2715
      %v2879 = vpop.f32.mrf.mxu0
      %v2880 = vadd.f32 0.0, %v2879
      %v2881 = vpop.f32.mrf.mxu0
      %v2882 = vpop.f32.mrf.mxu0
      %v2883 = vadd.f32 0.0, %v2882
      %v2884 = vpop.f32.mrf.mxu0
      %2885 = vmatprep.mubr.bf16.mxu0 0
      %2886 = vmatmul.mubr.bf16.gmra.mxu0 %v2716
      %v2887 = vpop.f32.mrf.mxu0
      %v2888 = vadd.f32 0.0, %v2887
      %v2889 = vpop.f32.mrf.mxu0
      %v2890 = vpop.f32.mrf.mxu0
      %v2891 = vadd.f32 0.0, %v2890
      %v2892 = vpop.f32.mrf.mxu0
      %2893 = vmatprep.mubr.bf16.mxu0 0
      %2894 = vmatmul.mubr.bf16.gmra.mxu0 %v2717
      %v2895 = vpop.f32.mrf.mxu0
      %v2896 = vadd.f32 0.0, %v2895
      %v2897 = vpop.f32.mrf.mxu0
      %v2898 = vpop.f32.mrf.mxu0
      %v2899 = vadd.f32 0.0, %v2898
      %v2900 = vpop.f32.mrf.mxu0
      %2901 = vmatprep.mubr.bf16.mxu0 0
      %2902 = vmatmul.mubr.bf16.gmra.mxu0 %v2718
      %v2903 = vpop.f32.mrf.mxu0
      %v2904 = vadd.f32 0.0, %v2903
      %v2905 = vpop.f32.mrf.mxu0
      %v2906 = vpop.f32.mrf.mxu0
      %v2907 = vadd.f32 0.0, %v2906
      %v2908 = vpop.f32.mrf.mxu0
      %2909 = vmatprep.mubr.bf16.mxu0 0
      %2910 = vmatmul.mubr.bf16.gmra.mxu0 %v2719
      %v2911 = vpop.f32.mrf.mxu0
      %v2912 = vadd.f32 0.0, %v2911
      %v2913 = vpop.f32.mrf.mxu0
      %v2914 = vpop.f32.mrf.mxu0
      %v2915 = vadd.f32 0.0, %v2914
      %v2916 = vpop.f32.mrf.mxu0
      %2917 = vmatprep.mubr.bf16.mxu0 0
      %2918 = vmatmul.mubr.bf16.gmra.mxu0 %v2720
      %v2919 = vpop.f32.mrf.mxu0
      %v2920 = vadd.f32 0.0, %v2919
      %v2921 = vpop.f32.mrf.mxu0
      %v2922 = vpop.f32.mrf.mxu0
      %v2923 = vadd.f32 0.0, %v2922
      %v2924 = vpop.f32.mrf.mxu0
      %2925 = vmatprep.mubr.bf16.mxu0 0
      %2926 = vmatmul.mubr.bf16.gmra.mxu0 %v2721
      %v2927 = vpop.f32.mrf.mxu0
      %v2928 = vadd.f32 0.0, %v2927
      %v2929 = vpop.f32.mrf.mxu0
      %v2930 = vpop.f32.mrf.mxu0
      %v2931 = vadd.f32 0.0, %v2930
      %v2932 = vpop.f32.mrf.mxu0
      %2933 = vmatprep.mubr.bf16.mxu0 0
      %2934 = vmatmul.mubr.bf16.gmra.mxu0 %v2722
      %v2935 = vpop.f32.mrf.mxu0
      %v2936 = vadd.f32 0.0, %v2935
      %v2937 = vpop.f32.mrf.mxu0
      %v2938 = vpop.f32.mrf.mxu0
      %v2939 = vadd.f32 0.0, %v2938
      %v2940 = vpop.f32.mrf.mxu0
      %2941 = vmatprep.mubr.bf16.mxu0 0
      %2942 = vmatmul.mubr.bf16.gmra.mxu0 %v2723
      %v2943 = vpop.f32.mrf.mxu0
      %v2944 = vadd.f32 0.0, %v2943
      %v2945 = vpop.f32.mrf.mxu0
      %v2946 = vpop.f32.mrf.mxu0
      %v2947 = vadd.f32 0.0, %v2946
      %v2948 = vpop.f32.mrf.mxu0
      %2949 = vdwg.mxu0
      %v2950 = vadd.f32 %v2676, %v2824
      %v2951 = vadd.f32 %v2677, %v2827
      %v2952 = vadd.f32 %v2678, %v2832
      %v2953 = vadd.f32 %v2679, %v2835
      %v2954 = vadd.f32 %v2680, %v2840
      %v2955 = vadd.f32 %v2681, %v2843
      %v2956 = vadd.f32 %v2682, %v2848
      %v2957 = vadd.f32 %v2683, %v2851
      %v2958 = vadd.f32 %v2684, %v2856
      %v2959 = vadd.f32 %v2685, %v2859
      %v2960 = vadd.f32 %v2686, %v2864
      %v2961 = vadd.f32 %v2687, %v2867
      %v2962 = vadd.f32 %v2688, %v2872
      %v2963 = vadd.f32 %v2689, %v2875
      %v2964 = vadd.f32 %v2690, %v2880
      %v2965 = vadd.f32 %v2691, %v2883
      %v2966 = vadd.f32 %v2692, %v2888
      %v2967 = vadd.f32 %v2693, %v2891
      %v2968 = vadd.f32 %v2694, %v2896
      %v2969 = vadd.f32 %v2695, %v2899
      %v2970 = vadd.f32 %v2696, %v2904
      %v2971 = vadd.f32 %v2697, %v2907
      %v2972 = vadd.f32 %v2698, %v2912
      %v2973 = vadd.f32 %v2699, %v2915
      %v2974 = vadd.f32 %v2700, %v2920
      %v2975 = vadd.f32 %v2701, %v2923
      %v2976 = vadd.f32 %v2702, %v2928
      %v2977 = vadd.f32 %v2703, %v2931
      %v2978 = vadd.f32 %v2704, %v2936
      %v2979 = vadd.f32 %v2705, %v2939
      %v2980 = vadd.f32 %v2706, %v2944
      %v2981 = vadd.f32 %v2707, %v2947
      %2982 = vst [vmem:[#allocation3] sm:$0xff] %v2950
      %2983 = vst [vmem:[#allocation3 + $0x8] sm:$0xff] %v2951
      %2984 = vst [vmem:[#allocation3 + $0x10] sm:$0xff] %v2952
      %2985 = vst [vmem:[#allocation3 + $0x18] sm:$0xff] %v2953
      %2986 = vst [vmem:[#allocation3 + $0x20] sm:$0xff] %v2954
      %2987 = vst [vmem:[#allocation3 + $0x28] sm:$0xff] %v2955
      %2988 = vst [vmem:[#allocation3 + $0x30] sm:$0xff] %v2956
      %2989 = vst [vmem:[#allocation3 + $0x38] sm:$0xff] %v2957
      %2990 = vst [vmem:[#allocation3 + $0x40] sm:$0xff] %v2958
      %2991 = vst [vmem:[#allocation3 + $0x48] sm:$0xff] %v2959
      %2992 = vst [vmem:[#allocation3 + $0x50] sm:$0xff] %v2960
      %2993 = vst [vmem:[#allocation3 + $0x58] sm:$0xff] %v2961
      %2994 = vst [vmem:[#allocation3 + $0x60] sm:$0xff] %v2962
      %2995 = vst [vmem:[#allocation3 + $0x68] sm:$0xff] %v2963
      %2996 = vst [vmem:[#allocation3 + $0x70] sm:$0xff] %v2964
      %2997 = vst [vmem:[#allocation3 + $0x78] sm:$0xff] %v2965
      %2998 = vst [vmem:[#allocation3 + $0x80] sm:$0xff] %v2966
      %2999 = vst [vmem:[#allocation3 + $0x88] sm:$0xff] %v2967
      %3000 = vst [vmem:[#allocation3 + $0x90] sm:$0xff] %v2968
      %3001 = vst [vmem:[#allocation3 + $0x98] sm:$0xff] %v2969
      %3002 = vst [vmem:[#allocation3 + $0xa0] sm:$0xff] %v2970
      %3003 = vst [vmem:[#allocation3 + $0xa8] sm:$0xff] %v2971
      %3004 = vst [vmem:[#allocation3 + $0xb0] sm:$0xff] %v2972
      %3005 = vst [vmem:[#allocation3 + $0xb8] sm:$0xff] %v2973
      %3006 = vst [vmem:[#allocation3 + $0xc0] sm:$0xff] %v2974
      %3007 = vst [vmem:[#allocation3 + $0xc8] sm:$0xff] %v2975
      %3008 = vst [vmem:[#allocation3 + $0xd0] sm:$0xff] %v2976
      %3009 = vst [vmem:[#allocation3 + $0xd8] sm:$0xff] %v2977
      %3010 = vst [vmem:[#allocation3 + $0xe0] sm:$0xff] %v2978
      %3011 = vst [vmem:[#allocation3 + $0xe8] sm:$0xff] %v2979
      %3012 = vst [vmem:[#allocation3 + $0xf0] sm:$0xff] %v2980
      %3013 = vst [vmem:[#allocation3 + $0xf8] sm:$0xff] %v2981
      %v3014 = vrot.slane %v2018, 1
      %v3015 = vrot.slane %v2019, 1
      %v3016 = vrot.slane %v2020, 1
      %v3017 = vrot.slane %v2021, 1
      %v3018 = vrot.slane %v2022, 1
      %v3019 = vrot.slane %v2023, 1
      %v3020 = vrot.slane %v2024, 1
      %v3021 = vrot.slane %v2025, 1
      %v3022 = vrot.slane %v2026, 1
      %v3023 = vrot.slane %v2027, 1
      %v3024 = vrot.slane %v2028, 1
      %v3025 = vrot.slane %v2029, 1
      %v3026 = vrot.slane %v2030, 1
      %v3027 = vrot.slane %v2031, 1
      %v3028 = vrot.slane %v2032, 1
      %v3029 = vrot.slane %v2033, 1
      %v3030 = vrot.slane %v2034, 1
      %v3031 = vrot.slane %v2035, 1
      %v3032 = vrot.slane %v2036, 1
      %v3033 = vrot.slane %v2037, 1
      %v3034 = vrot.slane %v2038, 1
      %v3035 = vrot.slane %v2039, 1
      %v3036 = vrot.slane %v2040, 1
      %v3037 = vrot.slane %v2041, 1
      %v3038 = vrot.slane %v2042, 1
      %v3039 = vrot.slane %v2043, 1
      %v3040 = vrot.slane %v2044, 1
      %v3041 = vrot.slane %v2045, 1
      %v3042 = vrot.slane %v2046, 1
      %v3043 = vrot.slane %v2047, 1
      %v3044 = vrot.slane %v2048, 1
      %v3045 = vrot.slane %v2049, 1
      %v3046 = vsel %vm1422, %v3044, %v3045
      %v3047 = vsel %vm1422, %v3043, %v3044
      %v3048 = vsel %vm1422, %v3042, %v3043
      %v3049 = vsel %vm1422, %v3041, %v3042
      %v3050 = vsel %vm1422, %v3040, %v3041
      %v3051 = vsel %vm1422, %v3039, %v3040
      %v3052 = vsel %vm1422, %v3038, %v3039
      %v3053 = vsel %vm1422, %v3037, %v3038
      %v3054 = vsel %vm1422, %v3036, %v3037
      %v3055 = vsel %vm1422, %v3035, %v3036
      %v3056 = vsel %vm1422, %v3034, %v3035
      %v3057 = vsel %vm1422, %v3033, %v3034
      %v3058 = vsel %vm1422, %v3032, %v3033
      %v3059 = vsel %vm1422, %v3031, %v3032
      %v3060 = vsel %vm1422, %v3030, %v3031
      %v3061 = vsel %vm1422, %v3029, %v3030
      %v3062 = vsel %vm1422, %v3028, %v3029
      %v3063 = vsel %vm1422, %v3027, %v3028
      %v3064 = vsel %vm1422, %v3026, %v3027
      %v3065 = vsel %vm1422, %v3025, %v3026
      %v3066 = vsel %vm1422, %v3024, %v3025
      %v3067 = vsel %vm1422, %v3023, %v3024
      %v3068 = vsel %vm1422, %v3022, %v3023
      %v3069 = vsel %vm1422, %v3021, %v3022
      %v3070 = vsel %vm1422, %v3020, %v3021
      %v3071 = vsel %vm1422, %v3019, %v3020
      %v3072 = vsel %vm1422, %v3018, %v3019
      %v3073 = vsel %vm1422, %v3017, %v3018
      %v3074 = vsel %vm1422, %v3016, %v3017
      %v3075 = vsel %vm1422, %v3015, %v3016
      %v3076 = vsel %vm1422, %v3014, %v3015
      %v3077 = vsel %vm1422, %v3045, %v3014
      %v3078 = vld [vmem:[%s1455] sm:$0xff]
      %v3079 = vld [vmem:[%s1455 + $0x8] sm:$0xff]
      %v3080 = vld [vmem:[%s1455 + $0x10] sm:$0xff]
      %v3081 = vld [vmem:[%s1455 + $0x18] sm:$0xff]
      %v3082 = vld [vmem:[%s1455 + $0x20] sm:$0xff]
      %v3083 = vld [vmem:[%s1455 + $0x28] sm:$0xff]
      %v3084 = vld [vmem:[%s1455 + $0x30] sm:$0xff]
      %v3085 = vld [vmem:[%s1455 + $0x38] sm:$0xff]
      %v3086 = vld [vmem:[%s1455 + $0x40] sm:$0xff]
      %v3087 = vld [vmem:[%s1455 + $0x48] sm:$0xff]
      %v3088 = vld [vmem:[%s1455 + $0x50] sm:$0xff]
      %v3089 = vld [vmem:[%s1455 + $0x58] sm:$0xff]
      %v3090 = vld [vmem:[%s1455 + $0x60] sm:$0xff]
      %v3091 = vld [vmem:[%s1455 + $0x68] sm:$0xff]
      %v3092 = vld [vmem:[%s1455 + $0x70] sm:$0xff]
      %v3093 = vld [vmem:[%s1455 + $0x78] sm:$0xff]
      %v3094 = vld [vmem:[%s1455 + $0x80] sm:$0xff]
      %v3095 = vld [vmem:[%s1455 + $0x88] sm:$0xff]
      %v3096 = vld [vmem:[%s1455 + $0x90] sm:$0xff]
      %v3097 = vld [vmem:[%s1455 + $0x98] sm:$0xff]
      %v3098 = vld [vmem:[%s1455 + $0xa0] sm:$0xff]
      %v3099 = vld [vmem:[%s1455 + $0xa8] sm:$0xff]
      %v3100 = vld [vmem:[%s1455 + $0xb0] sm:$0xff]
      %v3101 = vld [vmem:[%s1455 + $0xb8] sm:$0xff]
      %v3102 = vld [vmem:[%s1455 + $0xc0] sm:$0xff]
      %v3103 = vld [vmem:[%s1455 + $0xc8] sm:$0xff]
      %v3104 = vld [vmem:[%s1455 + $0xd0] sm:$0xff]
      %v3105 = vld [vmem:[%s1455 + $0xd8] sm:$0xff]
      %v3106 = vld [vmem:[%s1455 + $0xe0] sm:$0xff]
      %v3107 = vld [vmem:[%s1455 + $0xe8] sm:$0xff]
      %v3108 = vld [vmem:[%s1455 + $0xf0] sm:$0xff]
      %v3109 = vld [vmem:[%s1455 + $0xf8] sm:$0xff]
      %3111 = vset.pattern.permute.xlu0 0
      %3112 = vperm.xlu0 %3111, %v3078
      %v3113 = vpop.permute.xlu0 %3112
      %3116 = vset.pattern.permute.xlu0 0
      %3117 = vperm.xlu0 %3116, %v3079
      %v3118 = vpop.permute.xlu0 %3117
      %3121 = vset.pattern.permute.xlu0 0
      %3122 = vperm.xlu0 %3121, %v3080
      %v3123 = vpop.permute.xlu0 %3122
      %3126 = vset.pattern.permute.xlu0 0
      %3127 = vperm.xlu0 %3126, %v3081
      %v3128 = vpop.permute.xlu0 %3127
      %3131 = vset.pattern.permute.xlu0 0
      %3132 = vperm.xlu0 %3131, %v3082
      %v3133 = vpop.permute.xlu0 %3132
      %3136 = vset.pattern.permute.xlu0 0
      %3137 = vperm.xlu0 %3136, %v3083
      %v3138 = vpop.permute.xlu0 %3137
      %3141 = vset.pattern.permute.xlu0 0
      %3142 = vperm.xlu0 %3141, %v3084
      %v3143 = vpop.permute.xlu0 %3142
      %3146 = vset.pattern.permute.xlu0 0
      %3147 = vperm.xlu0 %3146, %v3085
      %v3148 = vpop.permute.xlu0 %3147
      %3151 = vset.pattern.permute.xlu0 0
      %3152 = vperm.xlu0 %3151, %v3086
      %v3153 = vpop.permute.xlu0 %3152
      %3156 = vset.pattern.permute.xlu0 0
      %3157 = vperm.xlu0 %3156, %v3087
      %v3158 = vpop.permute.xlu0 %3157
      %3161 = vset.pattern.permute.xlu0 0
      %3162 = vperm.xlu0 %3161, %v3088
      %v3163 = vpop.permute.xlu0 %3162
      %3166 = vset.pattern.permute.xlu0 0
      %3167 = vperm.xlu0 %3166, %v3089
      %v3168 = vpop.permute.xlu0 %3167
      %3171 = vset.pattern.permute.xlu0 0
      %3172 = vperm.xlu0 %3171, %v3090
      %v3173 = vpop.permute.xlu0 %3172
      %3176 = vset.pattern.permute.xlu0 0
      %3177 = vperm.xlu0 %3176, %v3091
      %v3178 = vpop.permute.xlu0 %3177
      %3181 = vset.pattern.permute.xlu0 0
      %3182 = vperm.xlu0 %3181, %v3092
      %v3183 = vpop.permute.xlu0 %3182
      %3186 = vset.pattern.permute.xlu0 0
      %3187 = vperm.xlu0 %3186, %v3093
      %v3188 = vpop.permute.xlu0 %3187
      %3191 = vset.pattern.permute.xlu0 0
      %3192 = vperm.xlu0 %3191, %v3094
      %v3193 = vpop.permute.xlu0 %3192
      %3196 = vset.pattern.permute.xlu0 0
      %3197 = vperm.xlu0 %3196, %v3095
      %v3198 = vpop.permute.xlu0 %3197
      %3201 = vset.pattern.permute.xlu0 0
      %3202 = vperm.xlu0 %3201, %v3096
      %v3203 = vpop.permute.xlu0 %3202
      %3206 = vset.pattern.permute.xlu0 0
      %3207 = vperm.xlu0 %3206, %v3097
      %v3208 = vpop.permute.xlu0 %3207
      %3211 = vset.pattern.permute.xlu0 0
      %3212 = vperm.xlu0 %3211, %v3098
      %v3213 = vpop.permute.xlu0 %3212
      %3216 = vset.pattern.permute.xlu0 0
      %3217 = vperm.xlu0 %3216, %v3099
      %v3218 = vpop.permute.xlu0 %3217
      %3221 = vset.pattern.permute.xlu0 0
      %3222 = vperm.xlu0 %3221, %v3100
      %v3223 = vpop.permute.xlu0 %3222
      %3226 = vset.pattern.permute.xlu0 0
      %3227 = vperm.xlu0 %3226, %v3101
      %v3228 = vpop.permute.xlu0 %3227
      %3231 = vset.pattern.permute.xlu0 0
      %3232 = vperm.xlu0 %3231, %v3102
      %v3233 = vpop.permute.xlu0 %3232
      %3236 = vset.pattern.permute.xlu0 0
      %3237 = vperm.xlu0 %3236, %v3103
      %v3238 = vpop.permute.xlu0 %3237
      %3241 = vset.pattern.permute.xlu0 0
      %3242 = vperm.xlu0 %3241, %v3104
      %v3243 = vpop.permute.xlu0 %3242
      %3246 = vset.pattern.permute.xlu0 0
      %3247 = vperm.xlu0 %3246, %v3105
      %v3248 = vpop.permute.xlu0 %3247
      %3251 = vset.pattern.permute.xlu0 0
      %3252 = vperm.xlu0 %3251, %v3106
      %v3253 = vpop.permute.xlu0 %3252
      %3256 = vset.pattern.permute.xlu0 0
      %3257 = vperm.xlu0 %3256, %v3107
      %v3258 = vpop.permute.xlu0 %3257
      %3261 = vset.pattern.permute.xlu0 0
      %3262 = vperm.xlu0 %3261, %v3108
      %v3263 = vpop.permute.xlu0 %3262
      %3266 = vset.pattern.permute.xlu0 0
      %3267 = vperm.xlu0 %3266, %v3109
      %v3268 = vpop.permute.xlu0 %3267
      %v3270 = vmul.f32 %v3076, %v3113
      %v3271 = vmul.f32 %v3075, %v3118
      %v3272 = vmul.f32 %v3074, %v3123
      %v3273 = vmul.f32 %v3073, %v3128
      %v3274 = vmul.f32 %v3072, %v3133
      %v3275 = vmul.f32 %v3071, %v3138
      %v3276 = vmul.f32 %v3070, %v3143
      %v3277 = vmul.f32 %v3069, %v3148
      %v3278 = vmul.f32 %v3068, %v3153
      %v3279 = vmul.f32 %v3067, %v3158
      %v3280 = vmul.f32 %v3066, %v3163
      %v3281 = vmul.f32 %v3065, %v3168
      %v3282 = vmul.f32 %v3064, %v3173
      %v3283 = vmul.f32 %v3063, %v3178
      %v3284 = vmul.f32 %v3062, %v3183
      %v3285 = vmul.f32 %v3061, %v3188
      %v3286 = vmul.f32 %v3060, %v3193
      %v3287 = vmul.f32 %v3059, %v3198
      %v3288 = vmul.f32 %v3058, %v3203
      %v3289 = vmul.f32 %v3057, %v3208
      %v3290 = vmul.f32 %v3056, %v3213
      %v3291 = vmul.f32 %v3055, %v3218
      %v3292 = vmul.f32 %v3054, %v3223
      %v3293 = vmul.f32 %v3053, %v3228
      %v3294 = vmul.f32 %v3052, %v3233
      %v3295 = vmul.f32 %v3051, %v3238
      %v3296 = vmul.f32 %v3050, %v3243
      %v3297 = vmul.f32 %v3049, %v3248
      %v3298 = vmul.f32 %v3048, %v3253
      %v3299 = vmul.f32 %v3047, %v3258
      %v3300 = vmul.f32 %v3046, %v3263
      %v3301 = vmul.f32 %v3077, %v3268
      %v3302 = vld [vmem:[#allocation3] sm:$0xff]
      %v3303 = vld [vmem:[#allocation3 + $0x8] sm:$0xff]
      %v3304 = vld [vmem:[#allocation3 + $0x10] sm:$0xff]
      %v3305 = vld [vmem:[#allocation3 + $0x18] sm:$0xff]
      %v3306 = vld [vmem:[#allocation3 + $0x20] sm:$0xff]
      %v3307 = vld [vmem:[#allocation3 + $0x28] sm:$0xff]
      %v3308 = vld [vmem:[#allocation3 + $0x30] sm:$0xff]
      %v3309 = vld [vmem:[#allocation3 + $0x38] sm:$0xff]
      %v3310 = vld [vmem:[#allocation3 + $0x40] sm:$0xff]
      %v3311 = vld [vmem:[#allocation3 + $0x48] sm:$0xff]
      %v3312 = vld [vmem:[#allocation3 + $0x50] sm:$0xff]
      %v3313 = vld [vmem:[#allocation3 + $0x58] sm:$0xff]
      %v3314 = vld [vmem:[#allocation3 + $0x60] sm:$0xff]
      %v3315 = vld [vmem:[#allocation3 + $0x68] sm:$0xff]
      %v3316 = vld [vmem:[#allocation3 + $0x70] sm:$0xff]
      %v3317 = vld [vmem:[#allocation3 + $0x78] sm:$0xff]
      %v3318 = vld [vmem:[#allocation3 + $0x80] sm:$0xff]
      %v3319 = vld [vmem:[#allocation3 + $0x88] sm:$0xff]
      %v3320 = vld [vmem:[#allocation3 + $0x90] sm:$0xff]
      %v3321 = vld [vmem:[#allocation3 + $0x98] sm:$0xff]
      %v3322 = vld [vmem:[#allocation3 + $0xa0] sm:$0xff]
      %v3323 = vld [vmem:[#allocation3 + $0xa8] sm:$0xff]
      %v3324 = vld [vmem:[#allocation3 + $0xb0] sm:$0xff]
      %v3325 = vld [vmem:[#allocation3 + $0xb8] sm:$0xff]
      %v3326 = vld [vmem:[#allocation3 + $0xc0] sm:$0xff]
      %v3327 = vld [vmem:[#allocation3 + $0xc8] sm:$0xff]
      %v3328 = vld [vmem:[#allocation3 + $0xd0] sm:$0xff]
      %v3329 = vld [vmem:[#allocation3 + $0xd8] sm:$0xff]
      %v3330 = vld [vmem:[#allocation3 + $0xe0] sm:$0xff]
      %v3331 = vld [vmem:[#allocation3 + $0xe8] sm:$0xff]
      %v3332 = vld [vmem:[#allocation3 + $0xf0] sm:$0xff]
      %v3333 = vld [vmem:[#allocation3 + $0xf8] sm:$0xff]
      %v3334 = vpack.c.bf16 %v3271, %v3270
      %v3335 = vpack.c.bf16 %v3273, %v3272
      %v3336 = vpack.c.bf16 %v3275, %v3274
      %v3337 = vpack.c.bf16 %v3277, %v3276
      %v3338 = vpack.c.bf16 %v3279, %v3278
      %v3339 = vpack.c.bf16 %v3281, %v3280
      %v3340 = vpack.c.bf16 %v3283, %v3282
      %v3341 = vpack.c.bf16 %v3285, %v3284
      %v3342 = vpack.c.bf16 %v3287, %v3286
      %v3343 = vpack.c.bf16 %v3289, %v3288
      %v3344 = vpack.c.bf16 %v3291, %v3290
      %v3345 = vpack.c.bf16 %v3293, %v3292
      %v3346 = vpack.c.bf16 %v3295, %v3294
      %v3347 = vpack.c.bf16 %v3297, %v3296
      %v3348 = vpack.c.bf16 %v3299, %v3298
      %v3349 = vpack.c.bf16 %v3301, %v3300
      %s3350 = scalar_lea.vmem %s1, 320
      %v3351 = vld [vmem:[%s3350] sm:$0xf]
      %v3352 = vld [vmem:[%s3350 + $0x4] sm:$0xf]
      %v3353 = vld [vmem:[%s3350 + $0x8] sm:$0xf]
      %v3354 = vld [vmem:[%s3350 + $0xc] sm:$0xf]
      %v3355 = vld [vmem:[%s3350 + $0x10] sm:$0xf]
      %v3356 = vld [vmem:[%s3350 + $0x14] sm:$0xf]
      %v3357 = vld [vmem:[%s3350 + $0x18] sm:$0xf]
      %v3358 = vld [vmem:[%s3350 + $0x1c] sm:$0xf]
      %v3359 = vld [vmem:[%s3350 + $0x20] sm:$0xf]
      %v3360 = vld [vmem:[%s3350 + $0x24] sm:$0xf]
      %v3361 = vld [vmem:[%s3350 + $0x28] sm:$0xf]
      %v3362 = vld [vmem:[%s3350 + $0x2c] sm:$0xf]
      %v3363 = vld [vmem:[%s3350 + $0x30] sm:$0xf]
      %v3364 = vld [vmem:[%s3350 + $0x34] sm:$0xf]
      %v3365 = vld [vmem:[%s3350 + $0x38] sm:$0xf]
      %v3366 = vld [vmem:[%s3350 + $0x3c] sm:$0xf]
      %v3383 = vunpack.c.l.b16 %v3351
      %v3384 = vunpack.c.l.b16 %v3352
      %v3385 = vunpack.c.l.b16 %v3353
      %v3386 = vunpack.c.l.b16 %v3354
      %v3387 = vunpack.c.l.b16 %v3355
      %v3388 = vunpack.c.l.b16 %v3356
      %v3389 = vunpack.c.l.b16 %v3357
      %v3390 = vunpack.c.l.b16 %v3358
      %v3391 = vunpack.c.l.b16 %v3359
      %v3392 = vunpack.c.l.b16 %v3360
      %v3393 = vunpack.c.l.b16 %v3361
      %v3394 = vunpack.c.l.b16 %v3362
      %v3395 = vunpack.c.l.b16 %v3363
      %v3396 = vunpack.c.l.b16 %v3364
      %v3397 = vunpack.c.l.b16 %v3365
      %v3398 = vunpack.c.l.b16 %v3366
      %v3399 = vpack.c.b16 %v3384, %v3383
      %v3400 = vpack.c.b16 %v3386, %v3385
      %v3401 = vpack.c.b16 %v3388, %v3387
      %v3402 = vpack.c.b16 %v3390, %v3389
      %v3403 = vpack.c.b16 %v3392, %v3391
      %v3404 = vpack.c.b16 %v3394, %v3393
      %v3405 = vpack.c.b16 %v3396, %v3395
      %v3406 = vpack.c.b16 %v3398, %v3397
      %3415 = vmatprep.subr.bf16.mxu0 0
      %3416 = vmatpush1.bf16.msra.mxu0 %v3406
      %3417 = vmatprep.subr.bf16.mxu0 0
      %3418 = vmatpush1.bf16.msra.mxu0 %v3405
      %3419 = vmatprep.subr.bf16.mxu0 0
      %3420 = vmatpush1.bf16.msra.mxu0 %v3404
      %3421 = vmatprep.subr.bf16.mxu0 0
      %3422 = vmatpush1.bf16.msra.mxu0 %v3403
      %3423 = vmatprep.subr.bf16.mxu0 0
      %3424 = vmatpush1.bf16.msra.mxu0 %v3402
      %3425 = vmatprep.subr.bf16.mxu0 0
      %3426 = vmatpush1.bf16.msra.mxu0 %v3401
      %3427 = vmatprep.subr.bf16.mxu0 0
      %3428 = vmatpush1.bf16.msra.mxu0 %v3400
      %3429 = vmatprep.subr.bf16.mxu0 0
      %3430 = vmatpush1.bf16.msra.mxu0 %v3399
      %3431 = vmatprep.subr.bf16.mxu0 0
      %3432 = vmatpush2.bf16.msra.mxu0 0
      %3433 = vmatprep.subr.bf16.mxu0 0
      %3434 = vmatpush2.bf16.msra.mxu0 0
      %3435 = vmatprep.subr.bf16.mxu0 0
      %3436 = vmatpush2.bf16.msra.mxu0 0
      %3437 = vmatprep.subr.bf16.mxu0 0
      %3438 = vmatpush2.bf16.msra.mxu0 0
      %3439 = vmatprep.subr.bf16.mxu0 0
      %3440 = vmatpush2.bf16.msra.mxu0 0
      %3441 = vmatprep.subr.bf16.mxu0 0
      %3442 = vmatpush2.bf16.msra.mxu0 0
      %3443 = vmatprep.subr.bf16.mxu0 0
      %3444 = vmatpush2.bf16.msra.mxu0 0
      %3445 = vmatprep.subr.bf16.mxu0 0
      %3446 = vmatpush2.bf16.msra.mxu0 0
      %3447 = vmatprep.mubr.bf16.mxu0 0
      %3448 = vmatmul.mubr.bf16.gmra.mxu0 %v3334
      %v3449 = vpop.f32.mrf.mxu0
      %v3450 = vadd.f32 0.0, %v3449
      %v3451 = vpop.f32.mrf.mxu0
      %v3452 = vpop.f32.mrf.mxu0
      %v3453 = vadd.f32 0.0, %v3452
      %v3454 = vpop.f32.mrf.mxu0
      %3455 = vmatprep.mubr.bf16.mxu0 0
      %3456 = vmatmul.mubr.bf16.gmra.mxu0 %v3335
      %v3457 = vpop.f32.mrf.mxu0
      %v3458 = vadd.f32 0.0, %v3457
      %v3459 = vpop.f32.mrf.mxu0
      %v3460 = vpop.f32.mrf.mxu0
      %v3461 = vadd.f32 0.0, %v3460
      %v3462 = vpop.f32.mrf.mxu0
      %3463 = vmatprep.mubr.bf16.mxu0 0
      %3464 = vmatmul.mubr.bf16.gmra.mxu0 %v3336
      %v3465 = vpop.f32.mrf.mxu0
      %v3466 = vadd.f32 0.0, %v3465
      %v3467 = vpop.f32.mrf.mxu0
      %v3468 = vpop.f32.mrf.mxu0
      %v3469 = vadd.f32 0.0, %v3468
      %v3470 = vpop.f32.mrf.mxu0
      %3471 = vmatprep.mubr.bf16.mxu0 0
      %3472 = vmatmul.mubr.bf16.gmra.mxu0 %v3337
      %v3473 = vpop.f32.mrf.mxu0
      %v3474 = vadd.f32 0.0, %v3473
      %v3475 = vpop.f32.mrf.mxu0
      %v3476 = vpop.f32.mrf.mxu0
      %v3477 = vadd.f32 0.0, %v3476
      %v3478 = vpop.f32.mrf.mxu0
      %3479 = vmatprep.mubr.bf16.mxu0 0
      %3480 = vmatmul.mubr.bf16.gmra.mxu0 %v3338
      %v3481 = vpop.f32.mrf.mxu0
      %v3482 = vadd.f32 0.0, %v3481
      %v3483 = vpop.f32.mrf.mxu0
      %v3484 = vpop.f32.mrf.mxu0
      %v3485 = vadd.f32 0.0, %v3484
      %v3486 = vpop.f32.mrf.mxu0
      %3487 = vmatprep.mubr.bf16.mxu0 0
      %3488 = vmatmul.mubr.bf16.gmra.mxu0 %v3339
      %v3489 = vpop.f32.mrf.mxu0
      %v3490 = vadd.f32 0.0, %v3489
      %v3491 = vpop.f32.mrf.mxu0
      %v3492 = vpop.f32.mrf.mxu0
      %v3493 = vadd.f32 0.0, %v3492
      %v3494 = vpop.f32.mrf.mxu0
      %3495 = vmatprep.mubr.bf16.mxu0 0
      %3496 = vmatmul.mubr.bf16.gmra.mxu0 %v3340
      %v3497 = vpop.f32.mrf.mxu0
      %v3498 = vadd.f32 0.0, %v3497
      %v3499 = vpop.f32.mrf.mxu0
      %v3500 = vpop.f32.mrf.mxu0
      %v3501 = vadd.f32 0.0, %v3500
      %v3502 = vpop.f32.mrf.mxu0
      %3503 = vmatprep.mubr.bf16.mxu0 0
      %3504 = vmatmul.mubr.bf16.gmra.mxu0 %v3341
      %v3505 = vpop.f32.mrf.mxu0
      %v3506 = vadd.f32 0.0, %v3505
      %v3507 = vpop.f32.mrf.mxu0
      %v3508 = vpop.f32.mrf.mxu0
      %v3509 = vadd.f32 0.0, %v3508
      %v3510 = vpop.f32.mrf.mxu0
      %3511 = vmatprep.mubr.bf16.mxu0 0
      %3512 = vmatmul.mubr.bf16.gmra.mxu0 %v3342
      %v3513 = vpop.f32.mrf.mxu0
      %v3514 = vadd.f32 0.0, %v3513
      %v3515 = vpop.f32.mrf.mxu0
      %v3516 = vpop.f32.mrf.mxu0
      %v3517 = vadd.f32 0.0, %v3516
      %v3518 = vpop.f32.mrf.mxu0
      %3519 = vmatprep.mubr.bf16.mxu0 0
      %3520 = vmatmul.mubr.bf16.gmra.mxu0 %v3343
      %v3521 = vpop.f32.mrf.mxu0
      %v3522 = vadd.f32 0.0, %v3521
      %v3523 = vpop.f32.mrf.mxu0
      %v3524 = vpop.f32.mrf.mxu0
      %v3525 = vadd.f32 0.0, %v3524
      %v3526 = vpop.f32.mrf.mxu0
      %3527 = vmatprep.mubr.bf16.mxu0 0
      %3528 = vmatmul.mubr.bf16.gmra.mxu0 %v3344
      %v3529 = vpop.f32.mrf.mxu0
      %v3530 = vadd.f32 0.0, %v3529
      %v3531 = vpop.f32.mrf.mxu0
      %v3532 = vpop.f32.mrf.mxu0
      %v3533 = vadd.f32 0.0, %v3532
      %v3534 = vpop.f32.mrf.mxu0
      %3535 = vmatprep.mubr.bf16.mxu0 0
      %3536 = vmatmul.mubr.bf16.gmra.mxu0 %v3345
      %v3537 = vpop.f32.mrf.mxu0
      %v3538 = vadd.f32 0.0, %v3537
      %v3539 = vpop.f32.mrf.mxu0
      %v3540 = vpop.f32.mrf.mxu0
      %v3541 = vadd.f32 0.0, %v3540
      %v3542 = vpop.f32.mrf.mxu0
      %3543 = vmatprep.mubr.bf16.mxu0 0
      %3544 = vmatmul.mubr.bf16.gmra.mxu0 %v3346
      %v3545 = vpop.f32.mrf.mxu0
      %v3546 = vadd.f32 0.0, %v3545
      %v3547 = vpop.f32.mrf.mxu0
      %v3548 = vpop.f32.mrf.mxu0
      %v3549 = vadd.f32 0.0, %v3548
      %v3550 = vpop.f32.mrf.mxu0
      %3551 = vmatprep.mubr.bf16.mxu0 0
      %3552 = vmatmul.mubr.bf16.gmra.mxu0 %v3347
      %v3553 = vpop.f32.mrf.mxu0
      %v3554 = vadd.f32 0.0, %v3553
      %v3555 = vpop.f32.mrf.mxu0
      %v3556 = vpop.f32.mrf.mxu0
      %v3557 = vadd.f32 0.0, %v3556
      %v3558 = vpop.f32.mrf.mxu0
      %3559 = vmatprep.mubr.bf16.mxu0 0
      %3560 = vmatmul.mubr.bf16.gmra.mxu0 %v3348
      %v3561 = vpop.f32.mrf.mxu0
      %v3562 = vadd.f32 0.0, %v3561
      %v3563 = vpop.f32.mrf.mxu0
      %v3564 = vpop.f32.mrf.mxu0
      %v3565 = vadd.f32 0.0, %v3564
      %v3566 = vpop.f32.mrf.mxu0
      %3567 = vmatprep.mubr.bf16.mxu0 0
      %3568 = vmatmul.mubr.bf16.gmra.mxu0 %v3349
      %v3569 = vpop.f32.mrf.mxu0
      %v3570 = vadd.f32 0.0, %v3569
      %v3571 = vpop.f32.mrf.mxu0
      %v3572 = vpop.f32.mrf.mxu0
      %v3573 = vadd.f32 0.0, %v3572
      %v3574 = vpop.f32.mrf.mxu0
      %3575 = vdwg.mxu0
      %v3576 = vadd.f32 %v3302, %v3450
      %v3577 = vadd.f32 %v3303, %v3453
      %v3578 = vadd.f32 %v3304, %v3458
      %v3579 = vadd.f32 %v3305, %v3461
      %v3580 = vadd.f32 %v3306, %v3466
      %v3581 = vadd.f32 %v3307, %v3469
      %v3582 = vadd.f32 %v3308, %v3474
      %v3583 = vadd.f32 %v3309, %v3477
      %v3584 = vadd.f32 %v3310, %v3482
      %v3585 = vadd.f32 %v3311, %v3485
      %v3586 = vadd.f32 %v3312, %v3490
      %v3587 = vadd.f32 %v3313, %v3493
      %v3588 = vadd.f32 %v3314, %v3498
      %v3589 = vadd.f32 %v3315, %v3501
      %v3590 = vadd.f32 %v3316, %v3506
      %v3591 = vadd.f32 %v3317, %v3509
      %v3592 = vadd.f32 %v3318, %v3514
      %v3593 = vadd.f32 %v3319, %v3517
      %v3594 = vadd.f32 %v3320, %v3522
      %v3595 = vadd.f32 %v3321, %v3525
      %v3596 = vadd.f32 %v3322, %v3530
      %v3597 = vadd.f32 %v3323, %v3533
      %v3598 = vadd.f32 %v3324, %v3538
      %v3599 = vadd.f32 %v3325, %v3541
      %v3600 = vadd.f32 %v3326, %v3546
      %v3601 = vadd.f32 %v3327, %v3549
      %v3602 = vadd.f32 %v3328, %v3554
      %v3603 = vadd.f32 %v3329, %v3557
      %v3604 = vadd.f32 %v3330, %v3562
      %v3605 = vadd.f32 %v3331, %v3565
      %v3606 = vadd.f32 %v3332, %v3570
      %v3607 = vadd.f32 %v3333, %v3573
      %3608 = vst [vmem:[#allocation3] sm:$0xff] %v3576
      %3609 = vst [vmem:[#allocation3 + $0x8] sm:$0xff] %v3577
      %3610 = vst [vmem:[#allocation3 + $0x10] sm:$0xff] %v3578
      %3611 = vst [vmem:[#allocation3 + $0x18] sm:$0xff] %v3579
      %3612 = vst [vmem:[#allocation3 + $0x20] sm:$0xff] %v3580
      %3613 = vst [vmem:[#allocation3 + $0x28] sm:$0xff] %v3581
      %3614 = vst [vmem:[#allocation3 + $0x30] sm:$0xff] %v3582
      %3615 = vst [vmem:[#allocation3 + $0x38] sm:$0xff] %v3583
      %3616 = vst [vmem:[#allocation3 + $0x40] sm:$0xff] %v3584
      %3617 = vst [vmem:[#allocation3 + $0x48] sm:$0xff] %v3585
      %3618 = vst [vmem:[#allocation3 + $0x50] sm:$0xff] %v3586
      %3619 = vst [vmem:[#allocation3 + $0x58] sm:$0xff] %v3587
      %3620 = vst [vmem:[#allocation3 + $0x60] sm:$0xff] %v3588
      %3621 = vst [vmem:[#allocation3 + $0x68] sm:$0xff] %v3589
      %3622 = vst [vmem:[#allocation3 + $0x70] sm:$0xff] %v3590
      %3623 = vst [vmem:[#allocation3 + $0x78] sm:$0xff] %v3591
      %3624 = vst [vmem:[#allocation3 + $0x80] sm:$0xff] %v3592
      %3625 = vst [vmem:[#allocation3 + $0x88] sm:$0xff] %v3593
      %3626 = vst [vmem:[#allocation3 + $0x90] sm:$0xff] %v3594
      %3627 = vst [vmem:[#allocation3 + $0x98] sm:$0xff] %v3595
      %3628 = vst [vmem:[#allocation3 + $0xa0] sm:$0xff] %v3596
      %3629 = vst [vmem:[#allocation3 + $0xa8] sm:$0xff] %v3597
      %3630 = vst [vmem:[#allocation3 + $0xb0] sm:$0xff] %v3598
      %3631 = vst [vmem:[#allocation3 + $0xb8] sm:$0xff] %v3599
      %3632 = vst [vmem:[#allocation3 + $0xc0] sm:$0xff] %v3600
      %3633 = vst [vmem:[#allocation3 + $0xc8] sm:$0xff] %v3601
      %3634 = vst [vmem:[#allocation3 + $0xd0] sm:$0xff] %v3602
      %3635 = vst [vmem:[#allocation3 + $0xd8] sm:$0xff] %v3603
      %3636 = vst [vmem:[#allocation3 + $0xe0] sm:$0xff] %v3604
      %3637 = vst [vmem:[#allocation3 + $0xe8] sm:$0xff] %v3605
      %3638 = vst [vmem:[#allocation3 + $0xf0] sm:$0xff] %v3606
      %3639 = vst [vmem:[#allocation3 + $0xf8] sm:$0xff] %v3607
      %v3640 = vld [vmem:[#allocation2 + $0x20] sm:$0xff]
      %v3641 = vld [vmem:[#allocation2 + $0x28] sm:$0xff]
      %v3642 = vld [vmem:[#allocation2 + $0x30] sm:$0xff]
      %v3643 = vld [vmem:[#allocation2 + $0x38] sm:$0xff]
      %v3644 = vld [vmem:[#allocation2 + $0x40] sm:$0xff]
      %v3645 = vld [vmem:[#allocation2 + $0x48] sm:$0xff]
      %v3646 = vld [vmem:[#allocation2 + $0x50] sm:$0xff]
      %v3647 = vld [vmem:[#allocation2 + $0x58] sm:$0xff]
      %v3648 = vld [vmem:[#allocation2 + $0x60] sm:$0xff]
      %v3649 = vld [vmem:[#allocation2 + $0x68] sm:$0xff]
      %v3650 = vld [vmem:[#allocation2 + $0x70] sm:$0xff]
      %v3651 = vld [vmem:[#allocation2 + $0x78] sm:$0xff]
      %v3652 = vld [vmem:[#allocation2 + $0x80] sm:$0xff]
      %v3653 = vld [vmem:[#allocation2 + $0x88] sm:$0xff]
      %v3654 = vld [vmem:[#allocation2 + $0x90] sm:$0xff]
      %v3655 = vld [vmem:[#allocation2 + $0x98] sm:$0xff]
      %v3656 = vld [vmem:[#allocation2 + $0xa0] sm:$0xff]
      %v3657 = vld [vmem:[#allocation2 + $0xa8] sm:$0xff]
      %v3658 = vld [vmem:[#allocation2 + $0xb0] sm:$0xff]
      %v3659 = vld [vmem:[#allocation2 + $0xb8] sm:$0xff]
      %v3660 = vld [vmem:[#allocation2 + $0xc0] sm:$0xff]
      %v3661 = vld [vmem:[#allocation2 + $0xc8] sm:$0xff]
      %v3662 = vld [vmem:[#allocation2 + $0xd0] sm:$0xff]
      %v3663 = vld [vmem:[#allocation2 + $0xd8] sm:$0xff]
      %v3664 = vld [vmem:[#allocation2 + $0xe0] sm:$0xff]
      %v3665 = vld [vmem:[#allocation2 + $0xe8] sm:$0xff]
      %v3666 = vld [vmem:[#allocation2 + $0xf0] sm:$0xff]
      %v3667 = vld [vmem:[#allocation2 + $0xf8] sm:$0xff]
      %v3668 = vld [vmem:[#allocation2 + $0x100] sm:$0xff]
      %v3669 = vld [vmem:[#allocation2 + $0x108] sm:$0xff]
      %v3670 = vld [vmem:[#allocation2 + $0x110] sm:$0xff]
      %v3671 = vld [vmem:[#allocation2 + $0x118] sm:$0xff]
      %v3672 = vrot.slane %v3640, 7
      %v3673 = vrot.slane %v3641, 7
      %v3674 = vrot.slane %v3642, 7
      %v3675 = vrot.slane %v3643, 7
      %v3676 = vrot.slane %v3644, 7
      %v3677 = vrot.slane %v3645, 7
      %v3678 = vrot.slane %v3646, 7
      %v3679 = vrot.slane %v3647, 7
      %v3680 = vrot.slane %v3648, 7
      %v3681 = vrot.slane %v3649, 7
      %v3682 = vrot.slane %v3650, 7
      %v3683 = vrot.slane %v3651, 7
      %v3684 = vrot.slane %v3652, 7
      %v3685 = vrot.slane %v3653, 7
      %v3686 = vrot.slane %v3654, 7
      %v3687 = vrot.slane %v3655, 7
      %v3688 = vrot.slane %v3656, 7
      %v3689 = vrot.slane %v3657, 7
      %v3690 = vrot.slane %v3658, 7
      %v3691 = vrot.slane %v3659, 7
      %v3692 = vrot.slane %v3660, 7
      %v3693 = vrot.slane %v3661, 7
      %v3694 = vrot.slane %v3662, 7
      %v3695 = vrot.slane %v3663, 7
      %v3696 = vrot.slane %v3664, 7
      %v3697 = vrot.slane %v3665, 7
      %v3698 = vrot.slane %v3666, 7
      %v3699 = vrot.slane %v3667, 7
      %v3700 = vrot.slane %v3668, 7
      %v3701 = vrot.slane %v3669, 7
      %v3702 = vrot.slane %v3670, 7
      %v3703 = vrot.slane %v3671, 7
      %v3704 = vsel %vm458, %v3702, %v3703
      %v3705 = vsel %vm458, %v3701, %v3702
      %v3706 = vsel %vm458, %v3700, %v3701
      %v3707 = vsel %vm458, %v3699, %v3700
      %v3708 = vsel %vm458, %v3698, %v3699
      %v3709 = vsel %vm458, %v3697, %v3698
      %v3710 = vsel %vm458, %v3696, %v3697
      %v3711 = vsel %vm458, %v3695, %v3696
      %v3712 = vsel %vm458, %v3694, %v3695
      %v3713 = vsel %vm458, %v3693, %v3694
      %v3714 = vsel %vm458, %v3692, %v3693
      %v3715 = vsel %vm458, %v3691, %v3692
      %v3716 = vsel %vm458, %v3690, %v3691
      %v3717 = vsel %vm458, %v3689, %v3690
      %v3718 = vsel %vm458, %v3688, %v3689
      %v3719 = vsel %vm458, %v3687, %v3688
      %v3720 = vsel %vm458, %v3686, %v3687
      %v3721 = vsel %vm458, %v3685, %v3686
      %v3722 = vsel %vm458, %v3684, %v3685
      %v3723 = vsel %vm458, %v3683, %v3684
      %v3724 = vsel %vm458, %v3682, %v3683
      %v3725 = vsel %vm458, %v3681, %v3682
      %v3726 = vsel %vm458, %v3680, %v3681
      %v3727 = vsel %vm458, %v3679, %v3680
      %v3728 = vsel %vm458, %v3678, %v3679
      %v3729 = vsel %vm458, %v3677, %v3678
      %v3730 = vsel %vm458, %v3676, %v3677
      %v3731 = vsel %vm458, %v3675, %v3676
      %v3732 = vsel %vm458, %v3674, %v3675
      %v3733 = vsel %vm458, %v3673, %v3674
      %v3734 = vsel %vm458, %v3672, %v3673
      %v3735 = vsel %vm458, %v3703, %v3672
      %v3736 = vld [vmem:[%s5] sm:$0xff]
      %v3737 = vld [vmem:[%s5 + $0x8] sm:$0xff]
      %v3738 = vld [vmem:[%s5 + $0x10] sm:$0xff]
      %v3739 = vld [vmem:[%s5 + $0x18] sm:$0xff]
      %v3740 = vld [vmem:[%s5 + $0x20] sm:$0xff]
      %v3741 = vld [vmem:[%s5 + $0x28] sm:$0xff]
      %v3742 = vld [vmem:[%s5 + $0x30] sm:$0xff]
      %v3743 = vld [vmem:[%s5 + $0x38] sm:$0xff]
      %v3744 = vld [vmem:[%s5 + $0x40] sm:$0xff]
      %v3745 = vld [vmem:[%s5 + $0x48] sm:$0xff]
      %v3746 = vld [vmem:[%s5 + $0x50] sm:$0xff]
      %v3747 = vld [vmem:[%s5 + $0x58] sm:$0xff]
      %v3748 = vld [vmem:[%s5 + $0x60] sm:$0xff]
      %v3749 = vld [vmem:[%s5 + $0x68] sm:$0xff]
      %v3750 = vld [vmem:[%s5 + $0x70] sm:$0xff]
      %v3751 = vld [vmem:[%s5 + $0x78] sm:$0xff]
      %v3752 = vld [vmem:[%s5 + $0x80] sm:$0xff]
      %v3753 = vld [vmem:[%s5 + $0x88] sm:$0xff]
      %v3754 = vld [vmem:[%s5 + $0x90] sm:$0xff]
      %v3755 = vld [vmem:[%s5 + $0x98] sm:$0xff]
      %v3756 = vld [vmem:[%s5 + $0xa0] sm:$0xff]
      %v3757 = vld [vmem:[%s5 + $0xa8] sm:$0xff]
      %v3758 = vld [vmem:[%s5 + $0xb0] sm:$0xff]
      %v3759 = vld [vmem:[%s5 + $0xb8] sm:$0xff]
      %v3760 = vld [vmem:[%s5 + $0xc0] sm:$0xff]
      %v3761 = vld [vmem:[%s5 + $0xc8] sm:$0xff]
      %v3762 = vld [vmem:[%s5 + $0xd0] sm:$0xff]
      %v3763 = vld [vmem:[%s5 + $0xd8] sm:$0xff]
      %v3764 = vld [vmem:[%s5 + $0xe0] sm:$0xff]
      %v3765 = vld [vmem:[%s5 + $0xe8] sm:$0xff]
      %v3766 = vld [vmem:[%s5 + $0xf0] sm:$0xff]
      %v3767 = vld [vmem:[%s5 + $0xf8] sm:$0xff]
      %3769 = vset.pattern.permute.xlu0 0
      %3770 = vperm.xlu0 %3769, %v3736
      %v3771 = vpop.permute.xlu0 %3770
      %3774 = vset.pattern.permute.xlu0 0
      %3775 = vperm.xlu0 %3774, %v3737
      %v3776 = vpop.permute.xlu0 %3775
      %3779 = vset.pattern.permute.xlu0 0
      %3780 = vperm.xlu0 %3779, %v3738
      %v3781 = vpop.permute.xlu0 %3780
      %3784 = vset.pattern.permute.xlu0 0
      %3785 = vperm.xlu0 %3784, %v3739
      %v3786 = vpop.permute.xlu0 %3785
      %3789 = vset.pattern.permute.xlu0 0
      %3790 = vperm.xlu0 %3789, %v3740
      %v3791 = vpop.permute.xlu0 %3790
      %3794 = vset.pattern.permute.xlu0 0
      %3795 = vperm.xlu0 %3794, %v3741
      %v3796 = vpop.permute.xlu0 %3795
      %3799 = vset.pattern.permute.xlu0 0
      %3800 = vperm.xlu0 %3799, %v3742
      %v3801 = vpop.permute.xlu0 %3800
      %3804 = vset.pattern.permute.xlu0 0
      %3805 = vperm.xlu0 %3804, %v3743
      %v3806 = vpop.permute.xlu0 %3805
      %3809 = vset.pattern.permute.xlu0 0
      %3810 = vperm.xlu0 %3809, %v3744
      %v3811 = vpop.permute.xlu0 %3810
      %3814 = vset.pattern.permute.xlu0 0
      %3815 = vperm.xlu0 %3814, %v3745
      %v3816 = vpop.permute.xlu0 %3815
      %3819 = vset.pattern.permute.xlu0 0
      %3820 = vperm.xlu0 %3819, %v3746
      %v3821 = vpop.permute.xlu0 %3820
      %3824 = vset.pattern.permute.xlu0 0
      %3825 = vperm.xlu0 %3824, %v3747
      %v3826 = vpop.permute.xlu0 %3825
      %3829 = vset.pattern.permute.xlu0 0
      %3830 = vperm.xlu0 %3829, %v3748
      %v3831 = vpop.permute.xlu0 %3830
      %3834 = vset.pattern.permute.xlu0 0
      %3835 = vperm.xlu0 %3834, %v3749
      %v3836 = vpop.permute.xlu0 %3835
      %3839 = vset.pattern.permute.xlu0 0
      %3840 = vperm.xlu0 %3839, %v3750
      %v3841 = vpop.permute.xlu0 %3840
      %3844 = vset.pattern.permute.xlu0 0
      %3845 = vperm.xlu0 %3844, %v3751
      %v3846 = vpop.permute.xlu0 %3845
      %3849 = vset.pattern.permute.xlu0 0
      %3850 = vperm.xlu0 %3849, %v3752
      %v3851 = vpop.permute.xlu0 %3850
      %3854 = vset.pattern.permute.xlu0 0
      %3855 = vperm.xlu0 %3854, %v3753
      %v3856 = vpop.permute.xlu0 %3855
      %3859 = vset.pattern.permute.xlu0 0
      %3860 = vperm.xlu0 %3859, %v3754
      %v3861 = vpop.permute.xlu0 %3860
      %3864 = vset.pattern.permute.xlu0 0
      %3865 = vperm.xlu0 %3864, %v3755
      %v3866 = vpop.permute.xlu0 %3865
      %3869 = vset.pattern.permute.xlu0 0
      %3870 = vperm.xlu0 %3869, %v3756
      %v3871 = vpop.permute.xlu0 %3870
      %3874 = vset.pattern.permute.xlu0 0
      %3875 = vperm.xlu0 %3874, %v3757
      %v3876 = vpop.permute.xlu0 %3875
      %3879 = vset.pattern.permute.xlu0 0
      %3880 = vperm.xlu0 %3879, %v3758
      %v3881 = vpop.permute.xlu0 %3880
      %3884 = vset.pattern.permute.xlu0 0
      %3885 = vperm.xlu0 %3884, %v3759
      %v3886 = vpop.permute.xlu0 %3885
      %3889 = vset.pattern.permute.xlu0 0
      %3890 = vperm.xlu0 %3889, %v3760
      %v3891 = vpop.permute.xlu0 %3890
      %3894 = vset.pattern.permute.xlu0 0
      %3895 = vperm.xlu0 %3894, %v3761
      %v3896 = vpop.permute.xlu0 %3895
      %3899 = vset.pattern.permute.xlu0 0
      %3900 = vperm.xlu0 %3899, %v3762
      %v3901 = vpop.permute.xlu0 %3900
      %3904 = vset.pattern.permute.xlu0 0
      %3905 = vperm.xlu0 %3904, %v3763
      %v3906 = vpop.permute.xlu0 %3905
      %3909 = vset.pattern.permute.xlu0 0
      %3910 = vperm.xlu0 %3909, %v3764
      %v3911 = vpop.permute.xlu0 %3910
      %3914 = vset.pattern.permute.xlu0 0
      %3915 = vperm.xlu0 %3914, %v3765
      %v3916 = vpop.permute.xlu0 %3915
      %3919 = vset.pattern.permute.xlu0 0
      %3920 = vperm.xlu0 %3919, %v3766
      %v3921 = vpop.permute.xlu0 %3920
      %3924 = vset.pattern.permute.xlu0 0
      %3925 = vperm.xlu0 %3924, %v3767
      %v3926 = vpop.permute.xlu0 %3925
      %v3928 = vmul.f32 %v3735, %v3771
      %v3929 = vmul.f32 %v3734, %v3776
      %v3930 = vmul.f32 %v3733, %v3781
      %v3931 = vmul.f32 %v3732, %v3786
      %v3932 = vmul.f32 %v3731, %v3791
      %v3933 = vmul.f32 %v3730, %v3796
      %v3934 = vmul.f32 %v3729, %v3801
      %v3935 = vmul.f32 %v3728, %v3806
      %v3936 = vmul.f32 %v3727, %v3811
      %v3937 = vmul.f32 %v3726, %v3816
      %v3938 = vmul.f32 %v3725, %v3821
      %v3939 = vmul.f32 %v3724, %v3826
      %v3940 = vmul.f32 %v3723, %v3831
      %v3941 = vmul.f32 %v3722, %v3836
      %v3942 = vmul.f32 %v3721, %v3841
      %v3943 = vmul.f32 %v3720, %v3846
      %v3944 = vmul.f32 %v3719, %v3851
      %v3945 = vmul.f32 %v3718, %v3856
      %v3946 = vmul.f32 %v3717, %v3861
      %v3947 = vmul.f32 %v3716, %v3866
      %v3948 = vmul.f32 %v3715, %v3871
      %v3949 = vmul.f32 %v3714, %v3876
      %v3950 = vmul.f32 %v3713, %v3881
      %v3951 = vmul.f32 %v3712, %v3886
      %v3952 = vmul.f32 %v3711, %v3891
      %v3953 = vmul.f32 %v3710, %v3896
      %v3954 = vmul.f32 %v3709, %v3901
      %v3955 = vmul.f32 %v3708, %v3906
      %v3956 = vmul.f32 %v3707, %v3911
      %v3957 = vmul.f32 %v3706, %v3916
      %v3958 = vmul.f32 %v3705, %v3921
      %v3959 = vmul.f32 %v3704, %v3926
      %v3960 = vld [vmem:[#allocation3] sm:$0xff]
      %v3961 = vld [vmem:[#allocation3 + $0x8] sm:$0xff]
      %v3962 = vld [vmem:[#allocation3 + $0x10] sm:$0xff]
      %v3963 = vld [vmem:[#allocation3 + $0x18] sm:$0xff]
      %v3964 = vld [vmem:[#allocation3 + $0x20] sm:$0xff]
      %v3965 = vld [vmem:[#allocation3 + $0x28] sm:$0xff]
      %v3966 = vld [vmem:[#allocation3 + $0x30] sm:$0xff]
      %v3967 = vld [vmem:[#allocation3 + $0x38] sm:$0xff]
      %v3968 = vld [vmem:[#allocation3 + $0x40] sm:$0xff]
      %v3969 = vld [vmem:[#allocation3 + $0x48] sm:$0xff]
      %v3970 = vld [vmem:[#allocation3 + $0x50] sm:$0xff]
      %v3971 = vld [vmem:[#allocation3 + $0x58] sm:$0xff]
      %v3972 = vld [vmem:[#allocation3 + $0x60] sm:$0xff]
      %v3973 = vld [vmem:[#allocation3 + $0x68] sm:$0xff]
      %v3974 = vld [vmem:[#allocation3 + $0x70] sm:$0xff]
      %v3975 = vld [vmem:[#allocation3 + $0x78] sm:$0xff]
      %v3976 = vld [vmem:[#allocation3 + $0x80] sm:$0xff]
      %v3977 = vld [vmem:[#allocation3 + $0x88] sm:$0xff]
      %v3978 = vld [vmem:[#allocation3 + $0x90] sm:$0xff]
      %v3979 = vld [vmem:[#allocation3 + $0x98] sm:$0xff]
      %v3980 = vld [vmem:[#allocation3 + $0xa0] sm:$0xff]
      %v3981 = vld [vmem:[#allocation3 + $0xa8] sm:$0xff]
      %v3982 = vld [vmem:[#allocation3 + $0xb0] sm:$0xff]
      %v3983 = vld [vmem:[#allocation3 + $0xb8] sm:$0xff]
      %v3984 = vld [vmem:[#allocation3 + $0xc0] sm:$0xff]
      %v3985 = vld [vmem:[#allocation3 + $0xc8] sm:$0xff]
      %v3986 = vld [vmem:[#allocation3 + $0xd0] sm:$0xff]
      %v3987 = vld [vmem:[#allocation3 + $0xd8] sm:$0xff]
      %v3988 = vld [vmem:[#allocation3 + $0xe0] sm:$0xff]
      %v3989 = vld [vmem:[#allocation3 + $0xe8] sm:$0xff]
      %v3990 = vld [vmem:[#allocation3 + $0xf0] sm:$0xff]
      %v3991 = vld [vmem:[#allocation3 + $0xf8] sm:$0xff]
      %v3992 = vpack.c.bf16 %v3929, %v3928
      %v3993 = vpack.c.bf16 %v3931, %v3930
      %v3994 = vpack.c.bf16 %v3933, %v3932
      %v3995 = vpack.c.bf16 %v3935, %v3934
      %v3996 = vpack.c.bf16 %v3937, %v3936
      %v3997 = vpack.c.bf16 %v3939, %v3938
      %v3998 = vpack.c.bf16 %v3941, %v3940
      %v3999 = vpack.c.bf16 %v3943, %v3942
      %v4000 = vpack.c.bf16 %v3945, %v3944
      %v4001 = vpack.c.bf16 %v3947, %v3946
      %v4002 = vpack.c.bf16 %v3949, %v3948
      %v4003 = vpack.c.bf16 %v3951, %v3950
      %v4004 = vpack.c.bf16 %v3953, %v3952
      %v4005 = vpack.c.bf16 %v3955, %v3954
      %v4006 = vpack.c.bf16 %v3957, %v3956
      %v4007 = vpack.c.bf16 %v3959, %v3958
      %s4008 = scalar_lea.vmem %s1, 384
      %v4009 = vld [vmem:[%s4008] sm:$0xf]
      %v4010 = vld [vmem:[%s4008 + $0x4] sm:$0xf]
      %v4011 = vld [vmem:[%s4008 + $0x8] sm:$0xf]
      %v4012 = vld [vmem:[%s4008 + $0xc] sm:$0xf]
      %v4013 = vld [vmem:[%s4008 + $0x10] sm:$0xf]
      %v4014 = vld [vmem:[%s4008 + $0x14] sm:$0xf]
      %v4015 = vld [vmem:[%s4008 + $0x18] sm:$0xf]
      %v4016 = vld [vmem:[%s4008 + $0x1c] sm:$0xf]
      %v4017 = vld [vmem:[%s4008 + $0x20] sm:$0xf]
      %v4018 = vld [vmem:[%s4008 + $0x24] sm:$0xf]
      %v4019 = vld [vmem:[%s4008 + $0x28] sm:$0xf]
      %v4020 = vld [vmem:[%s4008 + $0x2c] sm:$0xf]
      %v4021 = vld [vmem:[%s4008 + $0x30] sm:$0xf]
      %v4022 = vld [vmem:[%s4008 + $0x34] sm:$0xf]
      %v4023 = vld [vmem:[%s4008 + $0x38] sm:$0xf]
      %v4024 = vld [vmem:[%s4008 + $0x3c] sm:$0xf]
      %v4041 = vunpack.c.l.b16 %v4009
      %v4042 = vunpack.c.l.b16 %v4010
      %v4043 = vunpack.c.l.b16 %v4011
      %v4044 = vunpack.c.l.b16 %v4012
      %v4045 = vunpack.c.l.b16 %v4013
      %v4046 = vunpack.c.l.b16 %v4014
      %v4047 = vunpack.c.l.b16 %v4015
      %v4048 = vunpack.c.l.b16 %v4016
      %v4049 = vunpack.c.l.b16 %v4017
      %v4050 = vunpack.c.l.b16 %v4018
      %v4051 = vunpack.c.l.b16 %v4019
      %v4052 = vunpack.c.l.b16 %v4020
      %v4053 = vunpack.c.l.b16 %v4021
      %v4054 = vunpack.c.l.b16 %v4022
      %v4055 = vunpack.c.l.b16 %v4023
      %v4056 = vunpack.c.l.b16 %v4024
      %v4057 = vpack.c.b16 %v4042, %v4041
      %v4058 = vpack.c.b16 %v4044, %v4043
      %v4059 = vpack.c.b16 %v4046, %v4045
      %v4060 = vpack.c.b16 %v4048, %v4047
      %v4061 = vpack.c.b16 %v4050, %v4049
      %v4062 = vpack.c.b16 %v4052, %v4051
      %v4063 = vpack.c.b16 %v4054, %v4053
      %v4064 = vpack.c.b16 %v4056, %v4055
      %4073 = vmatprep.subr.bf16.mxu0 0
      %4074 = vmatpush1.bf16.msra.mxu0 %v4064
      %4075 = vmatprep.subr.bf16.mxu0 0
      %4076 = vmatpush1.bf16.msra.mxu0 %v4063
      %4077 = vmatprep.subr.bf16.mxu0 0
      %4078 = vmatpush1.bf16.msra.mxu0 %v4062
      %4079 = vmatprep.subr.bf16.mxu0 0
      %4080 = vmatpush1.bf16.msra.mxu0 %v4061
      %4081 = vmatprep.subr.bf16.mxu0 0
      %4082 = vmatpush1.bf16.msra.mxu0 %v4060
      %4083 = vmatprep.subr.bf16.mxu0 0
      %4084 = vmatpush1.bf16.msra.mxu0 %v4059
      %4085 = vmatprep.subr.bf16.mxu0 0
      %4086 = vmatpush1.bf16.msra.mxu0 %v4058
      %4087 = vmatprep.subr.bf16.mxu0 0
      %4088 = vmatpush1.bf16.msra.mxu0 %v4057
      %4089 = vmatprep.subr.bf16.mxu0 0
      %4090 = vmatpush2.bf16.msra.mxu0 0
      %4091 = vmatprep.subr.bf16.mxu0 0
      %4092 = vmatpush2.bf16.msra.mxu0 0
      %4093 = vmatprep.subr.bf16.mxu0 0
      %4094 = vmatpush2.bf16.msra.mxu0 0
      %4095 = vmatprep.subr.bf16.mxu0 0
      %4096 = vmatpush2.bf16.msra.mxu0 0
      %4097 = vmatprep.subr.bf16.mxu0 0
      %4098 = vmatpush2.bf16.msra.mxu0 0
      %4099 = vmatprep.subr.bf16.mxu0 0
      %4100 = vmatpush2.bf16.msra.mxu0 0
      %4101 = vmatprep.subr.bf16.mxu0 0
      %4102 = vmatpush2.bf16.msra.mxu0 0
      %4103 = vmatprep.subr.bf16.mxu0 0
      %4104 = vmatpush2.bf16.msra.mxu0 0
      %4105 = vmatprep.mubr.bf16.mxu0 0
      %4106 = vmatmul.mubr.bf16.gmra.mxu0 %v3992
      %v4107 = vpop.f32.mrf.mxu0
      %v4108 = vadd.f32 0.0, %v4107
      %v4109 = vpop.f32.mrf.mxu0
      %v4110 = vpop.f32.mrf.mxu0
      %v4111 = vadd.f32 0.0, %v4110
      %v4112 = vpop.f32.mrf.mxu0
      %4113 = vmatprep.mubr.bf16.mxu0 0
      %4114 = vmatmul.mubr.bf16.gmra.mxu0 %v3993
      %v4115 = vpop.f32.mrf.mxu0
      %v4116 = vadd.f32 0.0, %v4115
      %v4117 = vpop.f32.mrf.mxu0
      %v4118 = vpop.f32.mrf.mxu0
      %v4119 = vadd.f32 0.0, %v4118
      %v4120 = vpop.f32.mrf.mxu0
      %4121 = vmatprep.mubr.bf16.mxu0 0
      %4122 = vmatmul.mubr.bf16.gmra.mxu0 %v3994
      %v4123 = vpop.f32.mrf.mxu0
      %v4124 = vadd.f32 0.0, %v4123
      %v4125 = vpop.f32.mrf.mxu0
      %v4126 = vpop.f32.mrf.mxu0
      %v4127 = vadd.f32 0.0, %v4126
      %v4128 = vpop.f32.mrf.mxu0
      %4129 = vmatprep.mubr.bf16.mxu0 0
      %4130 = vmatmul.mubr.bf16.gmra.mxu0 %v3995
      %v4131 = vpop.f32.mrf.mxu0
      %v4132 = vadd.f32 0.0, %v4131
      %v4133 = vpop.f32.mrf.mxu0
      %v4134 = vpop.f32.mrf.mxu0
      %v4135 = vadd.f32 0.0, %v4134
      %v4136 = vpop.f32.mrf.mxu0
      %4137 = vmatprep.mubr.bf16.mxu0 0
      %4138 = vmatmul.mubr.bf16.gmra.mxu0 %v3996
      %v4139 = vpop.f32.mrf.mxu0
      %v4140 = vadd.f32 0.0, %v4139
      %v4141 = vpop.f32.mrf.mxu0
      %v4142 = vpop.f32.mrf.mxu0
      %v4143 = vadd.f32 0.0, %v4142
      %v4144 = vpop.f32.mrf.mxu0
      %4145 = vmatprep.mubr.bf16.mxu0 0
      %4146 = vmatmul.mubr.bf16.gmra.mxu0 %v3997
      %v4147 = vpop.f32.mrf.mxu0
      %v4148 = vadd.f32 0.0, %v4147
      %v4149 = vpop.f32.mrf.mxu0
      %v4150 = vpop.f32.mrf.mxu0
      %v4151 = vadd.f32 0.0, %v4150
      %v4152 = vpop.f32.mrf.mxu0
      %4153 = vmatprep.mubr.bf16.mxu0 0
      %4154 = vmatmul.mubr.bf16.gmra.mxu0 %v3998
      %v4155 = vpop.f32.mrf.mxu0
      %v4156 = vadd.f32 0.0, %v4155
      %v4157 = vpop.f32.mrf.mxu0
      %v4158 = vpop.f32.mrf.mxu0
      %v4159 = vadd.f32 0.0, %v4158
      %v4160 = vpop.f32.mrf.mxu0
      %4161 = vmatprep.mubr.bf16.mxu0 0
      %4162 = vmatmul.mubr.bf16.gmra.mxu0 %v3999
      %v4163 = vpop.f32.mrf.mxu0
      %v4164 = vadd.f32 0.0, %v4163
      %v4165 = vpop.f32.mrf.mxu0
      %v4166 = vpop.f32.mrf.mxu0
      %v4167 = vadd.f32 0.0, %v4166
      %v4168 = vpop.f32.mrf.mxu0
      %4169 = vmatprep.mubr.bf16.mxu0 0
      %4170 = vmatmul.mubr.bf16.gmra.mxu0 %v4000
      %v4171 = vpop.f32.mrf.mxu0
      %v4172 = vadd.f32 0.0, %v4171
      %v4173 = vpop.f32.mrf.mxu0
      %v4174 = vpop.f32.mrf.mxu0
      %v4175 = vadd.f32 0.0, %v4174
      %v4176 = vpop.f32.mrf.mxu0
      %4177 = vmatprep.mubr.bf16.mxu0 0
      %4178 = vmatmul.mubr.bf16.gmra.mxu0 %v4001
      %v4179 = vpop.f32.mrf.mxu0
      %v4180 = vadd.f32 0.0, %v4179
      %v4181 = vpop.f32.mrf.mxu0
      %v4182 = vpop.f32.mrf.mxu0
      %v4183 = vadd.f32 0.0, %v4182
      %v4184 = vpop.f32.mrf.mxu0
      %4185 = vmatprep.mubr.bf16.mxu0 0
      %4186 = vmatmul.mubr.bf16.gmra.mxu0 %v4002
      %v4187 = vpop.f32.mrf.mxu0
      %v4188 = vadd.f32 0.0, %v4187
      %v4189 = vpop.f32.mrf.mxu0
      %v4190 = vpop.f32.mrf.mxu0
      %v4191 = vadd.f32 0.0, %v4190
      %v4192 = vpop.f32.mrf.mxu0
      %4193 = vmatprep.mubr.bf16.mxu0 0
      %4194 = vmatmul.mubr.bf16.gmra.mxu0 %v4003
      %v4195 = vpop.f32.mrf.mxu0
      %v4196 = vadd.f32 0.0, %v4195
      %v4197 = vpop.f32.mrf.mxu0
      %v4198 = vpop.f32.mrf.mxu0
      %v4199 = vadd.f32 0.0, %v4198
      %v4200 = vpop.f32.mrf.mxu0
      %4201 = vmatprep.mubr.bf16.mxu0 0
      %4202 = vmatmul.mubr.bf16.gmra.mxu0 %v4004
      %v4203 = vpop.f32.mrf.mxu0
      %v4204 = vadd.f32 0.0, %v4203
      %v4205 = vpop.f32.mrf.mxu0
      %v4206 = vpop.f32.mrf.mxu0
      %v4207 = vadd.f32 0.0, %v4206
      %v4208 = vpop.f32.mrf.mxu0
      %4209 = vmatprep.mubr.bf16.mxu0 0
      %4210 = vmatmul.mubr.bf16.gmra.mxu0 %v4005
      %v4211 = vpop.f32.mrf.mxu0
      %v4212 = vadd.f32 0.0, %v4211
      %v4213 = vpop.f32.mrf.mxu0
      %v4214 = vpop.f32.mrf.mxu0
      %v4215 = vadd.f32 0.0, %v4214
      %v4216 = vpop.f32.mrf.mxu0
      %4217 = vmatprep.mubr.bf16.mxu0 0
      %4218 = vmatmul.mubr.bf16.gmra.mxu0 %v4006
      %v4219 = vpop.f32.mrf.mxu0
      %v4220 = vadd.f32 0.0, %v4219
      %v4221 = vpop.f32.mrf.mxu0
      %v4222 = vpop.f32.mrf.mxu0
      %v4223 = vadd.f32 0.0, %v4222
      %v4224 = vpop.f32.mrf.mxu0
      %4225 = vmatprep.mubr.bf16.mxu0 0
      %4226 = vmatmul.mubr.bf16.gmra.mxu0 %v4007
      %v4227 = vpop.f32.mrf.mxu0
      %v4228 = vadd.f32 0.0, %v4227
      %v4229 = vpop.f32.mrf.mxu0
      %v4230 = vpop.f32.mrf.mxu0
      %v4231 = vadd.f32 0.0, %v4230
      %v4232 = vpop.f32.mrf.mxu0
      %4233 = vdwg.mxu0
      %v4234 = vadd.f32 %v3960, %v4108
      %v4235 = vadd.f32 %v3961, %v4111
      %v4236 = vadd.f32 %v3962, %v4116
      %v4237 = vadd.f32 %v3963, %v4119
      %v4238 = vadd.f32 %v3964, %v4124
      %v4239 = vadd.f32 %v3965, %v4127
      %v4240 = vadd.f32 %v3966, %v4132
      %v4241 = vadd.f32 %v3967, %v4135
      %v4242 = vadd.f32 %v3968, %v4140
      %v4243 = vadd.f32 %v3969, %v4143
      %v4244 = vadd.f32 %v3970, %v4148
      %v4245 = vadd.f32 %v3971, %v4151
      %v4246 = vadd.f32 %v3972, %v4156
      %v4247 = vadd.f32 %v3973, %v4159
      %v4248 = vadd.f32 %v3974, %v4164
      %v4249 = vadd.f32 %v3975, %v4167
      %v4250 = vadd.f32 %v3976, %v4172
      %v4251 = vadd.f32 %v3977, %v4175
      %v4252 = vadd.f32 %v3978, %v4180
      %v4253 = vadd.f32 %v3979, %v4183
      %v4254 = vadd.f32 %v3980, %v4188
      %v4255 = vadd.f32 %v3981, %v4191
      %v4256 = vadd.f32 %v3982, %v4196
      %v4257 = vadd.f32 %v3983, %v4199
      %v4258 = vadd.f32 %v3984, %v4204
      %v4259 = vadd.f32 %v3985, %v4207
      %v4260 = vadd.f32 %v3986, %v4212
      %v4261 = vadd.f32 %v3987, %v4215
      %v4262 = vadd.f32 %v3988, %v4220
      %v4263 = vadd.f32 %v3989, %v4223
      %v4264 = vadd.f32 %v3990, %v4228
      %v4265 = vadd.f32 %v3991, %v4231
      %4266 = vst [vmem:[#allocation3] sm:$0xff] %v4234
      %4267 = vst [vmem:[#allocation3 + $0x8] sm:$0xff] %v4235
      %4268 = vst [vmem:[#allocation3 + $0x10] sm:$0xff] %v4236
      %4269 = vst [vmem:[#allocation3 + $0x18] sm:$0xff] %v4237
      %4270 = vst [vmem:[#allocation3 + $0x20] sm:$0xff] %v4238
      %4271 = vst [vmem:[#allocation3 + $0x28] sm:$0xff] %v4239
      %4272 = vst [vmem:[#allocation3 + $0x30] sm:$0xff] %v4240
      %4273 = vst [vmem:[#allocation3 + $0x38] sm:$0xff] %v4241
      %4274 = vst [vmem:[#allocation3 + $0x40] sm:$0xff] %v4242
      %4275 = vst [vmem:[#allocation3 + $0x48] sm:$0xff] %v4243
      %4276 = vst [vmem:[#allocation3 + $0x50] sm:$0xff] %v4244
      %4277 = vst [vmem:[#allocation3 + $0x58] sm:$0xff] %v4245
      %4278 = vst [vmem:[#allocation3 + $0x60] sm:$0xff] %v4246
      %4279 = vst [vmem:[#allocation3 + $0x68] sm:$0xff] %v4247
      %4280 = vst [vmem:[#allocation3 + $0x70] sm:$0xff] %v4248
      %4281 = vst [vmem:[#allocation3 + $0x78] sm:$0xff] %v4249
      %4282 = vst [vmem:[#allocation3 + $0x80] sm:$0xff] %v4250
      %4283 = vst [vmem:[#allocation3 + $0x88] sm:$0xff] %v4251
      %4284 = vst [vmem:[#allocation3 + $0x90] sm:$0xff] %v4252
      %4285 = vst [vmem:[#allocation3 + $0x98] sm:$0xff] %v4253
      %4286 = vst [vmem:[#allocation3 + $0xa0] sm:$0xff] %v4254
      %4287 = vst [vmem:[#allocation3 + $0xa8] sm:$0xff] %v4255
      %4288 = vst [vmem:[#allocation3 + $0xb0] sm:$0xff] %v4256
      %4289 = vst [vmem:[#allocation3 + $0xb8] sm:$0xff] %v4257
      %4290 = vst [vmem:[#allocation3 + $0xc0] sm:$0xff] %v4258
      %4291 = vst [vmem:[#allocation3 + $0xc8] sm:$0xff] %v4259
      %4292 = vst [vmem:[#allocation3 + $0xd0] sm:$0xff] %v4260
      %4293 = vst [vmem:[#allocation3 + $0xd8] sm:$0xff] %v4261
      %4294 = vst [vmem:[#allocation3 + $0xe0] sm:$0xff] %v4262
      %4295 = vst [vmem:[#allocation3 + $0xe8] sm:$0xff] %v4263
      %4296 = vst [vmem:[#allocation3 + $0xf0] sm:$0xff] %v4264
      %4297 = vst [vmem:[#allocation3 + $0xf8] sm:$0xff] %v4265
      %v4298 = vld [vmem:[#allocation3] sm:$0xff]
      %v4299 = vld [vmem:[#allocation3 + $0x8] sm:$0xff]
      %v4300 = vld [vmem:[#allocation3 + $0x10] sm:$0xff]
      %v4301 = vld [vmem:[#allocation3 + $0x18] sm:$0xff]
      %v4302 = vld [vmem:[#allocation3 + $0x20] sm:$0xff]
      %v4303 = vld [vmem:[#allocation3 + $0x28] sm:$0xff]
      %v4304 = vld [vmem:[#allocation3 + $0x30] sm:$0xff]
      %v4305 = vld [vmem:[#allocation3 + $0x38] sm:$0xff]
      %v4306 = vld [vmem:[#allocation3 + $0x40] sm:$0xff]
      %v4307 = vld [vmem:[#allocation3 + $0x48] sm:$0xff]
      %v4308 = vld [vmem:[#allocation3 + $0x50] sm:$0xff]
      %v4309 = vld [vmem:[#allocation3 + $0x58] sm:$0xff]
      %v4310 = vld [vmem:[#allocation3 + $0x60] sm:$0xff]
      %v4311 = vld [vmem:[#allocation3 + $0x68] sm:$0xff]
      %v4312 = vld [vmem:[#allocation3 + $0x70] sm:$0xff]
      %v4313 = vld [vmem:[#allocation3 + $0x78] sm:$0xff]
      %v4314 = vld [vmem:[#allocation3 + $0x80] sm:$0xff]
      %v4315 = vld [vmem:[#allocation3 + $0x88] sm:$0xff]
      %v4316 = vld [vmem:[#allocation3 + $0x90] sm:$0xff]
      %v4317 = vld [vmem:[#allocation3 + $0x98] sm:$0xff]
      %v4318 = vld [vmem:[#allocation3 + $0xa0] sm:$0xff]
      %v4319 = vld [vmem:[#allocation3 + $0xa8] sm:$0xff]
      %v4320 = vld [vmem:[#allocation3 + $0xb0] sm:$0xff]
      %v4321 = vld [vmem:[#allocation3 + $0xb8] sm:$0xff]
      %v4322 = vld [vmem:[#allocation3 + $0xc0] sm:$0xff]
      %v4323 = vld [vmem:[#allocation3 + $0xc8] sm:$0xff]
      %v4324 = vld [vmem:[#allocation3 + $0xd0] sm:$0xff]
      %v4325 = vld [vmem:[#allocation3 + $0xd8] sm:$0xff]
      %v4326 = vld [vmem:[#allocation3 + $0xe0] sm:$0xff]
      %v4327 = vld [vmem:[#allocation3 + $0xe8] sm:$0xff]
      %v4328 = vld [vmem:[#allocation3 + $0xf0] sm:$0xff]
      %v4329 = vld [vmem:[#allocation3 + $0xf8] sm:$0xff]
      %v4330 = vpack.c.bf16 %v3641, %v3640
      %v4331 = vpack.c.bf16 %v3643, %v3642
      %v4332 = vpack.c.bf16 %v3645, %v3644
      %v4333 = vpack.c.bf16 %v3647, %v3646
      %v4334 = vpack.c.bf16 %v3649, %v3648
      %v4335 = vpack.c.bf16 %v3651, %v3650
      %v4336 = vpack.c.bf16 %v3653, %v3652
      %v4337 = vpack.c.bf16 %v3655, %v3654
      %v4338 = vpack.c.bf16 %v3657, %v3656
      %v4339 = vpack.c.bf16 %v3659, %v3658
      %v4340 = vpack.c.bf16 %v3661, %v3660
      %v4341 = vpack.c.bf16 %v3663, %v3662
      %v4342 = vpack.c.bf16 %v3665, %v3664
      %v4343 = vpack.c.bf16 %v3667, %v3666
      %v4344 = vpack.c.bf16 %v3669, %v3668
      %v4345 = vpack.c.bf16 %v3671, %v3670
      %s4346 = scalar_lea.vmem %s1, 448
      %v4347 = vld [vmem:[%s4346] sm:$0xf]
      %v4348 = vld [vmem:[%s4346 + $0x4] sm:$0xf]
      %v4349 = vld [vmem:[%s4346 + $0x8] sm:$0xf]
      %v4350 = vld [vmem:[%s4346 + $0xc] sm:$0xf]
      %v4351 = vld [vmem:[%s4346 + $0x10] sm:$0xf]
      %v4352 = vld [vmem:[%s4346 + $0x14] sm:$0xf]
      %v4353 = vld [vmem:[%s4346 + $0x18] sm:$0xf]
      %v4354 = vld [vmem:[%s4346 + $0x1c] sm:$0xf]
      %v4355 = vld [vmem:[%s4346 + $0x20] sm:$0xf]
      %v4356 = vld [vmem:[%s4346 + $0x24] sm:$0xf]
      %v4357 = vld [vmem:[%s4346 + $0x28] sm:$0xf]
      %v4358 = vld [vmem:[%s4346 + $0x2c] sm:$0xf]
      %v4359 = vld [vmem:[%s4346 + $0x30] sm:$0xf]
      %v4360 = vld [vmem:[%s4346 + $0x34] sm:$0xf]
      %v4361 = vld [vmem:[%s4346 + $0x38] sm:$0xf]
      %v4362 = vld [vmem:[%s4346 + $0x3c] sm:$0xf]
      %v4379 = vunpack.c.l.b16 %v4347
      %v4380 = vunpack.c.l.b16 %v4348
      %v4381 = vunpack.c.l.b16 %v4349
      %v4382 = vunpack.c.l.b16 %v4350
      %v4383 = vunpack.c.l.b16 %v4351
      %v4384 = vunpack.c.l.b16 %v4352
      %v4385 = vunpack.c.l.b16 %v4353
      %v4386 = vunpack.c.l.b16 %v4354
      %v4387 = vunpack.c.l.b16 %v4355
      %v4388 = vunpack.c.l.b16 %v4356
      %v4389 = vunpack.c.l.b16 %v4357
      %v4390 = vunpack.c.l.b16 %v4358
      %v4391 = vunpack.c.l.b16 %v4359
      %v4392 = vunpack.c.l.b16 %v4360
      %v4393 = vunpack.c.l.b16 %v4361
      %v4394 = vunpack.c.l.b16 %v4362
      %v4395 = vpack.c.b16 %v4380, %v4379
      %v4396 = vpack.c.b16 %v4382, %v4381
      %v4397 = vpack.c.b16 %v4384, %v4383
      %v4398 = vpack.c.b16 %v4386, %v4385
      %v4399 = vpack.c.b16 %v4388, %v4387
      %v4400 = vpack.c.b16 %v4390, %v4389
      %v4401 = vpack.c.b16 %v4392, %v4391
      %v4402 = vpack.c.b16 %v4394, %v4393
      %4411 = vmatprep.subr.bf16.mxu0 0
      %4412 = vmatpush1.bf16.msra.mxu0 %v4402
      %4413 = vmatprep.subr.bf16.mxu0 0
      %4414 = vmatpush1.bf16.msra.mxu0 %v4401
      %4415 = vmatprep.subr.bf16.mxu0 0
      %4416 = vmatpush1.bf16.msra.mxu0 %v4400
      %4417 = vmatprep.subr.bf16.mxu0 0
      %4418 = vmatpush1.bf16.msra.mxu0 %v4399
      %4419 = vmatprep.subr.bf16.mxu0 0
      %4420 = vmatpush1.bf16.msra.mxu0 %v4398
      %4421 = vmatprep.subr.bf16.mxu0 0
      %4422 = vmatpush1.bf16.msra.mxu0 %v4397
      %4423 = vmatprep.subr.bf16.mxu0 0
      %4424 = vmatpush1.bf16.msra.mxu0 %v4396
      %4425 = vmatprep.subr.bf16.mxu0 0
      %4426 = vmatpush1.bf16.msra.mxu0 %v4395
      %4427 = vmatprep.subr.bf16.mxu0 0
      %4428 = vmatpush2.bf16.msra.mxu0 0
      %4429 = vmatprep.subr.bf16.mxu0 0
      %4430 = vmatpush2.bf16.msra.mxu0 0
      %4431 = vmatprep.subr.bf16.mxu0 0
      %4432 = vmatpush2.bf16.msra.mxu0 0
      %4433 = vmatprep.subr.bf16.mxu0 0
      %4434 = vmatpush2.bf16.msra.mxu0 0
      %4435 = vmatprep.subr.bf16.mxu0 0
      %4436 = vmatpush2.bf16.msra.mxu0 0
      %4437 = vmatprep.subr.bf16.mxu0 0
      %4438 = vmatpush2.bf16.msra.mxu0 0
      %4439 = vmatprep.subr.bf16.mxu0 0
      %4440 = vmatpush2.bf16.msra.mxu0 0
      %4441 = vmatprep.subr.bf16.mxu0 0
      %4442 = vmatpush2.bf16.msra.mxu0 0
      %4443 = vmatprep.mubr.bf16.mxu0 0
      %4444 = vmatmul.mubr.bf16.gmra.mxu0 %v4330
      %v4445 = vpop.f32.mrf.mxu0
      %v4446 = vadd.f32 0.0, %v4445
      %v4447 = vpop.f32.mrf.mxu0
      %v4448 = vpop.f32.mrf.mxu0
      %v4449 = vadd.f32 0.0, %v4448
      %v4450 = vpop.f32.mrf.mxu0
      %4451 = vmatprep.mubr.bf16.mxu0 0
      %4452 = vmatmul.mubr.bf16.gmra.mxu0 %v4331
      %v4453 = vpop.f32.mrf.mxu0
      %v4454 = vadd.f32 0.0, %v4453
      %v4455 = vpop.f32.mrf.mxu0
      %v4456 = vpop.f32.mrf.mxu0
      %v4457 = vadd.f32 0.0, %v4456
      %v4458 = vpop.f32.mrf.mxu0
      %4459 = vmatprep.mubr.bf16.mxu0 0
      %4460 = vmatmul.mubr.bf16.gmra.mxu0 %v4332
      %v4461 = vpop.f32.mrf.mxu0
      %v4462 = vadd.f32 0.0, %v4461
      %v4463 = vpop.f32.mrf.mxu0
      %v4464 = vpop.f32.mrf.mxu0
      %v4465 = vadd.f32 0.0, %v4464
      %v4466 = vpop.f32.mrf.mxu0
      %4467 = vmatprep.mubr.bf16.mxu0 0
      %4468 = vmatmul.mubr.bf16.gmra.mxu0 %v4333
      %v4469 = vpop.f32.mrf.mxu0
      %v4470 = vadd.f32 0.0, %v4469
      %v4471 = vpop.f32.mrf.mxu0
      %v4472 = vpop.f32.mrf.mxu0
      %v4473 = vadd.f32 0.0, %v4472
      %v4474 = vpop.f32.mrf.mxu0
      %4475 = vmatprep.mubr.bf16.mxu0 0
      %4476 = vmatmul.mubr.bf16.gmra.mxu0 %v4334
      %v4477 = vpop.f32.mrf.mxu0
      %v4478 = vadd.f32 0.0, %v4477
      %v4479 = vpop.f32.mrf.mxu0
      %v4480 = vpop.f32.mrf.mxu0
      %v4481 = vadd.f32 0.0, %v4480
      %v4482 = vpop.f32.mrf.mxu0
      %4483 = vmatprep.mubr.bf16.mxu0 0
      %4484 = vmatmul.mubr.bf16.gmra.mxu0 %v4335
      %v4485 = vpop.f32.mrf.mxu0
      %v4486 = vadd.f32 0.0, %v4485
      %v4487 = vpop.f32.mrf.mxu0
      %v4488 = vpop.f32.mrf.mxu0
      %v4489 = vadd.f32 0.0, %v4488
      %v4490 = vpop.f32.mrf.mxu0
      %4491 = vmatprep.mubr.bf16.mxu0 0
      %4492 = vmatmul.mubr.bf16.gmra.mxu0 %v4336
      %v4493 = vpop.f32.mrf.mxu0
      %v4494 = vadd.f32 0.0, %v4493
      %v4495 = vpop.f32.mrf.mxu0
      %v4496 = vpop.f32.mrf.mxu0
      %v4497 = vadd.f32 0.0, %v4496
      %v4498 = vpop.f32.mrf.mxu0
      %4499 = vmatprep.mubr.bf16.mxu0 0
      %4500 = vmatmul.mubr.bf16.gmra.mxu0 %v4337
      %v4501 = vpop.f32.mrf.mxu0
      %v4502 = vadd.f32 0.0, %v4501
      %v4503 = vpop.f32.mrf.mxu0
      %v4504 = vpop.f32.mrf.mxu0
      %v4505 = vadd.f32 0.0, %v4504
      %v4506 = vpop.f32.mrf.mxu0
      %4507 = vmatprep.mubr.bf16.mxu0 0
      %4508 = vmatmul.mubr.bf16.gmra.mxu0 %v4338
      %v4509 = vpop.f32.mrf.mxu0
      %v4510 = vadd.f32 0.0, %v4509
      %v4511 = vpop.f32.mrf.mxu0
      %v4512 = vpop.f32.mrf.mxu0
      %v4513 = vadd.f32 0.0, %v4512
      %v4514 = vpop.f32.mrf.mxu0
      %4515 = vmatprep.mubr.bf16.mxu0 0
      %4516 = vmatmul.mubr.bf16.gmra.mxu0 %v4339
      %v4517 = vpop.f32.mrf.mxu0
      %v4518 = vadd.f32 0.0, %v4517
      %v4519 = vpop.f32.mrf.mxu0
      %v4520 = vpop.f32.mrf.mxu0
      %v4521 = vadd.f32 0.0, %v4520
      %v4522 = vpop.f32.mrf.mxu0
      %4523 = vmatprep.mubr.bf16.mxu0 0
      %4524 = vmatmul.mubr.bf16.gmra.mxu0 %v4340
      %v4525 = vpop.f32.mrf.mxu0
      %v4526 = vadd.f32 0.0, %v4525
      %v4527 = vpop.f32.mrf.mxu0
      %v4528 = vpop.f32.mrf.mxu0
      %v4529 = vadd.f32 0.0, %v4528
      %v4530 = vpop.f32.mrf.mxu0
      %4531 = vmatprep.mubr.bf16.mxu0 0
      %4532 = vmatmul.mubr.bf16.gmra.mxu0 %v4341
      %v4533 = vpop.f32.mrf.mxu0
      %v4534 = vadd.f32 0.0, %v4533
      %v4535 = vpop.f32.mrf.mxu0
      %v4536 = vpop.f32.mrf.mxu0
      %v4537 = vadd.f32 0.0, %v4536
      %v4538 = vpop.f32.mrf.mxu0
      %4539 = vmatprep.mubr.bf16.mxu0 0
      %4540 = vmatmul.mubr.bf16.gmra.mxu0 %v4342
      %v4541 = vpop.f32.mrf.mxu0
      %v4542 = vadd.f32 0.0, %v4541
      %v4543 = vpop.f32.mrf.mxu0
      %v4544 = vpop.f32.mrf.mxu0
      %v4545 = vadd.f32 0.0, %v4544
      %v4546 = vpop.f32.mrf.mxu0
      %4547 = vmatprep.mubr.bf16.mxu0 0
      %4548 = vmatmul.mubr.bf16.gmra.mxu0 %v4343
      %v4549 = vpop.f32.mrf.mxu0
      %v4550 = vadd.f32 0.0, %v4549
      %v4551 = vpop.f32.mrf.mxu0
      %v4552 = vpop.f32.mrf.mxu0
      %v4553 = vadd.f32 0.0, %v4552
      %v4554 = vpop.f32.mrf.mxu0
      %4555 = vmatprep.mubr.bf16.mxu0 0
      %4556 = vmatmul.mubr.bf16.gmra.mxu0 %v4344
      %v4557 = vpop.f32.mrf.mxu0
      %v4558 = vadd.f32 0.0, %v4557
      %v4559 = vpop.f32.mrf.mxu0
      %v4560 = vpop.f32.mrf.mxu0
      %v4561 = vadd.f32 0.0, %v4560
      %v4562 = vpop.f32.mrf.mxu0
      %4563 = vmatprep.mubr.bf16.mxu0 0
      %4564 = vmatmul.mubr.bf16.gmra.mxu0 %v4345
      %v4565 = vpop.f32.mrf.mxu0
      %v4566 = vadd.f32 0.0, %v4565
      %v4567 = vpop.f32.mrf.mxu0
      %v4568 = vpop.f32.mrf.mxu0
      %v4569 = vadd.f32 0.0, %v4568
      %v4570 = vpop.f32.mrf.mxu0
      %4571 = vdwg.mxu0
      %v4572 = vadd.f32 %v4298, %v4446
      %v4573 = vadd.f32 %v4299, %v4449
      %v4574 = vadd.f32 %v4300, %v4454
      %v4575 = vadd.f32 %v4301, %v4457
      %v4576 = vadd.f32 %v4302, %v4462
      %v4577 = vadd.f32 %v4303, %v4465
      %v4578 = vadd.f32 %v4304, %v4470
      %v4579 = vadd.f32 %v4305, %v4473
      %v4580 = vadd.f32 %v4306, %v4478
      %v4581 = vadd.f32 %v4307, %v4481
      %v4582 = vadd.f32 %v4308, %v4486
      %v4583 = vadd.f32 %v4309, %v4489
      %v4584 = vadd.f32 %v4310, %v4494
      %v4585 = vadd.f32 %v4311, %v4497
      %v4586 = vadd.f32 %v4312, %v4502
      %v4587 = vadd.f32 %v4313, %v4505
      %v4588 = vadd.f32 %v4314, %v4510
      %v4589 = vadd.f32 %v4315, %v4513
      %v4590 = vadd.f32 %v4316, %v4518
      %v4591 = vadd.f32 %v4317, %v4521
      %v4592 = vadd.f32 %v4318, %v4526
      %v4593 = vadd.f32 %v4319, %v4529
      %v4594 = vadd.f32 %v4320, %v4534
      %v4595 = vadd.f32 %v4321, %v4537
      %v4596 = vadd.f32 %v4322, %v4542
      %v4597 = vadd.f32 %v4323, %v4545
      %v4598 = vadd.f32 %v4324, %v4550
      %v4599 = vadd.f32 %v4325, %v4553
      %v4600 = vadd.f32 %v4326, %v4558
      %v4601 = vadd.f32 %v4327, %v4561
      %v4602 = vadd.f32 %v4328, %v4566
      %v4603 = vadd.f32 %v4329, %v4569
      %4604 = vst [vmem:[#allocation3] sm:$0xff] %v4572
      %4605 = vst [vmem:[#allocation3 + $0x8] sm:$0xff] %v4573
      %4606 = vst [vmem:[#allocation3 + $0x10] sm:$0xff] %v4574
      %4607 = vst [vmem:[#allocation3 + $0x18] sm:$0xff] %v4575
      %4608 = vst [vmem:[#allocation3 + $0x20] sm:$0xff] %v4576
      %4609 = vst [vmem:[#allocation3 + $0x28] sm:$0xff] %v4577
      %4610 = vst [vmem:[#allocation3 + $0x30] sm:$0xff] %v4578
      %4611 = vst [vmem:[#allocation3 + $0x38] sm:$0xff] %v4579
      %4612 = vst [vmem:[#allocation3 + $0x40] sm:$0xff] %v4580
      %4613 = vst [vmem:[#allocation3 + $0x48] sm:$0xff] %v4581
      %4614 = vst [vmem:[#allocation3 + $0x50] sm:$0xff] %v4582
      %4615 = vst [vmem:[#allocation3 + $0x58] sm:$0xff] %v4583
      %4616 = vst [vmem:[#allocation3 + $0x60] sm:$0xff] %v4584
      %4617 = vst [vmem:[#allocation3 + $0x68] sm:$0xff] %v4585
      %4618 = vst [vmem:[#allocation3 + $0x70] sm:$0xff] %v4586
      %4619 = vst [vmem:[#allocation3 + $0x78] sm:$0xff] %v4587
      %4620 = vst [vmem:[#allocation3 + $0x80] sm:$0xff] %v4588
      %4621 = vst [vmem:[#allocation3 + $0x88] sm:$0xff] %v4589
      %4622 = vst [vmem:[#allocation3 + $0x90] sm:$0xff] %v4590
      %4623 = vst [vmem:[#allocation3 + $0x98] sm:$0xff] %v4591
      %4624 = vst [vmem:[#allocation3 + $0xa0] sm:$0xff] %v4592
      %4625 = vst [vmem:[#allocation3 + $0xa8] sm:$0xff] %v4593
      %4626 = vst [vmem:[#allocation3 + $0xb0] sm:$0xff] %v4594
      %4627 = vst [vmem:[#allocation3 + $0xb8] sm:$0xff] %v4595
      %4628 = vst [vmem:[#allocation3 + $0xc0] sm:$0xff] %v4596
      %4629 = vst [vmem:[#allocation3 + $0xc8] sm:$0xff] %v4597
      %4630 = vst [vmem:[#allocation3 + $0xd0] sm:$0xff] %v4598
      %4631 = vst [vmem:[#allocation3 + $0xd8] sm:$0xff] %v4599
      %4632 = vst [vmem:[#allocation3 + $0xe0] sm:$0xff] %v4600
      %4633 = vst [vmem:[#allocation3 + $0xe8] sm:$0xff] %v4601
      %4634 = vst [vmem:[#allocation3 + $0xf0] sm:$0xff] %v4602
      %4635 = vst [vmem:[#allocation3 + $0xf8] sm:$0xff] %v4603
      %v4636 = vrot.slane %v3640, 1
      %v4637 = vrot.slane %v3641, 1
      %v4638 = vrot.slane %v3642, 1
      %v4639 = vrot.slane %v3643, 1
      %v4640 = vrot.slane %v3644, 1
      %v4641 = vrot.slane %v3645, 1
      %v4642 = vrot.slane %v3646, 1
      %v4643 = vrot.slane %v3647, 1
      %v4644 = vrot.slane %v3648, 1
      %v4645 = vrot.slane %v3649, 1
      %v4646 = vrot.slane %v3650, 1
      %v4647 = vrot.slane %v3651, 1
      %v4648 = vrot.slane %v3652, 1
      %v4649 = vrot.slane %v3653, 1
      %v4650 = vrot.slane %v3654, 1
      %v4651 = vrot.slane %v3655, 1
      %v4652 = vrot.slane %v3656, 1
      %v4653 = vrot.slane %v3657, 1
      %v4654 = vrot.slane %v3658, 1
      %v4655 = vrot.slane %v3659, 1
      %v4656 = vrot.slane %v3660, 1
      %v4657 = vrot.slane %v3661, 1
      %v4658 = vrot.slane %v3662, 1
      %v4659 = vrot.slane %v3663, 1
      %v4660 = vrot.slane %v3664, 1
      %v4661 = vrot.slane %v3665, 1
      %v4662 = vrot.slane %v3666, 1
      %v4663 = vrot.slane %v3667, 1
      %v4664 = vrot.slane %v3668, 1
      %v4665 = vrot.slane %v3669, 1
      %v4666 = vrot.slane %v3670, 1
      %v4667 = vrot.slane %v3671, 1
      %v4668 = vsel %vm1422, %v4666, %v4667
      %v4669 = vsel %vm1422, %v4665, %v4666
      %v4670 = vsel %vm1422, %v4664, %v4665
      %v4671 = vsel %vm1422, %v4663, %v4664
      %v4672 = vsel %vm1422, %v4662, %v4663
      %v4673 = vsel %vm1422, %v4661, %v4662
      %v4674 = vsel %vm1422, %v4660, %v4661
      %v4675 = vsel %vm1422, %v4659, %v4660
      %v4676 = vsel %vm1422, %v4658, %v4659
      %v4677 = vsel %vm1422, %v4657, %v4658
      %v4678 = vsel %vm1422, %v4656, %v4657
      %v4679 = vsel %vm1422, %v4655, %v4656
      %v4680 = vsel %vm1422, %v4654, %v4655
      %v4681 = vsel %vm1422, %v4653, %v4654
      %v4682 = vsel %vm1422, %v4652, %v4653
      %v4683 = vsel %vm1422, %v4651, %v4652
      %v4684 = vsel %vm1422, %v4650, %v4651
      %v4685 = vsel %vm1422, %v4649, %v4650
      %v4686 = vsel %vm1422, %v4648, %v4649
      %v4687 = vsel %vm1422, %v4647, %v4648
      %v4688 = vsel %vm1422, %v4646, %v4647
      %v4689 = vsel %vm1422, %v4645, %v4646
      %v4690 = vsel %vm1422, %v4644, %v4645
      %v4691 = vsel %vm1422, %v4643, %v4644
      %v4692 = vsel %vm1422, %v4642, %v4643
      %v4693 = vsel %vm1422, %v4641, %v4642
      %v4694 = vsel %vm1422, %v4640, %v4641
      %v4695 = vsel %vm1422, %v4639, %v4640
      %v4696 = vsel %vm1422, %v4638, %v4639
      %v4697 = vsel %vm1422, %v4637, %v4638
      %v4698 = vsel %vm1422, %v4636, %v4637
      %v4699 = vsel %vm1422, %v4667, %v4636
      %v4700 = vld [vmem:[%s1455] sm:$0xff]
      %v4701 = vld [vmem:[%s1455 + $0x8] sm:$0xff]
      %v4702 = vld [vmem:[%s1455 + $0x10] sm:$0xff]
      %v4703 = vld [vmem:[%s1455 + $0x18] sm:$0xff]
      %v4704 = vld [vmem:[%s1455 + $0x20] sm:$0xff]
      %v4705 = vld [vmem:[%s1455 + $0x28] sm:$0xff]
      %v4706 = vld [vmem:[%s1455 + $0x30] sm:$0xff]
      %v4707 = vld [vmem:[%s1455 + $0x38] sm:$0xff]
      %v4708 = vld [vmem:[%s1455 + $0x40] sm:$0xff]
      %v4709 = vld [vmem:[%s1455 + $0x48] sm:$0xff]
      %v4710 = vld [vmem:[%s1455 + $0x50] sm:$0xff]
      %v4711 = vld [vmem:[%s1455 + $0x58] sm:$0xff]
      %v4712 = vld [vmem:[%s1455 + $0x60] sm:$0xff]
      %v4713 = vld [vmem:[%s1455 + $0x68] sm:$0xff]
      %v4714 = vld [vmem:[%s1455 + $0x70] sm:$0xff]
      %v4715 = vld [vmem:[%s1455 + $0x78] sm:$0xff]
      %v4716 = vld [vmem:[%s1455 + $0x80] sm:$0xff]
      %v4717 = vld [vmem:[%s1455 + $0x88] sm:$0xff]
      %v4718 = vld [vmem:[%s1455 + $0x90] sm:$0xff]
      %v4719 = vld [vmem:[%s1455 + $0x98] sm:$0xff]
      %v4720 = vld [vmem:[%s1455 + $0xa0] sm:$0xff]
      %v4721 = vld [vmem:[%s1455 + $0xa8] sm:$0xff]
      %v4722 = vld [vmem:[%s1455 + $0xb0] sm:$0xff]
      %v4723 = vld [vmem:[%s1455 + $0xb8] sm:$0xff]
      %v4724 = vld [vmem:[%s1455 + $0xc0] sm:$0xff]
      %v4725 = vld [vmem:[%s1455 + $0xc8] sm:$0xff]
      %v4726 = vld [vmem:[%s1455 + $0xd0] sm:$0xff]
      %v4727 = vld [vmem:[%s1455 + $0xd8] sm:$0xff]
      %v4728 = vld [vmem:[%s1455 + $0xe0] sm:$0xff]
      %v4729 = vld [vmem:[%s1455 + $0xe8] sm:$0xff]
      %v4730 = vld [vmem:[%s1455 + $0xf0] sm:$0xff]
      %v4731 = vld [vmem:[%s1455 + $0xf8] sm:$0xff]
      %4733 = vset.pattern.permute.xlu0 0
      %4734 = vperm.xlu0 %4733, %v4700
      %v4735 = vpop.permute.xlu0 %4734
      %4738 = vset.pattern.permute.xlu0 0
      %4739 = vperm.xlu0 %4738, %v4701
      %v4740 = vpop.permute.xlu0 %4739
      %4743 = vset.pattern.permute.xlu0 0
      %4744 = vperm.xlu0 %4743, %v4702
      %v4745 = vpop.permute.xlu0 %4744
      %4748 = vset.pattern.permute.xlu0 0
      %4749 = vperm.xlu0 %4748, %v4703
      %v4750 = vpop.permute.xlu0 %4749
      %4753 = vset.pattern.permute.xlu0 0
      %4754 = vperm.xlu0 %4753, %v4704
      %v4755 = vpop.permute.xlu0 %4754
      %4758 = vset.pattern.permute.xlu0 0
      %4759 = vperm.xlu0 %4758, %v4705
      %v4760 = vpop.permute.xlu0 %4759
      %4763 = vset.pattern.permute.xlu0 0
      %4764 = vperm.xlu0 %4763, %v4706
      %v4765 = vpop.permute.xlu0 %4764
      %4768 = vset.pattern.permute.xlu0 0
      %4769 = vperm.xlu0 %4768, %v4707
      %v4770 = vpop.permute.xlu0 %4769
      %4773 = vset.pattern.permute.xlu0 0
      %4774 = vperm.xlu0 %4773, %v4708
      %v4775 = vpop.permute.xlu0 %4774
      %4778 = vset.pattern.permute.xlu0 0
      %4779 = vperm.xlu0 %4778, %v4709
      %v4780 = vpop.permute.xlu0 %4779
      %4783 = vset.pattern.permute.xlu0 0
      %4784 = vperm.xlu0 %4783, %v4710
      %v4785 = vpop.permute.xlu0 %4784
      %4788 = vset.pattern.permute.xlu0 0
      %4789 = vperm.xlu0 %4788, %v4711
      %v4790 = vpop.permute.xlu0 %4789
      %4793 = vset.pattern.permute.xlu0 0
      %4794 = vperm.xlu0 %4793, %v4712
      %v4795 = vpop.permute.xlu0 %4794
      %4798 = vset.pattern.permute.xlu0 0
      %4799 = vperm.xlu0 %4798, %v4713
      %v4800 = vpop.permute.xlu0 %4799
      %4803 = vset.pattern.permute.xlu0 0
      %4804 = vperm.xlu0 %4803, %v4714
      %v4805 = vpop.permute.xlu0 %4804
      %4808 = vset.pattern.permute.xlu0 0
      %4809 = vperm.xlu0 %4808, %v4715
      %v4810 = vpop.permute.xlu0 %4809
      %4813 = vset.pattern.permute.xlu0 0
      %4814 = vperm.xlu0 %4813, %v4716
      %v4815 = vpop.permute.xlu0 %4814
      %4818 = vset.pattern.permute.xlu0 0
      %4819 = vperm.xlu0 %4818, %v4717
      %v4820 = vpop.permute.xlu0 %4819
      %4823 = vset.pattern.permute.xlu0 0
      %4824 = vperm.xlu0 %4823, %v4718
      %v4825 = vpop.permute.xlu0 %4824
      %4828 = vset.pattern.permute.xlu0 0
      %4829 = vperm.xlu0 %4828, %v4719
      %v4830 = vpop.permute.xlu0 %4829
      %4833 = vset.pattern.permute.xlu0 0
      %4834 = vperm.xlu0 %4833, %v4720
      %v4835 = vpop.permute.xlu0 %4834
      %4838 = vset.pattern.permute.xlu0 0
      %4839 = vperm.xlu0 %4838, %v4721
      %v4840 = vpop.permute.xlu0 %4839
      %4843 = vset.pattern.permute.xlu0 0
      %4844 = vperm.xlu0 %4843, %v4722
      %v4845 = vpop.permute.xlu0 %4844
      %4848 = vset.pattern.permute.xlu0 0
      %4849 = vperm.xlu0 %4848, %v4723
      %v4850 = vpop.permute.xlu0 %4849
      %4853 = vset.pattern.permute.xlu0 0
      %4854 = vperm.xlu0 %4853, %v4724
      %v4855 = vpop.permute.xlu0 %4854
      %4858 = vset.pattern.permute.xlu0 0
      %4859 = vperm.xlu0 %4858, %v4725
      %v4860 = vpop.permute.xlu0 %4859
      %4863 = vset.pattern.permute.xlu0 0
      %4864 = vperm.xlu0 %4863, %v4726
      %v4865 = vpop.permute.xlu0 %4864
      %4868 = vset.pattern.permute.xlu0 0
      %4869 = vperm.xlu0 %4868, %v4727
      %v4870 = vpop.permute.xlu0 %4869
      %4873 = vset.pattern.permute.xlu0 0
      %4874 = vperm.xlu0 %4873, %v4728
      %v4875 = vpop.permute.xlu0 %4874
      %4878 = vset.pattern.permute.xlu0 0
      %4879 = vperm.xlu0 %4878, %v4729
      %v4880 = vpop.permute.xlu0 %4879
      %4883 = vset.pattern.permute.xlu0 0
      %4884 = vperm.xlu0 %4883, %v4730
      %v4885 = vpop.permute.xlu0 %4884
      %4888 = vset.pattern.permute.xlu0 0
      %4889 = vperm.xlu0 %4888, %v4731
      %v4890 = vpop.permute.xlu0 %4889
      %v4892 = vmul.f32 %v4698, %v4735
      %v4893 = vmul.f32 %v4697, %v4740
      %v4894 = vmul.f32 %v4696, %v4745
      %v4895 = vmul.f32 %v4695, %v4750
      %v4896 = vmul.f32 %v4694, %v4755
      %v4897 = vmul.f32 %v4693, %v4760
      %v4898 = vmul.f32 %v4692, %v4765
      %v4899 = vmul.f32 %v4691, %v4770
      %v4900 = vmul.f32 %v4690, %v4775
      %v4901 = vmul.f32 %v4689, %v4780
      %v4902 = vmul.f32 %v4688, %v4785
      %v4903 = vmul.f32 %v4687, %v4790
      %v4904 = vmul.f32 %v4686, %v4795
      %v4905 = vmul.f32 %v4685, %v4800
      %v4906 = vmul.f32 %v4684, %v4805
      %v4907 = vmul.f32 %v4683, %v4810
      %v4908 = vmul.f32 %v4682, %v4815
      %v4909 = vmul.f32 %v4681, %v4820
      %v4910 = vmul.f32 %v4680, %v4825
      %v4911 = vmul.f32 %v4679, %v4830
      %v4912 = vmul.f32 %v4678, %v4835
      %v4913 = vmul.f32 %v4677, %v4840
      %v4914 = vmul.f32 %v4676, %v4845
      %v4915 = vmul.f32 %v4675, %v4850
      %v4916 = vmul.f32 %v4674, %v4855
      %v4917 = vmul.f32 %v4673, %v4860
      %v4918 = vmul.f32 %v4672, %v4865
      %v4919 = vmul.f32 %v4671, %v4870
      %v4920 = vmul.f32 %v4670, %v4875
      %v4921 = vmul.f32 %v4669, %v4880
      %v4922 = vmul.f32 %v4668, %v4885
      %v4923 = vmul.f32 %v4699, %v4890
      %v4924 = vld [vmem:[#allocation3] sm:$0xff]
      %v4925 = vld [vmem:[#allocation3 + $0x8] sm:$0xff]
      %v4926 = vld [vmem:[#allocation3 + $0x10] sm:$0xff]
      %v4927 = vld [vmem:[#allocation3 + $0x18] sm:$0xff]
      %v4928 = vld [vmem:[#allocation3 + $0x20] sm:$0xff]
      %v4929 = vld [vmem:[#allocation3 + $0x28] sm:$0xff]
      %v4930 = vld [vmem:[#allocation3 + $0x30] sm:$0xff]
      %v4931 = vld [vmem:[#allocation3 + $0x38] sm:$0xff]
      %v4932 = vld [vmem:[#allocation3 + $0x40] sm:$0xff]
      %v4933 = vld [vmem:[#allocation3 + $0x48] sm:$0xff]
      %v4934 = vld [vmem:[#allocation3 + $0x50] sm:$0xff]
      %v4935 = vld [vmem:[#allocation3 + $0x58] sm:$0xff]
      %v4936 = vld [vmem:[#allocation3 + $0x60] sm:$0xff]
      %v4937 = vld [vmem:[#allocation3 + $0x68] sm:$0xff]
      %v4938 = vld [vmem:[#allocation3 + $0x70] sm:$0xff]
      %v4939 = vld [vmem:[#allocation3 + $0x78] sm:$0xff]
      %v4940 = vld [vmem:[#allocation3 + $0x80] sm:$0xff]
      %v4941 = vld [vmem:[#allocation3 + $0x88] sm:$0xff]
      %v4942 = vld [vmem:[#allocation3 + $0x90] sm:$0xff]
      %v4943 = vld [vmem:[#allocation3 + $0x98] sm:$0xff]
      %v4944 = vld [vmem:[#allocation3 + $0xa0] sm:$0xff]
      %v4945 = vld [vmem:[#allocation3 + $0xa8] sm:$0xff]
      %v4946 = vld [vmem:[#allocation3 + $0xb0] sm:$0xff]
      %v4947 = vld [vmem:[#allocation3 + $0xb8] sm:$0xff]
      %v4948 = vld [vmem:[#allocation3 + $0xc0] sm:$0xff]
      %v4949 = vld [vmem:[#allocation3 + $0xc8] sm:$0xff]
      %v4950 = vld [vmem:[#allocation3 + $0xd0] sm:$0xff]
      %v4951 = vld [vmem:[#allocation3 + $0xd8] sm:$0xff]
      %v4952 = vld [vmem:[#allocation3 + $0xe0] sm:$0xff]
      %v4953 = vld [vmem:[#allocation3 + $0xe8] sm:$0xff]
      %v4954 = vld [vmem:[#allocation3 + $0xf0] sm:$0xff]
      %v4955 = vld [vmem:[#allocation3 + $0xf8] sm:$0xff]
      %v4956 = vpack.c.bf16 %v4893, %v4892
      %v4957 = vpack.c.bf16 %v4895, %v4894
      %v4958 = vpack.c.bf16 %v4897, %v4896
      %v4959 = vpack.c.bf16 %v4899, %v4898
      %v4960 = vpack.c.bf16 %v4901, %v4900
      %v4961 = vpack.c.bf16 %v4903, %v4902
      %v4962 = vpack.c.bf16 %v4905, %v4904
      %v4963 = vpack.c.bf16 %v4907, %v4906
      %v4964 = vpack.c.bf16 %v4909, %v4908
      %v4965 = vpack.c.bf16 %v4911, %v4910
      %v4966 = vpack.c.bf16 %v4913, %v4912
      %v4967 = vpack.c.bf16 %v4915, %v4914
      %v4968 = vpack.c.bf16 %v4917, %v4916
      %v4969 = vpack.c.bf16 %v4919, %v4918
      %v4970 = vpack.c.bf16 %v4921, %v4920
      %v4971 = vpack.c.bf16 %v4923, %v4922
      %s4972 = scalar_lea.vmem %s1, 512
      %v4973 = vld [vmem:[%s4972] sm:$0xf]
      %v4974 = vld [vmem:[%s4972 + $0x4] sm:$0xf]
      %v4975 = vld [vmem:[%s4972 + $0x8] sm:$0xf]
      %v4976 = vld [vmem:[%s4972 + $0xc] sm:$0xf]
      %v4977 = vld [vmem:[%s4972 + $0x10] sm:$0xf]
      %v4978 = vld [vmem:[%s4972 + $0x14] sm:$0xf]
      %v4979 = vld [vmem:[%s4972 + $0x18] sm:$0xf]
      %v4980 = vld [vmem:[%s4972 + $0x1c] sm:$0xf]
      %v4981 = vld [vmem:[%s4972 + $0x20] sm:$0xf]
      %v4982 = vld [vmem:[%s4972 + $0x24] sm:$0xf]
      %v4983 = vld [vmem:[%s4972 + $0x28] sm:$0xf]
      %v4984 = vld [vmem:[%s4972 + $0x2c] sm:$0xf]
      %v4985 = vld [vmem:[%s4972 + $0x30] sm:$0xf]
      %v4986 = vld [vmem:[%s4972 + $0x34] sm:$0xf]
      %v4987 = vld [vmem:[%s4972 + $0x38] sm:$0xf]
      %v4988 = vld [vmem:[%s4972 + $0x3c] sm:$0xf]
      %v5005 = vunpack.c.l.b16 %v4973
      %v5006 = vunpack.c.l.b16 %v4974
      %v5007 = vunpack.c.l.b16 %v4975
      %v5008 = vunpack.c.l.b16 %v4976
      %v5009 = vunpack.c.l.b16 %v4977
      %v5010 = vunpack.c.l.b16 %v4978
      %v5011 = vunpack.c.l.b16 %v4979
      %v5012 = vunpack.c.l.b16 %v4980
      %v5013 = vunpack.c.l.b16 %v4981
      %v5014 = vunpack.c.l.b16 %v4982
      %v5015 = vunpack.c.l.b16 %v4983
      %v5016 = vunpack.c.l.b16 %v4984
      %v5017 = vunpack.c.l.b16 %v4985
      %v5018 = vunpack.c.l.b16 %v4986
      %v5019 = vunpack.c.l.b16 %v4987
      %v5020 = vunpack.c.l.b16 %v4988
      %v5021 = vpack.c.b16 %v5006, %v5005
      %v5022 = vpack.c.b16 %v5008, %v5007
      %v5023 = vpack.c.b16 %v5010, %v5009
      %v5024 = vpack.c.b16 %v5012, %v5011
      %v5025 = vpack.c.b16 %v5014, %v5013
      %v5026 = vpack.c.b16 %v5016, %v5015
      %v5027 = vpack.c.b16 %v5018, %v5017
      %v5028 = vpack.c.b16 %v5020, %v5019
      %5037 = vmatprep.subr.bf16.mxu0 0
      %5038 = vmatpush1.bf16.msra.mxu0 %v5028
      %5039 = vmatprep.subr.bf16.mxu0 0
      %5040 = vmatpush1.bf16.msra.mxu0 %v5027
      %5041 = vmatprep.subr.bf16.mxu0 0
      %5042 = vmatpush1.bf16.msra.mxu0 %v5026
      %5043 = vmatprep.subr.bf16.mxu0 0
      %5044 = vmatpush1.bf16.msra.mxu0 %v5025
      %5045 = vmatprep.subr.bf16.mxu0 0
      %5046 = vmatpush1.bf16.msra.mxu0 %v5024
      %5047 = vmatprep.subr.bf16.mxu0 0
      %5048 = vmatpush1.bf16.msra.mxu0 %v5023
      %5049 = vmatprep.subr.bf16.mxu0 0
      %5050 = vmatpush1.bf16.msra.mxu0 %v5022
      %5051 = vmatprep.subr.bf16.mxu0 0
      %5052 = vmatpush1.bf16.msra.mxu0 %v5021
      %5053 = vmatprep.subr.bf16.mxu0 0
      %5054 = vmatpush2.bf16.msra.mxu0 0
      %5055 = vmatprep.subr.bf16.mxu0 0
      %5056 = vmatpush2.bf16.msra.mxu0 0
      %5057 = vmatprep.subr.bf16.mxu0 0
      %5058 = vmatpush2.bf16.msra.mxu0 0
      %5059 = vmatprep.subr.bf16.mxu0 0
      %5060 = vmatpush2.bf16.msra.mxu0 0
      %5061 = vmatprep.subr.bf16.mxu0 0
      %5062 = vmatpush2.bf16.msra.mxu0 0
      %5063 = vmatprep.subr.bf16.mxu0 0
      %5064 = vmatpush2.bf16.msra.mxu0 0
      %5065 = vmatprep.subr.bf16.mxu0 0
      %5066 = vmatpush2.bf16.msra.mxu0 0
      %5067 = vmatprep.subr.bf16.mxu0 0
      %5068 = vmatpush2.bf16.msra.mxu0 0
      %5069 = vmatprep.mubr.bf16.mxu0 0
      %5070 = vmatmul.mubr.bf16.gmra.mxu0 %v4956
      %v5071 = vpop.f32.mrf.mxu0
      %v5072 = vadd.f32 0.0, %v5071
      %v5073 = vpop.f32.mrf.mxu0
      %v5074 = vpop.f32.mrf.mxu0
      %v5075 = vadd.f32 0.0, %v5074
      %v5076 = vpop.f32.mrf.mxu0
      %5077 = vmatprep.mubr.bf16.mxu0 0
      %5078 = vmatmul.mubr.bf16.gmra.mxu0 %v4957
      %v5079 = vpop.f32.mrf.mxu0
      %v5080 = vadd.f32 0.0, %v5079
      %v5081 = vpop.f32.mrf.mxu0
      %v5082 = vpop.f32.mrf.mxu0
      %v5083 = vadd.f32 0.0, %v5082
      %v5084 = vpop.f32.mrf.mxu0
      %5085 = vmatprep.mubr.bf16.mxu0 0
      %5086 = vmatmul.mubr.bf16.gmra.mxu0 %v4958
      %v5087 = vpop.f32.mrf.mxu0
      %v5088 = vadd.f32 0.0, %v5087
      %v5089 = vpop.f32.mrf.mxu0
      %v5090 = vpop.f32.mrf.mxu0
      %v5091 = vadd.f32 0.0, %v5090
      %v5092 = vpop.f32.mrf.mxu0
      %5093 = vmatprep.mubr.bf16.mxu0 0
      %5094 = vmatmul.mubr.bf16.gmra.mxu0 %v4959
      %v5095 = vpop.f32.mrf.mxu0
      %v5096 = vadd.f32 0.0, %v5095
      %v5097 = vpop.f32.mrf.mxu0
      %v5098 = vpop.f32.mrf.mxu0
      %v5099 = vadd.f32 0.0, %v5098
      %v5100 = vpop.f32.mrf.mxu0
      %5101 = vmatprep.mubr.bf16.mxu0 0
      %5102 = vmatmul.mubr.bf16.gmra.mxu0 %v4960
      %v5103 = vpop.f32.mrf.mxu0
      %v5104 = vadd.f32 0.0, %v5103
      %v5105 = vpop.f32.mrf.mxu0
      %v5106 = vpop.f32.mrf.mxu0
      %v5107 = vadd.f32 0.0, %v5106
      %v5108 = vpop.f32.mrf.mxu0
      %5109 = vmatprep.mubr.bf16.mxu0 0
      %5110 = vmatmul.mubr.bf16.gmra.mxu0 %v4961
      %v5111 = vpop.f32.mrf.mxu0
      %v5112 = vadd.f32 0.0, %v5111
      %v5113 = vpop.f32.mrf.mxu0
      %v5114 = vpop.f32.mrf.mxu0
      %v5115 = vadd.f32 0.0, %v5114
      %v5116 = vpop.f32.mrf.mxu0
      %5117 = vmatprep.mubr.bf16.mxu0 0
      %5118 = vmatmul.mubr.bf16.gmra.mxu0 %v4962
      %v5119 = vpop.f32.mrf.mxu0
      %v5120 = vadd.f32 0.0, %v5119
      %v5121 = vpop.f32.mrf.mxu0
      %v5122 = vpop.f32.mrf.mxu0
      %v5123 = vadd.f32 0.0, %v5122
      %v5124 = vpop.f32.mrf.mxu0
      %5125 = vmatprep.mubr.bf16.mxu0 0
      %5126 = vmatmul.mubr.bf16.gmra.mxu0 %v4963
      %v5127 = vpop.f32.mrf.mxu0
      %v5128 = vadd.f32 0.0, %v5127
      %v5129 = vpop.f32.mrf.mxu0
      %v5130 = vpop.f32.mrf.mxu0
      %v5131 = vadd.f32 0.0, %v5130
      %v5132 = vpop.f32.mrf.mxu0
      %5133 = vmatprep.mubr.bf16.mxu0 0
      %5134 = vmatmul.mubr.bf16.gmra.mxu0 %v4964
      %v5135 = vpop.f32.mrf.mxu0
      %v5136 = vadd.f32 0.0, %v5135
      %v5137 = vpop.f32.mrf.mxu0
      %v5138 = vpop.f32.mrf.mxu0
      %v5139 = vadd.f32 0.0, %v5138
      %v5140 = vpop.f32.mrf.mxu0
      %5141 = vmatprep.mubr.bf16.mxu0 0
      %5142 = vmatmul.mubr.bf16.gmra.mxu0 %v4965
      %v5143 = vpop.f32.mrf.mxu0
      %v5144 = vadd.f32 0.0, %v5143
      %v5145 = vpop.f32.mrf.mxu0
      %v5146 = vpop.f32.mrf.mxu0
      %v5147 = vadd.f32 0.0, %v5146
      %v5148 = vpop.f32.mrf.mxu0
      %5149 = vmatprep.mubr.bf16.mxu0 0
      %5150 = vmatmul.mubr.bf16.gmra.mxu0 %v4966
      %v5151 = vpop.f32.mrf.mxu0
      %v5152 = vadd.f32 0.0, %v5151
      %v5153 = vpop.f32.mrf.mxu0
      %v5154 = vpop.f32.mrf.mxu0
      %v5155 = vadd.f32 0.0, %v5154
      %v5156 = vpop.f32.mrf.mxu0
      %5157 = vmatprep.mubr.bf16.mxu0 0
      %5158 = vmatmul.mubr.bf16.gmra.mxu0 %v4967
      %v5159 = vpop.f32.mrf.mxu0
      %v5160 = vadd.f32 0.0, %v5159
      %v5161 = vpop.f32.mrf.mxu0
      %v5162 = vpop.f32.mrf.mxu0
      %v5163 = vadd.f32 0.0, %v5162
      %v5164 = vpop.f32.mrf.mxu0
      %5165 = vmatprep.mubr.bf16.mxu0 0
      %5166 = vmatmul.mubr.bf16.gmra.mxu0 %v4968
      %v5167 = vpop.f32.mrf.mxu0
      %v5168 = vadd.f32 0.0, %v5167
      %v5169 = vpop.f32.mrf.mxu0
      %v5170 = vpop.f32.mrf.mxu0
      %v5171 = vadd.f32 0.0, %v5170
      %v5172 = vpop.f32.mrf.mxu0
      %5173 = vmatprep.mubr.bf16.mxu0 0
      %5174 = vmatmul.mubr.bf16.gmra.mxu0 %v4969
      %v5175 = vpop.f32.mrf.mxu0
      %v5176 = vadd.f32 0.0, %v5175
      %v5177 = vpop.f32.mrf.mxu0
      %v5178 = vpop.f32.mrf.mxu0
      %v5179 = vadd.f32 0.0, %v5178
      %v5180 = vpop.f32.mrf.mxu0
      %5181 = vmatprep.mubr.bf16.mxu0 0
      %5182 = vmatmul.mubr.bf16.gmra.mxu0 %v4970
      %v5183 = vpop.f32.mrf.mxu0
      %v5184 = vadd.f32 0.0, %v5183
      %v5185 = vpop.f32.mrf.mxu0
      %v5186 = vpop.f32.mrf.mxu0
      %v5187 = vadd.f32 0.0, %v5186
      %v5188 = vpop.f32.mrf.mxu0
      %5189 = vmatprep.mubr.bf16.mxu0 0
      %5190 = vmatmul.mubr.bf16.gmra.mxu0 %v4971
      %v5191 = vpop.f32.mrf.mxu0
      %v5192 = vadd.f32 0.0, %v5191
      %v5193 = vpop.f32.mrf.mxu0
      %v5194 = vpop.f32.mrf.mxu0
      %v5195 = vadd.f32 0.0, %v5194
      %v5196 = vpop.f32.mrf.mxu0
      %5197 = vdwg.mxu0
      %v5198 = vadd.f32 %v4924, %v5072
      %v5199 = vadd.f32 %v4925, %v5075
      %v5200 = vadd.f32 %v4926, %v5080
      %v5201 = vadd.f32 %v4927, %v5083
      %v5202 = vadd.f32 %v4928, %v5088
      %v5203 = vadd.f32 %v4929, %v5091
      %v5204 = vadd.f32 %v4930, %v5096
      %v5205 = vadd.f32 %v4931, %v5099
      %v5206 = vadd.f32 %v4932, %v5104
      %v5207 = vadd.f32 %v4933, %v5107
      %v5208 = vadd.f32 %v4934, %v5112
      %v5209 = vadd.f32 %v4935, %v5115
      %v5210 = vadd.f32 %v4936, %v5120
      %v5211 = vadd.f32 %v4937, %v5123
      %v5212 = vadd.f32 %v4938, %v5128
      %v5213 = vadd.f32 %v4939, %v5131
      %v5214 = vadd.f32 %v4940, %v5136
      %v5215 = vadd.f32 %v4941, %v5139
      %v5216 = vadd.f32 %v4942, %v5144
      %v5217 = vadd.f32 %v4943, %v5147
      %v5218 = vadd.f32 %v4944, %v5152
      %v5219 = vadd.f32 %v4945, %v5155
      %v5220 = vadd.f32 %v4946, %v5160
      %v5221 = vadd.f32 %v4947, %v5163
      %v5222 = vadd.f32 %v4948, %v5168
      %v5223 = vadd.f32 %v4949, %v5171
      %v5224 = vadd.f32 %v4950, %v5176
      %v5225 = vadd.f32 %v4951, %v5179
      %v5226 = vadd.f32 %v4952, %v5184
      %v5227 = vadd.f32 %v4953, %v5187
      %v5228 = vadd.f32 %v4954, %v5192
      %v5229 = vadd.f32 %v4955, %v5195
      %5230 = vst [vmem:[#allocation3] sm:$0xff] %v5198
      %5231 = vst [vmem:[#allocation3 + $0x8] sm:$0xff] %v5199
      %5232 = vst [vmem:[#allocation3 + $0x10] sm:$0xff] %v5200
      %5233 = vst [vmem:[#allocation3 + $0x18] sm:$0xff] %v5201
      %5234 = vst [vmem:[#allocation3 + $0x20] sm:$0xff] %v5202
      %5235 = vst [vmem:[#allocation3 + $0x28] sm:$0xff] %v5203
      %5236 = vst [vmem:[#allocation3 + $0x30] sm:$0xff] %v5204
      %5237 = vst [vmem:[#allocation3 + $0x38] sm:$0xff] %v5205
      %5238 = vst [vmem:[#allocation3 + $0x40] sm:$0xff] %v5206
      %5239 = vst [vmem:[#allocation3 + $0x48] sm:$0xff] %v5207
      %5240 = vst [vmem:[#allocation3 + $0x50] sm:$0xff] %v5208
      %5241 = vst [vmem:[#allocation3 + $0x58] sm:$0xff] %v5209
      %5242 = vst [vmem:[#allocation3 + $0x60] sm:$0xff] %v5210
      %5243 = vst [vmem:[#allocation3 + $0x68] sm:$0xff] %v5211
      %5244 = vst [vmem:[#allocation3 + $0x70] sm:$0xff] %v5212
      %5245 = vst [vmem:[#allocation3 + $0x78] sm:$0xff] %v5213
      %5246 = vst [vmem:[#allocation3 + $0x80] sm:$0xff] %v5214
      %5247 = vst [vmem:[#allocation3 + $0x88] sm:$0xff] %v5215
      %5248 = vst [vmem:[#allocation3 + $0x90] sm:$0xff] %v5216
      %5249 = vst [vmem:[#allocation3 + $0x98] sm:$0xff] %v5217
      %5250 = vst [vmem:[#allocation3 + $0xa0] sm:$0xff] %v5218
      %5251 = vst [vmem:[#allocation3 + $0xa8] sm:$0xff] %v5219
      %5252 = vst [vmem:[#allocation3 + $0xb0] sm:$0xff] %v5220
      %5253 = vst [vmem:[#allocation3 + $0xb8] sm:$0xff] %v5221
      %5254 = vst [vmem:[#allocation3 + $0xc0] sm:$0xff] %v5222
      %5255 = vst [vmem:[#allocation3 + $0xc8] sm:$0xff] %v5223
      %5256 = vst [vmem:[#allocation3 + $0xd0] sm:$0xff] %v5224
      %5257 = vst [vmem:[#allocation3 + $0xd8] sm:$0xff] %v5225
      %5258 = vst [vmem:[#allocation3 + $0xe0] sm:$0xff] %v5226
      %5259 = vst [vmem:[#allocation3 + $0xe8] sm:$0xff] %v5227
      %5260 = vst [vmem:[#allocation3 + $0xf0] sm:$0xff] %v5228
      %5261 = vst [vmem:[#allocation3 + $0xf8] sm:$0xff] %v5229
      %v5262 = vld [vmem:[#allocation3] sm:$0xff]
      %v5263 = vld [vmem:[#allocation3 + $0x8] sm:$0xff]
      %v5264 = vld [vmem:[#allocation3 + $0x10] sm:$0xff]
      %v5265 = vld [vmem:[#allocation3 + $0x18] sm:$0xff]
      %v5266 = vld [vmem:[#allocation3 + $0x20] sm:$0xff]
      %v5267 = vld [vmem:[#allocation3 + $0x28] sm:$0xff]
      %v5268 = vld [vmem:[#allocation3 + $0x30] sm:$0xff]
      %v5269 = vld [vmem:[#allocation3 + $0x38] sm:$0xff]
      %v5270 = vld [vmem:[#allocation3 + $0x40] sm:$0xff]
      %v5271 = vld [vmem:[#allocation3 + $0x48] sm:$0xff]
      %v5272 = vld [vmem:[#allocation3 + $0x50] sm:$0xff]
      %v5273 = vld [vmem:[#allocation3 + $0x58] sm:$0xff]
      %v5274 = vld [vmem:[#allocation3 + $0x60] sm:$0xff]
      %v5275 = vld [vmem:[#allocation3 + $0x68] sm:$0xff]
      %v5276 = vld [vmem:[#allocation3 + $0x70] sm:$0xff]
      %v5277 = vld [vmem:[#allocation3 + $0x78] sm:$0xff]
      %v5278 = vld [vmem:[#allocation3 + $0x80] sm:$0xff]
      %v5279 = vld [vmem:[#allocation3 + $0x88] sm:$0xff]
      %v5280 = vld [vmem:[#allocation3 + $0x90] sm:$0xff]
      %v5281 = vld [vmem:[#allocation3 + $0x98] sm:$0xff]
      %v5282 = vld [vmem:[#allocation3 + $0xa0] sm:$0xff]
      %v5283 = vld [vmem:[#allocation3 + $0xa8] sm:$0xff]
      %v5284 = vld [vmem:[#allocation3 + $0xb0] sm:$0xff]
      %v5285 = vld [vmem:[#allocation3 + $0xb8] sm:$0xff]
      %v5286 = vld [vmem:[#allocation3 + $0xc0] sm:$0xff]
      %v5287 = vld [vmem:[#allocation3 + $0xc8] sm:$0xff]
      %v5288 = vld [vmem:[#allocation3 + $0xd0] sm:$0xff]
      %v5289 = vld [vmem:[#allocation3 + $0xd8] sm:$0xff]
      %v5290 = vld [vmem:[#allocation3 + $0xe0] sm:$0xff]
      %v5291 = vld [vmem:[#allocation3 + $0xe8] sm:$0xff]
      %v5292 = vld [vmem:[#allocation3 + $0xf0] sm:$0xff]
      %v5293 = vld [vmem:[#allocation3 + $0xf8] sm:$0xff]
      %v5294 = vmax.f32 %v5262, 0.0
      %v5295 = vmax.f32 %v5263, 0.0
      %v5296 = vmax.f32 %v5264, 0.0
      %v5297 = vmax.f32 %v5265, 0.0
      %v5298 = vmax.f32 %v5266, 0.0
      %v5299 = vmax.f32 %v5267, 0.0
      %v5300 = vmax.f32 %v5268, 0.0
      %v5301 = vmax.f32 %v5269, 0.0
      %v5302 = vmax.f32 %v5270, 0.0
      %v5303 = vmax.f32 %v5271, 0.0
      %v5304 = vmax.f32 %v5272, 0.0
      %v5305 = vmax.f32 %v5273, 0.0
      %v5306 = vmax.f32 %v5274, 0.0
      %v5307 = vmax.f32 %v5275, 0.0
      %v5308 = vmax.f32 %v5276, 0.0
      %v5309 = vmax.f32 %v5277, 0.0
      %v5310 = vmax.f32 %v5278, 0.0
      %v5311 = vmax.f32 %v5279, 0.0
      %v5312 = vmax.f32 %v5280, 0.0
      %v5313 = vmax.f32 %v5281, 0.0
      %v5314 = vmax.f32 %v5282, 0.0
      %v5315 = vmax.f32 %v5283, 0.0
      %v5316 = vmax.f32 %v5284, 0.0
      %v5317 = vmax.f32 %v5285, 0.0
      %v5318 = vmax.f32 %v5286, 0.0
      %v5319 = vmax.f32 %v5287, 0.0
      %v5320 = vmax.f32 %v5288, 0.0
      %v5321 = vmax.f32 %v5289, 0.0
      %v5322 = vmax.f32 %v5290, 0.0
      %v5323 = vmax.f32 %v5291, 0.0
      %v5324 = vmax.f32 %v5292, 0.0
      %v5325 = vmax.f32 %v5293, 0.0
      %5326 = vst [vmem:[#allocation2 + $0x10] sm:$0xff] %v5294
      %5327 = vst [vmem:[#allocation2 + $0x18] sm:$0xff] %v5295
      %5328 = vst [vmem:[#allocation2 + $0x20] sm:$0xff] %v5296
      %5329 = vst [vmem:[#allocation2 + $0x28] sm:$0xff] %v5297
      %5330 = vst [vmem:[#allocation2 + $0x30] sm:$0xff] %v5298
      %5331 = vst [vmem:[#allocation2 + $0x38] sm:$0xff] %v5299
      %5332 = vst [vmem:[#allocation2 + $0x40] sm:$0xff] %v5300
      %5333 = vst [vmem:[#allocation2 + $0x48] sm:$0xff] %v5301
      %5334 = vst [vmem:[#allocation2 + $0x50] sm:$0xff] %v5302
      %5335 = vst [vmem:[#allocation2 + $0x58] sm:$0xff] %v5303
      %5336 = vst [vmem:[#allocation2 + $0x60] sm:$0xff] %v5304
      %5337 = vst [vmem:[#allocation2 + $0x68] sm:$0xff] %v5305
      %5338 = vst [vmem:[#allocation2 + $0x70] sm:$0xff] %v5306
      %5339 = vst [vmem:[#allocation2 + $0x78] sm:$0xff] %v5307
      %5340 = vst [vmem:[#allocation2 + $0x80] sm:$0xff] %v5308
      %5341 = vst [vmem:[#allocation2 + $0x88] sm:$0xff] %v5309
      %5342 = vst [vmem:[#allocation2 + $0x90] sm:$0xff] %v5310
      %5343 = vst [vmem:[#allocation2 + $0x98] sm:$0xff] %v5311
      %5344 = vst [vmem:[#allocation2 + $0xa0] sm:$0xff] %v5312
      %5345 = vst [vmem:[#allocation2 + $0xa8] sm:$0xff] %v5313
      %5346 = vst [vmem:[#allocation2 + $0xb0] sm:$0xff] %v5314
      %5347 = vst [vmem:[#allocation2 + $0xb8] sm:$0xff] %v5315
      %5348 = vst [vmem:[#allocation2 + $0xc0] sm:$0xff] %v5316
      %5349 = vst [vmem:[#allocation2 + $0xc8] sm:$0xff] %v5317
      %5350 = vst [vmem:[#allocation2 + $0xd0] sm:$0xff] %v5318
      %5351 = vst [vmem:[#allocation2 + $0xd8] sm:$0xff] %v5319
      %5352 = vst [vmem:[#allocation2 + $0xe0] sm:$0xff] %v5320
      %5353 = vst [vmem:[#allocation2 + $0xe8] sm:$0xff] %v5321
      %5354 = vst [vmem:[#allocation2 + $0xf0] sm:$0xff] %v5322
      %5355 = vst [vmem:[#allocation2 + $0xf8] sm:$0xff] %v5323
      %5356 = vst [vmem:[#allocation2 + $0x100] sm:$0xff] %v5324
      %5357 = vst [vmem:[#allocation2 + $0x108] sm:$0xff] %v5325
      %v5358 = vld [vmem:[%s4] sm:$0x1]
      %v5360 = vlaneseq
      %v5361 = vshrl.u32 %v5360, 7
      %v5362 = vsub.s32 0, %v5361
      %v5363 = vrot.slane %v5358, %v5362
      %5365 = vst [vmem:[#allocation3] sm:$0xff] %v5363
      %5366 = vst [vmem:[#allocation3 + $0x8] sm:$0xff] %v5363
      %5367 = vst [vmem:[#allocation3 + $0x10] sm:$0xff] %v5363
      %5368 = vst [vmem:[#allocation3 + $0x18] sm:$0xff] %v5363
      %5369 = vst [vmem:[#allocation3 + $0x20] sm:$0xff] %v5363
      %5370 = vst [vmem:[#allocation3 + $0x28] sm:$0xff] %v5363
      %5371 = vst [vmem:[#allocation3 + $0x30] sm:$0xff] %v5363
      %5372 = vst [vmem:[#allocation3 + $0x38] sm:$0xff] %v5363
      %5373 = vst [vmem:[#allocation3 + $0x40] sm:$0xff] %v5363
      %5374 = vst [vmem:[#allocation3 + $0x48] sm:$0xff] %v5363
      %5375 = vst [vmem:[#allocation3 + $0x50] sm:$0xff] %v5363
      %5376 = vst [vmem:[#allocation3 + $0x58] sm:$0xff] %v5363
      %5377 = vst [vmem:[#allocation3 + $0x60] sm:$0xff] %v5363
      %5378 = vst [vmem:[#allocation3 + $0x68] sm:$0xff] %v5363
      %5379 = vst [vmem:[#allocation3 + $0x70] sm:$0xff] %v5363
      %5380 = vst [vmem:[#allocation3 + $0x78] sm:$0xff] %v5363
      %5381 = vst [vmem:[#allocation3 + $0x80] sm:$0xff] %v5363
      %5382 = vst [vmem:[#allocation3 + $0x88] sm:$0xff] %v5363
      %5383 = vst [vmem:[#allocation3 + $0x90] sm:$0xff] %v5363
      %5384 = vst [vmem:[#allocation3 + $0x98] sm:$0xff] %v5363
      %5385 = vst [vmem:[#allocation3 + $0xa0] sm:$0xff] %v5363
      %5386 = vst [vmem:[#allocation3 + $0xa8] sm:$0xff] %v5363
      %5387 = vst [vmem:[#allocation3 + $0xb0] sm:$0xff] %v5363
      %5388 = vst [vmem:[#allocation3 + $0xb8] sm:$0xff] %v5363
      %5389 = vst [vmem:[#allocation3 + $0xc0] sm:$0xff] %v5363
      %5390 = vst [vmem:[#allocation3 + $0xc8] sm:$0xff] %v5363
      %5391 = vst [vmem:[#allocation3 + $0xd0] sm:$0xff] %v5363
      %5392 = vst [vmem:[#allocation3 + $0xd8] sm:$0xff] %v5363
      %5393 = vst [vmem:[#allocation3 + $0xe0] sm:$0xff] %v5363
      %5394 = vst [vmem:[#allocation3 + $0xe8] sm:$0xff] %v5363
      %5395 = vst [vmem:[#allocation3 + $0xf0] sm:$0xff] %v5363
      %5396 = vst [vmem:[#allocation3 + $0xf8] sm:$0xff] %v5363
      %v5397 = vld [vmem:[#allocation2] sm:$0xff]
      %v5398 = vld [vmem:[#allocation2 + $0x8] sm:$0xff]
      %v5399 = vld [vmem:[#allocation2 + $0x10] sm:$0xff]
      %v5400 = vld [vmem:[#allocation2 + $0x18] sm:$0xff]
      %v5401 = vld [vmem:[#allocation2 + $0x20] sm:$0xff]
      %v5402 = vld [vmem:[#allocation2 + $0x28] sm:$0xff]
      %v5403 = vld [vmem:[#allocation2 + $0x30] sm:$0xff]
      %v5404 = vld [vmem:[#allocation2 + $0x38] sm:$0xff]
      %v5405 = vld [vmem:[#allocation2 + $0x40] sm:$0xff]
      %v5406 = vld [vmem:[#allocation2 + $0x48] sm:$0xff]
      %v5407 = vld [vmem:[#allocation2 + $0x50] sm:$0xff]
      %v5408 = vld [vmem:[#allocation2 + $0x58] sm:$0xff]
      %v5409 = vld [vmem:[#allocation2 + $0x60] sm:$0xff]
      %v5410 = vld [vmem:[#allocation2 + $0x68] sm:$0xff]
      %v5411 = vld [vmem:[#allocation2 + $0x70] sm:$0xff]
      %v5412 = vld [vmem:[#allocation2 + $0x78] sm:$0xff]
      %v5413 = vld [vmem:[#allocation2 + $0x80] sm:$0xff]
      %v5414 = vld [vmem:[#allocation2 + $0x88] sm:$0xff]
      %v5415 = vld [vmem:[#allocation2 + $0x90] sm:$0xff]
      %v5416 = vld [vmem:[#allocation2 + $0x98] sm:$0xff]
      %v5417 = vld [vmem:[#allocation2 + $0xa0] sm:$0xff]
      %v5418 = vld [vmem:[#allocation2 + $0xa8] sm:$0xff]
      %v5419 = vld [vmem:[#allocation2 + $0xb0] sm:$0xff]
      %v5420 = vld [vmem:[#allocation2 + $0xb8] sm:$0xff]
      %v5421 = vld [vmem:[#allocation2 + $0xc0] sm:$0xff]
      %v5422 = vld [vmem:[#allocation2 + $0xc8] sm:$0xff]
      %v5423 = vld [vmem:[#allocation2 + $0xd0] sm:$0xff]
      %v5424 = vld [vmem:[#allocation2 + $0xd8] sm:$0xff]
      %v5425 = vld [vmem:[#allocation2 + $0xe0] sm:$0xff]
      %v5426 = vld [vmem:[#allocation2 + $0xe8] sm:$0xff]
      %v5427 = vld [vmem:[#allocation2 + $0xf0] sm:$0xff]
      %v5428 = vld [vmem:[#allocation2 + $0xf8] sm:$0xff]
      %v5429 = vrot.slane %v5397, 7
      %v5430 = vrot.slane %v5398, 7
      %v5431 = vrot.slane %v5399, 7
      %v5432 = vrot.slane %v5400, 7
      %v5433 = vrot.slane %v5401, 7
      %v5434 = vrot.slane %v5402, 7
      %v5435 = vrot.slane %v5403, 7
      %v5436 = vrot.slane %v5404, 7
      %v5437 = vrot.slane %v5405, 7
      %v5438 = vrot.slane %v5406, 7
      %v5439 = vrot.slane %v5407, 7
      %v5440 = vrot.slane %v5408, 7
      %v5441 = vrot.slane %v5409, 7
      %v5442 = vrot.slane %v5410, 7
      %v5443 = vrot.slane %v5411, 7
      %v5444 = vrot.slane %v5412, 7
      %v5445 = vrot.slane %v5413, 7
      %v5446 = vrot.slane %v5414, 7
      %v5447 = vrot.slane %v5415, 7
      %v5448 = vrot.slane %v5416, 7
      %v5449 = vrot.slane %v5417, 7
      %v5450 = vrot.slane %v5418, 7
      %v5451 = vrot.slane %v5419, 7
      %v5452 = vrot.slane %v5420, 7
      %v5453 = vrot.slane %v5421, 7
      %v5454 = vrot.slane %v5422, 7
      %v5455 = vrot.slane %v5423, 7
      %v5456 = vrot.slane %v5424, 7
      %v5457 = vrot.slane %v5425, 7
      %v5458 = vrot.slane %v5426, 7
      %v5459 = vrot.slane %v5427, 7
      %v5460 = vrot.slane %v5428, 7
      %v5461 = vsel %vm458, %v5459, %v5460
      %v5462 = vsel %vm458, %v5458, %v5459
      %v5463 = vsel %vm458, %v5457, %v5458
      %v5464 = vsel %vm458, %v5456, %v5457
      %v5465 = vsel %vm458, %v5455, %v5456
      %v5466 = vsel %vm458, %v5454, %v5455
      %v5467 = vsel %vm458, %v5453, %v5454
      %v5468 = vsel %vm458, %v5452, %v5453
      %v5469 = vsel %vm458, %v5451, %v5452
      %v5470 = vsel %vm458, %v5450, %v5451
      %v5471 = vsel %vm458, %v5449, %v5450
      %v5472 = vsel %vm458, %v5448, %v5449
      %v5473 = vsel %vm458, %v5447, %v5448
      %v5474 = vsel %vm458, %v5446, %v5447
      %v5475 = vsel %vm458, %v5445, %v5446
      %v5476 = vsel %vm458, %v5444, %v5445
      %v5477 = vsel %vm458, %v5443, %v5444
      %v5478 = vsel %vm458, %v5442, %v5443
      %v5479 = vsel %vm458, %v5441, %v5442
      %v5480 = vsel %vm458, %v5440, %v5441
      %v5481 = vsel %vm458, %v5439, %v5440
      %v5482 = vsel %vm458, %v5438, %v5439
      %v5483 = vsel %vm458, %v5437, %v5438
      %v5484 = vsel %vm458, %v5436, %v5437
      %v5485 = vsel %vm458, %v5435, %v5436
      %v5486 = vsel %vm458, %v5434, %v5435
      %v5487 = vsel %vm458, %v5433, %v5434
      %v5488 = vsel %vm458, %v5432, %v5433
      %v5489 = vsel %vm458, %v5431, %v5432
      %v5490 = vsel %vm458, %v5430, %v5431
      %v5491 = vsel %vm458, %v5429, %v5430
      %v5492 = vsel %vm458, %v5460, %v5429
      %v5493 = vld [vmem:[%s5] sm:$0xff]
      %v5494 = vld [vmem:[%s5 + $0x8] sm:$0xff]
      %v5495 = vld [vmem:[%s5 + $0x10] sm:$0xff]
      %v5496 = vld [vmem:[%s5 + $0x18] sm:$0xff]
      %v5497 = vld [vmem:[%s5 + $0x20] sm:$0xff]
      %v5498 = vld [vmem:[%s5 + $0x28] sm:$0xff]
      %v5499 = vld [vmem:[%s5 + $0x30] sm:$0xff]
      %v5500 = vld [vmem:[%s5 + $0x38] sm:$0xff]
      %v5501 = vld [vmem:[%s5 + $0x40] sm:$0xff]
      %v5502 = vld [vmem:[%s5 + $0x48] sm:$0xff]
      %v5503 = vld [vmem:[%s5 + $0x50] sm:$0xff]
      %v5504 = vld [vmem:[%s5 + $0x58] sm:$0xff]
      %v5505 = vld [vmem:[%s5 + $0x60] sm:$0xff]
      %v5506 = vld [vmem:[%s5 + $0x68] sm:$0xff]
      %v5507 = vld [vmem:[%s5 + $0x70] sm:$0xff]
      %v5508 = vld [vmem:[%s5 + $0x78] sm:$0xff]
      %v5509 = vld [vmem:[%s5 + $0x80] sm:$0xff]
      %v5510 = vld [vmem:[%s5 + $0x88] sm:$0xff]
      %v5511 = vld [vmem:[%s5 + $0x90] sm:$0xff]
      %v5512 = vld [vmem:[%s5 + $0x98] sm:$0xff]
      %v5513 = vld [vmem:[%s5 + $0xa0] sm:$0xff]
      %v5514 = vld [vmem:[%s5 + $0xa8] sm:$0xff]
      %v5515 = vld [vmem:[%s5 + $0xb0] sm:$0xff]
      %v5516 = vld [vmem:[%s5 + $0xb8] sm:$0xff]
      %v5517 = vld [vmem:[%s5 + $0xc0] sm:$0xff]
      %v5518 = vld [vmem:[%s5 + $0xc8] sm:$0xff]
      %v5519 = vld [vmem:[%s5 + $0xd0] sm:$0xff]
      %v5520 = vld [vmem:[%s5 + $0xd8] sm:$0xff]
      %v5521 = vld [vmem:[%s5 + $0xe0] sm:$0xff]
      %v5522 = vld [vmem:[%s5 + $0xe8] sm:$0xff]
      %v5523 = vld [vmem:[%s5 + $0xf0] sm:$0xff]
      %v5524 = vld [vmem:[%s5 + $0xf8] sm:$0xff]
      %5526 = vset.pattern.permute.xlu0 0
      %5527 = vperm.xlu0 %5526, %v5493
      %v5528 = vpop.permute.xlu0 %5527
      %5531 = vset.pattern.permute.xlu0 0
      %5532 = vperm.xlu0 %5531, %v5494
      %v5533 = vpop.permute.xlu0 %5532
      %5536 = vset.pattern.permute.xlu0 0
      %5537 = vperm.xlu0 %5536, %v5495
      %v5538 = vpop.permute.xlu0 %5537
      %5541 = vset.pattern.permute.xlu0 0
      %5542 = vperm.xlu0 %5541, %v5496
      %v5543 = vpop.permute.xlu0 %5542
      %5546 = vset.pattern.permute.xlu0 0
      %5547 = vperm.xlu0 %5546, %v5497
      %v5548 = vpop.permute.xlu0 %5547
      %5551 = vset.pattern.permute.xlu0 0
      %5552 = vperm.xlu0 %5551, %v5498
      %v5553 = vpop.permute.xlu0 %5552
      %5556 = vset.pattern.permute.xlu0 0
      %5557 = vperm.xlu0 %5556, %v5499
      %v5558 = vpop.permute.xlu0 %5557
      %5561 = vset.pattern.permute.xlu0 0
      %5562 = vperm.xlu0 %5561, %v5500
      %v5563 = vpop.permute.xlu0 %5562
      %5566 = vset.pattern.permute.xlu0 0
      %5567 = vperm.xlu0 %5566, %v5501
      %v5568 = vpop.permute.xlu0 %5567
      %5571 = vset.pattern.permute.xlu0 0
      %5572 = vperm.xlu0 %5571, %v5502
      %v5573 = vpop.permute.xlu0 %5572
      %5576 = vset.pattern.permute.xlu0 0
      %5577 = vperm.xlu0 %5576, %v5503
      %v5578 = vpop.permute.xlu0 %5577
      %5581 = vset.pattern.permute.xlu0 0
      %5582 = vperm.xlu0 %5581, %v5504
      %v5583 = vpop.permute.xlu0 %5582
      %5586 = vset.pattern.permute.xlu0 0
      %5587 = vperm.xlu0 %5586, %v5505
      %v5588 = vpop.permute.xlu0 %5587
      %5591 = vset.pattern.permute.xlu0 0
      %5592 = vperm.xlu0 %5591, %v5506
      %v5593 = vpop.permute.xlu0 %5592
      %5596 = vset.pattern.permute.xlu0 0
      %5597 = vperm.xlu0 %5596, %v5507
      %v5598 = vpop.permute.xlu0 %5597
      %5601 = vset.pattern.permute.xlu0 0
      %5602 = vperm.xlu0 %5601, %v5508
      %v5603 = vpop.permute.xlu0 %5602
      %5606 = vset.pattern.permute.xlu0 0
      %5607 = vperm.xlu0 %5606, %v5509
      %v5608 = vpop.permute.xlu0 %5607
      %5611 = vset.pattern.permute.xlu0 0
      %5612 = vperm.xlu0 %5611, %v5510
      %v5613 = vpop.permute.xlu0 %5612
      %5616 = vset.pattern.permute.xlu0 0
      %5617 = vperm.xlu0 %5616, %v5511
      %v5618 = vpop.permute.xlu0 %5617
      %5621 = vset.pattern.permute.xlu0 0
      %5622 = vperm.xlu0 %5621, %v5512
      %v5623 = vpop.permute.xlu0 %5622
      %5626 = vset.pattern.permute.xlu0 0
      %5627 = vperm.xlu0 %5626, %v5513
      %v5628 = vpop.permute.xlu0 %5627
      %5631 = vset.pattern.permute.xlu0 0
      %5632 = vperm.xlu0 %5631, %v5514
      %v5633 = vpop.permute.xlu0 %5632
      %5636 = vset.pattern.permute.xlu0 0
      %5637 = vperm.xlu0 %5636, %v5515
      %v5638 = vpop.permute.xlu0 %5637
      %5641 = vset.pattern.permute.xlu0 0
      %5642 = vperm.xlu0 %5641, %v5516
      %v5643 = vpop.permute.xlu0 %5642
      %5646 = vset.pattern.permute.xlu0 0
      %5647 = vperm.xlu0 %5646, %v5517
      %v5648 = vpop.permute.xlu0 %5647
      %5651 = vset.pattern.permute.xlu0 0
      %5652 = vperm.xlu0 %5651, %v5518
      %v5653 = vpop.permute.xlu0 %5652
      %5656 = vset.pattern.permute.xlu0 0
      %5657 = vperm.xlu0 %5656, %v5519
      %v5658 = vpop.permute.xlu0 %5657
      %5661 = vset.pattern.permute.xlu0 0
      %5662 = vperm.xlu0 %5661, %v5520
      %v5663 = vpop.permute.xlu0 %5662
      %5666 = vset.pattern.permute.xlu0 0
      %5667 = vperm.xlu0 %5666, %v5521
      %v5668 = vpop.permute.xlu0 %5667
      %5671 = vset.pattern.permute.xlu0 0
      %5672 = vperm.xlu0 %5671, %v5522
      %v5673 = vpop.permute.xlu0 %5672
      %5676 = vset.pattern.permute.xlu0 0
      %5677 = vperm.xlu0 %5676, %v5523
      %v5678 = vpop.permute.xlu0 %5677
      %5681 = vset.pattern.permute.xlu0 0
      %5682 = vperm.xlu0 %5681, %v5524
      %v5683 = vpop.permute.xlu0 %5682
      %v5685 = vmul.f32 %v5492, %v5528
      %v5686 = vmul.f32 %v5491, %v5533
      %v5687 = vmul.f32 %v5490, %v5538
      %v5688 = vmul.f32 %v5489, %v5543
      %v5689 = vmul.f32 %v5488, %v5548
      %v5690 = vmul.f32 %v5487, %v5553
      %v5691 = vmul.f32 %v5486, %v5558
      %v5692 = vmul.f32 %v5485, %v5563
      %v5693 = vmul.f32 %v5484, %v5568
      %v5694 = vmul.f32 %v5483, %v5573
      %v5695 = vmul.f32 %v5482, %v5578
      %v5696 = vmul.f32 %v5481, %v5583
      %v5697 = vmul.f32 %v5480, %v5588
      %v5698 = vmul.f32 %v5479, %v5593
      %v5699 = vmul.f32 %v5478, %v5598
      %v5700 = vmul.f32 %v5477, %v5603
      %v5701 = vmul.f32 %v5476, %v5608
      %v5702 = vmul.f32 %v5475, %v5613
      %v5703 = vmul.f32 %v5474, %v5618
      %v5704 = vmul.f32 %v5473, %v5623
      %v5705 = vmul.f32 %v5472, %v5628
      %v5706 = vmul.f32 %v5471, %v5633
      %v5707 = vmul.f32 %v5470, %v5638
      %v5708 = vmul.f32 %v5469, %v5643
      %v5709 = vmul.f32 %v5468, %v5648
      %v5710 = vmul.f32 %v5467, %v5653
      %v5711 = vmul.f32 %v5466, %v5658
      %v5712 = vmul.f32 %v5465, %v5663
      %v5713 = vmul.f32 %v5464, %v5668
      %v5714 = vmul.f32 %v5463, %v5673
      %v5715 = vmul.f32 %v5462, %v5678
      %v5716 = vmul.f32 %v5461, %v5683
      %v5717 = vld [vmem:[#allocation3] sm:$0xff]
      %v5718 = vld [vmem:[#allocation3 + $0x8] sm:$0xff]
      %v5719 = vld [vmem:[#allocation3 + $0x10] sm:$0xff]
      %v5720 = vld [vmem:[#allocation3 + $0x18] sm:$0xff]
      %v5721 = vld [vmem:[#allocation3 + $0x20] sm:$0xff]
      %v5722 = vld [vmem:[#allocation3 + $0x28] sm:$0xff]
      %v5723 = vld [vmem:[#allocation3 + $0x30] sm:$0xff]
      %v5724 = vld [vmem:[#allocation3 + $0x38] sm:$0xff]
      %v5725 = vld [vmem:[#allocation3 + $0x40] sm:$0xff]
      %v5726 = vld [vmem:[#allocation3 + $0x48] sm:$0xff]
      %v5727 = vld [vmem:[#allocation3 + $0x50] sm:$0xff]
      %v5728 = vld [vmem:[#allocation3 + $0x58] sm:$0xff]
      %v5729 = vld [vmem:[#allocation3 + $0x60] sm:$0xff]
      %v5730 = vld [vmem:[#allocation3 + $0x68] sm:$0xff]
      %v5731 = vld [vmem:[#allocation3 + $0x70] sm:$0xff]
      %v5732 = vld [vmem:[#allocation3 + $0x78] sm:$0xff]
      %v5733 = vld [vmem:[#allocation3 + $0x80] sm:$0xff]
      %v5734 = vld [vmem:[#allocation3 + $0x88] sm:$0xff]
      %v5735 = vld [vmem:[#allocation3 + $0x90] sm:$0xff]
      %v5736 = vld [vmem:[#allocation3 + $0x98] sm:$0xff]
      %v5737 = vld [vmem:[#allocation3 + $0xa0] sm:$0xff]
      %v5738 = vld [vmem:[#allocation3 + $0xa8] sm:$0xff]
      %v5739 = vld [vmem:[#allocation3 + $0xb0] sm:$0xff]
      %v5740 = vld [vmem:[#allocation3 + $0xb8] sm:$0xff]
      %v5741 = vld [vmem:[#allocation3 + $0xc0] sm:$0xff]
      %v5742 = vld [vmem:[#allocation3 + $0xc8] sm:$0xff]
      %v5743 = vld [vmem:[#allocation3 + $0xd0] sm:$0xff]
      %v5744 = vld [vmem:[#allocation3 + $0xd8] sm:$0xff]
      %v5745 = vld [vmem:[#allocation3 + $0xe0] sm:$0xff]
      %v5746 = vld [vmem:[#allocation3 + $0xe8] sm:$0xff]
      %v5747 = vld [vmem:[#allocation3 + $0xf0] sm:$0xff]
      %v5748 = vld [vmem:[#allocation3 + $0xf8] sm:$0xff]
      %v5749 = vpack.c.bf16 %v5686, %v5685
      %v5750 = vpack.c.bf16 %v5688, %v5687
      %v5751 = vpack.c.bf16 %v5690, %v5689
      %v5752 = vpack.c.bf16 %v5692, %v5691
      %v5753 = vpack.c.bf16 %v5694, %v5693
      %v5754 = vpack.c.bf16 %v5696, %v5695
      %v5755 = vpack.c.bf16 %v5698, %v5697
      %v5756 = vpack.c.bf16 %v5700, %v5699
      %v5757 = vpack.c.bf16 %v5702, %v5701
      %v5758 = vpack.c.bf16 %v5704, %v5703
      %v5759 = vpack.c.bf16 %v5706, %v5705
      %v5760 = vpack.c.bf16 %v5708, %v5707
      %v5761 = vpack.c.bf16 %v5710, %v5709
      %v5762 = vpack.c.bf16 %v5712, %v5711
      %v5763 = vpack.c.bf16 %v5714, %v5713
      %v5764 = vpack.c.bf16 %v5716, %v5715
      %v5765 = vld [vmem:[%s3] sm:$0xf]
      %v5766 = vld [vmem:[%s3 + $0x4] sm:$0xf]
      %v5767 = vld [vmem:[%s3 + $0x8] sm:$0xf]
      %v5768 = vld [vmem:[%s3 + $0xc] sm:$0xf]
      %v5769 = vld [vmem:[%s3 + $0x10] sm:$0xf]
      %v5770 = vld [vmem:[%s3 + $0x14] sm:$0xf]
      %v5771 = vld [vmem:[%s3 + $0x18] sm:$0xf]
      %v5772 = vld [vmem:[%s3 + $0x1c] sm:$0xf]
      %v5773 = vld [vmem:[%s3 + $0x20] sm:$0xf]
      %v5774 = vld [vmem:[%s3 + $0x24] sm:$0xf]
      %v5775 = vld [vmem:[%s3 + $0x28] sm:$0xf]
      %v5776 = vld [vmem:[%s3 + $0x2c] sm:$0xf]
      %v5777 = vld [vmem:[%s3 + $0x30] sm:$0xf]
      %v5778 = vld [vmem:[%s3 + $0x34] sm:$0xf]
      %v5779 = vld [vmem:[%s3 + $0x38] sm:$0xf]
      %v5780 = vld [vmem:[%s3 + $0x3c] sm:$0xf]
      %v5797 = vunpack.c.l.b16 %v5765
      %v5798 = vunpack.c.l.b16 %v5766
      %v5799 = vunpack.c.l.b16 %v5767
      %v5800 = vunpack.c.l.b16 %v5768
      %v5801 = vunpack.c.l.b16 %v5769
      %v5802 = vunpack.c.l.b16 %v5770
      %v5803 = vunpack.c.l.b16 %v5771
      %v5804 = vunpack.c.l.b16 %v5772
      %v5805 = vunpack.c.l.b16 %v5773
      %v5806 = vunpack.c.l.b16 %v5774
      %v5807 = vunpack.c.l.b16 %v5775
      %v5808 = vunpack.c.l.b16 %v5776
      %v5809 = vunpack.c.l.b16 %v5777
      %v5810 = vunpack.c.l.b16 %v5778
      %v5811 = vunpack.c.l.b16 %v5779
      %v5812 = vunpack.c.l.b16 %v5780
      %v5813 = vpack.c.b16 %v5798, %v5797
      %v5814 = vpack.c.b16 %v5800, %v5799
      %v5815 = vpack.c.b16 %v5802, %v5801
      %v5816 = vpack.c.b16 %v5804, %v5803
      %v5817 = vpack.c.b16 %v5806, %v5805
      %v5818 = vpack.c.b16 %v5808, %v5807
      %v5819 = vpack.c.b16 %v5810, %v5809
      %v5820 = vpack.c.b16 %v5812, %v5811
      %5829 = vmatprep.subr.bf16.mxu0 0
      %5830 = vmatpush1.bf16.msra.mxu0 %v5820
      %5831 = vmatprep.subr.bf16.mxu0 0
      %5832 = vmatpush1.bf16.msra.mxu0 %v5819
      %5833 = vmatprep.subr.bf16.mxu0 0
      %5834 = vmatpush1.bf16.msra.mxu0 %v5818
      %5835 = vmatprep.subr.bf16.mxu0 0
      %5836 = vmatpush1.bf16.msra.mxu0 %v5817
      %5837 = vmatprep.subr.bf16.mxu0 0
      %5838 = vmatpush1.bf16.msra.mxu0 %v5816
      %5839 = vmatprep.subr.bf16.mxu0 0
      %5840 = vmatpush1.bf16.msra.mxu0 %v5815
      %5841 = vmatprep.subr.bf16.mxu0 0
      %5842 = vmatpush1.bf16.msra.mxu0 %v5814
      %5843 = vmatprep.subr.bf16.mxu0 0
      %5844 = vmatpush1.bf16.msra.mxu0 %v5813
      %5845 = vmatprep.subr.bf16.mxu0 0
      %5846 = vmatpush2.bf16.msra.mxu0 0
      %5847 = vmatprep.subr.bf16.mxu0 0
      %5848 = vmatpush2.bf16.msra.mxu0 0
      %5849 = vmatprep.subr.bf16.mxu0 0
      %5850 = vmatpush2.bf16.msra.mxu0 0
      %5851 = vmatprep.subr.bf16.mxu0 0
      %5852 = vmatpush2.bf16.msra.mxu0 0
      %5853 = vmatprep.subr.bf16.mxu0 0
      %5854 = vmatpush2.bf16.msra.mxu0 0
      %5855 = vmatprep.subr.bf16.mxu0 0
      %5856 = vmatpush2.bf16.msra.mxu0 0
      %5857 = vmatprep.subr.bf16.mxu0 0
      %5858 = vmatpush2.bf16.msra.mxu0 0
      %5859 = vmatprep.subr.bf16.mxu0 0
      %5860 = vmatpush2.bf16.msra.mxu0 0
      %5861 = vmatprep.mubr.bf16.mxu0 0
      %5862 = vmatmul.mubr.bf16.gmra.mxu0 %v5749
      %v5863 = vpop.f32.mrf.mxu0
      %v5864 = vadd.f32 0.0, %v5863
      %v5865 = vpop.f32.mrf.mxu0
      %v5866 = vpop.f32.mrf.mxu0
      %v5867 = vadd.f32 0.0, %v5866
      %v5868 = vpop.f32.mrf.mxu0
      %5869 = vmatprep.mubr.bf16.mxu0 0
      %5870 = vmatmul.mubr.bf16.gmra.mxu0 %v5750
      %v5871 = vpop.f32.mrf.mxu0
      %v5872 = vadd.f32 0.0, %v5871
      %v5873 = vpop.f32.mrf.mxu0
      %v5874 = vpop.f32.mrf.mxu0
      %v5875 = vadd.f32 0.0, %v5874
      %v5876 = vpop.f32.mrf.mxu0
      %5877 = vmatprep.mubr.bf16.mxu0 0
      %5878 = vmatmul.mubr.bf16.gmra.mxu0 %v5751
      %v5879 = vpop.f32.mrf.mxu0
      %v5880 = vadd.f32 0.0, %v5879
      %v5881 = vpop.f32.mrf.mxu0
      %v5882 = vpop.f32.mrf.mxu0
      %v5883 = vadd.f32 0.0, %v5882
      %v5884 = vpop.f32.mrf.mxu0
      %5885 = vmatprep.mubr.bf16.mxu0 0
      %5886 = vmatmul.mubr.bf16.gmra.mxu0 %v5752
      %v5887 = vpop.f32.mrf.mxu0
      %v5888 = vadd.f32 0.0, %v5887
      %v5889 = vpop.f32.mrf.mxu0
      %v5890 = vpop.f32.mrf.mxu0
      %v5891 = vadd.f32 0.0, %v5890
      %v5892 = vpop.f32.mrf.mxu0
      %5893 = vmatprep.mubr.bf16.mxu0 0
      %5894 = vmatmul.mubr.bf16.gmra.mxu0 %v5753
      %v5895 = vpop.f32.mrf.mxu0
      %v5896 = vadd.f32 0.0, %v5895
      %v5897 = vpop.f32.mrf.mxu0
      %v5898 = vpop.f32.mrf.mxu0
      %v5899 = vadd.f32 0.0, %v5898
      %v5900 = vpop.f32.mrf.mxu0
      %5901 = vmatprep.mubr.bf16.mxu0 0
      %5902 = vmatmul.mubr.bf16.gmra.mxu0 %v5754
      %v5903 = vpop.f32.mrf.mxu0
      %v5904 = vadd.f32 0.0, %v5903
      %v5905 = vpop.f32.mrf.mxu0
      %v5906 = vpop.f32.mrf.mxu0
      %v5907 = vadd.f32 0.0, %v5906
      %v5908 = vpop.f32.mrf.mxu0
      %5909 = vmatprep.mubr.bf16.mxu0 0
      %5910 = vmatmul.mubr.bf16.gmra.mxu0 %v5755
      %v5911 = vpop.f32.mrf.mxu0
      %v5912 = vadd.f32 0.0, %v5911
      %v5913 = vpop.f32.mrf.mxu0
      %v5914 = vpop.f32.mrf.mxu0
      %v5915 = vadd.f32 0.0, %v5914
      %v5916 = vpop.f32.mrf.mxu0
      %5917 = vmatprep.mubr.bf16.mxu0 0
      %5918 = vmatmul.mubr.bf16.gmra.mxu0 %v5756
      %v5919 = vpop.f32.mrf.mxu0
      %v5920 = vadd.f32 0.0, %v5919
      %v5921 = vpop.f32.mrf.mxu0
      %v5922 = vpop.f32.mrf.mxu0
      %v5923 = vadd.f32 0.0, %v5922
      %v5924 = vpop.f32.mrf.mxu0
      %5925 = vmatprep.mubr.bf16.mxu0 0
      %5926 = vmatmul.mubr.bf16.gmra.mxu0 %v5757
      %v5927 = vpop.f32.mrf.mxu0
      %v5928 = vadd.f32 0.0, %v5927
      %v5929 = vpop.f32.mrf.mxu0
      %v5930 = vpop.f32.mrf.mxu0
      %v5931 = vadd.f32 0.0, %v5930
      %v5932 = vpop.f32.mrf.mxu0
      %5933 = vmatprep.mubr.bf16.mxu0 0
      %5934 = vmatmul.mubr.bf16.gmra.mxu0 %v5758
      %v5935 = vpop.f32.mrf.mxu0
      %v5936 = vadd.f32 0.0, %v5935
      %v5937 = vpop.f32.mrf.mxu0
      %v5938 = vpop.f32.mrf.mxu0
      %v5939 = vadd.f32 0.0, %v5938
      %v5940 = vpop.f32.mrf.mxu0
      %5941 = vmatprep.mubr.bf16.mxu0 0
      %5942 = vmatmul.mubr.bf16.gmra.mxu0 %v5759
      %v5943 = vpop.f32.mrf.mxu0
      %v5944 = vadd.f32 0.0, %v5943
      %v5945 = vpop.f32.mrf.mxu0
      %v5946 = vpop.f32.mrf.mxu0
      %v5947 = vadd.f32 0.0, %v5946
      %v5948 = vpop.f32.mrf.mxu0
      %5949 = vmatprep.mubr.bf16.mxu0 0
      %5950 = vmatmul.mubr.bf16.gmra.mxu0 %v5760
      %v5951 = vpop.f32.mrf.mxu0
      %v5952 = vadd.f32 0.0, %v5951
      %v5953 = vpop.f32.mrf.mxu0
      %v5954 = vpop.f32.mrf.mxu0
      %v5955 = vadd.f32 0.0, %v5954
      %v5956 = vpop.f32.mrf.mxu0
      %5957 = vmatprep.mubr.bf16.mxu0 0
      %5958 = vmatmul.mubr.bf16.gmra.mxu0 %v5761
      %v5959 = vpop.f32.mrf.mxu0
      %v5960 = vadd.f32 0.0, %v5959
      %v5961 = vpop.f32.mrf.mxu0
      %v5962 = vpop.f32.mrf.mxu0
      %v5963 = vadd.f32 0.0, %v5962
      %v5964 = vpop.f32.mrf.mxu0
      %5965 = vmatprep.mubr.bf16.mxu0 0
      %5966 = vmatmul.mubr.bf16.gmra.mxu0 %v5762
      %v5967 = vpop.f32.mrf.mxu0
      %v5968 = vadd.f32 0.0, %v5967
      %v5969 = vpop.f32.mrf.mxu0
      %v5970 = vpop.f32.mrf.mxu0
      %v5971 = vadd.f32 0.0, %v5970
      %v5972 = vpop.f32.mrf.mxu0
      %5973 = vmatprep.mubr.bf16.mxu0 0
      %5974 = vmatmul.mubr.bf16.gmra.mxu0 %v5763
      %v5975 = vpop.f32.mrf.mxu0
      %v5976 = vadd.f32 0.0, %v5975
      %v5977 = vpop.f32.mrf.mxu0
      %v5978 = vpop.f32.mrf.mxu0
      %v5979 = vadd.f32 0.0, %v5978
      %v5980 = vpop.f32.mrf.mxu0
      %5981 = vmatprep.mubr.bf16.mxu0 0
      %5982 = vmatmul.mubr.bf16.gmra.mxu0 %v5764
      %v5983 = vpop.f32.mrf.mxu0
      %v5984 = vadd.f32 0.0, %v5983
      %v5985 = vpop.f32.mrf.mxu0
      %v5986 = vpop.f32.mrf.mxu0
      %v5987 = vadd.f32 0.0, %v5986
      %v5988 = vpop.f32.mrf.mxu0
      %5989 = vdwg.mxu0
      %v5990 = vadd.f32 %v5717, %v5864
      %v5991 = vadd.f32 %v5718, %v5867
      %v5992 = vadd.f32 %v5719, %v5872
      %v5993 = vadd.f32 %v5720, %v5875
      %v5994 = vadd.f32 %v5721, %v5880
      %v5995 = vadd.f32 %v5722, %v5883
      %v5996 = vadd.f32 %v5723, %v5888
      %v5997 = vadd.f32 %v5724, %v5891
      %v5998 = vadd.f32 %v5725, %v5896
      %v5999 = vadd.f32 %v5726, %v5899
      %v6000 = vadd.f32 %v5727, %v5904
      %v6001 = vadd.f32 %v5728, %v5907
      %v6002 = vadd.f32 %v5729, %v5912
      %v6003 = vadd.f32 %v5730, %v5915
      %v6004 = vadd.f32 %v5731, %v5920
      %v6005 = vadd.f32 %v5732, %v5923
      %v6006 = vadd.f32 %v5733, %v5928
      %v6007 = vadd.f32 %v5734, %v5931
      %v6008 = vadd.f32 %v5735, %v5936
      %v6009 = vadd.f32 %v5736, %v5939
      %v6010 = vadd.f32 %v5737, %v5944
      %v6011 = vadd.f32 %v5738, %v5947
      %v6012 = vadd.f32 %v5739, %v5952
      %v6013 = vadd.f32 %v5740, %v5955
      %v6014 = vadd.f32 %v5741, %v5960
      %v6015 = vadd.f32 %v5742, %v5963
      %v6016 = vadd.f32 %v5743, %v5968
      %v6017 = vadd.f32 %v5744, %v5971
      %v6018 = vadd.f32 %v5745, %v5976
      %v6019 = vadd.f32 %v5746, %v5979
      %v6020 = vadd.f32 %v5747, %v5984
      %v6021 = vadd.f32 %v5748, %v5987
      %6022 = vst [vmem:[#allocation3] sm:$0xff] %v5990
      %6023 = vst [vmem:[#allocation3 + $0x8] sm:$0xff] %v5991
      %6024 = vst [vmem:[#allocation3 + $0x10] sm:$0xff] %v5992
      %6025 = vst [vmem:[#allocation3 + $0x18] sm:$0xff] %v5993
      %6026 = vst [vmem:[#allocation3 + $0x20] sm:$0xff] %v5994
      %6027 = vst [vmem:[#allocation3 + $0x28] sm:$0xff] %v5995
      %6028 = vst [vmem:[#allocation3 + $0x30] sm:$0xff] %v5996
      %6029 = vst [vmem:[#allocation3 + $0x38] sm:$0xff] %v5997
      %6030 = vst [vmem:[#allocation3 + $0x40] sm:$0xff] %v5998
      %6031 = vst [vmem:[#allocation3 + $0x48] sm:$0xff] %v5999
      %6032 = vst [vmem:[#allocation3 + $0x50] sm:$0xff] %v6000
      %6033 = vst [vmem:[#allocation3 + $0x58] sm:$0xff] %v6001
      %6034 = vst [vmem:[#allocation3 + $0x60] sm:$0xff] %v6002
      %6035 = vst [vmem:[#allocation3 + $0x68] sm:$0xff] %v6003
      %6036 = vst [vmem:[#allocation3 + $0x70] sm:$0xff] %v6004
      %6037 = vst [vmem:[#allocation3 + $0x78] sm:$0xff] %v6005
      %6038 = vst [vmem:[#allocation3 + $0x80] sm:$0xff] %v6006
      %6039 = vst [vmem:[#allocation3 + $0x88] sm:$0xff] %v6007
      %6040 = vst [vmem:[#allocation3 + $0x90] sm:$0xff] %v6008
      %6041 = vst [vmem:[#allocation3 + $0x98] sm:$0xff] %v6009
      %6042 = vst [vmem:[#allocation3 + $0xa0] sm:$0xff] %v6010
      %6043 = vst [vmem:[#allocation3 + $0xa8] sm:$0xff] %v6011
      %6044 = vst [vmem:[#allocation3 + $0xb0] sm:$0xff] %v6012
      %6045 = vst [vmem:[#allocation3 + $0xb8] sm:$0xff] %v6013
      %6046 = vst [vmem:[#allocation3 + $0xc0] sm:$0xff] %v6014
      %6047 = vst [vmem:[#allocation3 + $0xc8] sm:$0xff] %v6015
      %6048 = vst [vmem:[#allocation3 + $0xd0] sm:$0xff] %v6016
      %6049 = vst [vmem:[#allocation3 + $0xd8] sm:$0xff] %v6017
      %6050 = vst [vmem:[#allocation3 + $0xe0] sm:$0xff] %v6018
      %6051 = vst [vmem:[#allocation3 + $0xe8] sm:$0xff] %v6019
      %6052 = vst [vmem:[#allocation3 + $0xf0] sm:$0xff] %v6020
      %6053 = vst [vmem:[#allocation3 + $0xf8] sm:$0xff] %v6021
      %v6054 = vld [vmem:[#allocation3] sm:$0xff]
      %v6055 = vld [vmem:[#allocation3 + $0x8] sm:$0xff]
      %v6056 = vld [vmem:[#allocation3 + $0x10] sm:$0xff]
      %v6057 = vld [vmem:[#allocation3 + $0x18] sm:$0xff]
      %v6058 = vld [vmem:[#allocation3 + $0x20] sm:$0xff]
      %v6059 = vld [vmem:[#allocation3 + $0x28] sm:$0xff]
      %v6060 = vld [vmem:[#allocation3 + $0x30] sm:$0xff]
      %v6061 = vld [vmem:[#allocation3 + $0x38] sm:$0xff]
      %v6062 = vld [vmem:[#allocation3 + $0x40] sm:$0xff]
      %v6063 = vld [vmem:[#allocation3 + $0x48] sm:$0xff]
      %v6064 = vld [vmem:[#allocation3 + $0x50] sm:$0xff]
      %v6065 = vld [vmem:[#allocation3 + $0x58] sm:$0xff]
      %v6066 = vld [vmem:[#allocation3 + $0x60] sm:$0xff]
      %v6067 = vld [vmem:[#allocation3 + $0x68] sm:$0xff]
      %v6068 = vld [vmem:[#allocation3 + $0x70] sm:$0xff]
      %v6069 = vld [vmem:[#allocation3 + $0x78] sm:$0xff]
      %v6070 = vld [vmem:[#allocation3 + $0x80] sm:$0xff]
      %v6071 = vld [vmem:[#allocation3 + $0x88] sm:$0xff]
      %v6072 = vld [vmem:[#allocation3 + $0x90] sm:$0xff]
      %v6073 = vld [vmem:[#allocation3 + $0x98] sm:$0xff]
      %v6074 = vld [vmem:[#allocation3 + $0xa0] sm:$0xff]
      %v6075 = vld [vmem:[#allocation3 + $0xa8] sm:$0xff]
      %v6076 = vld [vmem:[#allocation3 + $0xb0] sm:$0xff]
      %v6077 = vld [vmem:[#allocation3 + $0xb8] sm:$0xff]
      %v6078 = vld [vmem:[#allocation3 + $0xc0] sm:$0xff]
      %v6079 = vld [vmem:[#allocation3 + $0xc8] sm:$0xff]
      %v6080 = vld [vmem:[#allocation3 + $0xd0] sm:$0xff]
      %v6081 = vld [vmem:[#allocation3 + $0xd8] sm:$0xff]
      %v6082 = vld [vmem:[#allocation3 + $0xe0] sm:$0xff]
      %v6083 = vld [vmem:[#allocation3 + $0xe8] sm:$0xff]
      %v6084 = vld [vmem:[#allocation3 + $0xf0] sm:$0xff]
      %v6085 = vld [vmem:[#allocation3 + $0xf8] sm:$0xff]
      %v6086 = vpack.c.bf16 %v5398, %v5397
      %v6087 = vpack.c.bf16 %v5400, %v5399
      %v6088 = vpack.c.bf16 %v5402, %v5401
      %v6089 = vpack.c.bf16 %v5404, %v5403
      %v6090 = vpack.c.bf16 %v5406, %v5405
      %v6091 = vpack.c.bf16 %v5408, %v5407
      %v6092 = vpack.c.bf16 %v5410, %v5409
      %v6093 = vpack.c.bf16 %v5412, %v5411
      %v6094 = vpack.c.bf16 %v5414, %v5413
      %v6095 = vpack.c.bf16 %v5416, %v5415
      %v6096 = vpack.c.bf16 %v5418, %v5417
      %v6097 = vpack.c.bf16 %v5420, %v5419
      %v6098 = vpack.c.bf16 %v5422, %v5421
      %v6099 = vpack.c.bf16 %v5424, %v5423
      %v6100 = vpack.c.bf16 %v5426, %v5425
      %v6101 = vpack.c.bf16 %v5428, %v5427
      %s6102 = scalar_lea.vmem %s3, 64
      %v6103 = vld [vmem:[%s6102] sm:$0xf]
      %v6104 = vld [vmem:[%s6102 + $0x4] sm:$0xf]
      %v6105 = vld [vmem:[%s6102 + $0x8] sm:$0xf]
      %v6106 = vld [vmem:[%s6102 + $0xc] sm:$0xf]
      %v6107 = vld [vmem:[%s6102 + $0x10] sm:$0xf]
      %v6108 = vld [vmem:[%s6102 + $0x14] sm:$0xf]
      %v6109 = vld [vmem:[%s6102 + $0x18] sm:$0xf]
      %v6110 = vld [vmem:[%s6102 + $0x1c] sm:$0xf]
      %v6111 = vld [vmem:[%s6102 + $0x20] sm:$0xf]
      %v6112 = vld [vmem:[%s6102 + $0x24] sm:$0xf]
      %v6113 = vld [vmem:[%s6102 + $0x28] sm:$0xf]
      %v6114 = vld [vmem:[%s6102 + $0x2c] sm:$0xf]
      %v6115 = vld [vmem:[%s6102 + $0x30] sm:$0xf]
      %v6116 = vld [vmem:[%s6102 + $0x34] sm:$0xf]
      %v6117 = vld [vmem:[%s6102 + $0x38] sm:$0xf]
      %v6118 = vld [vmem:[%s6102 + $0x3c] sm:$0xf]
      %v6135 = vunpack.c.l.b16 %v6103
      %v6136 = vunpack.c.l.b16 %v6104
      %v6137 = vunpack.c.l.b16 %v6105
      %v6138 = vunpack.c.l.b16 %v6106
      %v6139 = vunpack.c.l.b16 %v6107
      %v6140 = vunpack.c.l.b16 %v6108
      %v6141 = vunpack.c.l.b16 %v6109
      %v6142 = vunpack.c.l.b16 %v6110
      %v6143 = vunpack.c.l.b16 %v6111
      %v6144 = vunpack.c.l.b16 %v6112
      %v6145 = vunpack.c.l.b16 %v6113
      %v6146 = vunpack.c.l.b16 %v6114
      %v6147 = vunpack.c.l.b16 %v6115
      %v6148 = vunpack.c.l.b16 %v6116
      %v6149 = vunpack.c.l.b16 %v6117
      %v6150 = vunpack.c.l.b16 %v6118
      %v6151 = vpack.c.b16 %v6136, %v6135
      %v6152 = vpack.c.b16 %v6138, %v6137
      %v6153 = vpack.c.b16 %v6140, %v6139
      %v6154 = vpack.c.b16 %v6142, %v6141
      %v6155 = vpack.c.b16 %v6144, %v6143
      %v6156 = vpack.c.b16 %v6146, %v6145
      %v6157 = vpack.c.b16 %v6148, %v6147
      %v6158 = vpack.c.b16 %v6150, %v6149
      %6167 = vmatprep.subr.bf16.mxu0 0
      %6168 = vmatpush1.bf16.msra.mxu0 %v6158
      %6169 = vmatprep.subr.bf16.mxu0 0
      %6170 = vmatpush1.bf16.msra.mxu0 %v6157
      %6171 = vmatprep.subr.bf16.mxu0 0
      %6172 = vmatpush1.bf16.msra.mxu0 %v6156
      %6173 = vmatprep.subr.bf16.mxu0 0
      %6174 = vmatpush1.bf16.msra.mxu0 %v6155
      %6175 = vmatprep.subr.bf16.mxu0 0
      %6176 = vmatpush1.bf16.msra.mxu0 %v6154
      %6177 = vmatprep.subr.bf16.mxu0 0
      %6178 = vmatpush1.bf16.msra.mxu0 %v6153
      %6179 = vmatprep.subr.bf16.mxu0 0
      %6180 = vmatpush1.bf16.msra.mxu0 %v6152
      %6181 = vmatprep.subr.bf16.mxu0 0
      %6182 = vmatpush1.bf16.msra.mxu0 %v6151
      %6183 = vmatprep.subr.bf16.mxu0 0
      %6184 = vmatpush2.bf16.msra.mxu0 0
      %6185 = vmatprep.subr.bf16.mxu0 0
      %6186 = vmatpush2.bf16.msra.mxu0 0
      %6187 = vmatprep.subr.bf16.mxu0 0
      %6188 = vmatpush2.bf16.msra.mxu0 0
      %6189 = vmatprep.subr.bf16.mxu0 0
      %6190 = vmatpush2.bf16.msra.mxu0 0
      %6191 = vmatprep.subr.bf16.mxu0 0
      %6192 = vmatpush2.bf16.msra.mxu0 0
      %6193 = vmatprep.subr.bf16.mxu0 0
      %6194 = vmatpush2.bf16.msra.mxu0 0
      %6195 = vmatprep.subr.bf16.mxu0 0
      %6196 = vmatpush2.bf16.msra.mxu0 0
      %6197 = vmatprep.subr.bf16.mxu0 0
      %6198 = vmatpush2.bf16.msra.mxu0 0
      %6199 = vmatprep.mubr.bf16.mxu0 0
      %6200 = vmatmul.mubr.bf16.gmra.mxu0 %v6086
      %v6201 = vpop.f32.mrf.mxu0
      %v6202 = vadd.f32 0.0, %v6201
      %v6203 = vpop.f32.mrf.mxu0
      %v6204 = vpop.f32.mrf.mxu0
      %v6205 = vadd.f32 0.0, %v6204
      %v6206 = vpop.f32.mrf.mxu0
      %6207 = vmatprep.mubr.bf16.mxu0 0
      %6208 = vmatmul.mubr.bf16.gmra.mxu0 %v6087
      %v6209 = vpop.f32.mrf.mxu0
      %v6210 = vadd.f32 0.0, %v6209
      %v6211 = vpop.f32.mrf.mxu0
      %v6212 = vpop.f32.mrf.mxu0
      %v6213 = vadd.f32 0.0, %v6212
      %v6214 = vpop.f32.mrf.mxu0
      %6215 = vmatprep.mubr.bf16.mxu0 0
      %6216 = vmatmul.mubr.bf16.gmra.mxu0 %v6088
      %v6217 = vpop.f32.mrf.mxu0
      %v6218 = vadd.f32 0.0, %v6217
      %v6219 = vpop.f32.mrf.mxu0
      %v6220 = vpop.f32.mrf.mxu0
      %v6221 = vadd.f32 0.0, %v6220
      %v6222 = vpop.f32.mrf.mxu0
      %6223 = vmatprep.mubr.bf16.mxu0 0
      %6224 = vmatmul.mubr.bf16.gmra.mxu0 %v6089
      %v6225 = vpop.f32.mrf.mxu0
      %v6226 = vadd.f32 0.0, %v6225
      %v6227 = vpop.f32.mrf.mxu0
      %v6228 = vpop.f32.mrf.mxu0
      %v6229 = vadd.f32 0.0, %v6228
      %v6230 = vpop.f32.mrf.mxu0
      %6231 = vmatprep.mubr.bf16.mxu0 0
      %6232 = vmatmul.mubr.bf16.gmra.mxu0 %v6090
      %v6233 = vpop.f32.mrf.mxu0
      %v6234 = vadd.f32 0.0, %v6233
      %v6235 = vpop.f32.mrf.mxu0
      %v6236 = vpop.f32.mrf.mxu0
      %v6237 = vadd.f32 0.0, %v6236
      %v6238 = vpop.f32.mrf.mxu0
      %6239 = vmatprep.mubr.bf16.mxu0 0
      %6240 = vmatmul.mubr.bf16.gmra.mxu0 %v6091
      %v6241 = vpop.f32.mrf.mxu0
      %v6242 = vadd.f32 0.0, %v6241
      %v6243 = vpop.f32.mrf.mxu0
      %v6244 = vpop.f32.mrf.mxu0
      %v6245 = vadd.f32 0.0, %v6244
      %v6246 = vpop.f32.mrf.mxu0
      %6247 = vmatprep.mubr.bf16.mxu0 0
      %6248 = vmatmul.mubr.bf16.gmra.mxu0 %v6092
      %v6249 = vpop.f32.mrf.mxu0
      %v6250 = vadd.f32 0.0, %v6249
      %v6251 = vpop.f32.mrf.mxu0
      %v6252 = vpop.f32.mrf.mxu0
      %v6253 = vadd.f32 0.0, %v6252
      %v6254 = vpop.f32.mrf.mxu0
      %6255 = vmatprep.mubr.bf16.mxu0 0
      %6256 = vmatmul.mubr.bf16.gmra.mxu0 %v6093
      %v6257 = vpop.f32.mrf.mxu0
      %v6258 = vadd.f32 0.0, %v6257
      %v6259 = vpop.f32.mrf.mxu0
      %v6260 = vpop.f32.mrf.mxu0
      %v6261 = vadd.f32 0.0, %v6260
      %v6262 = vpop.f32.mrf.mxu0
      %6263 = vmatprep.mubr.bf16.mxu0 0
      %6264 = vmatmul.mubr.bf16.gmra.mxu0 %v6094
      %v6265 = vpop.f32.mrf.mxu0
      %v6266 = vadd.f32 0.0, %v6265
      %v6267 = vpop.f32.mrf.mxu0
      %v6268 = vpop.f32.mrf.mxu0
      %v6269 = vadd.f32 0.0, %v6268
      %v6270 = vpop.f32.mrf.mxu0
      %6271 = vmatprep.mubr.bf16.mxu0 0
      %6272 = vmatmul.mubr.bf16.gmra.mxu0 %v6095
      %v6273 = vpop.f32.mrf.mxu0
      %v6274 = vadd.f32 0.0, %v6273
      %v6275 = vpop.f32.mrf.mxu0
      %v6276 = vpop.f32.mrf.mxu0
      %v6277 = vadd.f32 0.0, %v6276
      %v6278 = vpop.f32.mrf.mxu0
      %6279 = vmatprep.mubr.bf16.mxu0 0
      %6280 = vmatmul.mubr.bf16.gmra.mxu0 %v6096
      %v6281 = vpop.f32.mrf.mxu0
      %v6282 = vadd.f32 0.0, %v6281
      %v6283 = vpop.f32.mrf.mxu0
      %v6284 = vpop.f32.mrf.mxu0
      %v6285 = vadd.f32 0.0, %v6284
      %v6286 = vpop.f32.mrf.mxu0
      %6287 = vmatprep.mubr.bf16.mxu0 0
      %6288 = vmatmul.mubr.bf16.gmra.mxu0 %v6097
      %v6289 = vpop.f32.mrf.mxu0
      %v6290 = vadd.f32 0.0, %v6289
      %v6291 = vpop.f32.mrf.mxu0
      %v6292 = vpop.f32.mrf.mxu0
      %v6293 = vadd.f32 0.0, %v6292
      %v6294 = vpop.f32.mrf.mxu0
      %6295 = vmatprep.mubr.bf16.mxu0 0
      %6296 = vmatmul.mubr.bf16.gmra.mxu0 %v6098
      %v6297 = vpop.f32.mrf.mxu0
      %v6298 = vadd.f32 0.0, %v6297
      %v6299 = vpop.f32.mrf.mxu0
      %v6300 = vpop.f32.mrf.mxu0
      %v6301 = vadd.f32 0.0, %v6300
      %v6302 = vpop.f32.mrf.mxu0
      %6303 = vmatprep.mubr.bf16.mxu0 0
      %6304 = vmatmul.mubr.bf16.gmra.mxu0 %v6099
      %v6305 = vpop.f32.mrf.mxu0
      %v6306 = vadd.f32 0.0, %v6305
      %v6307 = vpop.f32.mrf.mxu0
      %v6308 = vpop.f32.mrf.mxu0
      %v6309 = vadd.f32 0.0, %v6308
      %v6310 = vpop.f32.mrf.mxu0
      %6311 = vmatprep.mubr.bf16.mxu0 0
      %6312 = vmatmul.mubr.bf16.gmra.mxu0 %v6100
      %v6313 = vpop.f32.mrf.mxu0
      %v6314 = vadd.f32 0.0, %v6313
      %v6315 = vpop.f32.mrf.mxu0
      %v6316 = vpop.f32.mrf.mxu0
      %v6317 = vadd.f32 0.0, %v6316
      %v6318 = vpop.f32.mrf.mxu0
      %6319 = vmatprep.mubr.bf16.mxu0 0
      %6320 = vmatmul.mubr.bf16.gmra.mxu0 %v6101
      %v6321 = vpop.f32.mrf.mxu0
      %v6322 = vadd.f32 0.0, %v6321
      %v6323 = vpop.f32.mrf.mxu0
      %v6324 = vpop.f32.mrf.mxu0
      %v6325 = vadd.f32 0.0, %v6324
      %v6326 = vpop.f32.mrf.mxu0
      %6327 = vdwg.mxu0
      %v6328 = vadd.f32 %v6054, %v6202
      %v6329 = vadd.f32 %v6055, %v6205
      %v6330 = vadd.f32 %v6056, %v6210
      %v6331 = vadd.f32 %v6057, %v6213
      %v6332 = vadd.f32 %v6058, %v6218
      %v6333 = vadd.f32 %v6059, %v6221
      %v6334 = vadd.f32 %v6060, %v6226
      %v6335 = vadd.f32 %v6061, %v6229
      %v6336 = vadd.f32 %v6062, %v6234
      %v6337 = vadd.f32 %v6063, %v6237
      %v6338 = vadd.f32 %v6064, %v6242
      %v6339 = vadd.f32 %v6065, %v6245
      %v6340 = vadd.f32 %v6066, %v6250
      %v6341 = vadd.f32 %v6067, %v6253
      %v6342 = vadd.f32 %v6068, %v6258
      %v6343 = vadd.f32 %v6069, %v6261
      %v6344 = vadd.f32 %v6070, %v6266
      %v6345 = vadd.f32 %v6071, %v6269
      %v6346 = vadd.f32 %v6072, %v6274
      %v6347 = vadd.f32 %v6073, %v6277
      %v6348 = vadd.f32 %v6074, %v6282
      %v6349 = vadd.f32 %v6075, %v6285
      %v6350 = vadd.f32 %v6076, %v6290
      %v6351 = vadd.f32 %v6077, %v6293
      %v6352 = vadd.f32 %v6078, %v6298
      %v6353 = vadd.f32 %v6079, %v6301
      %v6354 = vadd.f32 %v6080, %v6306
      %v6355 = vadd.f32 %v6081, %v6309
      %v6356 = vadd.f32 %v6082, %v6314
      %v6357 = vadd.f32 %v6083, %v6317
      %v6358 = vadd.f32 %v6084, %v6322
      %v6359 = vadd.f32 %v6085, %v6325
      %6360 = vst [vmem:[#allocation3] sm:$0xff] %v6328
      %6361 = vst [vmem:[#allocation3 + $0x8] sm:$0xff] %v6329
      %6362 = vst [vmem:[#allocation3 + $0x10] sm:$0xff] %v6330
      %6363 = vst [vmem:[#allocation3 + $0x18] sm:$0xff] %v6331
      %6364 = vst [vmem:[#allocation3 + $0x20] sm:$0xff] %v6332
      %6365 = vst [vmem:[#allocation3 + $0x28] sm:$0xff] %v6333
      %6366 = vst [vmem:[#allocation3 + $0x30] sm:$0xff] %v6334
      %6367 = vst [vmem:[#allocation3 + $0x38] sm:$0xff] %v6335
      %6368 = vst [vmem:[#allocation3 + $0x40] sm:$0xff] %v6336
      %6369 = vst [vmem:[#allocation3 + $0x48] sm:$0xff] %v6337
      %6370 = vst [vmem:[#allocation3 + $0x50] sm:$0xff] %v6338
      %6371 = vst [vmem:[#allocation3 + $0x58] sm:$0xff] %v6339
      %6372 = vst [vmem:[#allocation3 + $0x60] sm:$0xff] %v6340
      %6373 = vst [vmem:[#allocation3 + $0x68] sm:$0xff] %v6341
      %6374 = vst [vmem:[#allocation3 + $0x70] sm:$0xff] %v6342
      %6375 = vst [vmem:[#allocation3 + $0x78] sm:$0xff] %v6343
      %6376 = vst [vmem:[#allocation3 + $0x80] sm:$0xff] %v6344
      %6377 = vst [vmem:[#allocation3 + $0x88] sm:$0xff] %v6345
      %6378 = vst [vmem:[#allocation3 + $0x90] sm:$0xff] %v6346
      %6379 = vst [vmem:[#allocation3 + $0x98] sm:$0xff] %v6347
      %6380 = vst [vmem:[#allocation3 + $0xa0] sm:$0xff] %v6348
      %6381 = vst [vmem:[#allocation3 + $0xa8] sm:$0xff] %v6349
      %6382 = vst [vmem:[#allocation3 + $0xb0] sm:$0xff] %v6350
      %6383 = vst [vmem:[#allocation3 + $0xb8] sm:$0xff] %v6351
      %6384 = vst [vmem:[#allocation3 + $0xc0] sm:$0xff] %v6352
      %6385 = vst [vmem:[#allocation3 + $0xc8] sm:$0xff] %v6353
      %6386 = vst [vmem:[#allocation3 + $0xd0] sm:$0xff] %v6354
      %6387 = vst [vmem:[#allocation3 + $0xd8] sm:$0xff] %v6355
      %6388 = vst [vmem:[#allocation3 + $0xe0] sm:$0xff] %v6356
      %6389 = vst [vmem:[#allocation3 + $0xe8] sm:$0xff] %v6357
      %6390 = vst [vmem:[#allocation3 + $0xf0] sm:$0xff] %v6358
      %6391 = vst [vmem:[#allocation3 + $0xf8] sm:$0xff] %v6359
      %v6392 = vrot.slane %v5397, 1
      %v6393 = vrot.slane %v5398, 1
      %v6394 = vrot.slane %v5399, 1
      %v6395 = vrot.slane %v5400, 1
      %v6396 = vrot.slane %v5401, 1
      %v6397 = vrot.slane %v5402, 1
      %v6398 = vrot.slane %v5403, 1
      %v6399 = vrot.slane %v5404, 1
      %v6400 = vrot.slane %v5405, 1
      %v6401 = vrot.slane %v5406, 1
      %v6402 = vrot.slane %v5407, 1
      %v6403 = vrot.slane %v5408, 1
      %v6404 = vrot.slane %v5409, 1
      %v6405 = vrot.slane %v5410, 1
      %v6406 = vrot.slane %v5411, 1
      %v6407 = vrot.slane %v5412, 1
      %v6408 = vrot.slane %v5413, 1
      %v6409 = vrot.slane %v5414, 1
      %v6410 = vrot.slane %v5415, 1
      %v6411 = vrot.slane %v5416, 1
      %v6412 = vrot.slane %v5417, 1
      %v6413 = vrot.slane %v5418, 1
      %v6414 = vrot.slane %v5419, 1
      %v6415 = vrot.slane %v5420, 1
      %v6416 = vrot.slane %v5421, 1
      %v6417 = vrot.slane %v5422, 1
      %v6418 = vrot.slane %v5423, 1
      %v6419 = vrot.slane %v5424, 1
      %v6420 = vrot.slane %v5425, 1
      %v6421 = vrot.slane %v5426, 1
      %v6422 = vrot.slane %v5427, 1
      %v6423 = vrot.slane %v5428, 1
      %v6424 = vsel %vm1422, %v6422, %v6423
      %v6425 = vsel %vm1422, %v6421, %v6422
      %v6426 = vsel %vm1422, %v6420, %v6421
      %v6427 = vsel %vm1422, %v6419, %v6420
      %v6428 = vsel %vm1422, %v6418, %v6419
      %v6429 = vsel %vm1422, %v6417, %v6418
      %v6430 = vsel %vm1422, %v6416, %v6417
      %v6431 = vsel %vm1422, %v6415, %v6416
      %v6432 = vsel %vm1422, %v6414, %v6415
      %v6433 = vsel %vm1422, %v6413, %v6414
      %v6434 = vsel %vm1422, %v6412, %v6413
      %v6435 = vsel %vm1422, %v6411, %v6412
      %v6436 = vsel %vm1422, %v6410, %v6411
      %v6437 = vsel %vm1422, %v6409, %v6410
      %v6438 = vsel %vm1422, %v6408, %v6409
      %v6439 = vsel %vm1422, %v6407, %v6408
      %v6440 = vsel %vm1422, %v6406, %v6407
      %v6441 = vsel %vm1422, %v6405, %v6406
      %v6442 = vsel %vm1422, %v6404, %v6405
      %v6443 = vsel %vm1422, %v6403, %v6404
      %v6444 = vsel %vm1422, %v6402, %v6403
      %v6445 = vsel %vm1422, %v6401, %v6402
      %v6446 = vsel %vm1422, %v6400, %v6401
      %v6447 = vsel %vm1422, %v6399, %v6400
      %v6448 = vsel %vm1422, %v6398, %v6399
      %v6449 = vsel %vm1422, %v6397, %v6398
      %v6450 = vsel %vm1422, %v6396, %v6397
      %v6451 = vsel %vm1422, %v6395, %v6396
      %v6452 = vsel %vm1422, %v6394, %v6395
      %v6453 = vsel %vm1422, %v6393, %v6394
      %v6454 = vsel %vm1422, %v6392, %v6393
      %v6455 = vsel %vm1422, %v6423, %v6392
      %v6456 = vld [vmem:[%s1455] sm:$0xff]
      %v6457 = vld [vmem:[%s1455 + $0x8] sm:$0xff]
      %v6458 = vld [vmem:[%s1455 + $0x10] sm:$0xff]
      %v6459 = vld [vmem:[%s1455 + $0x18] sm:$0xff]
      %v6460 = vld [vmem:[%s1455 + $0x20] sm:$0xff]
      %v6461 = vld [vmem:[%s1455 + $0x28] sm:$0xff]
      %v6462 = vld [vmem:[%s1455 + $0x30] sm:$0xff]
      %v6463 = vld [vmem:[%s1455 + $0x38] sm:$0xff]
      %v6464 = vld [vmem:[%s1455 + $0x40] sm:$0xff]
      %v6465 = vld [vmem:[%s1455 + $0x48] sm:$0xff]
      %v6466 = vld [vmem:[%s1455 + $0x50] sm:$0xff]
      %v6467 = vld [vmem:[%s1455 + $0x58] sm:$0xff]
      %v6468 = vld [vmem:[%s1455 + $0x60] sm:$0xff]
      %v6469 = vld [vmem:[%s1455 + $0x68] sm:$0xff]
      %v6470 = vld [vmem:[%s1455 + $0x70] sm:$0xff]
      %v6471 = vld [vmem:[%s1455 + $0x78] sm:$0xff]
      %v6472 = vld [vmem:[%s1455 + $0x80] sm:$0xff]
      %v6473 = vld [vmem:[%s1455 + $0x88] sm:$0xff]
      %v6474 = vld [vmem:[%s1455 + $0x90] sm:$0xff]
      %v6475 = vld [vmem:[%s1455 + $0x98] sm:$0xff]
      %v6476 = vld [vmem:[%s1455 + $0xa0] sm:$0xff]
      %v6477 = vld [vmem:[%s1455 + $0xa8] sm:$0xff]
      %v6478 = vld [vmem:[%s1455 + $0xb0] sm:$0xff]
      %v6479 = vld [vmem:[%s1455 + $0xb8] sm:$0xff]
      %v6480 = vld [vmem:[%s1455 + $0xc0] sm:$0xff]
      %v6481 = vld [vmem:[%s1455 + $0xc8] sm:$0xff]
      %v6482 = vld [vmem:[%s1455 + $0xd0] sm:$0xff]
      %v6483 = vld [vmem:[%s1455 + $0xd8] sm:$0xff]
      %v6484 = vld [vmem:[%s1455 + $0xe0] sm:$0xff]
      %v6485 = vld [vmem:[%s1455 + $0xe8] sm:$0xff]
      %v6486 = vld [vmem:[%s1455 + $0xf0] sm:$0xff]
      %v6487 = vld [vmem:[%s1455 + $0xf8] sm:$0xff]
      %6489 = vset.pattern.permute.xlu0 0
      %6490 = vperm.xlu0 %6489, %v6456
      %v6491 = vpop.permute.xlu0 %6490
      %6494 = vset.pattern.permute.xlu0 0
      %6495 = vperm.xlu0 %6494, %v6457
      %v6496 = vpop.permute.xlu0 %6495
      %6499 = vset.pattern.permute.xlu0 0
      %6500 = vperm.xlu0 %6499, %v6458
      %v6501 = vpop.permute.xlu0 %6500
      %6504 = vset.pattern.permute.xlu0 0
      %6505 = vperm.xlu0 %6504, %v6459
      %v6506 = vpop.permute.xlu0 %6505
      %6509 = vset.pattern.permute.xlu0 0
      %6510 = vperm.xlu0 %6509, %v6460
      %v6511 = vpop.permute.xlu0 %6510
      %6514 = vset.pattern.permute.xlu0 0
      %6515 = vperm.xlu0 %6514, %v6461
      %v6516 = vpop.permute.xlu0 %6515
      %6519 = vset.pattern.permute.xlu0 0
      %6520 = vperm.xlu0 %6519, %v6462
      %v6521 = vpop.permute.xlu0 %6520
      %6524 = vset.pattern.permute.xlu0 0
      %6525 = vperm.xlu0 %6524, %v6463
      %v6526 = vpop.permute.xlu0 %6525
      %6529 = vset.pattern.permute.xlu0 0
      %6530 = vperm.xlu0 %6529, %v6464
      %v6531 = vpop.permute.xlu0 %6530
      %6534 = vset.pattern.permute.xlu0 0
      %6535 = vperm.xlu0 %6534, %v6465
      %v6536 = vpop.permute.xlu0 %6535
      %6539 = vset.pattern.permute.xlu0 0
      %6540 = vperm.xlu0 %6539, %v6466
      %v6541 = vpop.permute.xlu0 %6540
      %6544 = vset.pattern.permute.xlu0 0
      %6545 = vperm.xlu0 %6544, %v6467
      %v6546 = vpop.permute.xlu0 %6545
      %6549 = vset.pattern.permute.xlu0 0
      %6550 = vperm.xlu0 %6549, %v6468
      %v6551 = vpop.permute.xlu0 %6550
      %6554 = vset.pattern.permute.xlu0 0
      %6555 = vperm.xlu0 %6554, %v6469
      %v6556 = vpop.permute.xlu0 %6555
      %6559 = vset.pattern.permute.xlu0 0
      %6560 = vperm.xlu0 %6559, %v6470
      %v6561 = vpop.permute.xlu0 %6560
      %6564 = vset.pattern.permute.xlu0 0
      %6565 = vperm.xlu0 %6564, %v6471
      %v6566 = vpop.permute.xlu0 %6565
      %6569 = vset.pattern.permute.xlu0 0
      %6570 = vperm.xlu0 %6569, %v6472
      %v6571 = vpop.permute.xlu0 %6570
      %6574 = vset.pattern.permute.xlu0 0
      %6575 = vperm.xlu0 %6574, %v6473
      %v6576 = vpop.permute.xlu0 %6575
      %6579 = vset.pattern.permute.xlu0 0
      %6580 = vperm.xlu0 %6579, %v6474
      %v6581 = vpop.permute.xlu0 %6580
      %6584 = vset.pattern.permute.xlu0 0
      %6585 = vperm.xlu0 %6584, %v6475
      %v6586 = vpop.permute.xlu0 %6585
      %6589 = vset.pattern.permute.xlu0 0
      %6590 = vperm.xlu0 %6589, %v6476
      %v6591 = vpop.permute.xlu0 %6590
      %6594 = vset.pattern.permute.xlu0 0
      %6595 = vperm.xlu0 %6594, %v6477
      %v6596 = vpop.permute.xlu0 %6595
      %6599 = vset.pattern.permute.xlu0 0
      %6600 = vperm.xlu0 %6599, %v6478
      %v6601 = vpop.permute.xlu0 %6600
      %6604 = vset.pattern.permute.xlu0 0
      %6605 = vperm.xlu0 %6604, %v6479
      %v6606 = vpop.permute.xlu0 %6605
      %6609 = vset.pattern.permute.xlu0 0
      %6610 = vperm.xlu0 %6609, %v6480
      %v6611 = vpop.permute.xlu0 %6610
      %6614 = vset.pattern.permute.xlu0 0
      %6615 = vperm.xlu0 %6614, %v6481
      %v6616 = vpop.permute.xlu0 %6615
      %6619 = vset.pattern.permute.xlu0 0
      %6620 = vperm.xlu0 %6619, %v6482
      %v6621 = vpop.permute.xlu0 %6620
      %6624 = vset.pattern.permute.xlu0 0
      %6625 = vperm.xlu0 %6624, %v6483
      %v6626 = vpop.permute.xlu0 %6625
      %6629 = vset.pattern.permute.xlu0 0
      %6630 = vperm.xlu0 %6629, %v6484
      %v6631 = vpop.permute.xlu0 %6630
      %6634 = vset.pattern.permute.xlu0 0
      %6635 = vperm.xlu0 %6634, %v6485
      %v6636 = vpop.permute.xlu0 %6635
      %6639 = vset.pattern.permute.xlu0 0
      %6640 = vperm.xlu0 %6639, %v6486
      %v6641 = vpop.permute.xlu0 %6640
      %6644 = vset.pattern.permute.xlu0 0
      %6645 = vperm.xlu0 %6644, %v6487
      %v6646 = vpop.permute.xlu0 %6645
      %v6648 = vmul.f32 %v6454, %v6491
      %v6649 = vmul.f32 %v6453, %v6496
      %v6650 = vmul.f32 %v6452, %v6501
      %v6651 = vmul.f32 %v6451, %v6506
      %v6652 = vmul.f32 %v6450, %v6511
      %v6653 = vmul.f32 %v6449, %v6516
      %v6654 = vmul.f32 %v6448, %v6521
      %v6655 = vmul.f32 %v6447, %v6526
      %v6656 = vmul.f32 %v6446, %v6531
      %v6657 = vmul.f32 %v6445, %v6536
      %v6658 = vmul.f32 %v6444, %v6541
      %v6659 = vmul.f32 %v6443, %v6546
      %v6660 = vmul.f32 %v6442, %v6551
      %v6661 = vmul.f32 %v6441, %v6556
      %v6662 = vmul.f32 %v6440, %v6561
      %v6663 = vmul.f32 %v6439, %v6566
      %v6664 = vmul.f32 %v6438, %v6571
      %v6665 = vmul.f32 %v6437, %v6576
      %v6666 = vmul.f32 %v6436, %v6581
      %v6667 = vmul.f32 %v6435, %v6586
      %v6668 = vmul.f32 %v6434, %v6591
      %v6669 = vmul.f32 %v6433, %v6596
      %v6670 = vmul.f32 %v6432, %v6601
      %v6671 = vmul.f32 %v6431, %v6606
      %v6672 = vmul.f32 %v6430, %v6611
      %v6673 = vmul.f32 %v6429, %v6616
      %v6674 = vmul.f32 %v6428, %v6621
      %v6675 = vmul.f32 %v6427, %v6626
      %v6676 = vmul.f32 %v6426, %v6631
      %v6677 = vmul.f32 %v6425, %v6636
      %v6678 = vmul.f32 %v6424, %v6641
      %v6679 = vmul.f32 %v6455, %v6646
      %v6680 = vld [vmem:[#allocation3] sm:$0xff]
      %v6681 = vld [vmem:[#allocation3 + $0x8] sm:$0xff]
      %v6682 = vld [vmem:[#allocation3 + $0x10] sm:$0xff]
      %v6683 = vld [vmem:[#allocation3 + $0x18] sm:$0xff]
      %v6684 = vld [vmem:[#allocation3 + $0x20] sm:$0xff]
      %v6685 = vld [vmem:[#allocation3 + $0x28] sm:$0xff]
      %v6686 = vld [vmem:[#allocation3 + $0x30] sm:$0xff]
      %v6687 = vld [vmem:[#allocation3 + $0x38] sm:$0xff]
      %v6688 = vld [vmem:[#allocation3 + $0x40] sm:$0xff]
      %v6689 = vld [vmem:[#allocation3 + $0x48] sm:$0xff]
      %v6690 = vld [vmem:[#allocation3 + $0x50] sm:$0xff]
      %v6691 = vld [vmem:[#allocation3 + $0x58] sm:$0xff]
      %v6692 = vld [vmem:[#allocation3 + $0x60] sm:$0xff]
      %v6693 = vld [vmem:[#allocation3 + $0x68] sm:$0xff]
      %v6694 = vld [vmem:[#allocation3 + $0x70] sm:$0xff]
      %v6695 = vld [vmem:[#allocation3 + $0x78] sm:$0xff]
      %v6696 = vld [vmem:[#allocation3 + $0x80] sm:$0xff]
      %v6697 = vld [vmem:[#allocation3 + $0x88] sm:$0xff]
      %v6698 = vld [vmem:[#allocation3 + $0x90] sm:$0xff]
      %v6699 = vld [vmem:[#allocation3 + $0x98] sm:$0xff]
      %v6700 = vld [vmem:[#allocation3 + $0xa0] sm:$0xff]
      %v6701 = vld [vmem:[#allocation3 + $0xa8] sm:$0xff]
      %v6702 = vld [vmem:[#allocation3 + $0xb0] sm:$0xff]
      %v6703 = vld [vmem:[#allocation3 + $0xb8] sm:$0xff]
      %v6704 = vld [vmem:[#allocation3 + $0xc0] sm:$0xff]
      %v6705 = vld [vmem:[#allocation3 + $0xc8] sm:$0xff]
      %v6706 = vld [vmem:[#allocation3 + $0xd0] sm:$0xff]
      %v6707 = vld [vmem:[#allocation3 + $0xd8] sm:$0xff]
      %v6708 = vld [vmem:[#allocation3 + $0xe0] sm:$0xff]
      %v6709 = vld [vmem:[#allocation3 + $0xe8] sm:$0xff]
      %v6710 = vld [vmem:[#allocation3 + $0xf0] sm:$0xff]
      %v6711 = vld [vmem:[#allocation3 + $0xf8] sm:$0xff]
      %v6712 = vpack.c.bf16 %v6649, %v6648
      %v6713 = vpack.c.bf16 %v6651, %v6650
      %v6714 = vpack.c.bf16 %v6653, %v6652
      %v6715 = vpack.c.bf16 %v6655, %v6654
      %v6716 = vpack.c.bf16 %v6657, %v6656
      %v6717 = vpack.c.bf16 %v6659, %v6658
      %v6718 = vpack.c.bf16 %v6661, %v6660
      %v6719 = vpack.c.bf16 %v6663, %v6662
      %v6720 = vpack.c.bf16 %v6665, %v6664
      %v6721 = vpack.c.bf16 %v6667, %v6666
      %v6722 = vpack.c.bf16 %v6669, %v6668
      %v6723 = vpack.c.bf16 %v6671, %v6670
      %v6724 = vpack.c.bf16 %v6673, %v6672
      %v6725 = vpack.c.bf16 %v6675, %v6674
      %v6726 = vpack.c.bf16 %v6677, %v6676
      %v6727 = vpack.c.bf16 %v6679, %v6678
      %s6728 = scalar_lea.vmem %s3, 128
      %v6729 = vld [vmem:[%s6728] sm:$0xf]
      %v6730 = vld [vmem:[%s6728 + $0x4] sm:$0xf]
      %v6731 = vld [vmem:[%s6728 + $0x8] sm:$0xf]
      %v6732 = vld [vmem:[%s6728 + $0xc] sm:$0xf]
      %v6733 = vld [vmem:[%s6728 + $0x10] sm:$0xf]
      %v6734 = vld [vmem:[%s6728 + $0x14] sm:$0xf]
      %v6735 = vld [vmem:[%s6728 + $0x18] sm:$0xf]
      %v6736 = vld [vmem:[%s6728 + $0x1c] sm:$0xf]
      %v6737 = vld [vmem:[%s6728 + $0x20] sm:$0xf]
      %v6738 = vld [vmem:[%s6728 + $0x24] sm:$0xf]
      %v6739 = vld [vmem:[%s6728 + $0x28] sm:$0xf]
      %v6740 = vld [vmem:[%s6728 + $0x2c] sm:$0xf]
      %v6741 = vld [vmem:[%s6728 + $0x30] sm:$0xf]
      %v6742 = vld [vmem:[%s6728 + $0x34] sm:$0xf]
      %v6743 = vld [vmem:[%s6728 + $0x38] sm:$0xf]
      %v6744 = vld [vmem:[%s6728 + $0x3c] sm:$0xf]
      %v6761 = vunpack.c.l.b16 %v6729
      %v6762 = vunpack.c.l.b16 %v6730
      %v6763 = vunpack.c.l.b16 %v6731
      %v6764 = vunpack.c.l.b16 %v6732
      %v6765 = vunpack.c.l.b16 %v6733
      %v6766 = vunpack.c.l.b16 %v6734
      %v6767 = vunpack.c.l.b16 %v6735
      %v6768 = vunpack.c.l.b16 %v6736
      %v6769 = vunpack.c.l.b16 %v6737
      %v6770 = vunpack.c.l.b16 %v6738
      %v6771 = vunpack.c.l.b16 %v6739
      %v6772 = vunpack.c.l.b16 %v6740
      %v6773 = vunpack.c.l.b16 %v6741
      %v6774 = vunpack.c.l.b16 %v6742
      %v6775 = vunpack.c.l.b16 %v6743
      %v6776 = vunpack.c.l.b16 %v6744
      %v6777 = vpack.c.b16 %v6762, %v6761
      %v6778 = vpack.c.b16 %v6764, %v6763
      %v6779 = vpack.c.b16 %v6766, %v6765
      %v6780 = vpack.c.b16 %v6768, %v6767
      %v6781 = vpack.c.b16 %v6770, %v6769
      %v6782 = vpack.c.b16 %v6772, %v6771
      %v6783 = vpack.c.b16 %v6774, %v6773
      %v6784 = vpack.c.b16 %v6776, %v6775
      %6793 = vmatprep.subr.bf16.mxu0 0
      %6794 = vmatpush1.bf16.msra.mxu0 %v6784
      %6795 = vmatprep.subr.bf16.mxu0 0
      %6796 = vmatpush1.bf16.msra.mxu0 %v6783
      %6797 = vmatprep.subr.bf16.mxu0 0
      %6798 = vmatpush1.bf16.msra.mxu0 %v6782
      %6799 = vmatprep.subr.bf16.mxu0 0
      %6800 = vmatpush1.bf16.msra.mxu0 %v6781
      %6801 = vmatprep.subr.bf16.mxu0 0
      %6802 = vmatpush1.bf16.msra.mxu0 %v6780
      %6803 = vmatprep.subr.bf16.mxu0 0
      %6804 = vmatpush1.bf16.msra.mxu0 %v6779
      %6805 = vmatprep.subr.bf16.mxu0 0
      %6806 = vmatpush1.bf16.msra.mxu0 %v6778
      %6807 = vmatprep.subr.bf16.mxu0 0
      %6808 = vmatpush1.bf16.msra.mxu0 %v6777
      %6809 = vmatprep.subr.bf16.mxu0 0
      %6810 = vmatpush2.bf16.msra.mxu0 0
      %6811 = vmatprep.subr.bf16.mxu0 0
      %6812 = vmatpush2.bf16.msra.mxu0 0
      %6813 = vmatprep.subr.bf16.mxu0 0
      %6814 = vmatpush2.bf16.msra.mxu0 0
      %6815 = vmatprep.subr.bf16.mxu0 0
      %6816 = vmatpush2.bf16.msra.mxu0 0
      %6817 = vmatprep.subr.bf16.mxu0 0
      %6818 = vmatpush2.bf16.msra.mxu0 0
      %6819 = vmatprep.subr.bf16.mxu0 0
      %6820 = vmatpush2.bf16.msra.mxu0 0
      %6821 = vmatprep.subr.bf16.mxu0 0
      %6822 = vmatpush2.bf16.msra.mxu0 0
      %6823 = vmatprep.subr.bf16.mxu0 0
      %6824 = vmatpush2.bf16.msra.mxu0 0
      %6825 = vmatprep.mubr.bf16.mxu0 0
      %6826 = vmatmul.mubr.bf16.gmra.mxu0 %v6712
      %v6827 = vpop.f32.mrf.mxu0
      %v6828 = vadd.f32 0.0, %v6827
      %v6829 = vpop.f32.mrf.mxu0
      %v6830 = vpop.f32.mrf.mxu0
      %v6831 = vadd.f32 0.0, %v6830
      %v6832 = vpop.f32.mrf.mxu0
      %6833 = vmatprep.mubr.bf16.mxu0 0
      %6834 = vmatmul.mubr.bf16.gmra.mxu0 %v6713
      %v6835 = vpop.f32.mrf.mxu0
      %v6836 = vadd.f32 0.0, %v6835
      %v6837 = vpop.f32.mrf.mxu0
      %v6838 = vpop.f32.mrf.mxu0
      %v6839 = vadd.f32 0.0, %v6838
      %v6840 = vpop.f32.mrf.mxu0
      %6841 = vmatprep.mubr.bf16.mxu0 0
      %6842 = vmatmul.mubr.bf16.gmra.mxu0 %v6714
      %v6843 = vpop.f32.mrf.mxu0
      %v6844 = vadd.f32 0.0, %v6843
      %v6845 = vpop.f32.mrf.mxu0
      %v6846 = vpop.f32.mrf.mxu0
      %v6847 = vadd.f32 0.0, %v6846
      %v6848 = vpop.f32.mrf.mxu0
      %6849 = vmatprep.mubr.bf16.mxu0 0
      %6850 = vmatmul.mubr.bf16.gmra.mxu0 %v6715
      %v6851 = vpop.f32.mrf.mxu0
      %v6852 = vadd.f32 0.0, %v6851
      %v6853 = vpop.f32.mrf.mxu0
      %v6854 = vpop.f32.mrf.mxu0
      %v6855 = vadd.f32 0.0, %v6854
      %v6856 = vpop.f32.mrf.mxu0
      %6857 = vmatprep.mubr.bf16.mxu0 0
      %6858 = vmatmul.mubr.bf16.gmra.mxu0 %v6716
      %v6859 = vpop.f32.mrf.mxu0
      %v6860 = vadd.f32 0.0, %v6859
      %v6861 = vpop.f32.mrf.mxu0
      %v6862 = vpop.f32.mrf.mxu0
      %v6863 = vadd.f32 0.0, %v6862
      %v6864 = vpop.f32.mrf.mxu0
      %6865 = vmatprep.mubr.bf16.mxu0 0
      %6866 = vmatmul.mubr.bf16.gmra.mxu0 %v6717
      %v6867 = vpop.f32.mrf.mxu0
      %v6868 = vadd.f32 0.0, %v6867
      %v6869 = vpop.f32.mrf.mxu0
      %v6870 = vpop.f32.mrf.mxu0
      %v6871 = vadd.f32 0.0, %v6870
      %v6872 = vpop.f32.mrf.mxu0
      %6873 = vmatprep.mubr.bf16.mxu0 0
      %6874 = vmatmul.mubr.bf16.gmra.mxu0 %v6718
      %v6875 = vpop.f32.mrf.mxu0
      %v6876 = vadd.f32 0.0, %v6875
      %v6877 = vpop.f32.mrf.mxu0
      %v6878 = vpop.f32.mrf.mxu0
      %v6879 = vadd.f32 0.0, %v6878
      %v6880 = vpop.f32.mrf.mxu0
      %6881 = vmatprep.mubr.bf16.mxu0 0
      %6882 = vmatmul.mubr.bf16.gmra.mxu0 %v6719
      %v6883 = vpop.f32.mrf.mxu0
      %v6884 = vadd.f32 0.0, %v6883
      %v6885 = vpop.f32.mrf.mxu0
      %v6886 = vpop.f32.mrf.mxu0
      %v6887 = vadd.f32 0.0, %v6886
      %v6888 = vpop.f32.mrf.mxu0
      %6889 = vmatprep.mubr.bf16.mxu0 0
      %6890 = vmatmul.mubr.bf16.gmra.mxu0 %v6720
      %v6891 = vpop.f32.mrf.mxu0
      %v6892 = vadd.f32 0.0, %v6891
      %v6893 = vpop.f32.mrf.mxu0
      %v6894 = vpop.f32.mrf.mxu0
      %v6895 = vadd.f32 0.0, %v6894
      %v6896 = vpop.f32.mrf.mxu0
      %6897 = vmatprep.mubr.bf16.mxu0 0
      %6898 = vmatmul.mubr.bf16.gmra.mxu0 %v6721
      %v6899 = vpop.f32.mrf.mxu0
      %v6900 = vadd.f32 0.0, %v6899
      %v6901 = vpop.f32.mrf.mxu0
      %v6902 = vpop.f32.mrf.mxu0
      %v6903 = vadd.f32 0.0, %v6902
      %v6904 = vpop.f32.mrf.mxu0
      %6905 = vmatprep.mubr.bf16.mxu0 0
      %6906 = vmatmul.mubr.bf16.gmra.mxu0 %v6722
      %v6907 = vpop.f32.mrf.mxu0
      %v6908 = vadd.f32 0.0, %v6907
      %v6909 = vpop.f32.mrf.mxu0
      %v6910 = vpop.f32.mrf.mxu0
      %v6911 = vadd.f32 0.0, %v6910
      %v6912 = vpop.f32.mrf.mxu0
      %6913 = vmatprep.mubr.bf16.mxu0 0
      %6914 = vmatmul.mubr.bf16.gmra.mxu0 %v6723
      %v6915 = vpop.f32.mrf.mxu0
      %v6916 = vadd.f32 0.0, %v6915
      %v6917 = vpop.f32.mrf.mxu0
      %v6918 = vpop.f32.mrf.mxu0
      %v6919 = vadd.f32 0.0, %v6918
      %v6920 = vpop.f32.mrf.mxu0
      %6921 = vmatprep.mubr.bf16.mxu0 0
      %6922 = vmatmul.mubr.bf16.gmra.mxu0 %v6724
      %v6923 = vpop.f32.mrf.mxu0
      %v6924 = vadd.f32 0.0, %v6923
      %v6925 = vpop.f32.mrf.mxu0
      %v6926 = vpop.f32.mrf.mxu0
      %v6927 = vadd.f32 0.0, %v6926
      %v6928 = vpop.f32.mrf.mxu0
      %6929 = vmatprep.mubr.bf16.mxu0 0
      %6930 = vmatmul.mubr.bf16.gmra.mxu0 %v6725
      %v6931 = vpop.f32.mrf.mxu0
      %v6932 = vadd.f32 0.0, %v6931
      %v6933 = vpop.f32.mrf.mxu0
      %v6934 = vpop.f32.mrf.mxu0
      %v6935 = vadd.f32 0.0, %v6934
      %v6936 = vpop.f32.mrf.mxu0
      %6937 = vmatprep.mubr.bf16.mxu0 0
      %6938 = vmatmul.mubr.bf16.gmra.mxu0 %v6726
      %v6939 = vpop.f32.mrf.mxu0
      %v6940 = vadd.f32 0.0, %v6939
      %v6941 = vpop.f32.mrf.mxu0
      %v6942 = vpop.f32.mrf.mxu0
      %v6943 = vadd.f32 0.0, %v6942
      %v6944 = vpop.f32.mrf.mxu0
      %6945 = vmatprep.mubr.bf16.mxu0 0
      %6946 = vmatmul.mubr.bf16.gmra.mxu0 %v6727
      %v6947 = vpop.f32.mrf.mxu0
      %v6948 = vadd.f32 0.0, %v6947
      %v6949 = vpop.f32.mrf.mxu0
      %v6950 = vpop.f32.mrf.mxu0
      %v6951 = vadd.f32 0.0, %v6950
      %v6952 = vpop.f32.mrf.mxu0
      %6953 = vdwg.mxu0
      %v6954 = vadd.f32 %v6680, %v6828
      %v6955 = vadd.f32 %v6681, %v6831
      %v6956 = vadd.f32 %v6682, %v6836
      %v6957 = vadd.f32 %v6683, %v6839
      %v6958 = vadd.f32 %v6684, %v6844
      %v6959 = vadd.f32 %v6685, %v6847
      %v6960 = vadd.f32 %v6686, %v6852
      %v6961 = vadd.f32 %v6687, %v6855
      %v6962 = vadd.f32 %v6688, %v6860
      %v6963 = vadd.f32 %v6689, %v6863
      %v6964 = vadd.f32 %v6690, %v6868
      %v6965 = vadd.f32 %v6691, %v6871
      %v6966 = vadd.f32 %v6692, %v6876
      %v6967 = vadd.f32 %v6693, %v6879
      %v6968 = vadd.f32 %v6694, %v6884
      %v6969 = vadd.f32 %v6695, %v6887
      %v6970 = vadd.f32 %v6696, %v6892
      %v6971 = vadd.f32 %v6697, %v6895
      %v6972 = vadd.f32 %v6698, %v6900
      %v6973 = vadd.f32 %v6699, %v6903
      %v6974 = vadd.f32 %v6700, %v6908
      %v6975 = vadd.f32 %v6701, %v6911
      %v6976 = vadd.f32 %v6702, %v6916
      %v6977 = vadd.f32 %v6703, %v6919
      %v6978 = vadd.f32 %v6704, %v6924
      %v6979 = vadd.f32 %v6705, %v6927
      %v6980 = vadd.f32 %v6706, %v6932
      %v6981 = vadd.f32 %v6707, %v6935
      %v6982 = vadd.f32 %v6708, %v6940
      %v6983 = vadd.f32 %v6709, %v6943
      %v6984 = vadd.f32 %v6710, %v6948
      %v6985 = vadd.f32 %v6711, %v6951
      %6986 = vst [vmem:[#allocation3] sm:$0xff] %v6954
      %6987 = vst [vmem:[#allocation3 + $0x8] sm:$0xff] %v6955
      %6988 = vst [vmem:[#allocation3 + $0x10] sm:$0xff] %v6956
      %6989 = vst [vmem:[#allocation3 + $0x18] sm:$0xff] %v6957
      %6990 = vst [vmem:[#allocation3 + $0x20] sm:$0xff] %v6958
      %6991 = vst [vmem:[#allocation3 + $0x28] sm:$0xff] %v6959
      %6992 = vst [vmem:[#allocation3 + $0x30] sm:$0xff] %v6960
      %6993 = vst [vmem:[#allocation3 + $0x38] sm:$0xff] %v6961
      %6994 = vst [vmem:[#allocation3 + $0x40] sm:$0xff] %v6962
      %6995 = vst [vmem:[#allocation3 + $0x48] sm:$0xff] %v6963
      %6996 = vst [vmem:[#allocation3 + $0x50] sm:$0xff] %v6964
      %6997 = vst [vmem:[#allocation3 + $0x58] sm:$0xff] %v6965
      %6998 = vst [vmem:[#allocation3 + $0x60] sm:$0xff] %v6966
      %6999 = vst [vmem:[#allocation3 + $0x68] sm:$0xff] %v6967
      %7000 = vst [vmem:[#allocation3 + $0x70] sm:$0xff] %v6968
      %7001 = vst [vmem:[#allocation3 + $0x78] sm:$0xff] %v6969
      %7002 = vst [vmem:[#allocation3 + $0x80] sm:$0xff] %v6970
      %7003 = vst [vmem:[#allocation3 + $0x88] sm:$0xff] %v6971
      %7004 = vst [vmem:[#allocation3 + $0x90] sm:$0xff] %v6972
      %7005 = vst [vmem:[#allocation3 + $0x98] sm:$0xff] %v6973
      %7006 = vst [vmem:[#allocation3 + $0xa0] sm:$0xff] %v6974
      %7007 = vst [vmem:[#allocation3 + $0xa8] sm:$0xff] %v6975
      %7008 = vst [vmem:[#allocation3 + $0xb0] sm:$0xff] %v6976
      %7009 = vst [vmem:[#allocation3 + $0xb8] sm:$0xff] %v6977
      %7010 = vst [vmem:[#allocation3 + $0xc0] sm:$0xff] %v6978
      %7011 = vst [vmem:[#allocation3 + $0xc8] sm:$0xff] %v6979
      %7012 = vst [vmem:[#allocation3 + $0xd0] sm:$0xff] %v6980
      %7013 = vst [vmem:[#allocation3 + $0xd8] sm:$0xff] %v6981
      %7014 = vst [vmem:[#allocation3 + $0xe0] sm:$0xff] %v6982
      %7015 = vst [vmem:[#allocation3 + $0xe8] sm:$0xff] %v6983
      %7016 = vst [vmem:[#allocation3 + $0xf0] sm:$0xff] %v6984
      %7017 = vst [vmem:[#allocation3 + $0xf8] sm:$0xff] %v6985
      %v7018 = vld [vmem:[#allocation2 + $0x10] sm:$0xff]
      %v7019 = vld [vmem:[#allocation2 + $0x18] sm:$0xff]
      %v7020 = vld [vmem:[#allocation2 + $0x20] sm:$0xff]
      %v7021 = vld [vmem:[#allocation2 + $0x28] sm:$0xff]
      %v7022 = vld [vmem:[#allocation2 + $0x30] sm:$0xff]
      %v7023 = vld [vmem:[#allocation2 + $0x38] sm:$0xff]
      %v7024 = vld [vmem:[#allocation2 + $0x40] sm:$0xff]
      %v7025 = vld [vmem:[#allocation2 + $0x48] sm:$0xff]
      %v7026 = vld [vmem:[#allocation2 + $0x50] sm:$0xff]
      %v7027 = vld [vmem:[#allocation2 + $0x58] sm:$0xff]
      %v7028 = vld [vmem:[#allocation2 + $0x60] sm:$0xff]
      %v7029 = vld [vmem:[#allocation2 + $0x68] sm:$0xff]
      %v7030 = vld [vmem:[#allocation2 + $0x70] sm:$0xff]
      %v7031 = vld [vmem:[#allocation2 + $0x78] sm:$0xff]
      %v7032 = vld [vmem:[#allocation2 + $0x80] sm:$0xff]
      %v7033 = vld [vmem:[#allocation2 + $0x88] sm:$0xff]
      %v7034 = vld [vmem:[#allocation2 + $0x90] sm:$0xff]
      %v7035 = vld [vmem:[#allocation2 + $0x98] sm:$0xff]
      %v7036 = vld [vmem:[#allocation2 + $0xa0] sm:$0xff]
      %v7037 = vld [vmem:[#allocation2 + $0xa8] sm:$0xff]
      %v7038 = vld [vmem:[#allocation2 + $0xb0] sm:$0xff]
      %v7039 = vld [vmem:[#allocation2 + $0xb8] sm:$0xff]
      %v7040 = vld [vmem:[#allocation2 + $0xc0] sm:$0xff]
      %v7041 = vld [vmem:[#allocation2 + $0xc8] sm:$0xff]
      %v7042 = vld [vmem:[#allocation2 + $0xd0] sm:$0xff]
      %v7043 = vld [vmem:[#allocation2 + $0xd8] sm:$0xff]
      %v7044 = vld [vmem:[#allocation2 + $0xe0] sm:$0xff]
      %v7045 = vld [vmem:[#allocation2 + $0xe8] sm:$0xff]
      %v7046 = vld [vmem:[#allocation2 + $0xf0] sm:$0xff]
      %v7047 = vld [vmem:[#allocation2 + $0xf8] sm:$0xff]
      %v7048 = vld [vmem:[#allocation2 + $0x100] sm:$0xff]
      %v7049 = vld [vmem:[#allocation2 + $0x108] sm:$0xff]
      %v7050 = vrot.slane %v7018, 7
      %v7051 = vrot.slane %v7019, 7
      %v7052 = vrot.slane %v7020, 7
      %v7053 = vrot.slane %v7021, 7
      %v7054 = vrot.slane %v7022, 7
      %v7055 = vrot.slane %v7023, 7
      %v7056 = vrot.slane %v7024, 7
      %v7057 = vrot.slane %v7025, 7
      %v7058 = vrot.slane %v7026, 7
      %v7059 = vrot.slane %v7027, 7
      %v7060 = vrot.slane %v7028, 7
      %v7061 = vrot.slane %v7029, 7
      %v7062 = vrot.slane %v7030, 7
      %v7063 = vrot.slane %v7031, 7
      %v7064 = vrot.slane %v7032, 7
      %v7065 = vrot.slane %v7033, 7
      %v7066 = vrot.slane %v7034, 7
      %v7067 = vrot.slane %v7035, 7
      %v7068 = vrot.slane %v7036, 7
      %v7069 = vrot.slane %v7037, 7
      %v7070 = vrot.slane %v7038, 7
      %v7071 = vrot.slane %v7039, 7
      %v7072 = vrot.slane %v7040, 7
      %v7073 = vrot.slane %v7041, 7
      %v7074 = vrot.slane %v7042, 7
      %v7075 = vrot.slane %v7043, 7
      %v7076 = vrot.slane %v7044, 7
      %v7077 = vrot.slane %v7045, 7
      %v7078 = vrot.slane %v7046, 7
      %v7079 = vrot.slane %v7047, 7
      %v7080 = vrot.slane %v7048, 7
      %v7081 = vrot.slane %v7049, 7
      %v7082 = vsel %vm458, %v7080, %v7081
      %v7083 = vsel %vm458, %v7079, %v7080
      %v7084 = vsel %vm458, %v7078, %v7079
      %v7085 = vsel %vm458, %v7077, %v7078
      %v7086 = vsel %vm458, %v7076, %v7077
      %v7087 = vsel %vm458, %v7075, %v7076
      %v7088 = vsel %vm458, %v7074, %v7075
      %v7089 = vsel %vm458, %v7073, %v7074
      %v7090 = vsel %vm458, %v7072, %v7073
      %v7091 = vsel %vm458, %v7071, %v7072
      %v7092 = vsel %vm458, %v7070, %v7071
      %v7093 = vsel %vm458, %v7069, %v7070
      %v7094 = vsel %vm458, %v7068, %v7069
      %v7095 = vsel %vm458, %v7067, %v7068
      %v7096 = vsel %vm458, %v7066, %v7067
      %v7097 = vsel %vm458, %v7065, %v7066
      %v7098 = vsel %vm458, %v7064, %v7065
      %v7099 = vsel %vm458, %v7063, %v7064
      %v7100 = vsel %vm458, %v7062, %v7063
      %v7101 = vsel %vm458, %v7061, %v7062
      %v7102 = vsel %vm458, %v7060, %v7061
      %v7103 = vsel %vm458, %v7059, %v7060
      %v7104 = vsel %vm458, %v7058, %v7059
      %v7105 = vsel %vm458, %v7057, %v7058
      %v7106 = vsel %vm458, %v7056, %v7057
      %v7107 = vsel %vm458, %v7055, %v7056
      %v7108 = vsel %vm458, %v7054, %v7055
      %v7109 = vsel %vm458, %v7053, %v7054
      %v7110 = vsel %vm458, %v7052, %v7053
      %v7111 = vsel %vm458, %v7051, %v7052
      %v7112 = vsel %vm458, %v7050, %v7051
      %v7113 = vsel %vm458, %v7081, %v7050
      %v7114 = vld [vmem:[%s5] sm:$0xff]
      %v7115 = vld [vmem:[%s5 + $0x8] sm:$0xff]
      %v7116 = vld [vmem:[%s5 + $0x10] sm:$0xff]
      %v7117 = vld [vmem:[%s5 + $0x18] sm:$0xff]
      %v7118 = vld [vmem:[%s5 + $0x20] sm:$0xff]
      %v7119 = vld [vmem:[%s5 + $0x28] sm:$0xff]
      %v7120 = vld [vmem:[%s5 + $0x30] sm:$0xff]
      %v7121 = vld [vmem:[%s5 + $0x38] sm:$0xff]
      %v7122 = vld [vmem:[%s5 + $0x40] sm:$0xff]
      %v7123 = vld [vmem:[%s5 + $0x48] sm:$0xff]
      %v7124 = vld [vmem:[%s5 + $0x50] sm:$0xff]
      %v7125 = vld [vmem:[%s5 + $0x58] sm:$0xff]
      %v7126 = vld [vmem:[%s5 + $0x60] sm:$0xff]
      %v7127 = vld [vmem:[%s5 + $0x68] sm:$0xff]
      %v7128 = vld [vmem:[%s5 + $0x70] sm:$0xff]
      %v7129 = vld [vmem:[%s5 + $0x78] sm:$0xff]
      %v7130 = vld [vmem:[%s5 + $0x80] sm:$0xff]
      %v7131 = vld [vmem:[%s5 + $0x88] sm:$0xff]
      %v7132 = vld [vmem:[%s5 + $0x90] sm:$0xff]
      %v7133 = vld [vmem:[%s5 + $0x98] sm:$0xff]
      %v7134 = vld [vmem:[%s5 + $0xa0] sm:$0xff]
      %v7135 = vld [vmem:[%s5 + $0xa8] sm:$0xff]
      %v7136 = vld [vmem:[%s5 + $0xb0] sm:$0xff]
      %v7137 = vld [vmem:[%s5 + $0xb8] sm:$0xff]
      %v7138 = vld [vmem:[%s5 + $0xc0] sm:$0xff]
      %v7139 = vld [vmem:[%s5 + $0xc8] sm:$0xff]
      %v7140 = vld [vmem:[%s5 + $0xd0] sm:$0xff]
      %v7141 = vld [vmem:[%s5 + $0xd8] sm:$0xff]
      %v7142 = vld [vmem:[%s5 + $0xe0] sm:$0xff]
      %v7143 = vld [vmem:[%s5 + $0xe8] sm:$0xff]
      %v7144 = vld [vmem:[%s5 + $0xf0] sm:$0xff]
      %v7145 = vld [vmem:[%s5 + $0xf8] sm:$0xff]
      %7147 = vset.pattern.permute.xlu0 0
      %7148 = vperm.xlu0 %7147, %v7114
      %v7149 = vpop.permute.xlu0 %7148
      %7152 = vset.pattern.permute.xlu0 0
      %7153 = vperm.xlu0 %7152, %v7115
      %v7154 = vpop.permute.xlu0 %7153
      %7157 = vset.pattern.permute.xlu0 0
      %7158 = vperm.xlu0 %7157, %v7116
      %v7159 = vpop.permute.xlu0 %7158
      %7162 = vset.pattern.permute.xlu0 0
      %7163 = vperm.xlu0 %7162, %v7117
      %v7164 = vpop.permute.xlu0 %7163
      %7167 = vset.pattern.permute.xlu0 0
      %7168 = vperm.xlu0 %7167, %v7118
      %v7169 = vpop.permute.xlu0 %7168
      %7172 = vset.pattern.permute.xlu0 0
      %7173 = vperm.xlu0 %7172, %v7119
      %v7174 = vpop.permute.xlu0 %7173
      %7177 = vset.pattern.permute.xlu0 0
      %7178 = vperm.xlu0 %7177, %v7120
      %v7179 = vpop.permute.xlu0 %7178
      %7182 = vset.pattern.permute.xlu0 0
      %7183 = vperm.xlu0 %7182, %v7121
      %v7184 = vpop.permute.xlu0 %7183
      %7187 = vset.pattern.permute.xlu0 0
      %7188 = vperm.xlu0 %7187, %v7122
      %v7189 = vpop.permute.xlu0 %7188
      %7192 = vset.pattern.permute.xlu0 0
      %7193 = vperm.xlu0 %7192, %v7123
      %v7194 = vpop.permute.xlu0 %7193
      %7197 = vset.pattern.permute.xlu0 0
      %7198 = vperm.xlu0 %7197, %v7124
      %v7199 = vpop.permute.xlu0 %7198
      %7202 = vset.pattern.permute.xlu0 0
      %7203 = vperm.xlu0 %7202, %v7125
      %v7204 = vpop.permute.xlu0 %7203
      %7207 = vset.pattern.permute.xlu0 0
      %7208 = vperm.xlu0 %7207, %v7126
      %v7209 = vpop.permute.xlu0 %7208
      %7212 = vset.pattern.permute.xlu0 0
      %7213 = vperm.xlu0 %7212, %v7127
      %v7214 = vpop.permute.xlu0 %7213
      %7217 = vset.pattern.permute.xlu0 0
      %7218 = vperm.xlu0 %7217, %v7128
      %v7219 = vpop.permute.xlu0 %7218
      %7222 = vset.pattern.permute.xlu0 0
      %7223 = vperm.xlu0 %7222, %v7129
      %v7224 = vpop.permute.xlu0 %7223
      %7227 = vset.pattern.permute.xlu0 0
      %7228 = vperm.xlu0 %7227, %v7130
      %v7229 = vpop.permute.xlu0 %7228
      %7232 = vset.pattern.permute.xlu0 0
      %7233 = vperm.xlu0 %7232, %v7131
      %v7234 = vpop.permute.xlu0 %7233
      %7237 = vset.pattern.permute.xlu0 0
      %7238 = vperm.xlu0 %7237, %v7132
      %v7239 = vpop.permute.xlu0 %7238
      %7242 = vset.pattern.permute.xlu0 0
      %7243 = vperm.xlu0 %7242, %v7133
      %v7244 = vpop.permute.xlu0 %7243
      %7247 = vset.pattern.permute.xlu0 0
      %7248 = vperm.xlu0 %7247, %v7134
      %v7249 = vpop.permute.xlu0 %7248
      %7252 = vset.pattern.permute.xlu0 0
      %7253 = vperm.xlu0 %7252, %v7135
      %v7254 = vpop.permute.xlu0 %7253
      %7257 = vset.pattern.permute.xlu0 0
      %7258 = vperm.xlu0 %7257, %v7136
      %v7259 = vpop.permute.xlu0 %7258
      %7262 = vset.pattern.permute.xlu0 0
      %7263 = vperm.xlu0 %7262, %v7137
      %v7264 = vpop.permute.xlu0 %7263
      %7267 = vset.pattern.permute.xlu0 0
      %7268 = vperm.xlu0 %7267, %v7138
      %v7269 = vpop.permute.xlu0 %7268
      %7272 = vset.pattern.permute.xlu0 0
      %7273 = vperm.xlu0 %7272, %v7139
      %v7274 = vpop.permute.xlu0 %7273
      %7277 = vset.pattern.permute.xlu0 0
      %7278 = vperm.xlu0 %7277, %v7140
      %v7279 = vpop.permute.xlu0 %7278
      %7282 = vset.pattern.permute.xlu0 0
      %7283 = vperm.xlu0 %7282, %v7141
      %v7284 = vpop.permute.xlu0 %7283
      %7287 = vset.pattern.permute.xlu0 0
      %7288 = vperm.xlu0 %7287, %v7142
      %v7289 = vpop.permute.xlu0 %7288
      %7292 = vset.pattern.permute.xlu0 0
      %7293 = vperm.xlu0 %7292, %v7143
      %v7294 = vpop.permute.xlu0 %7293
      %7297 = vset.pattern.permute.xlu0 0
      %7298 = vperm.xlu0 %7297, %v7144
      %v7299 = vpop.permute.xlu0 %7298
      %7302 = vset.pattern.permute.xlu0 0
      %7303 = vperm.xlu0 %7302, %v7145
      %v7304 = vpop.permute.xlu0 %7303
      %v7306 = vmul.f32 %v7113, %v7149
      %v7307 = vmul.f32 %v7112, %v7154
      %v7308 = vmul.f32 %v7111, %v7159
      %v7309 = vmul.f32 %v7110, %v7164
      %v7310 = vmul.f32 %v7109, %v7169
      %v7311 = vmul.f32 %v7108, %v7174
      %v7312 = vmul.f32 %v7107, %v7179
      %v7313 = vmul.f32 %v7106, %v7184
      %v7314 = vmul.f32 %v7105, %v7189
      %v7315 = vmul.f32 %v7104, %v7194
      %v7316 = vmul.f32 %v7103, %v7199
      %v7317 = vmul.f32 %v7102, %v7204
      %v7318 = vmul.f32 %v7101, %v7209
      %v7319 = vmul.f32 %v7100, %v7214
      %v7320 = vmul.f32 %v7099, %v7219
      %v7321 = vmul.f32 %v7098, %v7224
      %v7322 = vmul.f32 %v7097, %v7229
      %v7323 = vmul.f32 %v7096, %v7234
      %v7324 = vmul.f32 %v7095, %v7239
      %v7325 = vmul.f32 %v7094, %v7244
      %v7326 = vmul.f32 %v7093, %v7249
      %v7327 = vmul.f32 %v7092, %v7254
      %v7328 = vmul.f32 %v7091, %v7259
      %v7329 = vmul.f32 %v7090, %v7264
      %v7330 = vmul.f32 %v7089, %v7269
      %v7331 = vmul.f32 %v7088, %v7274
      %v7332 = vmul.f32 %v7087, %v7279
      %v7333 = vmul.f32 %v7086, %v7284
      %v7334 = vmul.f32 %v7085, %v7289
      %v7335 = vmul.f32 %v7084, %v7294
      %v7336 = vmul.f32 %v7083, %v7299
      %v7337 = vmul.f32 %v7082, %v7304
      %v7338 = vld [vmem:[#allocation3] sm:$0xff]
      %v7339 = vld [vmem:[#allocation3 + $0x8] sm:$0xff]
      %v7340 = vld [vmem:[#allocation3 + $0x10] sm:$0xff]
      %v7341 = vld [vmem:[#allocation3 + $0x18] sm:$0xff]
      %v7342 = vld [vmem:[#allocation3 + $0x20] sm:$0xff]
      %v7343 = vld [vmem:[#allocation3 + $0x28] sm:$0xff]
      %v7344 = vld [vmem:[#allocation3 + $0x30] sm:$0xff]
      %v7345 = vld [vmem:[#allocation3 + $0x38] sm:$0xff]
      %v7346 = vld [vmem:[#allocation3 + $0x40] sm:$0xff]
      %v7347 = vld [vmem:[#allocation3 + $0x48] sm:$0xff]
      %v7348 = vld [vmem:[#allocation3 + $0x50] sm:$0xff]
      %v7349 = vld [vmem:[#allocation3 + $0x58] sm:$0xff]
      %v7350 = vld [vmem:[#allocation3 + $0x60] sm:$0xff]
      %v7351 = vld [vmem:[#allocation3 + $0x68] sm:$0xff]
      %v7352 = vld [vmem:[#allocation3 + $0x70] sm:$0xff]
      %v7353 = vld [vmem:[#allocation3 + $0x78] sm:$0xff]
      %v7354 = vld [vmem:[#allocation3 + $0x80] sm:$0xff]
      %v7355 = vld [vmem:[#allocation3 + $0x88] sm:$0xff]
      %v7356 = vld [vmem:[#allocation3 + $0x90] sm:$0xff]
      %v7357 = vld [vmem:[#allocation3 + $0x98] sm:$0xff]
      %v7358 = vld [vmem:[#allocation3 + $0xa0] sm:$0xff]
      %v7359 = vld [vmem:[#allocation3 + $0xa8] sm:$0xff]
      %v7360 = vld [vmem:[#allocation3 + $0xb0] sm:$0xff]
      %v7361 = vld [vmem:[#allocation3 + $0xb8] sm:$0xff]
      %v7362 = vld [vmem:[#allocation3 + $0xc0] sm:$0xff]
      %v7363 = vld [vmem:[#allocation3 + $0xc8] sm:$0xff]
      %v7364 = vld [vmem:[#allocation3 + $0xd0] sm:$0xff]
      %v7365 = vld [vmem:[#allocation3 + $0xd8] sm:$0xff]
      %v7366 = vld [vmem:[#allocation3 + $0xe0] sm:$0xff]
      %v7367 = vld [vmem:[#allocation3 + $0xe8] sm:$0xff]
      %v7368 = vld [vmem:[#allocation3 + $0xf0] sm:$0xff]
      %v7369 = vld [vmem:[#allocation3 + $0xf8] sm:$0xff]
      %v7370 = vpack.c.bf16 %v7307, %v7306
      %v7371 = vpack.c.bf16 %v7309, %v7308
      %v7372 = vpack.c.bf16 %v7311, %v7310
      %v7373 = vpack.c.bf16 %v7313, %v7312
      %v7374 = vpack.c.bf16 %v7315, %v7314
      %v7375 = vpack.c.bf16 %v7317, %v7316
      %v7376 = vpack.c.bf16 %v7319, %v7318
      %v7377 = vpack.c.bf16 %v7321, %v7320
      %v7378 = vpack.c.bf16 %v7323, %v7322
      %v7379 = vpack.c.bf16 %v7325, %v7324
      %v7380 = vpack.c.bf16 %v7327, %v7326
      %v7381 = vpack.c.bf16 %v7329, %v7328
      %v7382 = vpack.c.bf16 %v7331, %v7330
      %v7383 = vpack.c.bf16 %v7333, %v7332
      %v7384 = vpack.c.bf16 %v7335, %v7334
      %v7385 = vpack.c.bf16 %v7337, %v7336
      %s7386 = scalar_lea.vmem %s3, 192
      %v7387 = vld [vmem:[%s7386] sm:$0xf]
      %v7388 = vld [vmem:[%s7386 + $0x4] sm:$0xf]
      %v7389 = vld [vmem:[%s7386 + $0x8] sm:$0xf]
      %v7390 = vld [vmem:[%s7386 + $0xc] sm:$0xf]
      %v7391 = vld [vmem:[%s7386 + $0x10] sm:$0xf]
      %v7392 = vld [vmem:[%s7386 + $0x14] sm:$0xf]
      %v7393 = vld [vmem:[%s7386 + $0x18] sm:$0xf]
      %v7394 = vld [vmem:[%s7386 + $0x1c] sm:$0xf]
      %v7395 = vld [vmem:[%s7386 + $0x20] sm:$0xf]
      %v7396 = vld [vmem:[%s7386 + $0x24] sm:$0xf]
      %v7397 = vld [vmem:[%s7386 + $0x28] sm:$0xf]
      %v7398 = vld [vmem:[%s7386 + $0x2c] sm:$0xf]
      %v7399 = vld [vmem:[%s7386 + $0x30] sm:$0xf]
      %v7400 = vld [vmem:[%s7386 + $0x34] sm:$0xf]
      %v7401 = vld [vmem:[%s7386 + $0x38] sm:$0xf]
      %v7402 = vld [vmem:[%s7386 + $0x3c] sm:$0xf]
      %v7419 = vunpack.c.l.b16 %v7387
      %v7420 = vunpack.c.l.b16 %v7388
      %v7421 = vunpack.c.l.b16 %v7389
      %v7422 = vunpack.c.l.b16 %v7390
      %v7423 = vunpack.c.l.b16 %v7391
      %v7424 = vunpack.c.l.b16 %v7392
      %v7425 = vunpack.c.l.b16 %v7393
      %v7426 = vunpack.c.l.b16 %v7394
      %v7427 = vunpack.c.l.b16 %v7395
      %v7428 = vunpack.c.l.b16 %v7396
      %v7429 = vunpack.c.l.b16 %v7397
      %v7430 = vunpack.c.l.b16 %v7398
      %v7431 = vunpack.c.l.b16 %v7399
      %v7432 = vunpack.c.l.b16 %v7400
      %v7433 = vunpack.c.l.b16 %v7401
      %v7434 = vunpack.c.l.b16 %v7402
      %v7435 = vpack.c.b16 %v7420, %v7419
      %v7436 = vpack.c.b16 %v7422, %v7421
      %v7437 = vpack.c.b16 %v7424, %v7423
      %v7438 = vpack.c.b16 %v7426, %v7425
      %v7439 = vpack.c.b16 %v7428, %v7427
      %v7440 = vpack.c.b16 %v7430, %v7429
      %v7441 = vpack.c.b16 %v7432, %v7431
      %v7442 = vpack.c.b16 %v7434, %v7433
      %7451 = vmatprep.subr.bf16.mxu0 0
      %7452 = vmatpush1.bf16.msra.mxu0 %v7442
      %7453 = vmatprep.subr.bf16.mxu0 0
      %7454 = vmatpush1.bf16.msra.mxu0 %v7441
      %7455 = vmatprep.subr.bf16.mxu0 0
      %7456 = vmatpush1.bf16.msra.mxu0 %v7440
      %7457 = vmatprep.subr.bf16.mxu0 0
      %7458 = vmatpush1.bf16.msra.mxu0 %v7439
      %7459 = vmatprep.subr.bf16.mxu0 0
      %7460 = vmatpush1.bf16.msra.mxu0 %v7438
      %7461 = vmatprep.subr.bf16.mxu0 0
      %7462 = vmatpush1.bf16.msra.mxu0 %v7437
      %7463 = vmatprep.subr.bf16.mxu0 0
      %7464 = vmatpush1.bf16.msra.mxu0 %v7436
      %7465 = vmatprep.subr.bf16.mxu0 0
      %7466 = vmatpush1.bf16.msra.mxu0 %v7435
      %7467 = vmatprep.subr.bf16.mxu0 0
      %7468 = vmatpush2.bf16.msra.mxu0 0
      %7469 = vmatprep.subr.bf16.mxu0 0
      %7470 = vmatpush2.bf16.msra.mxu0 0
      %7471 = vmatprep.subr.bf16.mxu0 0
      %7472 = vmatpush2.bf16.msra.mxu0 0
      %7473 = vmatprep.subr.bf16.mxu0 0
      %7474 = vmatpush2.bf16.msra.mxu0 0
      %7475 = vmatprep.subr.bf16.mxu0 0
      %7476 = vmatpush2.bf16.msra.mxu0 0
      %7477 = vmatprep.subr.bf16.mxu0 0
      %7478 = vmatpush2.bf16.msra.mxu0 0
      %7479 = vmatprep.subr.bf16.mxu0 0
      %7480 = vmatpush2.bf16.msra.mxu0 0
      %7481 = vmatprep.subr.bf16.mxu0 0
      %7482 = vmatpush2.bf16.msra.mxu0 0
      %7483 = vmatprep.mubr.bf16.mxu0 0
      %7484 = vmatmul.mubr.bf16.gmra.mxu0 %v7370
      %v7485 = vpop.f32.mrf.mxu0
      %v7486 = vadd.f32 0.0, %v7485
      %v7487 = vpop.f32.mrf.mxu0
      %v7488 = vpop.f32.mrf.mxu0
      %v7489 = vadd.f32 0.0, %v7488
      %v7490 = vpop.f32.mrf.mxu0
      %7491 = vmatprep.mubr.bf16.mxu0 0
      %7492 = vmatmul.mubr.bf16.gmra.mxu0 %v7371
      %v7493 = vpop.f32.mrf.mxu0
      %v7494 = vadd.f32 0.0, %v7493
      %v7495 = vpop.f32.mrf.mxu0
      %v7496 = vpop.f32.mrf.mxu0
      %v7497 = vadd.f32 0.0, %v7496
      %v7498 = vpop.f32.mrf.mxu0
      %7499 = vmatprep.mubr.bf16.mxu0 0
      %7500 = vmatmul.mubr.bf16.gmra.mxu0 %v7372
      %v7501 = vpop.f32.mrf.mxu0
      %v7502 = vadd.f32 0.0, %v7501
      %v7503 = vpop.f32.mrf.mxu0
      %v7504 = vpop.f32.mrf.mxu0
      %v7505 = vadd.f32 0.0, %v7504
      %v7506 = vpop.f32.mrf.mxu0
      %7507 = vmatprep.mubr.bf16.mxu0 0
      %7508 = vmatmul.mubr.bf16.gmra.mxu0 %v7373
      %v7509 = vpop.f32.mrf.mxu0
      %v7510 = vadd.f32 0.0, %v7509
      %v7511 = vpop.f32.mrf.mxu0
      %v7512 = vpop.f32.mrf.mxu0
      %v7513 = vadd.f32 0.0, %v7512
      %v7514 = vpop.f32.mrf.mxu0
      %7515 = vmatprep.mubr.bf16.mxu0 0
      %7516 = vmatmul.mubr.bf16.gmra.mxu0 %v7374
      %v7517 = vpop.f32.mrf.mxu0
      %v7518 = vadd.f32 0.0, %v7517
      %v7519 = vpop.f32.mrf.mxu0
      %v7520 = vpop.f32.mrf.mxu0
      %v7521 = vadd.f32 0.0, %v7520
      %v7522 = vpop.f32.mrf.mxu0
      %7523 = vmatprep.mubr.bf16.mxu0 0
      %7524 = vmatmul.mubr.bf16.gmra.mxu0 %v7375
      %v7525 = vpop.f32.mrf.mxu0
      %v7526 = vadd.f32 0.0, %v7525
      %v7527 = vpop.f32.mrf.mxu0
      %v7528 = vpop.f32.mrf.mxu0
      %v7529 = vadd.f32 0.0, %v7528
      %v7530 = vpop.f32.mrf.mxu0
      %7531 = vmatprep.mubr.bf16.mxu0 0
      %7532 = vmatmul.mubr.bf16.gmra.mxu0 %v7376
      %v7533 = vpop.f32.mrf.mxu0
      %v7534 = vadd.f32 0.0, %v7533
      %v7535 = vpop.f32.mrf.mxu0
      %v7536 = vpop.f32.mrf.mxu0
      %v7537 = vadd.f32 0.0, %v7536
      %v7538 = vpop.f32.mrf.mxu0
      %7539 = vmatprep.mubr.bf16.mxu0 0
      %7540 = vmatmul.mubr.bf16.gmra.mxu0 %v7377
      %v7541 = vpop.f32.mrf.mxu0
      %v7542 = vadd.f32 0.0, %v7541
      %v7543 = vpop.f32.mrf.mxu0
      %v7544 = vpop.f32.mrf.mxu0
      %v7545 = vadd.f32 0.0, %v7544
      %v7546 = vpop.f32.mrf.mxu0
      %7547 = vmatprep.mubr.bf16.mxu0 0
      %7548 = vmatmul.mubr.bf16.gmra.mxu0 %v7378
      %v7549 = vpop.f32.mrf.mxu0
      %v7550 = vadd.f32 0.0, %v7549
      %v7551 = vpop.f32.mrf.mxu0
      %v7552 = vpop.f32.mrf.mxu0
      %v7553 = vadd.f32 0.0, %v7552
      %v7554 = vpop.f32.mrf.mxu0
      %7555 = vmatprep.mubr.bf16.mxu0 0
      %7556 = vmatmul.mubr.bf16.gmra.mxu0 %v7379
      %v7557 = vpop.f32.mrf.mxu0
      %v7558 = vadd.f32 0.0, %v7557
      %v7559 = vpop.f32.mrf.mxu0
      %v7560 = vpop.f32.mrf.mxu0
      %v7561 = vadd.f32 0.0, %v7560
      %v7562 = vpop.f32.mrf.mxu0
      %7563 = vmatprep.mubr.bf16.mxu0 0
      %7564 = vmatmul.mubr.bf16.gmra.mxu0 %v7380
      %v7565 = vpop.f32.mrf.mxu0
      %v7566 = vadd.f32 0.0, %v7565
      %v7567 = vpop.f32.mrf.mxu0
      %v7568 = vpop.f32.mrf.mxu0
      %v7569 = vadd.f32 0.0, %v7568
      %v7570 = vpop.f32.mrf.mxu0
      %7571 = vmatprep.mubr.bf16.mxu0 0
      %7572 = vmatmul.mubr.bf16.gmra.mxu0 %v7381
      %v7573 = vpop.f32.mrf.mxu0
      %v7574 = vadd.f32 0.0, %v7573
      %v7575 = vpop.f32.mrf.mxu0
      %v7576 = vpop.f32.mrf.mxu0
      %v7577 = vadd.f32 0.0, %v7576
      %v7578 = vpop.f32.mrf.mxu0
      %7579 = vmatprep.mubr.bf16.mxu0 0
      %7580 = vmatmul.mubr.bf16.gmra.mxu0 %v7382
      %v7581 = vpop.f32.mrf.mxu0
      %v7582 = vadd.f32 0.0, %v7581
      %v7583 = vpop.f32.mrf.mxu0
      %v7584 = vpop.f32.mrf.mxu0
      %v7585 = vadd.f32 0.0, %v7584
      %v7586 = vpop.f32.mrf.mxu0
      %7587 = vmatprep.mubr.bf16.mxu0 0
      %7588 = vmatmul.mubr.bf16.gmra.mxu0 %v7383
      %v7589 = vpop.f32.mrf.mxu0
      %v7590 = vadd.f32 0.0, %v7589
      %v7591 = vpop.f32.mrf.mxu0
      %v7592 = vpop.f32.mrf.mxu0
      %v7593 = vadd.f32 0.0, %v7592
      %v7594 = vpop.f32.mrf.mxu0
      %7595 = vmatprep.mubr.bf16.mxu0 0
      %7596 = vmatmul.mubr.bf16.gmra.mxu0 %v7384
      %v7597 = vpop.f32.mrf.mxu0
      %v7598 = vadd.f32 0.0, %v7597
      %v7599 = vpop.f32.mrf.mxu0
      %v7600 = vpop.f32.mrf.mxu0
      %v7601 = vadd.f32 0.0, %v7600
      %v7602 = vpop.f32.mrf.mxu0
      %7603 = vmatprep.mubr.bf16.mxu0 0
      %7604 = vmatmul.mubr.bf16.gmra.mxu0 %v7385
      %v7605 = vpop.f32.mrf.mxu0
      %v7606 = vadd.f32 0.0, %v7605
      %v7607 = vpop.f32.mrf.mxu0
      %v7608 = vpop.f32.mrf.mxu0
      %v7609 = vadd.f32 0.0, %v7608
      %v7610 = vpop.f32.mrf.mxu0
      %7611 = vdwg.mxu0
      %v7612 = vadd.f32 %v7338, %v7486
      %v7613 = vadd.f32 %v7339, %v7489
      %v7614 = vadd.f32 %v7340, %v7494
      %v7615 = vadd.f32 %v7341, %v7497
      %v7616 = vadd.f32 %v7342, %v7502
      %v7617 = vadd.f32 %v7343, %v7505
      %v7618 = vadd.f32 %v7344, %v7510
      %v7619 = vadd.f32 %v7345, %v7513
      %v7620 = vadd.f32 %v7346, %v7518
      %v7621 = vadd.f32 %v7347, %v7521
      %v7622 = vadd.f32 %v7348, %v7526
      %v7623 = vadd.f32 %v7349, %v7529
      %v7624 = vadd.f32 %v7350, %v7534
      %v7625 = vadd.f32 %v7351, %v7537
      %v7626 = vadd.f32 %v7352, %v7542
      %v7627 = vadd.f32 %v7353, %v7545
      %v7628 = vadd.f32 %v7354, %v7550
      %v7629 = vadd.f32 %v7355, %v7553
      %v7630 = vadd.f32 %v7356, %v7558
      %v7631 = vadd.f32 %v7357, %v7561
      %v7632 = vadd.f32 %v7358, %v7566
      %v7633 = vadd.f32 %v7359, %v7569
      %v7634 = vadd.f32 %v7360, %v7574
      %v7635 = vadd.f32 %v7361, %v7577
      %v7636 = vadd.f32 %v7362, %v7582
      %v7637 = vadd.f32 %v7363, %v7585
      %v7638 = vadd.f32 %v7364, %v7590
      %v7639 = vadd.f32 %v7365, %v7593
      %v7640 = vadd.f32 %v7366, %v7598
      %v7641 = vadd.f32 %v7367, %v7601
      %v7642 = vadd.f32 %v7368, %v7606
      %v7643 = vadd.f32 %v7369, %v7609
      %7644 = vst [vmem:[#allocation3] sm:$0xff] %v7612
      %7645 = vst [vmem:[#allocation3 + $0x8] sm:$0xff] %v7613
      %7646 = vst [vmem:[#allocation3 + $0x10] sm:$0xff] %v7614
      %7647 = vst [vmem:[#allocation3 + $0x18] sm:$0xff] %v7615
      %7648 = vst [vmem:[#allocation3 + $0x20] sm:$0xff] %v7616
      %7649 = vst [vmem:[#allocation3 + $0x28] sm:$0xff] %v7617
      %7650 = vst [vmem:[#allocation3 + $0x30] sm:$0xff] %v7618
      %7651 = vst [vmem:[#allocation3 + $0x38] sm:$0xff] %v7619
      %7652 = vst [vmem:[#allocation3 + $0x40] sm:$0xff] %v7620
      %7653 = vst [vmem:[#allocation3 + $0x48] sm:$0xff] %v7621
      %7654 = vst [vmem:[#allocation3 + $0x50] sm:$0xff] %v7622
      %7655 = vst [vmem:[#allocation3 + $0x58] sm:$0xff] %v7623
      %7656 = vst [vmem:[#allocation3 + $0x60] sm:$0xff] %v7624
      %7657 = vst [vmem:[#allocation3 + $0x68] sm:$0xff] %v7625
      %7658 = vst [vmem:[#allocation3 + $0x70] sm:$0xff] %v7626
      %7659 = vst [vmem:[#allocation3 + $0x78] sm:$0xff] %v7627
      %7660 = vst [vmem:[#allocation3 + $0x80] sm:$0xff] %v7628
      %7661 = vst [vmem:[#allocation3 + $0x88] sm:$0xff] %v7629
      %7662 = vst [vmem:[#allocation3 + $0x90] sm:$0xff] %v7630
      %7663 = vst [vmem:[#allocation3 + $0x98] sm:$0xff] %v7631
      %7664 = vst [vmem:[#allocation3 + $0xa0] sm:$0xff] %v7632
      %7665 = vst [vmem:[#allocation3 + $0xa8] sm:$0xff] %v7633
      %7666 = vst [vmem:[#allocation3 + $0xb0] sm:$0xff] %v7634
      %7667 = vst [vmem:[#allocation3 + $0xb8] sm:$0xff] %v7635
      %7668 = vst [vmem:[#allocation3 + $0xc0] sm:$0xff] %v7636
      %7669 = vst [vmem:[#allocation3 + $0xc8] sm:$0xff] %v7637
      %7670 = vst [vmem:[#allocation3 + $0xd0] sm:$0xff] %v7638
      %7671 = vst [vmem:[#allocation3 + $0xd8] sm:$0xff] %v7639
      %7672 = vst [vmem:[#allocation3 + $0xe0] sm:$0xff] %v7640
      %7673 = vst [vmem:[#allocation3 + $0xe8] sm:$0xff] %v7641
      %7674 = vst [vmem:[#allocation3 + $0xf0] sm:$0xff] %v7642
      %7675 = vst [vmem:[#allocation3 + $0xf8] sm:$0xff] %v7643
      %v7676 = vld [vmem:[#allocation3] sm:$0xff]
      %v7677 = vld [vmem:[#allocation3 + $0x8] sm:$0xff]
      %v7678 = vld [vmem:[#allocation3 + $0x10] sm:$0xff]
      %v7679 = vld [vmem:[#allocation3 + $0x18] sm:$0xff]
      %v7680 = vld [vmem:[#allocation3 + $0x20] sm:$0xff]
      %v7681 = vld [vmem:[#allocation3 + $0x28] sm:$0xff]
      %v7682 = vld [vmem:[#allocation3 + $0x30] sm:$0xff]
      %v7683 = vld [vmem:[#allocation3 + $0x38] sm:$0xff]
      %v7684 = vld [vmem:[#allocation3 + $0x40] sm:$0xff]
      %v7685 = vld [vmem:[#allocation3 + $0x48] sm:$0xff]
      %v7686 = vld [vmem:[#allocation3 + $0x50] sm:$0xff]
      %v7687 = vld [vmem:[#allocation3 + $0x58] sm:$0xff]
      %v7688 = vld [vmem:[#allocation3 + $0x60] sm:$0xff]
      %v7689 = vld [vmem:[#allocation3 + $0x68] sm:$0xff]
      %v7690 = vld [vmem:[#allocation3 + $0x70] sm:$0xff]
      %v7691 = vld [vmem:[#allocation3 + $0x78] sm:$0xff]
      %v7692 = vld [vmem:[#allocation3 + $0x80] sm:$0xff]
      %v7693 = vld [vmem:[#allocation3 + $0x88] sm:$0xff]
      %v7694 = vld [vmem:[#allocation3 + $0x90] sm:$0xff]
      %v7695 = vld [vmem:[#allocation3 + $0x98] sm:$0xff]
      %v7696 = vld [vmem:[#allocation3 + $0xa0] sm:$0xff]
      %v7697 = vld [vmem:[#allocation3 + $0xa8] sm:$0xff]
      %v7698 = vld [vmem:[#allocation3 + $0xb0] sm:$0xff]
      %v7699 = vld [vmem:[#allocation3 + $0xb8] sm:$0xff]
      %v7700 = vld [vmem:[#allocation3 + $0xc0] sm:$0xff]
      %v7701 = vld [vmem:[#allocation3 + $0xc8] sm:$0xff]
      %v7702 = vld [vmem:[#allocation3 + $0xd0] sm:$0xff]
      %v7703 = vld [vmem:[#allocation3 + $0xd8] sm:$0xff]
      %v7704 = vld [vmem:[#allocation3 + $0xe0] sm:$0xff]
      %v7705 = vld [vmem:[#allocation3 + $0xe8] sm:$0xff]
      %v7706 = vld [vmem:[#allocation3 + $0xf0] sm:$0xff]
      %v7707 = vld [vmem:[#allocation3 + $0xf8] sm:$0xff]
      %v7708 = vpack.c.bf16 %v7019, %v7018
      %v7709 = vpack.c.bf16 %v7021, %v7020
      %v7710 = vpack.c.bf16 %v7023, %v7022
      %v7711 = vpack.c.bf16 %v7025, %v7024
      %v7712 = vpack.c.bf16 %v7027, %v7026
      %v7713 = vpack.c.bf16 %v7029, %v7028
      %v7714 = vpack.c.bf16 %v7031, %v7030
      %v7715 = vpack.c.bf16 %v7033, %v7032
      %v7716 = vpack.c.bf16 %v7035, %v7034
      %v7717 = vpack.c.bf16 %v7037, %v7036
      %v7718 = vpack.c.bf16 %v7039, %v7038
      %v7719 = vpack.c.bf16 %v7041, %v7040
      %v7720 = vpack.c.bf16 %v7043, %v7042
      %v7721 = vpack.c.bf16 %v7045, %v7044
      %v7722 = vpack.c.bf16 %v7047, %v7046
      %v7723 = vpack.c.bf16 %v7049, %v7048
      %s7724 = scalar_lea.vmem %s3, 256
      %v7725 = vld [vmem:[%s7724] sm:$0xf]
      %v7726 = vld [vmem:[%s7724 + $0x4] sm:$0xf]
      %v7727 = vld [vmem:[%s7724 + $0x8] sm:$0xf]
      %v7728 = vld [vmem:[%s7724 + $0xc] sm:$0xf]
      %v7729 = vld [vmem:[%s7724 + $0x10] sm:$0xf]
      %v7730 = vld [vmem:[%s7724 + $0x14] sm:$0xf]
      %v7731 = vld [vmem:[%s7724 + $0x18] sm:$0xf]
      %v7732 = vld [vmem:[%s7724 + $0x1c] sm:$0xf]
      %v7733 = vld [vmem:[%s7724 + $0x20] sm:$0xf]
      %v7734 = vld [vmem:[%s7724 + $0x24] sm:$0xf]
      %v7735 = vld [vmem:[%s7724 + $0x28] sm:$0xf]
      %v7736 = vld [vmem:[%s7724 + $0x2c] sm:$0xf]
      %v7737 = vld [vmem:[%s7724 + $0x30] sm:$0xf]
      %v7738 = vld [vmem:[%s7724 + $0x34] sm:$0xf]
      %v7739 = vld [vmem:[%s7724 + $0x38] sm:$0xf]
      %v7740 = vld [vmem:[%s7724 + $0x3c] sm:$0xf]
      %v7757 = vunpack.c.l.b16 %v7725
      %v7758 = vunpack.c.l.b16 %v7726
      %v7759 = vunpack.c.l.b16 %v7727
      %v7760 = vunpack.c.l.b16 %v7728
      %v7761 = vunpack.c.l.b16 %v7729
      %v7762 = vunpack.c.l.b16 %v7730
      %v7763 = vunpack.c.l.b16 %v7731
      %v7764 = vunpack.c.l.b16 %v7732
      %v7765 = vunpack.c.l.b16 %v7733
      %v7766 = vunpack.c.l.b16 %v7734
      %v7767 = vunpack.c.l.b16 %v7735
      %v7768 = vunpack.c.l.b16 %v7736
      %v7769 = vunpack.c.l.b16 %v7737
      %v7770 = vunpack.c.l.b16 %v7738
      %v7771 = vunpack.c.l.b16 %v7739
      %v7772 = vunpack.c.l.b16 %v7740
      %v7773 = vpack.c.b16 %v7758, %v7757
      %v7774 = vpack.c.b16 %v7760, %v7759
      %v7775 = vpack.c.b16 %v7762, %v7761
      %v7776 = vpack.c.b16 %v7764, %v7763
      %v7777 = vpack.c.b16 %v7766, %v7765
      %v7778 = vpack.c.b16 %v7768, %v7767
      %v7779 = vpack.c.b16 %v7770, %v7769
      %v7780 = vpack.c.b16 %v7772, %v7771
      %7789 = vmatprep.subr.bf16.mxu0 0
      %7790 = vmatpush1.bf16.msra.mxu0 %v7780
      %7791 = vmatprep.subr.bf16.mxu0 0
      %7792 = vmatpush1.bf16.msra.mxu0 %v7779
      %7793 = vmatprep.subr.bf16.mxu0 0
      %7794 = vmatpush1.bf16.msra.mxu0 %v7778
      %7795 = vmatprep.subr.bf16.mxu0 0
      %7796 = vmatpush1.bf16.msra.mxu0 %v7777
      %7797 = vmatprep.subr.bf16.mxu0 0
      %7798 = vmatpush1.bf16.msra.mxu0 %v7776
      %7799 = vmatprep.subr.bf16.mxu0 0
      %7800 = vmatpush1.bf16.msra.mxu0 %v7775
      %7801 = vmatprep.subr.bf16.mxu0 0
      %7802 = vmatpush1.bf16.msra.mxu0 %v7774
      %7803 = vmatprep.subr.bf16.mxu0 0
      %7804 = vmatpush1.bf16.msra.mxu0 %v7773
      %7805 = vmatprep.subr.bf16.mxu0 0
      %7806 = vmatpush2.bf16.msra.mxu0 0
      %7807 = vmatprep.subr.bf16.mxu0 0
      %7808 = vmatpush2.bf16.msra.mxu0 0
      %7809 = vmatprep.subr.bf16.mxu0 0
      %7810 = vmatpush2.bf16.msra.mxu0 0
      %7811 = vmatprep.subr.bf16.mxu0 0
      %7812 = vmatpush2.bf16.msra.mxu0 0
      %7813 = vmatprep.subr.bf16.mxu0 0
      %7814 = vmatpush2.bf16.msra.mxu0 0
      %7815 = vmatprep.subr.bf16.mxu0 0
      %7816 = vmatpush2.bf16.msra.mxu0 0
      %7817 = vmatprep.subr.bf16.mxu0 0
      %7818 = vmatpush2.bf16.msra.mxu0 0
      %7819 = vmatprep.subr.bf16.mxu0 0
      %7820 = vmatpush2.bf16.msra.mxu0 0
      %7821 = vmatprep.mubr.bf16.mxu0 0
      %7822 = vmatmul.mubr.bf16.gmra.mxu0 %v7708
      %v7823 = vpop.f32.mrf.mxu0
      %v7824 = vadd.f32 0.0, %v7823
      %v7825 = vpop.f32.mrf.mxu0
      %v7826 = vpop.f32.mrf.mxu0
      %v7827 = vadd.f32 0.0, %v7826
      %v7828 = vpop.f32.mrf.mxu0
      %7829 = vmatprep.mubr.bf16.mxu0 0
      %7830 = vmatmul.mubr.bf16.gmra.mxu0 %v7709
      %v7831 = vpop.f32.mrf.mxu0
      %v7832 = vadd.f32 0.0, %v7831
      %v7833 = vpop.f32.mrf.mxu0
      %v7834 = vpop.f32.mrf.mxu0
      %v7835 = vadd.f32 0.0, %v7834
      %v7836 = vpop.f32.mrf.mxu0
      %7837 = vmatprep.mubr.bf16.mxu0 0
      %7838 = vmatmul.mubr.bf16.gmra.mxu0 %v7710
      %v7839 = vpop.f32.mrf.mxu0
      %v7840 = vadd.f32 0.0, %v7839
      %v7841 = vpop.f32.mrf.mxu0
      %v7842 = vpop.f32.mrf.mxu0
      %v7843 = vadd.f32 0.0, %v7842
      %v7844 = vpop.f32.mrf.mxu0
      %7845 = vmatprep.mubr.bf16.mxu0 0
      %7846 = vmatmul.mubr.bf16.gmra.mxu0 %v7711
      %v7847 = vpop.f32.mrf.mxu0
      %v7848 = vadd.f32 0.0, %v7847
      %v7849 = vpop.f32.mrf.mxu0
      %v7850 = vpop.f32.mrf.mxu0
      %v7851 = vadd.f32 0.0, %v7850
      %v7852 = vpop.f32.mrf.mxu0
      %7853 = vmatprep.mubr.bf16.mxu0 0
      %7854 = vmatmul.mubr.bf16.gmra.mxu0 %v7712
      %v7855 = vpop.f32.mrf.mxu0
      %v7856 = vadd.f32 0.0, %v7855
      %v7857 = vpop.f32.mrf.mxu0
      %v7858 = vpop.f32.mrf.mxu0
      %v7859 = vadd.f32 0.0, %v7858
      %v7860 = vpop.f32.mrf.mxu0
      %7861 = vmatprep.mubr.bf16.mxu0 0
      %7862 = vmatmul.mubr.bf16.gmra.mxu0 %v7713
      %v7863 = vpop.f32.mrf.mxu0
      %v7864 = vadd.f32 0.0, %v7863
      %v7865 = vpop.f32.mrf.mxu0
      %v7866 = vpop.f32.mrf.mxu0
      %v7867 = vadd.f32 0.0, %v7866
      %v7868 = vpop.f32.mrf.mxu0
      %7869 = vmatprep.mubr.bf16.mxu0 0
      %7870 = vmatmul.mubr.bf16.gmra.mxu0 %v7714
      %v7871 = vpop.f32.mrf.mxu0
      %v7872 = vadd.f32 0.0, %v7871
      %v7873 = vpop.f32.mrf.mxu0
      %v7874 = vpop.f32.mrf.mxu0
      %v7875 = vadd.f32 0.0, %v7874
      %v7876 = vpop.f32.mrf.mxu0
      %7877 = vmatprep.mubr.bf16.mxu0 0
      %7878 = vmatmul.mubr.bf16.gmra.mxu0 %v7715
      %v7879 = vpop.f32.mrf.mxu0
      %v7880 = vadd.f32 0.0, %v7879
      %v7881 = vpop.f32.mrf.mxu0
      %v7882 = vpop.f32.mrf.mxu0
      %v7883 = vadd.f32 0.0, %v7882
      %v7884 = vpop.f32.mrf.mxu0
      %7885 = vmatprep.mubr.bf16.mxu0 0
      %7886 = vmatmul.mubr.bf16.gmra.mxu0 %v7716
      %v7887 = vpop.f32.mrf.mxu0
      %v7888 = vadd.f32 0.0, %v7887
      %v7889 = vpop.f32.mrf.mxu0
      %v7890 = vpop.f32.mrf.mxu0
      %v7891 = vadd.f32 0.0, %v7890
      %v7892 = vpop.f32.mrf.mxu0
      %7893 = vmatprep.mubr.bf16.mxu0 0
      %7894 = vmatmul.mubr.bf16.gmra.mxu0 %v7717
      %v7895 = vpop.f32.mrf.mxu0
      %v7896 = vadd.f32 0.0, %v7895
      %v7897 = vpop.f32.mrf.mxu0
      %v7898 = vpop.f32.mrf.mxu0
      %v7899 = vadd.f32 0.0, %v7898
      %v7900 = vpop.f32.mrf.mxu0
      %7901 = vmatprep.mubr.bf16.mxu0 0
      %7902 = vmatmul.mubr.bf16.gmra.mxu0 %v7718
      %v7903 = vpop.f32.mrf.mxu0
      %v7904 = vadd.f32 0.0, %v7903
      %v7905 = vpop.f32.mrf.mxu0
      %v7906 = vpop.f32.mrf.mxu0
      %v7907 = vadd.f32 0.0, %v7906
      %v7908 = vpop.f32.mrf.mxu0
      %7909 = vmatprep.mubr.bf16.mxu0 0
      %7910 = vmatmul.mubr.bf16.gmra.mxu0 %v7719
      %v7911 = vpop.f32.mrf.mxu0
      %v7912 = vadd.f32 0.0, %v7911
      %v7913 = vpop.f32.mrf.mxu0
      %v7914 = vpop.f32.mrf.mxu0
      %v7915 = vadd.f32 0.0, %v7914
      %v7916 = vpop.f32.mrf.mxu0
      %7917 = vmatprep.mubr.bf16.mxu0 0
      %7918 = vmatmul.mubr.bf16.gmra.mxu0 %v7720
      %v7919 = vpop.f32.mrf.mxu0
      %v7920 = vadd.f32 0.0, %v7919
      %v7921 = vpop.f32.mrf.mxu0
      %v7922 = vpop.f32.mrf.mxu0
      %v7923 = vadd.f32 0.0, %v7922
      %v7924 = vpop.f32.mrf.mxu0
      %7925 = vmatprep.mubr.bf16.mxu0 0
      %7926 = vmatmul.mubr.bf16.gmra.mxu0 %v7721
      %v7927 = vpop.f32.mrf.mxu0
      %v7928 = vadd.f32 0.0, %v7927
      %v7929 = vpop.f32.mrf.mxu0
      %v7930 = vpop.f32.mrf.mxu0
      %v7931 = vadd.f32 0.0, %v7930
      %v7932 = vpop.f32.mrf.mxu0
      %7933 = vmatprep.mubr.bf16.mxu0 0
      %7934 = vmatmul.mubr.bf16.gmra.mxu0 %v7722
      %v7935 = vpop.f32.mrf.mxu0
      %v7936 = vadd.f32 0.0, %v7935
      %v7937 = vpop.f32.mrf.mxu0
      %v7938 = vpop.f32.mrf.mxu0
      %v7939 = vadd.f32 0.0, %v7938
      %v7940 = vpop.f32.mrf.mxu0
      %7941 = vmatprep.mubr.bf16.mxu0 0
      %7942 = vmatmul.mubr.bf16.gmra.mxu0 %v7723
      %v7943 = vpop.f32.mrf.mxu0
      %v7944 = vadd.f32 0.0, %v7943
      %v7945 = vpop.f32.mrf.mxu0
      %v7946 = vpop.f32.mrf.mxu0
      %v7947 = vadd.f32 0.0, %v7946
      %v7948 = vpop.f32.mrf.mxu0
      %7949 = vdwg.mxu0
      %v7950 = vadd.f32 %v7676, %v7824
      %v7951 = vadd.f32 %v7677, %v7827
      %v7952 = vadd.f32 %v7678, %v7832
      %v7953 = vadd.f32 %v7679, %v7835
      %v7954 = vadd.f32 %v7680, %v7840
      %v7955 = vadd.f32 %v7681, %v7843
      %v7956 = vadd.f32 %v7682, %v7848
      %v7957 = vadd.f32 %v7683, %v7851
      %v7958 = vadd.f32 %v7684, %v7856
      %v7959 = vadd.f32 %v7685, %v7859
      %v7960 = vadd.f32 %v7686, %v7864
      %v7961 = vadd.f32 %v7687, %v7867
      %v7962 = vadd.f32 %v7688, %v7872
      %v7963 = vadd.f32 %v7689, %v7875
      %v7964 = vadd.f32 %v7690, %v7880
      %v7965 = vadd.f32 %v7691, %v7883
      %v7966 = vadd.f32 %v7692, %v7888
      %v7967 = vadd.f32 %v7693, %v7891
      %v7968 = vadd.f32 %v7694, %v7896
      %v7969 = vadd.f32 %v7695, %v7899
      %v7970 = vadd.f32 %v7696, %v7904
      %v7971 = vadd.f32 %v7697, %v7907
      %v7972 = vadd.f32 %v7698, %v7912
      %v7973 = vadd.f32 %v7699, %v7915
      %v7974 = vadd.f32 %v7700, %v7920
      %v7975 = vadd.f32 %v7701, %v7923
      %v7976 = vadd.f32 %v7702, %v7928
      %v7977 = vadd.f32 %v7703, %v7931
      %v7978 = vadd.f32 %v7704, %v7936
      %v7979 = vadd.f32 %v7705, %v7939
      %v7980 = vadd.f32 %v7706, %v7944
      %v7981 = vadd.f32 %v7707, %v7947
      %7982 = vst [vmem:[#allocation3] sm:$0xff] %v7950
      %7983 = vst [vmem:[#allocation3 + $0x8] sm:$0xff] %v7951
      %7984 = vst [vmem:[#allocation3 + $0x10] sm:$0xff] %v7952
      %7985 = vst [vmem:[#allocation3 + $0x18] sm:$0xff] %v7953
      %7986 = vst [vmem:[#allocation3 + $0x20] sm:$0xff] %v7954
      %7987 = vst [vmem:[#allocation3 + $0x28] sm:$0xff] %v7955
      %7988 = vst [vmem:[#allocation3 + $0x30] sm:$0xff] %v7956
      %7989 = vst [vmem:[#allocation3 + $0x38] sm:$0xff] %v7957
      %7990 = vst [vmem:[#allocation3 + $0x40] sm:$0xff] %v7958
      %7991 = vst [vmem:[#allocation3 + $0x48] sm:$0xff] %v7959
      %7992 = vst [vmem:[#allocation3 + $0x50] sm:$0xff] %v7960
      %7993 = vst [vmem:[#allocation3 + $0x58] sm:$0xff] %v7961
      %7994 = vst [vmem:[#allocation3 + $0x60] sm:$0xff] %v7962
      %7995 = vst [vmem:[#allocation3 + $0x68] sm:$0xff] %v7963
      %7996 = vst [vmem:[#allocation3 + $0x70] sm:$0xff] %v7964
      %7997 = vst [vmem:[#allocation3 + $0x78] sm:$0xff] %v7965
      %7998 = vst [vmem:[#allocation3 + $0x80] sm:$0xff] %v7966
      %7999 = vst [vmem:[#allocation3 + $0x88] sm:$0xff] %v7967
      %8000 = vst [vmem:[#allocation3 + $0x90] sm:$0xff] %v7968
      %8001 = vst [vmem:[#allocation3 + $0x98] sm:$0xff] %v7969
      %8002 = vst [vmem:[#allocation3 + $0xa0] sm:$0xff] %v7970
      %8003 = vst [vmem:[#allocation3 + $0xa8] sm:$0xff] %v7971
      %8004 = vst [vmem:[#allocation3 + $0xb0] sm:$0xff] %v7972
      %8005 = vst [vmem:[#allocation3 + $0xb8] sm:$0xff] %v7973
      %8006 = vst [vmem:[#allocation3 + $0xc0] sm:$0xff] %v7974
      %8007 = vst [vmem:[#allocation3 + $0xc8] sm:$0xff] %v7975
      %8008 = vst [vmem:[#allocation3 + $0xd0] sm:$0xff] %v7976
      %8009 = vst [vmem:[#allocation3 + $0xd8] sm:$0xff] %v7977
      %8010 = vst [vmem:[#allocation3 + $0xe0] sm:$0xff] %v7978
      %8011 = vst [vmem:[#allocation3 + $0xe8] sm:$0xff] %v7979
      %8012 = vst [vmem:[#allocation3 + $0xf0] sm:$0xff] %v7980
      %8013 = vst [vmem:[#allocation3 + $0xf8] sm:$0xff] %v7981
      %v8014 = vrot.slane %v7018, 1
      %v8015 = vrot.slane %v7019, 1
      %v8016 = vrot.slane %v7020, 1
      %v8017 = vrot.slane %v7021, 1
      %v8018 = vrot.slane %v7022, 1
      %v8019 = vrot.slane %v7023, 1
      %v8020 = vrot.slane %v7024, 1
      %v8021 = vrot.slane %v7025, 1
      %v8022 = vrot.slane %v7026, 1
      %v8023 = vrot.slane %v7027, 1
      %v8024 = vrot.slane %v7028, 1
      %v8025 = vrot.slane %v7029, 1
      %v8026 = vrot.slane %v7030, 1
      %v8027 = vrot.slane %v7031, 1
      %v8028 = vrot.slane %v7032, 1
      %v8029 = vrot.slane %v7033, 1
      %v8030 = vrot.slane %v7034, 1
      %v8031 = vrot.slane %v7035, 1
      %v8032 = vrot.slane %v7036, 1
      %v8033 = vrot.slane %v7037, 1
      %v8034 = vrot.slane %v7038, 1
      %v8035 = vrot.slane %v7039, 1
      %v8036 = vrot.slane %v7040, 1
      %v8037 = vrot.slane %v7041, 1
      %v8038 = vrot.slane %v7042, 1
      %v8039 = vrot.slane %v7043, 1
      %v8040 = vrot.slane %v7044, 1
      %v8041 = vrot.slane %v7045, 1
      %v8042 = vrot.slane %v7046, 1
      %v8043 = vrot.slane %v7047, 1
      %v8044 = vrot.slane %v7048, 1
      %v8045 = vrot.slane %v7049, 1
      %v8046 = vsel %vm1422, %v8044, %v8045
      %v8047 = vsel %vm1422, %v8043, %v8044
      %v8048 = vsel %vm1422, %v8042, %v8043
      %v8049 = vsel %vm1422, %v8041, %v8042
      %v8050 = vsel %vm1422, %v8040, %v8041
      %v8051 = vsel %vm1422, %v8039, %v8040
      %v8052 = vsel %vm1422, %v8038, %v8039
      %v8053 = vsel %vm1422, %v8037, %v8038
      %v8054 = vsel %vm1422, %v8036, %v8037
      %v8055 = vsel %vm1422, %v8035, %v8036
      %v8056 = vsel %vm1422, %v8034, %v8035
      %v8057 = vsel %vm1422, %v8033, %v8034
      %v8058 = vsel %vm1422, %v8032, %v8033
      %v8059 = vsel %vm1422, %v8031, %v8032
      %v8060 = vsel %vm1422, %v8030, %v8031
      %v8061 = vsel %vm1422, %v8029, %v8030
      %v8062 = vsel %vm1422, %v8028, %v8029
      %v8063 = vsel %vm1422, %v8027, %v8028
      %v8064 = vsel %vm1422, %v8026, %v8027
      %v8065 = vsel %vm1422, %v8025, %v8026
      %v8066 = vsel %vm1422, %v8024, %v8025
      %v8067 = vsel %vm1422, %v8023, %v8024
      %v8068 = vsel %vm1422, %v8022, %v8023
      %v8069 = vsel %vm1422, %v8021, %v8022
      %v8070 = vsel %vm1422, %v8020, %v8021
      %v8071 = vsel %vm1422, %v8019, %v8020
      %v8072 = vsel %vm1422, %v8018, %v8019
      %v8073 = vsel %vm1422, %v8017, %v8018
      %v8074 = vsel %vm1422, %v8016, %v8017
      %v8075 = vsel %vm1422, %v8015, %v8016
      %v8076 = vsel %vm1422, %v8014, %v8015
      %v8077 = vsel %vm1422, %v8045, %v8014
      %v8078 = vld [vmem:[%s1455] sm:$0xff]
      %v8079 = vld [vmem:[%s1455 + $0x8] sm:$0xff]
      %v8080 = vld [vmem:[%s1455 + $0x10] sm:$0xff]
      %v8081 = vld [vmem:[%s1455 + $0x18] sm:$0xff]
      %v8082 = vld [vmem:[%s1455 + $0x20] sm:$0xff]
      %v8083 = vld [vmem:[%s1455 + $0x28] sm:$0xff]
      %v8084 = vld [vmem:[%s1455 + $0x30] sm:$0xff]
      %v8085 = vld [vmem:[%s1455 + $0x38] sm:$0xff]
      %v8086 = vld [vmem:[%s1455 + $0x40] sm:$0xff]
      %v8087 = vld [vmem:[%s1455 + $0x48] sm:$0xff]
      %v8088 = vld [vmem:[%s1455 + $0x50] sm:$0xff]
      %v8089 = vld [vmem:[%s1455 + $0x58] sm:$0xff]
      %v8090 = vld [vmem:[%s1455 + $0x60] sm:$0xff]
      %v8091 = vld [vmem:[%s1455 + $0x68] sm:$0xff]
      %v8092 = vld [vmem:[%s1455 + $0x70] sm:$0xff]
      %v8093 = vld [vmem:[%s1455 + $0x78] sm:$0xff]
      %v8094 = vld [vmem:[%s1455 + $0x80] sm:$0xff]
      %v8095 = vld [vmem:[%s1455 + $0x88] sm:$0xff]
      %v8096 = vld [vmem:[%s1455 + $0x90] sm:$0xff]
      %v8097 = vld [vmem:[%s1455 + $0x98] sm:$0xff]
      %v8098 = vld [vmem:[%s1455 + $0xa0] sm:$0xff]
      %v8099 = vld [vmem:[%s1455 + $0xa8] sm:$0xff]
      %v8100 = vld [vmem:[%s1455 + $0xb0] sm:$0xff]
      %v8101 = vld [vmem:[%s1455 + $0xb8] sm:$0xff]
      %v8102 = vld [vmem:[%s1455 + $0xc0] sm:$0xff]
      %v8103 = vld [vmem:[%s1455 + $0xc8] sm:$0xff]
      %v8104 = vld [vmem:[%s1455 + $0xd0] sm:$0xff]
      %v8105 = vld [vmem:[%s1455 + $0xd8] sm:$0xff]
      %v8106 = vld [vmem:[%s1455 + $0xe0] sm:$0xff]
      %v8107 = vld [vmem:[%s1455 + $0xe8] sm:$0xff]
      %v8108 = vld [vmem:[%s1455 + $0xf0] sm:$0xff]
      %v8109 = vld [vmem:[%s1455 + $0xf8] sm:$0xff]
      %8111 = vset.pattern.permute.xlu0 0
      %8112 = vperm.xlu0 %8111, %v8078
      %v8113 = vpop.permute.xlu0 %8112
      %8116 = vset.pattern.permute.xlu0 0
      %8117 = vperm.xlu0 %8116, %v8079
      %v8118 = vpop.permute.xlu0 %8117
      %8121 = vset.pattern.permute.xlu0 0
      %8122 = vperm.xlu0 %8121, %v8080
      %v8123 = vpop.permute.xlu0 %8122
      %8126 = vset.pattern.permute.xlu0 0
      %8127 = vperm.xlu0 %8126, %v8081
      %v8128 = vpop.permute.xlu0 %8127
      %8131 = vset.pattern.permute.xlu0 0
      %8132 = vperm.xlu0 %8131, %v8082
      %v8133 = vpop.permute.xlu0 %8132
      %8136 = vset.pattern.permute.xlu0 0
      %8137 = vperm.xlu0 %8136, %v8083
      %v8138 = vpop.permute.xlu0 %8137
      %8141 = vset.pattern.permute.xlu0 0
      %8142 = vperm.xlu0 %8141, %v8084
      %v8143 = vpop.permute.xlu0 %8142
      %8146 = vset.pattern.permute.xlu0 0
      %8147 = vperm.xlu0 %8146, %v8085
      %v8148 = vpop.permute.xlu0 %8147
      %8151 = vset.pattern.permute.xlu0 0
      %8152 = vperm.xlu0 %8151, %v8086
      %v8153 = vpop.permute.xlu0 %8152
      %8156 = vset.pattern.permute.xlu0 0
      %8157 = vperm.xlu0 %8156, %v8087
      %v8158 = vpop.permute.xlu0 %8157
      %8161 = vset.pattern.permute.xlu0 0
      %8162 = vperm.xlu0 %8161, %v8088
      %v8163 = vpop.permute.xlu0 %8162
      %8166 = vset.pattern.permute.xlu0 0
      %8167 = vperm.xlu0 %8166, %v8089
      %v8168 = vpop.permute.xlu0 %8167
      %8171 = vset.pattern.permute.xlu0 0
      %8172 = vperm.xlu0 %8171, %v8090
      %v8173 = vpop.permute.xlu0 %8172
      %8176 = vset.pattern.permute.xlu0 0
      %8177 = vperm.xlu0 %8176, %v8091
      %v8178 = vpop.permute.xlu0 %8177
      %8181 = vset.pattern.permute.xlu0 0
      %8182 = vperm.xlu0 %8181, %v8092
      %v8183 = vpop.permute.xlu0 %8182
      %8186 = vset.pattern.permute.xlu0 0
      %8187 = vperm.xlu0 %8186, %v8093
      %v8188 = vpop.permute.xlu0 %8187
      %8191 = vset.pattern.permute.xlu0 0
      %8192 = vperm.xlu0 %8191, %v8094
      %v8193 = vpop.permute.xlu0 %8192
      %8196 = vset.pattern.permute.xlu0 0
      %8197 = vperm.xlu0 %8196, %v8095
      %v8198 = vpop.permute.xlu0 %8197
      %8201 = vset.pattern.permute.xlu0 0
      %8202 = vperm.xlu0 %8201, %v8096
      %v8203 = vpop.permute.xlu0 %8202
      %8206 = vset.pattern.permute.xlu0 0
      %8207 = vperm.xlu0 %8206, %v8097
      %v8208 = vpop.permute.xlu0 %8207
      %8211 = vset.pattern.permute.xlu0 0
      %8212 = vperm.xlu0 %8211, %v8098
      %v8213 = vpop.permute.xlu0 %8212
      %8216 = vset.pattern.permute.xlu0 0
      %8217 = vperm.xlu0 %8216, %v8099
      %v8218 = vpop.permute.xlu0 %8217
      %8221 = vset.pattern.permute.xlu0 0
      %8222 = vperm.xlu0 %8221, %v8100
      %v8223 = vpop.permute.xlu0 %8222
      %8226 = vset.pattern.permute.xlu0 0
      %8227 = vperm.xlu0 %8226, %v8101
      %v8228 = vpop.permute.xlu0 %8227
      %8231 = vset.pattern.permute.xlu0 0
      %8232 = vperm.xlu0 %8231, %v8102
      %v8233 = vpop.permute.xlu0 %8232
      %8236 = vset.pattern.permute.xlu0 0
      %8237 = vperm.xlu0 %8236, %v8103
      %v8238 = vpop.permute.xlu0 %8237
      %8241 = vset.pattern.permute.xlu0 0
      %8242 = vperm.xlu0 %8241, %v8104
      %v8243 = vpop.permute.xlu0 %8242
      %8246 = vset.pattern.permute.xlu0 0
      %8247 = vperm.xlu0 %8246, %v8105
      %v8248 = vpop.permute.xlu0 %8247
      %8251 = vset.pattern.permute.xlu0 0
      %8252 = vperm.xlu0 %8251, %v8106
      %v8253 = vpop.permute.xlu0 %8252
      %8256 = vset.pattern.permute.xlu0 0
      %8257 = vperm.xlu0 %8256, %v8107
      %v8258 = vpop.permute.xlu0 %8257
      %8261 = vset.pattern.permute.xlu0 0
      %8262 = vperm.xlu0 %8261, %v8108
      %v8263 = vpop.permute.xlu0 %8262
      %8266 = vset.pattern.permute.xlu0 0
      %8267 = vperm.xlu0 %8266, %v8109
      %v8268 = vpop.permute.xlu0 %8267
      %v8270 = vmul.f32 %v8076, %v8113
      %v8271 = vmul.f32 %v8075, %v8118
      %v8272 = vmul.f32 %v8074, %v8123
      %v8273 = vmul.f32 %v8073, %v8128
      %v8274 = vmul.f32 %v8072, %v8133
      %v8275 = vmul.f32 %v8071, %v8138
      %v8276 = vmul.f32 %v8070, %v8143
      %v8277 = vmul.f32 %v8069, %v8148
      %v8278 = vmul.f32 %v8068, %v8153
      %v8279 = vmul.f32 %v8067, %v8158
      %v8280 = vmul.f32 %v8066, %v8163
      %v8281 = vmul.f32 %v8065, %v8168
      %v8282 = vmul.f32 %v8064, %v8173
      %v8283 = vmul.f32 %v8063, %v8178
      %v8284 = vmul.f32 %v8062, %v8183
      %v8285 = vmul.f32 %v8061, %v8188
      %v8286 = vmul.f32 %v8060, %v8193
      %v8287 = vmul.f32 %v8059, %v8198
      %v8288 = vmul.f32 %v8058, %v8203
      %v8289 = vmul.f32 %v8057, %v8208
      %v8290 = vmul.f32 %v8056, %v8213
      %v8291 = vmul.f32 %v8055, %v8218
      %v8292 = vmul.f32 %v8054, %v8223
      %v8293 = vmul.f32 %v8053, %v8228
      %v8294 = vmul.f32 %v8052, %v8233
      %v8295 = vmul.f32 %v8051, %v8238
      %v8296 = vmul.f32 %v8050, %v8243
      %v8297 = vmul.f32 %v8049, %v8248
      %v8298 = vmul.f32 %v8048, %v8253
      %v8299 = vmul.f32 %v8047, %v8258
      %v8300 = vmul.f32 %v8046, %v8263
      %v8301 = vmul.f32 %v8077, %v8268
      %v8302 = vld [vmem:[#allocation3] sm:$0xff]
      %v8303 = vld [vmem:[#allocation3 + $0x8] sm:$0xff]
      %v8304 = vld [vmem:[#allocation3 + $0x10] sm:$0xff]
      %v8305 = vld [vmem:[#allocation3 + $0x18] sm:$0xff]
      %v8306 = vld [vmem:[#allocation3 + $0x20] sm:$0xff]
      %v8307 = vld [vmem:[#allocation3 + $0x28] sm:$0xff]
      %v8308 = vld [vmem:[#allocation3 + $0x30] sm:$0xff]
      %v8309 = vld [vmem:[#allocation3 + $0x38] sm:$0xff]
      %v8310 = vld [vmem:[#allocation3 + $0x40] sm:$0xff]
      %v8311 = vld [vmem:[#allocation3 + $0x48] sm:$0xff]
      %v8312 = vld [vmem:[#allocation3 + $0x50] sm:$0xff]
      %v8313 = vld [vmem:[#allocation3 + $0x58] sm:$0xff]
      %v8314 = vld [vmem:[#allocation3 + $0x60] sm:$0xff]
      %v8315 = vld [vmem:[#allocation3 + $0x68] sm:$0xff]
      %v8316 = vld [vmem:[#allocation3 + $0x70] sm:$0xff]
      %v8317 = vld [vmem:[#allocation3 + $0x78] sm:$0xff]
      %v8318 = vld [vmem:[#allocation3 + $0x80] sm:$0xff]
      %v8319 = vld [vmem:[#allocation3 + $0x88] sm:$0xff]
      %v8320 = vld [vmem:[#allocation3 + $0x90] sm:$0xff]
      %v8321 = vld [vmem:[#allocation3 + $0x98] sm:$0xff]
      %v8322 = vld [vmem:[#allocation3 + $0xa0] sm:$0xff]
      %v8323 = vld [vmem:[#allocation3 + $0xa8] sm:$0xff]
      %v8324 = vld [vmem:[#allocation3 + $0xb0] sm:$0xff]
      %v8325 = vld [vmem:[#allocation3 + $0xb8] sm:$0xff]
      %v8326 = vld [vmem:[#allocation3 + $0xc0] sm:$0xff]
      %v8327 = vld [vmem:[#allocation3 + $0xc8] sm:$0xff]
      %v8328 = vld [vmem:[#allocation3 + $0xd0] sm:$0xff]
      %v8329 = vld [vmem:[#allocation3 + $0xd8] sm:$0xff]
      %v8330 = vld [vmem:[#allocation3 + $0xe0] sm:$0xff]
      %v8331 = vld [vmem:[#allocation3 + $0xe8] sm:$0xff]
      %v8332 = vld [vmem:[#allocation3 + $0xf0] sm:$0xff]
      %v8333 = vld [vmem:[#allocation3 + $0xf8] sm:$0xff]
      %v8334 = vpack.c.bf16 %v8271, %v8270
      %v8335 = vpack.c.bf16 %v8273, %v8272
      %v8336 = vpack.c.bf16 %v8275, %v8274
      %v8337 = vpack.c.bf16 %v8277, %v8276
      %v8338 = vpack.c.bf16 %v8279, %v8278
      %v8339 = vpack.c.bf16 %v8281, %v8280
      %v8340 = vpack.c.bf16 %v8283, %v8282
      %v8341 = vpack.c.bf16 %v8285, %v8284
      %v8342 = vpack.c.bf16 %v8287, %v8286
      %v8343 = vpack.c.bf16 %v8289, %v8288
      %v8344 = vpack.c.bf16 %v8291, %v8290
      %v8345 = vpack.c.bf16 %v8293, %v8292
      %v8346 = vpack.c.bf16 %v8295, %v8294
      %v8347 = vpack.c.bf16 %v8297, %v8296
      %v8348 = vpack.c.bf16 %v8299, %v8298
      %v8349 = vpack.c.bf16 %v8301, %v8300
      %s8350 = scalar_lea.vmem %s3, 320
      %v8351 = vld [vmem:[%s8350] sm:$0xf]
      %v8352 = vld [vmem:[%s8350 + $0x4] sm:$0xf]
      %v8353 = vld [vmem:[%s8350 + $0x8] sm:$0xf]
      %v8354 = vld [vmem:[%s8350 + $0xc] sm:$0xf]
      %v8355 = vld [vmem:[%s8350 + $0x10] sm:$0xf]
      %v8356 = vld [vmem:[%s8350 + $0x14] sm:$0xf]
      %v8357 = vld [vmem:[%s8350 + $0x18] sm:$0xf]
      %v8358 = vld [vmem:[%s8350 + $0x1c] sm:$0xf]
      %v8359 = vld [vmem:[%s8350 + $0x20] sm:$0xf]
      %v8360 = vld [vmem:[%s8350 + $0x24] sm:$0xf]
      %v8361 = vld [vmem:[%s8350 + $0x28] sm:$0xf]
      %v8362 = vld [vmem:[%s8350 + $0x2c] sm:$0xf]
      %v8363 = vld [vmem:[%s8350 + $0x30] sm:$0xf]
      %v8364 = vld [vmem:[%s8350 + $0x34] sm:$0xf]
      %v8365 = vld [vmem:[%s8350 + $0x38] sm:$0xf]
      %v8366 = vld [vmem:[%s8350 + $0x3c] sm:$0xf]
      %v8383 = vunpack.c.l.b16 %v8351
      %v8384 = vunpack.c.l.b16 %v8352
      %v8385 = vunpack.c.l.b16 %v8353
      %v8386 = vunpack.c.l.b16 %v8354
      %v8387 = vunpack.c.l.b16 %v8355
      %v8388 = vunpack.c.l.b16 %v8356
      %v8389 = vunpack.c.l.b16 %v8357
      %v8390 = vunpack.c.l.b16 %v8358
      %v8391 = vunpack.c.l.b16 %v8359
      %v8392 = vunpack.c.l.b16 %v8360
      %v8393 = vunpack.c.l.b16 %v8361
      %v8394 = vunpack.c.l.b16 %v8362
      %v8395 = vunpack.c.l.b16 %v8363
      %v8396 = vunpack.c.l.b16 %v8364
      %v8397 = vunpack.c.l.b16 %v8365
      %v8398 = vunpack.c.l.b16 %v8366
      %v8399 = vpack.c.b16 %v8384, %v8383
      %v8400 = vpack.c.b16 %v8386, %v8385
      %v8401 = vpack.c.b16 %v8388, %v8387
      %v8402 = vpack.c.b16 %v8390, %v8389
      %v8403 = vpack.c.b16 %v8392, %v8391
      %v8404 = vpack.c.b16 %v8394, %v8393
      %v8405 = vpack.c.b16 %v8396, %v8395
      %v8406 = vpack.c.b16 %v8398, %v8397
      %8415 = vmatprep.subr.bf16.mxu0 0
      %8416 = vmatpush1.bf16.msra.mxu0 %v8406
      %8417 = vmatprep.subr.bf16.mxu0 0
      %8418 = vmatpush1.bf16.msra.mxu0 %v8405
      %8419 = vmatprep.subr.bf16.mxu0 0
      %8420 = vmatpush1.bf16.msra.mxu0 %v8404
      %8421 = vmatprep.subr.bf16.mxu0 0
      %8422 = vmatpush1.bf16.msra.mxu0 %v8403
      %8423 = vmatprep.subr.bf16.mxu0 0
      %8424 = vmatpush1.bf16.msra.mxu0 %v8402
      %8425 = vmatprep.subr.bf16.mxu0 0
      %8426 = vmatpush1.bf16.msra.mxu0 %v8401
      %8427 = vmatprep.subr.bf16.mxu0 0
      %8428 = vmatpush1.bf16.msra.mxu0 %v8400
      %8429 = vmatprep.subr.bf16.mxu0 0
      %8430 = vmatpush1.bf16.msra.mxu0 %v8399
      %8431 = vmatprep.subr.bf16.mxu0 0
      %8432 = vmatpush2.bf16.msra.mxu0 0
      %8433 = vmatprep.subr.bf16.mxu0 0
      %8434 = vmatpush2.bf16.msra.mxu0 0
      %8435 = vmatprep.subr.bf16.mxu0 0
      %8436 = vmatpush2.bf16.msra.mxu0 0
      %8437 = vmatprep.subr.bf16.mxu0 0
      %8438 = vmatpush2.bf16.msra.mxu0 0
      %8439 = vmatprep.subr.bf16.mxu0 0
      %8440 = vmatpush2.bf16.msra.mxu0 0
      %8441 = vmatprep.subr.bf16.mxu0 0
      %8442 = vmatpush2.bf16.msra.mxu0 0
      %8443 = vmatprep.subr.bf16.mxu0 0
      %8444 = vmatpush2.bf16.msra.mxu0 0
      %8445 = vmatprep.subr.bf16.mxu0 0
      %8446 = vmatpush2.bf16.msra.mxu0 0
      %8447 = vmatprep.mubr.bf16.mxu0 0
      %8448 = vmatmul.mubr.bf16.gmra.mxu0 %v8334
      %v8449 = vpop.f32.mrf.mxu0
      %v8450 = vadd.f32 0.0, %v8449
      %v8451 = vpop.f32.mrf.mxu0
      %v8452 = vpop.f32.mrf.mxu0
      %v8453 = vadd.f32 0.0, %v8452
      %v8454 = vpop.f32.mrf.mxu0
      %8455 = vmatprep.mubr.bf16.mxu0 0
      %8456 = vmatmul.mubr.bf16.gmra.mxu0 %v8335
      %v8457 = vpop.f32.mrf.mxu0
      %v8458 = vadd.f32 0.0, %v8457
      %v8459 = vpop.f32.mrf.mxu0
      %v8460 = vpop.f32.mrf.mxu0
      %v8461 = vadd.f32 0.0, %v8460
      %v8462 = vpop.f32.mrf.mxu0
      %8463 = vmatprep.mubr.bf16.mxu0 0
      %8464 = vmatmul.mubr.bf16.gmra.mxu0 %v8336
      %v8465 = vpop.f32.mrf.mxu0
      %v8466 = vadd.f32 0.0, %v8465
      %v8467 = vpop.f32.mrf.mxu0
      %v8468 = vpop.f32.mrf.mxu0
      %v8469 = vadd.f32 0.0, %v8468
      %v8470 = vpop.f32.mrf.mxu0
      %8471 = vmatprep.mubr.bf16.mxu0 0
      %8472 = vmatmul.mubr.bf16.gmra.mxu0 %v8337
      %v8473 = vpop.f32.mrf.mxu0
      %v8474 = vadd.f32 0.0, %v8473
      %v8475 = vpop.f32.mrf.mxu0
      %v8476 = vpop.f32.mrf.mxu0
      %v8477 = vadd.f32 0.0, %v8476
      %v8478 = vpop.f32.mrf.mxu0
      %8479 = vmatprep.mubr.bf16.mxu0 0
      %8480 = vmatmul.mubr.bf16.gmra.mxu0 %v8338
      %v8481 = vpop.f32.mrf.mxu0
      %v8482 = vadd.f32 0.0, %v8481
      %v8483 = vpop.f32.mrf.mxu0
      %v8484 = vpop.f32.mrf.mxu0
      %v8485 = vadd.f32 0.0, %v8484
      %v8486 = vpop.f32.mrf.mxu0
      %8487 = vmatprep.mubr.bf16.mxu0 0
      %8488 = vmatmul.mubr.bf16.gmra.mxu0 %v8339
      %v8489 = vpop.f32.mrf.mxu0
      %v8490 = vadd.f32 0.0, %v8489
      %v8491 = vpop.f32.mrf.mxu0
      %v8492 = vpop.f32.mrf.mxu0
      %v8493 = vadd.f32 0.0, %v8492
      %v8494 = vpop.f32.mrf.mxu0
      %8495 = vmatprep.mubr.bf16.mxu0 0
      %8496 = vmatmul.mubr.bf16.gmra.mxu0 %v8340
      %v8497 = vpop.f32.mrf.mxu0
      %v8498 = vadd.f32 0.0, %v8497
      %v8499 = vpop.f32.mrf.mxu0
      %v8500 = vpop.f32.mrf.mxu0
      %v8501 = vadd.f32 0.0, %v8500
      %v8502 = vpop.f32.mrf.mxu0
      %8503 = vmatprep.mubr.bf16.mxu0 0
      %8504 = vmatmul.mubr.bf16.gmra.mxu0 %v8341
      %v8505 = vpop.f32.mrf.mxu0
      %v8506 = vadd.f32 0.0, %v8505
      %v8507 = vpop.f32.mrf.mxu0
      %v8508 = vpop.f32.mrf.mxu0
      %v8509 = vadd.f32 0.0, %v8508
      %v8510 = vpop.f32.mrf.mxu0
      %8511 = vmatprep.mubr.bf16.mxu0 0
      %8512 = vmatmul.mubr.bf16.gmra.mxu0 %v8342
      %v8513 = vpop.f32.mrf.mxu0
      %v8514 = vadd.f32 0.0, %v8513
      %v8515 = vpop.f32.mrf.mxu0
      %v8516 = vpop.f32.mrf.mxu0
      %v8517 = vadd.f32 0.0, %v8516
      %v8518 = vpop.f32.mrf.mxu0
      %8519 = vmatprep.mubr.bf16.mxu0 0
      %8520 = vmatmul.mubr.bf16.gmra.mxu0 %v8343
      %v8521 = vpop.f32.mrf.mxu0
      %v8522 = vadd.f32 0.0, %v8521
      %v8523 = vpop.f32.mrf.mxu0
      %v8524 = vpop.f32.mrf.mxu0
      %v8525 = vadd.f32 0.0, %v8524
      %v8526 = vpop.f32.mrf.mxu0
      %8527 = vmatprep.mubr.bf16.mxu0 0
      %8528 = vmatmul.mubr.bf16.gmra.mxu0 %v8344
      %v8529 = vpop.f32.mrf.mxu0
      %v8530 = vadd.f32 0.0, %v8529
      %v8531 = vpop.f32.mrf.mxu0
      %v8532 = vpop.f32.mrf.mxu0
      %v8533 = vadd.f32 0.0, %v8532
      %v8534 = vpop.f32.mrf.mxu0
      %8535 = vmatprep.mubr.bf16.mxu0 0
      %8536 = vmatmul.mubr.bf16.gmra.mxu0 %v8345
      %v8537 = vpop.f32.mrf.mxu0
      %v8538 = vadd.f32 0.0, %v8537
      %v8539 = vpop.f32.mrf.mxu0
      %v8540 = vpop.f32.mrf.mxu0
      %v8541 = vadd.f32 0.0, %v8540
      %v8542 = vpop.f32.mrf.mxu0
      %8543 = vmatprep.mubr.bf16.mxu0 0
      %8544 = vmatmul.mubr.bf16.gmra.mxu0 %v8346
      %v8545 = vpop.f32.mrf.mxu0
      %v8546 = vadd.f32 0.0, %v8545
      %v8547 = vpop.f32.mrf.mxu0
      %v8548 = vpop.f32.mrf.mxu0
      %v8549 = vadd.f32 0.0, %v8548
      %v8550 = vpop.f32.mrf.mxu0
      %8551 = vmatprep.mubr.bf16.mxu0 0
      %8552 = vmatmul.mubr.bf16.gmra.mxu0 %v8347
      %v8553 = vpop.f32.mrf.mxu0
      %v8554 = vadd.f32 0.0, %v8553
      %v8555 = vpop.f32.mrf.mxu0
      %v8556 = vpop.f32.mrf.mxu0
      %v8557 = vadd.f32 0.0, %v8556
      %v8558 = vpop.f32.mrf.mxu0
      %8559 = vmatprep.mubr.bf16.mxu0 0
      %8560 = vmatmul.mubr.bf16.gmra.mxu0 %v8348
      %v8561 = vpop.f32.mrf.mxu0
      %v8562 = vadd.f32 0.0, %v8561
      %v8563 = vpop.f32.mrf.mxu0
      %v8564 = vpop.f32.mrf.mxu0
      %v8565 = vadd.f32 0.0, %v8564
      %v8566 = vpop.f32.mrf.mxu0
      %8567 = vmatprep.mubr.bf16.mxu0 0
      %8568 = vmatmul.mubr.bf16.gmra.mxu0 %v8349
      %v8569 = vpop.f32.mrf.mxu0
      %v8570 = vadd.f32 0.0, %v8569
      %v8571 = vpop.f32.mrf.mxu0
      %v8572 = vpop.f32.mrf.mxu0
      %v8573 = vadd.f32 0.0, %v8572
      %v8574 = vpop.f32.mrf.mxu0
      %8575 = vdwg.mxu0
      %v8576 = vadd.f32 %v8302, %v8450
      %v8577 = vadd.f32 %v8303, %v8453
      %v8578 = vadd.f32 %v8304, %v8458
      %v8579 = vadd.f32 %v8305, %v8461
      %v8580 = vadd.f32 %v8306, %v8466
      %v8581 = vadd.f32 %v8307, %v8469
      %v8582 = vadd.f32 %v8308, %v8474
      %v8583 = vadd.f32 %v8309, %v8477
      %v8584 = vadd.f32 %v8310, %v8482
      %v8585 = vadd.f32 %v8311, %v8485
      %v8586 = vadd.f32 %v8312, %v8490
      %v8587 = vadd.f32 %v8313, %v8493
      %v8588 = vadd.f32 %v8314, %v8498
      %v8589 = vadd.f32 %v8315, %v8501
      %v8590 = vadd.f32 %v8316, %v8506
      %v8591 = vadd.f32 %v8317, %v8509
      %v8592 = vadd.f32 %v8318, %v8514
      %v8593 = vadd.f32 %v8319, %v8517
      %v8594 = vadd.f32 %v8320, %v8522
      %v8595 = vadd.f32 %v8321, %v8525
      %v8596 = vadd.f32 %v8322, %v8530
      %v8597 = vadd.f32 %v8323, %v8533
      %v8598 = vadd.f32 %v8324, %v8538
      %v8599 = vadd.f32 %v8325, %v8541
      %v8600 = vadd.f32 %v8326, %v8546
      %v8601 = vadd.f32 %v8327, %v8549
      %v8602 = vadd.f32 %v8328, %v8554
      %v8603 = vadd.f32 %v8329, %v8557
      %v8604 = vadd.f32 %v8330, %v8562
      %v8605 = vadd.f32 %v8331, %v8565
      %v8606 = vadd.f32 %v8332, %v8570
      %v8607 = vadd.f32 %v8333, %v8573
      %8608 = vst [vmem:[#allocation3] sm:$0xff] %v8576
      %8609 = vst [vmem:[#allocation3 + $0x8] sm:$0xff] %v8577
      %8610 = vst [vmem:[#allocation3 + $0x10] sm:$0xff] %v8578
      %8611 = vst [vmem:[#allocation3 + $0x18] sm:$0xff] %v8579
      %8612 = vst [vmem:[#allocation3 + $0x20] sm:$0xff] %v8580
      %8613 = vst [vmem:[#allocation3 + $0x28] sm:$0xff] %v8581
      %8614 = vst [vmem:[#allocation3 + $0x30] sm:$0xff] %v8582
      %8615 = vst [vmem:[#allocation3 + $0x38] sm:$0xff] %v8583
      %8616 = vst [vmem:[#allocation3 + $0x40] sm:$0xff] %v8584
      %8617 = vst [vmem:[#allocation3 + $0x48] sm:$0xff] %v8585
      %8618 = vst [vmem:[#allocation3 + $0x50] sm:$0xff] %v8586
      %8619 = vst [vmem:[#allocation3 + $0x58] sm:$0xff] %v8587
      %8620 = vst [vmem:[#allocation3 + $0x60] sm:$0xff] %v8588
      %8621 = vst [vmem:[#allocation3 + $0x68] sm:$0xff] %v8589
      %8622 = vst [vmem:[#allocation3 + $0x70] sm:$0xff] %v8590
      %8623 = vst [vmem:[#allocation3 + $0x78] sm:$0xff] %v8591
      %8624 = vst [vmem:[#allocation3 + $0x80] sm:$0xff] %v8592
      %8625 = vst [vmem:[#allocation3 + $0x88] sm:$0xff] %v8593
      %8626 = vst [vmem:[#allocation3 + $0x90] sm:$0xff] %v8594
      %8627 = vst [vmem:[#allocation3 + $0x98] sm:$0xff] %v8595
      %8628 = vst [vmem:[#allocation3 + $0xa0] sm:$0xff] %v8596
      %8629 = vst [vmem:[#allocation3 + $0xa8] sm:$0xff] %v8597
      %8630 = vst [vmem:[#allocation3 + $0xb0] sm:$0xff] %v8598
      %8631 = vst [vmem:[#allocation3 + $0xb8] sm:$0xff] %v8599
      %8632 = vst [vmem:[#allocation3 + $0xc0] sm:$0xff] %v8600
      %8633 = vst [vmem:[#allocation3 + $0xc8] sm:$0xff] %v8601
      %8634 = vst [vmem:[#allocation3 + $0xd0] sm:$0xff] %v8602
      %8635 = vst [vmem:[#allocation3 + $0xd8] sm:$0xff] %v8603
      %8636 = vst [vmem:[#allocation3 + $0xe0] sm:$0xff] %v8604
      %8637 = vst [vmem:[#allocation3 + $0xe8] sm:$0xff] %v8605
      %8638 = vst [vmem:[#allocation3 + $0xf0] sm:$0xff] %v8606
      %8639 = vst [vmem:[#allocation3 + $0xf8] sm:$0xff] %v8607
      %v8640 = vld [vmem:[#allocation2 + $0x20] sm:$0xff]
      %v8641 = vld [vmem:[#allocation2 + $0x28] sm:$0xff]
      %v8642 = vld [vmem:[#allocation2 + $0x30] sm:$0xff]
      %v8643 = vld [vmem:[#allocation2 + $0x38] sm:$0xff]
      %v8644 = vld [vmem:[#allocation2 + $0x40] sm:$0xff]
      %v8645 = vld [vmem:[#allocation2 + $0x48] sm:$0xff]
      %v8646 = vld [vmem:[#allocation2 + $0x50] sm:$0xff]
      %v8647 = vld [vmem:[#allocation2 + $0x58] sm:$0xff]
      %v8648 = vld [vmem:[#allocation2 + $0x60] sm:$0xff]
      %v8649 = vld [vmem:[#allocation2 + $0x68] sm:$0xff]
      %v8650 = vld [vmem:[#allocation2 + $0x70] sm:$0xff]
      %v8651 = vld [vmem:[#allocation2 + $0x78] sm:$0xff]
      %v8652 = vld [vmem:[#allocation2 + $0x80] sm:$0xff]
      %v8653 = vld [vmem:[#allocation2 + $0x88] sm:$0xff]
      %v8654 = vld [vmem:[#allocation2 + $0x90] sm:$0xff]
      %v8655 = vld [vmem:[#allocation2 + $0x98] sm:$0xff]
      %v8656 = vld [vmem:[#allocation2 + $0xa0] sm:$0xff]
      %v8657 = vld [vmem:[#allocation2 + $0xa8] sm:$0xff]
      %v8658 = vld [vmem:[#allocation2 + $0xb0] sm:$0xff]
      %v8659 = vld [vmem:[#allocation2 + $0xb8] sm:$0xff]
      %v8660 = vld [vmem:[#allocation2 + $0xc0] sm:$0xff]
      %v8661 = vld [vmem:[#allocation2 + $0xc8] sm:$0xff]
      %v8662 = vld [vmem:[#allocation2 + $0xd0] sm:$0xff]
      %v8663 = vld [vmem:[#allocation2 + $0xd8] sm:$0xff]
      %v8664 = vld [vmem:[#allocation2 + $0xe0] sm:$0xff]
      %v8665 = vld [vmem:[#allocation2 + $0xe8] sm:$0xff]
      %v8666 = vld [vmem:[#allocation2 + $0xf0] sm:$0xff]
      %v8667 = vld [vmem:[#allocation2 + $0xf8] sm:$0xff]
      %v8668 = vld [vmem:[#allocation2 + $0x100] sm:$0xff]
      %v8669 = vld [vmem:[#allocation2 + $0x108] sm:$0xff]
      %v8670 = vld [vmem:[#allocation2 + $0x110] sm:$0xff]
      %v8671 = vld [vmem:[#allocation2 + $0x118] sm:$0xff]
      %v8672 = vrot.slane %v8640, 7
      %v8673 = vrot.slane %v8641, 7
      %v8674 = vrot.slane %v8642, 7
      %v8675 = vrot.slane %v8643, 7
      %v8676 = vrot.slane %v8644, 7
      %v8677 = vrot.slane %v8645, 7
      %v8678 = vrot.slane %v8646, 7
      %v8679 = vrot.slane %v8647, 7
      %v8680 = vrot.slane %v8648, 7
      %v8681 = vrot.slane %v8649, 7
      %v8682 = vrot.slane %v8650, 7
      %v8683 = vrot.slane %v8651, 7
      %v8684 = vrot.slane %v8652, 7
      %v8685 = vrot.slane %v8653, 7
      %v8686 = vrot.slane %v8654, 7
      %v8687 = vrot.slane %v8655, 7
      %v8688 = vrot.slane %v8656, 7
      %v8689 = vrot.slane %v8657, 7
      %v8690 = vrot.slane %v8658, 7
      %v8691 = vrot.slane %v8659, 7
      %v8692 = vrot.slane %v8660, 7
      %v8693 = vrot.slane %v8661, 7
      %v8694 = vrot.slane %v8662, 7
      %v8695 = vrot.slane %v8663, 7
      %v8696 = vrot.slane %v8664, 7
      %v8697 = vrot.slane %v8665, 7
      %v8698 = vrot.slane %v8666, 7
      %v8699 = vrot.slane %v8667, 7
      %v8700 = vrot.slane %v8668, 7
      %v8701 = vrot.slane %v8669, 7
      %v8702 = vrot.slane %v8670, 7
      %v8703 = vrot.slane %v8671, 7
      %v8704 = vsel %vm458, %v8702, %v8703
      %v8705 = vsel %vm458, %v8701, %v8702
      %v8706 = vsel %vm458, %v8700, %v8701
      %v8707 = vsel %vm458, %v8699, %v8700
      %v8708 = vsel %vm458, %v8698, %v8699
      %v8709 = vsel %vm458, %v8697, %v8698
      %v8710 = vsel %vm458, %v8696, %v8697
      %v8711 = vsel %vm458, %v8695, %v8696
      %v8712 = vsel %vm458, %v8694, %v8695
      %v8713 = vsel %vm458, %v8693, %v8694
      %v8714 = vsel %vm458, %v8692, %v8693
      %v8715 = vsel %vm458, %v8691, %v8692
      %v8716 = vsel %vm458, %v8690, %v8691
      %v8717 = vsel %vm458, %v8689, %v8690
      %v8718 = vsel %vm458, %v8688, %v8689
      %v8719 = vsel %vm458, %v8687, %v8688
      %v8720 = vsel %vm458, %v8686, %v8687
      %v8721 = vsel %vm458, %v8685, %v8686
      %v8722 = vsel %vm458, %v8684, %v8685
      %v8723 = vsel %vm458, %v8683, %v8684
      %v8724 = vsel %vm458, %v8682, %v8683
      %v8725 = vsel %vm458, %v8681, %v8682
      %v8726 = vsel %vm458, %v8680, %v8681
      %v8727 = vsel %vm458, %v8679, %v8680
      %v8728 = vsel %vm458, %v8678, %v8679
      %v8729 = vsel %vm458, %v8677, %v8678
      %v8730 = vsel %vm458, %v8676, %v8677
      %v8731 = vsel %vm458, %v8675, %v8676
      %v8732 = vsel %vm458, %v8674, %v8675
      %v8733 = vsel %vm458, %v8673, %v8674
      %v8734 = vsel %vm458, %v8672, %v8673
      %v8735 = vsel %vm458, %v8703, %v8672
      %v8736 = vld [vmem:[%s5] sm:$0xff]
      %v8737 = vld [vmem:[%s5 + $0x8] sm:$0xff]
      %v8738 = vld [vmem:[%s5 + $0x10] sm:$0xff]
      %v8739 = vld [vmem:[%s5 + $0x18] sm:$0xff]
      %v8740 = vld [vmem:[%s5 + $0x20] sm:$0xff]
      %v8741 = vld [vmem:[%s5 + $0x28] sm:$0xff]
      %v8742 = vld [vmem:[%s5 + $0x30] sm:$0xff]
      %v8743 = vld [vmem:[%s5 + $0x38] sm:$0xff]
      %v8744 = vld [vmem:[%s5 + $0x40] sm:$0xff]
      %v8745 = vld [vmem:[%s5 + $0x48] sm:$0xff]
      %v8746 = vld [vmem:[%s5 + $0x50] sm:$0xff]
      %v8747 = vld [vmem:[%s5 + $0x58] sm:$0xff]
      %v8748 = vld [vmem:[%s5 + $0x60] sm:$0xff]
      %v8749 = vld [vmem:[%s5 + $0x68] sm:$0xff]
      %v8750 = vld [vmem:[%s5 + $0x70] sm:$0xff]
      %v8751 = vld [vmem:[%s5 + $0x78] sm:$0xff]
      %v8752 = vld [vmem:[%s5 + $0x80] sm:$0xff]
      %v8753 = vld [vmem:[%s5 + $0x88] sm:$0xff]
      %v8754 = vld [vmem:[%s5 + $0x90] sm:$0xff]
      %v8755 = vld [vmem:[%s5 + $0x98] sm:$0xff]
      %v8756 = vld [vmem:[%s5 + $0xa0] sm:$0xff]
      %v8757 = vld [vmem:[%s5 + $0xa8] sm:$0xff]
      %v8758 = vld [vmem:[%s5 + $0xb0] sm:$0xff]
      %v8759 = vld [vmem:[%s5 + $0xb8] sm:$0xff]
      %v8760 = vld [vmem:[%s5 + $0xc0] sm:$0xff]
      %v8761 = vld [vmem:[%s5 + $0xc8] sm:$0xff]
      %v8762 = vld [vmem:[%s5 + $0xd0] sm:$0xff]
      %v8763 = vld [vmem:[%s5 + $0xd8] sm:$0xff]
      %v8764 = vld [vmem:[%s5 + $0xe0] sm:$0xff]
      %v8765 = vld [vmem:[%s5 + $0xe8] sm:$0xff]
      %v8766 = vld [vmem:[%s5 + $0xf0] sm:$0xff]
      %v8767 = vld [vmem:[%s5 + $0xf8] sm:$0xff]
      %8769 = vset.pattern.permute.xlu0 0
      %8770 = vperm.xlu0 %8769, %v8736
      %v8771 = vpop.permute.xlu0 %8770
      %8774 = vset.pattern.permute.xlu0 0
      %8775 = vperm.xlu0 %8774, %v8737
      %v8776 = vpop.permute.xlu0 %8775
      %8779 = vset.pattern.permute.xlu0 0
      %8780 = vperm.xlu0 %8779, %v8738
      %v8781 = vpop.permute.xlu0 %8780
      %8784 = vset.pattern.permute.xlu0 0
      %8785 = vperm.xlu0 %8784, %v8739
      %v8786 = vpop.permute.xlu0 %8785
      %8789 = vset.pattern.permute.xlu0 0
      %8790 = vperm.xlu0 %8789, %v8740
      %v8791 = vpop.permute.xlu0 %8790
      %8794 = vset.pattern.permute.xlu0 0
      %8795 = vperm.xlu0 %8794, %v8741
      %v8796 = vpop.permute.xlu0 %8795
      %8799 = vset.pattern.permute.xlu0 0
      %8800 = vperm.xlu0 %8799, %v8742
      %v8801 = vpop.permute.xlu0 %8800
      %8804 = vset.pattern.permute.xlu0 0
      %8805 = vperm.xlu0 %8804, %v8743
      %v8806 = vpop.permute.xlu0 %8805
      %8809 = vset.pattern.permute.xlu0 0
      %8810 = vperm.xlu0 %8809, %v8744
      %v8811 = vpop.permute.xlu0 %8810
      %8814 = vset.pattern.permute.xlu0 0
      %8815 = vperm.xlu0 %8814, %v8745
      %v8816 = vpop.permute.xlu0 %8815
      %8819 = vset.pattern.permute.xlu0 0
      %8820 = vperm.xlu0 %8819, %v8746
      %v8821 = vpop.permute.xlu0 %8820
      %8824 = vset.pattern.permute.xlu0 0
      %8825 = vperm.xlu0 %8824, %v8747
      %v8826 = vpop.permute.xlu0 %8825
      %8829 = vset.pattern.permute.xlu0 0
      %8830 = vperm.xlu0 %8829, %v8748
      %v8831 = vpop.permute.xlu0 %8830
      %8834 = vset.pattern.permute.xlu0 0
      %8835 = vperm.xlu0 %8834, %v8749
      %v8836 = vpop.permute.xlu0 %8835
      %8839 = vset.pattern.permute.xlu0 0
      %8840 = vperm.xlu0 %8839, %v8750
      %v8841 = vpop.permute.xlu0 %8840
      %8844 = vset.pattern.permute.xlu0 0
      %8845 = vperm.xlu0 %8844, %v8751
      %v8846 = vpop.permute.xlu0 %8845
      %8849 = vset.pattern.permute.xlu0 0
      %8850 = vperm.xlu0 %8849, %v8752
      %v8851 = vpop.permute.xlu0 %8850
      %8854 = vset.pattern.permute.xlu0 0
      %8855 = vperm.xlu0 %8854, %v8753
      %v8856 = vpop.permute.xlu0 %8855
      %8859 = vset.pattern.permute.xlu0 0
      %8860 = vperm.xlu0 %8859, %v8754
      %v8861 = vpop.permute.xlu0 %8860
      %8864 = vset.pattern.permute.xlu0 0
      %8865 = vperm.xlu0 %8864, %v8755
      %v8866 = vpop.permute.xlu0 %8865
      %8869 = vset.pattern.permute.xlu0 0
      %8870 = vperm.xlu0 %8869, %v8756
      %v8871 = vpop.permute.xlu0 %8870
      %8874 = vset.pattern.permute.xlu0 0
      %8875 = vperm.xlu0 %8874, %v8757
      %v8876 = vpop.permute.xlu0 %8875
      %8879 = vset.pattern.permute.xlu0 0
      %8880 = vperm.xlu0 %8879, %v8758
      %v8881 = vpop.permute.xlu0 %8880
      %8884 = vset.pattern.permute.xlu0 0
      %8885 = vperm.xlu0 %8884, %v8759
      %v8886 = vpop.permute.xlu0 %8885
      %8889 = vset.pattern.permute.xlu0 0
      %8890 = vperm.xlu0 %8889, %v8760
      %v8891 = vpop.permute.xlu0 %8890
      %8894 = vset.pattern.permute.xlu0 0
      %8895 = vperm.xlu0 %8894, %v8761
      %v8896 = vpop.permute.xlu0 %8895
      %8899 = vset.pattern.permute.xlu0 0
      %8900 = vperm.xlu0 %8899, %v8762
      %v8901 = vpop.permute.xlu0 %8900
      %8904 = vset.pattern.permute.xlu0 0
      %8905 = vperm.xlu0 %8904, %v8763
      %v8906 = vpop.permute.xlu0 %8905
      %8909 = vset.pattern.permute.xlu0 0
      %8910 = vperm.xlu0 %8909, %v8764
      %v8911 = vpop.permute.xlu0 %8910
      %8914 = vset.pattern.permute.xlu0 0
      %8915 = vperm.xlu0 %8914, %v8765
      %v8916 = vpop.permute.xlu0 %8915
      %8919 = vset.pattern.permute.xlu0 0
      %8920 = vperm.xlu0 %8919, %v8766
      %v8921 = vpop.permute.xlu0 %8920
      %8924 = vset.pattern.permute.xlu0 0
      %8925 = vperm.xlu0 %8924, %v8767
      %v8926 = vpop.permute.xlu0 %8925
      %v8928 = vmul.f32 %v8735, %v8771
      %v8929 = vmul.f32 %v8734, %v8776
      %v8930 = vmul.f32 %v8733, %v8781
      %v8931 = vmul.f32 %v8732, %v8786
      %v8932 = vmul.f32 %v8731, %v8791
      %v8933 = vmul.f32 %v8730, %v8796
      %v8934 = vmul.f32 %v8729, %v8801
      %v8935 = vmul.f32 %v8728, %v8806
      %v8936 = vmul.f32 %v8727, %v8811
      %v8937 = vmul.f32 %v8726, %v8816
      %v8938 = vmul.f32 %v8725, %v8821
      %v8939 = vmul.f32 %v8724, %v8826
      %v8940 = vmul.f32 %v8723, %v8831
      %v8941 = vmul.f32 %v8722, %v8836
      %v8942 = vmul.f32 %v8721, %v8841
      %v8943 = vmul.f32 %v8720, %v8846
      %v8944 = vmul.f32 %v8719, %v8851
      %v8945 = vmul.f32 %v8718, %v8856
      %v8946 = vmul.f32 %v8717, %v8861
      %v8947 = vmul.f32 %v8716, %v8866
      %v8948 = vmul.f32 %v8715, %v8871
      %v8949 = vmul.f32 %v8714, %v8876
      %v8950 = vmul.f32 %v8713, %v8881
      %v8951 = vmul.f32 %v8712, %v8886
      %v8952 = vmul.f32 %v8711, %v8891
      %v8953 = vmul.f32 %v8710, %v8896
      %v8954 = vmul.f32 %v8709, %v8901
      %v8955 = vmul.f32 %v8708, %v8906
      %v8956 = vmul.f32 %v8707, %v8911
      %v8957 = vmul.f32 %v8706, %v8916
      %v8958 = vmul.f32 %v8705, %v8921
      %v8959 = vmul.f32 %v8704, %v8926
      %v8960 = vld [vmem:[#allocation3] sm:$0xff]
      %v8961 = vld [vmem:[#allocation3 + $0x8] sm:$0xff]
      %v8962 = vld [vmem:[#allocation3 + $0x10] sm:$0xff]
      %v8963 = vld [vmem:[#allocation3 + $0x18] sm:$0xff]
      %v8964 = vld [vmem:[#allocation3 + $0x20] sm:$0xff]
      %v8965 = vld [vmem:[#allocation3 + $0x28] sm:$0xff]
      %v8966 = vld [vmem:[#allocation3 + $0x30] sm:$0xff]
      %v8967 = vld [vmem:[#allocation3 + $0x38] sm:$0xff]
      %v8968 = vld [vmem:[#allocation3 + $0x40] sm:$0xff]
      %v8969 = vld [vmem:[#allocation3 + $0x48] sm:$0xff]
      %v8970 = vld [vmem:[#allocation3 + $0x50] sm:$0xff]
      %v8971 = vld [vmem:[#allocation3 + $0x58] sm:$0xff]
      %v8972 = vld [vmem:[#allocation3 + $0x60] sm:$0xff]
      %v8973 = vld [vmem:[#allocation3 + $0x68] sm:$0xff]
      %v8974 = vld [vmem:[#allocation3 + $0x70] sm:$0xff]
      %v8975 = vld [vmem:[#allocation3 + $0x78] sm:$0xff]
      %v8976 = vld [vmem:[#allocation3 + $0x80] sm:$0xff]
      %v8977 = vld [vmem:[#allocation3 + $0x88] sm:$0xff]
      %v8978 = vld [vmem:[#allocation3 + $0x90] sm:$0xff]
      %v8979 = vld [vmem:[#allocation3 + $0x98] sm:$0xff]
      %v8980 = vld [vmem:[#allocation3 + $0xa0] sm:$0xff]
      %v8981 = vld [vmem:[#allocation3 + $0xa8] sm:$0xff]
      %v8982 = vld [vmem:[#allocation3 + $0xb0] sm:$0xff]
      %v8983 = vld [vmem:[#allocation3 + $0xb8] sm:$0xff]
      %v8984 = vld [vmem:[#allocation3 + $0xc0] sm:$0xff]
      %v8985 = vld [vmem:[#allocation3 + $0xc8] sm:$0xff]
      %v8986 = vld [vmem:[#allocation3 + $0xd0] sm:$0xff]
      %v8987 = vld [vmem:[#allocation3 + $0xd8] sm:$0xff]
      %v8988 = vld [vmem:[#allocation3 + $0xe0] sm:$0xff]
      %v8989 = vld [vmem:[#allocation3 + $0xe8] sm:$0xff]
      %v8990 = vld [vmem:[#allocation3 + $0xf0] sm:$0xff]
      %v8991 = vld [vmem:[#allocation3 + $0xf8] sm:$0xff]
      %v8992 = vpack.c.bf16 %v8929, %v8928
      %v8993 = vpack.c.bf16 %v8931, %v8930
      %v8994 = vpack.c.bf16 %v8933, %v8932
      %v8995 = vpack.c.bf16 %v8935, %v8934
      %v8996 = vpack.c.bf16 %v8937, %v8936
      %v8997 = vpack.c.bf16 %v8939, %v8938
      %v8998 = vpack.c.bf16 %v8941, %v8940
      %v8999 = vpack.c.bf16 %v8943, %v8942
      %v9000 = vpack.c.bf16 %v8945, %v8944
      %v9001 = vpack.c.bf16 %v8947, %v8946
      %v9002 = vpack.c.bf16 %v8949, %v8948
      %v9003 = vpack.c.bf16 %v8951, %v8950
      %v9004 = vpack.c.bf16 %v8953, %v8952
      %v9005 = vpack.c.bf16 %v8955, %v8954
      %v9006 = vpack.c.bf16 %v8957, %v8956
      %v9007 = vpack.c.bf16 %v8959, %v8958
      %s9008 = scalar_lea.vmem %s3, 384
      %v9009 = vld [vmem:[%s9008] sm:$0xf]
      %v9010 = vld [vmem:[%s9008 + $0x4] sm:$0xf]
      %v9011 = vld [vmem:[%s9008 + $0x8] sm:$0xf]
      %v9012 = vld [vmem:[%s9008 + $0xc] sm:$0xf]
      %v9013 = vld [vmem:[%s9008 + $0x10] sm:$0xf]
      %v9014 = vld [vmem:[%s9008 + $0x14] sm:$0xf]
      %v9015 = vld [vmem:[%s9008 + $0x18] sm:$0xf]
      %v9016 = vld [vmem:[%s9008 + $0x1c] sm:$0xf]
      %v9017 = vld [vmem:[%s9008 + $0x20] sm:$0xf]
      %v9018 = vld [vmem:[%s9008 + $0x24] sm:$0xf]
      %v9019 = vld [vmem:[%s9008 + $0x28] sm:$0xf]
      %v9020 = vld [vmem:[%s9008 + $0x2c] sm:$0xf]
      %v9021 = vld [vmem:[%s9008 + $0x30] sm:$0xf]
      %v9022 = vld [vmem:[%s9008 + $0x34] sm:$0xf]
      %v9023 = vld [vmem:[%s9008 + $0x38] sm:$0xf]
      %v9024 = vld [vmem:[%s9008 + $0x3c] sm:$0xf]
      %v9041 = vunpack.c.l.b16 %v9009
      %v9042 = vunpack.c.l.b16 %v9010
      %v9043 = vunpack.c.l.b16 %v9011
      %v9044 = vunpack.c.l.b16 %v9012
      %v9045 = vunpack.c.l.b16 %v9013
      %v9046 = vunpack.c.l.b16 %v9014
      %v9047 = vunpack.c.l.b16 %v9015
      %v9048 = vunpack.c.l.b16 %v9016
      %v9049 = vunpack.c.l.b16 %v9017
      %v9050 = vunpack.c.l.b16 %v9018
      %v9051 = vunpack.c.l.b16 %v9019
      %v9052 = vunpack.c.l.b16 %v9020
      %v9053 = vunpack.c.l.b16 %v9021
      %v9054 = vunpack.c.l.b16 %v9022
      %v9055 = vunpack.c.l.b16 %v9023
      %v9056 = vunpack.c.l.b16 %v9024
      %v9057 = vpack.c.b16 %v9042, %v9041
      %v9058 = vpack.c.b16 %v9044, %v9043
      %v9059 = vpack.c.b16 %v9046, %v9045
      %v9060 = vpack.c.b16 %v9048, %v9047
      %v9061 = vpack.c.b16 %v9050, %v9049
      %v9062 = vpack.c.b16 %v9052, %v9051
      %v9063 = vpack.c.b16 %v9054, %v9053
      %v9064 = vpack.c.b16 %v9056, %v9055
      %9073 = vmatprep.subr.bf16.mxu0 0
      %9074 = vmatpush1.bf16.msra.mxu0 %v9064
      %9075 = vmatprep.subr.bf16.mxu0 0
      %9076 = vmatpush1.bf16.msra.mxu0 %v9063
      %9077 = vmatprep.subr.bf16.mxu0 0
      %9078 = vmatpush1.bf16.msra.mxu0 %v9062
      %9079 = vmatprep.subr.bf16.mxu0 0
      %9080 = vmatpush1.bf16.msra.mxu0 %v9061
      %9081 = vmatprep.subr.bf16.mxu0 0
      %9082 = vmatpush1.bf16.msra.mxu0 %v9060
      %9083 = vmatprep.subr.bf16.mxu0 0
      %9084 = vmatpush1.bf16.msra.mxu0 %v9059
      %9085 = vmatprep.subr.bf16.mxu0 0
      %9086 = vmatpush1.bf16.msra.mxu0 %v9058
      %9087 = vmatprep.subr.bf16.mxu0 0
      %9088 = vmatpush1.bf16.msra.mxu0 %v9057
      %9089 = vmatprep.subr.bf16.mxu0 0
      %9090 = vmatpush2.bf16.msra.mxu0 0
      %9091 = vmatprep.subr.bf16.mxu0 0
      %9092 = vmatpush2.bf16.msra.mxu0 0
      %9093 = vmatprep.subr.bf16.mxu0 0
      %9094 = vmatpush2.bf16.msra.mxu0 0
      %9095 = vmatprep.subr.bf16.mxu0 0
      %9096 = vmatpush2.bf16.msra.mxu0 0
      %9097 = vmatprep.subr.bf16.mxu0 0
      %9098 = vmatpush2.bf16.msra.mxu0 0
      %9099 = vmatprep.subr.bf16.mxu0 0
      %9100 = vmatpush2.bf16.msra.mxu0 0
      %9101 = vmatprep.subr.bf16.mxu0 0
      %9102 = vmatpush2.bf16.msra.mxu0 0
      %9103 = vmatprep.subr.bf16.mxu0 0
      %9104 = vmatpush2.bf16.msra.mxu0 0
      %9105 = vmatprep.mubr.bf16.mxu0 0
      %9106 = vmatmul.mubr.bf16.gmra.mxu0 %v8992
      %v9107 = vpop.f32.mrf.mxu0
      %v9108 = vadd.f32 0.0, %v9107
      %v9109 = vpop.f32.mrf.mxu0
      %v9110 = vpop.f32.mrf.mxu0
      %v9111 = vadd.f32 0.0, %v9110
      %v9112 = vpop.f32.mrf.mxu0
      %9113 = vmatprep.mubr.bf16.mxu0 0
      %9114 = vmatmul.mubr.bf16.gmra.mxu0 %v8993
      %v9115 = vpop.f32.mrf.mxu0
      %v9116 = vadd.f32 0.0, %v9115
      %v9117 = vpop.f32.mrf.mxu0
      %v9118 = vpop.f32.mrf.mxu0
      %v9119 = vadd.f32 0.0, %v9118
      %v9120 = vpop.f32.mrf.mxu0
      %9121 = vmatprep.mubr.bf16.mxu0 0
      %9122 = vmatmul.mubr.bf16.gmra.mxu0 %v8994
      %v9123 = vpop.f32.mrf.mxu0
      %v9124 = vadd.f32 0.0, %v9123
      %v9125 = vpop.f32.mrf.mxu0
      %v9126 = vpop.f32.mrf.mxu0
      %v9127 = vadd.f32 0.0, %v9126
      %v9128 = vpop.f32.mrf.mxu0
      %9129 = vmatprep.mubr.bf16.mxu0 0
      %9130 = vmatmul.mubr.bf16.gmra.mxu0 %v8995
      %v9131 = vpop.f32.mrf.mxu0
      %v9132 = vadd.f32 0.0, %v9131
      %v9133 = vpop.f32.mrf.mxu0
      %v9134 = vpop.f32.mrf.mxu0
      %v9135 = vadd.f32 0.0, %v9134
      %v9136 = vpop.f32.mrf.mxu0
      %9137 = vmatprep.mubr.bf16.mxu0 0
      %9138 = vmatmul.mubr.bf16.gmra.mxu0 %v8996
      %v9139 = vpop.f32.mrf.mxu0
      %v9140 = vadd.f32 0.0, %v9139
      %v9141 = vpop.f32.mrf.mxu0
      %v9142 = vpop.f32.mrf.mxu0
      %v9143 = vadd.f32 0.0, %v9142
      %v9144 = vpop.f32.mrf.mxu0
      %9145 = vmatprep.mubr.bf16.mxu0 0
      %9146 = vmatmul.mubr.bf16.gmra.mxu0 %v8997
      %v9147 = vpop.f32.mrf.mxu0
      %v9148 = vadd.f32 0.0, %v9147
      %v9149 = vpop.f32.mrf.mxu0
      %v9150 = vpop.f32.mrf.mxu0
      %v9151 = vadd.f32 0.0, %v9150
      %v9152 = vpop.f32.mrf.mxu0
      %9153 = vmatprep.mubr.bf16.mxu0 0
      %9154 = vmatmul.mubr.bf16.gmra.mxu0 %v8998
      %v9155 = vpop.f32.mrf.mxu0
      %v9156 = vadd.f32 0.0, %v9155
      %v9157 = vpop.f32.mrf.mxu0
      %v9158 = vpop.f32.mrf.mxu0
      %v9159 = vadd.f32 0.0, %v9158
      %v9160 = vpop.f32.mrf.mxu0
      %9161 = vmatprep.mubr.bf16.mxu0 0
      %9162 = vmatmul.mubr.bf16.gmra.mxu0 %v8999
      %v9163 = vpop.f32.mrf.mxu0
      %v9164 = vadd.f32 0.0, %v9163
      %v9165 = vpop.f32.mrf.mxu0
      %v9166 = vpop.f32.mrf.mxu0
      %v9167 = vadd.f32 0.0, %v9166
      %v9168 = vpop.f32.mrf.mxu0
      %9169 = vmatprep.mubr.bf16.mxu0 0
      %9170 = vmatmul.mubr.bf16.gmra.mxu0 %v9000
      %v9171 = vpop.f32.mrf.mxu0
      %v9172 = vadd.f32 0.0, %v9171
      %v9173 = vpop.f32.mrf.mxu0
      %v9174 = vpop.f32.mrf.mxu0
      %v9175 = vadd.f32 0.0, %v9174
      %v9176 = vpop.f32.mrf.mxu0
      %9177 = vmatprep.mubr.bf16.mxu0 0
      %9178 = vmatmul.mubr.bf16.gmra.mxu0 %v9001
      %v9179 = vpop.f32.mrf.mxu0
      %v9180 = vadd.f32 0.0, %v9179
      %v9181 = vpop.f32.mrf.mxu0
      %v9182 = vpop.f32.mrf.mxu0
      %v9183 = vadd.f32 0.0, %v9182
      %v9184 = vpop.f32.mrf.mxu0
      %9185 = vmatprep.mubr.bf16.mxu0 0
      %9186 = vmatmul.mubr.bf16.gmra.mxu0 %v9002
      %v9187 = vpop.f32.mrf.mxu0
      %v9188 = vadd.f32 0.0, %v9187
      %v9189 = vpop.f32.mrf.mxu0
      %v9190 = vpop.f32.mrf.mxu0
      %v9191 = vadd.f32 0.0, %v9190
      %v9192 = vpop.f32.mrf.mxu0
      %9193 = vmatprep.mubr.bf16.mxu0 0
      %9194 = vmatmul.mubr.bf16.gmra.mxu0 %v9003
      %v9195 = vpop.f32.mrf.mxu0
      %v9196 = vadd.f32 0.0, %v9195
      %v9197 = vpop.f32.mrf.mxu0
      %v9198 = vpop.f32.mrf.mxu0
      %v9199 = vadd.f32 0.0, %v9198
      %v9200 = vpop.f32.mrf.mxu0
      %9201 = vmatprep.mubr.bf16.mxu0 0
      %9202 = vmatmul.mubr.bf16.gmra.mxu0 %v9004
      %v9203 = vpop.f32.mrf.mxu0
      %v9204 = vadd.f32 0.0, %v9203
      %v9205 = vpop.f32.mrf.mxu0
      %v9206 = vpop.f32.mrf.mxu0
      %v9207 = vadd.f32 0.0, %v9206
      %v9208 = vpop.f32.mrf.mxu0
      %9209 = vmatprep.mubr.bf16.mxu0 0
      %9210 = vmatmul.mubr.bf16.gmra.mxu0 %v9005
      %v9211 = vpop.f32.mrf.mxu0
      %v9212 = vadd.f32 0.0, %v9211
      %v9213 = vpop.f32.mrf.mxu0
      %v9214 = vpop.f32.mrf.mxu0
      %v9215 = vadd.f32 0.0, %v9214
      %v9216 = vpop.f32.mrf.mxu0
      %9217 = vmatprep.mubr.bf16.mxu0 0
      %9218 = vmatmul.mubr.bf16.gmra.mxu0 %v9006
      %v9219 = vpop.f32.mrf.mxu0
      %v9220 = vadd.f32 0.0, %v9219
      %v9221 = vpop.f32.mrf.mxu0
      %v9222 = vpop.f32.mrf.mxu0
      %v9223 = vadd.f32 0.0, %v9222
      %v9224 = vpop.f32.mrf.mxu0
      %9225 = vmatprep.mubr.bf16.mxu0 0
      %9226 = vmatmul.mubr.bf16.gmra.mxu0 %v9007
      %v9227 = vpop.f32.mrf.mxu0
      %v9228 = vadd.f32 0.0, %v9227
      %v9229 = vpop.f32.mrf.mxu0
      %v9230 = vpop.f32.mrf.mxu0
      %v9231 = vadd.f32 0.0, %v9230
      %v9232 = vpop.f32.mrf.mxu0
      %9233 = vdwg.mxu0
      %v9234 = vadd.f32 %v8960, %v9108
      %v9235 = vadd.f32 %v8961, %v9111
      %v9236 = vadd.f32 %v8962, %v9116
      %v9237 = vadd.f32 %v8963, %v9119
      %v9238 = vadd.f32 %v8964, %v9124
      %v9239 = vadd.f32 %v8965, %v9127
      %v9240 = vadd.f32 %v8966, %v9132
      %v9241 = vadd.f32 %v8967, %v9135
      %v9242 = vadd.f32 %v8968, %v9140
      %v9243 = vadd.f32 %v8969, %v9143
      %v9244 = vadd.f32 %v8970, %v9148
      %v9245 = vadd.f32 %v8971, %v9151
      %v9246 = vadd.f32 %v8972, %v9156
      %v9247 = vadd.f32 %v8973, %v9159
      %v9248 = vadd.f32 %v8974, %v9164
      %v9249 = vadd.f32 %v8975, %v9167
      %v9250 = vadd.f32 %v8976, %v9172
      %v9251 = vadd.f32 %v8977, %v9175
      %v9252 = vadd.f32 %v8978, %v9180
      %v9253 = vadd.f32 %v8979, %v9183
      %v9254 = vadd.f32 %v8980, %v9188
      %v9255 = vadd.f32 %v8981, %v9191
      %v9256 = vadd.f32 %v8982, %v9196
      %v9257 = vadd.f32 %v8983, %v9199
      %v9258 = vadd.f32 %v8984, %v9204
      %v9259 = vadd.f32 %v8985, %v9207
      %v9260 = vadd.f32 %v8986, %v9212
      %v9261 = vadd.f32 %v8987, %v9215
      %v9262 = vadd.f32 %v8988, %v9220
      %v9263 = vadd.f32 %v8989, %v9223
      %v9264 = vadd.f32 %v8990, %v9228
      %v9265 = vadd.f32 %v8991, %v9231
      %9266 = vst [vmem:[#allocation3] sm:$0xff] %v9234
      %9267 = vst [vmem:[#allocation3 + $0x8] sm:$0xff] %v9235
      %9268 = vst [vmem:[#allocation3 + $0x10] sm:$0xff] %v9236
      %9269 = vst [vmem:[#allocation3 + $0x18] sm:$0xff] %v9237
      %9270 = vst [vmem:[#allocation3 + $0x20] sm:$0xff] %v9238
      %9271 = vst [vmem:[#allocation3 + $0x28] sm:$0xff] %v9239
      %9272 = vst [vmem:[#allocation3 + $0x30] sm:$0xff] %v9240
      %9273 = vst [vmem:[#allocation3 + $0x38] sm:$0xff] %v9241
      %9274 = vst [vmem:[#allocation3 + $0x40] sm:$0xff] %v9242
      %9275 = vst [vmem:[#allocation3 + $0x48] sm:$0xff] %v9243
      %9276 = vst [vmem:[#allocation3 + $0x50] sm:$0xff] %v9244
      %9277 = vst [vmem:[#allocation3 + $0x58] sm:$0xff] %v9245
      %9278 = vst [vmem:[#allocation3 + $0x60] sm:$0xff] %v9246
      %9279 = vst [vmem:[#allocation3 + $0x68] sm:$0xff] %v9247
      %9280 = vst [vmem:[#allocation3 + $0x70] sm:$0xff] %v9248
      %9281 = vst [vmem:[#allocation3 + $0x78] sm:$0xff] %v9249
      %9282 = vst [vmem:[#allocation3 + $0x80] sm:$0xff] %v9250
      %9283 = vst [vmem:[#allocation3 + $0x88] sm:$0xff] %v9251
      %9284 = vst [vmem:[#allocation3 + $0x90] sm:$0xff] %v9252
      %9285 = vst [vmem:[#allocation3 + $0x98] sm:$0xff] %v9253
      %9286 = vst [vmem:[#allocation3 + $0xa0] sm:$0xff] %v9254
      %9287 = vst [vmem:[#allocation3 + $0xa8] sm:$0xff] %v9255
      %9288 = vst [vmem:[#allocation3 + $0xb0] sm:$0xff] %v9256
      %9289 = vst [vmem:[#allocation3 + $0xb8] sm:$0xff] %v9257
      %9290 = vst [vmem:[#allocation3 + $0xc0] sm:$0xff] %v9258
      %9291 = vst [vmem:[#allocation3 + $0xc8] sm:$0xff] %v9259
      %9292 = vst [vmem:[#allocation3 + $0xd0] sm:$0xff] %v9260
      %9293 = vst [vmem:[#allocation3 + $0xd8] sm:$0xff] %v9261
      %9294 = vst [vmem:[#allocation3 + $0xe0] sm:$0xff] %v9262
      %9295 = vst [vmem:[#allocation3 + $0xe8] sm:$0xff] %v9263
      %9296 = vst [vmem:[#allocation3 + $0xf0] sm:$0xff] %v9264
      %9297 = vst [vmem:[#allocation3 + $0xf8] sm:$0xff] %v9265
      %v9298 = vld [vmem:[#allocation3] sm:$0xff]
      %v9299 = vld [vmem:[#allocation3 + $0x8] sm:$0xff]
      %v9300 = vld [vmem:[#allocation3 + $0x10] sm:$0xff]
      %v9301 = vld [vmem:[#allocation3 + $0x18] sm:$0xff]
      %v9302 = vld [vmem:[#allocation3 + $0x20] sm:$0xff]
      %v9303 = vld [vmem:[#allocation3 + $0x28] sm:$0xff]
      %v9304 = vld [vmem:[#allocation3 + $0x30] sm:$0xff]
      %v9305 = vld [vmem:[#allocation3 + $0x38] sm:$0xff]
      %v9306 = vld [vmem:[#allocation3 + $0x40] sm:$0xff]
      %v9307 = vld [vmem:[#allocation3 + $0x48] sm:$0xff]
      %v9308 = vld [vmem:[#allocation3 + $0x50] sm:$0xff]
      %v9309 = vld [vmem:[#allocation3 + $0x58] sm:$0xff]
      %v9310 = vld [vmem:[#allocation3 + $0x60] sm:$0xff]
      %v9311 = vld [vmem:[#allocation3 + $0x68] sm:$0xff]
      %v9312 = vld [vmem:[#allocation3 + $0x70] sm:$0xff]
      %v9313 = vld [vmem:[#allocation3 + $0x78] sm:$0xff]
      %v9314 = vld [vmem:[#allocation3 + $0x80] sm:$0xff]
      %v9315 = vld [vmem:[#allocation3 + $0x88] sm:$0xff]
      %v9316 = vld [vmem:[#allocation3 + $0x90] sm:$0xff]
      %v9317 = vld [vmem:[#allocation3 + $0x98] sm:$0xff]
      %v9318 = vld [vmem:[#allocation3 + $0xa0] sm:$0xff]
      %v9319 = vld [vmem:[#allocation3 + $0xa8] sm:$0xff]
      %v9320 = vld [vmem:[#allocation3 + $0xb0] sm:$0xff]
      %v9321 = vld [vmem:[#allocation3 + $0xb8] sm:$0xff]
      %v9322 = vld [vmem:[#allocation3 + $0xc0] sm:$0xff]
      %v9323 = vld [vmem:[#allocation3 + $0xc8] sm:$0xff]
      %v9324 = vld [vmem:[#allocation3 + $0xd0] sm:$0xff]
      %v9325 = vld [vmem:[#allocation3 + $0xd8] sm:$0xff]
      %v9326 = vld [vmem:[#allocation3 + $0xe0] sm:$0xff]
      %v9327 = vld [vmem:[#allocation3 + $0xe8] sm:$0xff]
      %v9328 = vld [vmem:[#allocation3 + $0xf0] sm:$0xff]
      %v9329 = vld [vmem:[#allocation3 + $0xf8] sm:$0xff]
      %v9330 = vpack.c.bf16 %v8641, %v8640
      %v9331 = vpack.c.bf16 %v8643, %v8642
      %v9332 = vpack.c.bf16 %v8645, %v8644
      %v9333 = vpack.c.bf16 %v8647, %v8646
      %v9334 = vpack.c.bf16 %v8649, %v8648
      %v9335 = vpack.c.bf16 %v8651, %v8650
      %v9336 = vpack.c.bf16 %v8653, %v8652
      %v9337 = vpack.c.bf16 %v8655, %v8654
      %v9338 = vpack.c.bf16 %v8657, %v8656
      %v9339 = vpack.c.bf16 %v8659, %v8658
      %v9340 = vpack.c.bf16 %v8661, %v8660
      %v9341 = vpack.c.bf16 %v8663, %v8662
      %v9342 = vpack.c.bf16 %v8665, %v8664
      %v9343 = vpack.c.bf16 %v8667, %v8666
      %v9344 = vpack.c.bf16 %v8669, %v8668
      %v9345 = vpack.c.bf16 %v8671, %v8670
      %s9346 = scalar_lea.vmem %s3, 448
      %v9347 = vld [vmem:[%s9346] sm:$0xf]
      %v9348 = vld [vmem:[%s9346 + $0x4] sm:$0xf]
      %v9349 = vld [vmem:[%s9346 + $0x8] sm:$0xf]
      %v9350 = vld [vmem:[%s9346 + $0xc] sm:$0xf]
      %v9351 = vld [vmem:[%s9346 + $0x10] sm:$0xf]
      %v9352 = vld [vmem:[%s9346 + $0x14] sm:$0xf]
      %v9353 = vld [vmem:[%s9346 + $0x18] sm:$0xf]
      %v9354 = vld [vmem:[%s9346 + $0x1c] sm:$0xf]
      %v9355 = vld [vmem:[%s9346 + $0x20] sm:$0xf]
      %v9356 = vld [vmem:[%s9346 + $0x24] sm:$0xf]
      %v9357 = vld [vmem:[%s9346 + $0x28] sm:$0xf]
      %v9358 = vld [vmem:[%s9346 + $0x2c] sm:$0xf]
      %v9359 = vld [vmem:[%s9346 + $0x30] sm:$0xf]
      %v9360 = vld [vmem:[%s9346 + $0x34] sm:$0xf]
      %v9361 = vld [vmem:[%s9346 + $0x38] sm:$0xf]
      %v9362 = vld [vmem:[%s9346 + $0x3c] sm:$0xf]
      %v9379 = vunpack.c.l.b16 %v9347
      %v9380 = vunpack.c.l.b16 %v9348
      %v9381 = vunpack.c.l.b16 %v9349
      %v9382 = vunpack.c.l.b16 %v9350
      %v9383 = vunpack.c.l.b16 %v9351
      %v9384 = vunpack.c.l.b16 %v9352
      %v9385 = vunpack.c.l.b16 %v9353
      %v9386 = vunpack.c.l.b16 %v9354
      %v9387 = vunpack.c.l.b16 %v9355
      %v9388 = vunpack.c.l.b16 %v9356
      %v9389 = vunpack.c.l.b16 %v9357
      %v9390 = vunpack.c.l.b16 %v9358
      %v9391 = vunpack.c.l.b16 %v9359
      %v9392 = vunpack.c.l.b16 %v9360
      %v9393 = vunpack.c.l.b16 %v9361
      %v9394 = vunpack.c.l.b16 %v9362
      %v9395 = vpack.c.b16 %v9380, %v9379
      %v9396 = vpack.c.b16 %v9382, %v9381
      %v9397 = vpack.c.b16 %v9384, %v9383
      %v9398 = vpack.c.b16 %v9386, %v9385
      %v9399 = vpack.c.b16 %v9388, %v9387
      %v9400 = vpack.c.b16 %v9390, %v9389
      %v9401 = vpack.c.b16 %v9392, %v9391
      %v9402 = vpack.c.b16 %v9394, %v9393
      %9411 = vmatprep.subr.bf16.mxu0 0
      %9412 = vmatpush1.bf16.msra.mxu0 %v9402
      %9413 = vmatprep.subr.bf16.mxu0 0
      %9414 = vmatpush1.bf16.msra.mxu0 %v9401
      %9415 = vmatprep.subr.bf16.mxu0 0
      %9416 = vmatpush1.bf16.msra.mxu0 %v9400
      %9417 = vmatprep.subr.bf16.mxu0 0
      %9418 = vmatpush1.bf16.msra.mxu0 %v9399
      %9419 = vmatprep.subr.bf16.mxu0 0
      %9420 = vmatpush1.bf16.msra.mxu0 %v9398
      %9421 = vmatprep.subr.bf16.mxu0 0
      %9422 = vmatpush1.bf16.msra.mxu0 %v9397
      %9423 = vmatprep.subr.bf16.mxu0 0
      %9424 = vmatpush1.bf16.msra.mxu0 %v9396
      %9425 = vmatprep.subr.bf16.mxu0 0
      %9426 = vmatpush1.bf16.msra.mxu0 %v9395
      %9427 = vmatprep.subr.bf16.mxu0 0
      %9428 = vmatpush2.bf16.msra.mxu0 0
      %9429 = vmatprep.subr.bf16.mxu0 0
      %9430 = vmatpush2.bf16.msra.mxu0 0
      %9431 = vmatprep.subr.bf16.mxu0 0
      %9432 = vmatpush2.bf16.msra.mxu0 0
      %9433 = vmatprep.subr.bf16.mxu0 0
      %9434 = vmatpush2.bf16.msra.mxu0 0
      %9435 = vmatprep.subr.bf16.mxu0 0
      %9436 = vmatpush2.bf16.msra.mxu0 0
      %9437 = vmatprep.subr.bf16.mxu0 0
      %9438 = vmatpush2.bf16.msra.mxu0 0
      %9439 = vmatprep.subr.bf16.mxu0 0
      %9440 = vmatpush2.bf16.msra.mxu0 0
      %9441 = vmatprep.subr.bf16.mxu0 0
      %9442 = vmatpush2.bf16.msra.mxu0 0
      %9443 = vmatprep.mubr.bf16.mxu0 0
      %9444 = vmatmul.mubr.bf16.gmra.mxu0 %v9330
      %v9445 = vpop.f32.mrf.mxu0
      %v9446 = vadd.f32 0.0, %v9445
      %v9447 = vpop.f32.mrf.mxu0
      %v9448 = vpop.f32.mrf.mxu0
      %v9449 = vadd.f32 0.0, %v9448
      %v9450 = vpop.f32.mrf.mxu0
      %9451 = vmatprep.mubr.bf16.mxu0 0
      %9452 = vmatmul.mubr.bf16.gmra.mxu0 %v9331
      %v9453 = vpop.f32.mrf.mxu0
      %v9454 = vadd.f32 0.0, %v9453
      %v9455 = vpop.f32.mrf.mxu0
      %v9456 = vpop.f32.mrf.mxu0
      %v9457 = vadd.f32 0.0, %v9456
      %v9458 = vpop.f32.mrf.mxu0
      %9459 = vmatprep.mubr.bf16.mxu0 0
      %9460 = vmatmul.mubr.bf16.gmra.mxu0 %v9332
      %v9461 = vpop.f32.mrf.mxu0
      %v9462 = vadd.f32 0.0, %v9461
      %v9463 = vpop.f32.mrf.mxu0
      %v9464 = vpop.f32.mrf.mxu0
      %v9465 = vadd.f32 0.0, %v9464
      %v9466 = vpop.f32.mrf.mxu0
      %9467 = vmatprep.mubr.bf16.mxu0 0
      %9468 = vmatmul.mubr.bf16.gmra.mxu0 %v9333
      %v9469 = vpop.f32.mrf.mxu0
      %v9470 = vadd.f32 0.0, %v9469
      %v9471 = vpop.f32.mrf.mxu0
      %v9472 = vpop.f32.mrf.mxu0
      %v9473 = vadd.f32 0.0, %v9472
      %v9474 = vpop.f32.mrf.mxu0
      %9475 = vmatprep.mubr.bf16.mxu0 0
      %9476 = vmatmul.mubr.bf16.gmra.mxu0 %v9334
      %v9477 = vpop.f32.mrf.mxu0
      %v9478 = vadd.f32 0.0, %v9477
      %v9479 = vpop.f32.mrf.mxu0
      %v9480 = vpop.f32.mrf.mxu0
      %v9481 = vadd.f32 0.0, %v9480
      %v9482 = vpop.f32.mrf.mxu0
      %9483 = vmatprep.mubr.bf16.mxu0 0
      %9484 = vmatmul.mubr.bf16.gmra.mxu0 %v9335
      %v9485 = vpop.f32.mrf.mxu0
      %v9486 = vadd.f32 0.0, %v9485
      %v9487 = vpop.f32.mrf.mxu0
      %v9488 = vpop.f32.mrf.mxu0
      %v9489 = vadd.f32 0.0, %v9488
      %v9490 = vpop.f32.mrf.mxu0
      %9491 = vmatprep.mubr.bf16.mxu0 0
      %9492 = vmatmul.mubr.bf16.gmra.mxu0 %v9336
      %v9493 = vpop.f32.mrf.mxu0
      %v9494 = vadd.f32 0.0, %v9493
      %v9495 = vpop.f32.mrf.mxu0
      %v9496 = vpop.f32.mrf.mxu0
      %v9497 = vadd.f32 0.0, %v9496
      %v9498 = vpop.f32.mrf.mxu0
      %9499 = vmatprep.mubr.bf16.mxu0 0
      %9500 = vmatmul.mubr.bf16.gmra.mxu0 %v9337
      %v9501 = vpop.f32.mrf.mxu0
      %v9502 = vadd.f32 0.0, %v9501
      %v9503 = vpop.f32.mrf.mxu0
      %v9504 = vpop.f32.mrf.mxu0
      %v9505 = vadd.f32 0.0, %v9504
      %v9506 = vpop.f32.mrf.mxu0
      %9507 = vmatprep.mubr.bf16.mxu0 0
      %9508 = vmatmul.mubr.bf16.gmra.mxu0 %v9338
      %v9509 = vpop.f32.mrf.mxu0
      %v9510 = vadd.f32 0.0, %v9509
      %v9511 = vpop.f32.mrf.mxu0
      %v9512 = vpop.f32.mrf.mxu0
      %v9513 = vadd.f32 0.0, %v9512
      %v9514 = vpop.f32.mrf.mxu0
      %9515 = vmatprep.mubr.bf16.mxu0 0
      %9516 = vmatmul.mubr.bf16.gmra.mxu0 %v9339
      %v9517 = vpop.f32.mrf.mxu0
      %v9518 = vadd.f32 0.0, %v9517
      %v9519 = vpop.f32.mrf.mxu0
      %v9520 = vpop.f32.mrf.mxu0
      %v9521 = vadd.f32 0.0, %v9520
      %v9522 = vpop.f32.mrf.mxu0
      %9523 = vmatprep.mubr.bf16.mxu0 0
      %9524 = vmatmul.mubr.bf16.gmra.mxu0 %v9340
      %v9525 = vpop.f32.mrf.mxu0
      %v9526 = vadd.f32 0.0, %v9525
      %v9527 = vpop.f32.mrf.mxu0
      %v9528 = vpop.f32.mrf.mxu0
      %v9529 = vadd.f32 0.0, %v9528
      %v9530 = vpop.f32.mrf.mxu0
      %9531 = vmatprep.mubr.bf16.mxu0 0
      %9532 = vmatmul.mubr.bf16.gmra.mxu0 %v9341
      %v9533 = vpop.f32.mrf.mxu0
      %v9534 = vadd.f32 0.0, %v9533
      %v9535 = vpop.f32.mrf.mxu0
      %v9536 = vpop.f32.mrf.mxu0
      %v9537 = vadd.f32 0.0, %v9536
      %v9538 = vpop.f32.mrf.mxu0
      %9539 = vmatprep.mubr.bf16.mxu0 0
      %9540 = vmatmul.mubr.bf16.gmra.mxu0 %v9342
      %v9541 = vpop.f32.mrf.mxu0
      %v9542 = vadd.f32 0.0, %v9541
      %v9543 = vpop.f32.mrf.mxu0
      %v9544 = vpop.f32.mrf.mxu0
      %v9545 = vadd.f32 0.0, %v9544
      %v9546 = vpop.f32.mrf.mxu0
      %9547 = vmatprep.mubr.bf16.mxu0 0
      %9548 = vmatmul.mubr.bf16.gmra.mxu0 %v9343
      %v9549 = vpop.f32.mrf.mxu0
      %v9550 = vadd.f32 0.0, %v9549
      %v9551 = vpop.f32.mrf.mxu0
      %v9552 = vpop.f32.mrf.mxu0
      %v9553 = vadd.f32 0.0, %v9552
      %v9554 = vpop.f32.mrf.mxu0
      %9555 = vmatprep.mubr.bf16.mxu0 0
      %9556 = vmatmul.mubr.bf16.gmra.mxu0 %v9344
      %v9557 = vpop.f32.mrf.mxu0
      %v9558 = vadd.f32 0.0, %v9557
      %v9559 = vpop.f32.mrf.mxu0
      %v9560 = vpop.f32.mrf.mxu0
      %v9561 = vadd.f32 0.0, %v9560
      %v9562 = vpop.f32.mrf.mxu0
      %9563 = vmatprep.mubr.bf16.mxu0 0
      %9564 = vmatmul.mubr.bf16.gmra.mxu0 %v9345
      %v9565 = vpop.f32.mrf.mxu0
      %v9566 = vadd.f32 0.0, %v9565
      %v9567 = vpop.f32.mrf.mxu0
      %v9568 = vpop.f32.mrf.mxu0
      %v9569 = vadd.f32 0.0, %v9568
      %v9570 = vpop.f32.mrf.mxu0
      %9571 = vdwg.mxu0
      %v9572 = vadd.f32 %v9298, %v9446
      %v9573 = vadd.f32 %v9299, %v9449
      %v9574 = vadd.f32 %v9300, %v9454
      %v9575 = vadd.f32 %v9301, %v9457
      %v9576 = vadd.f32 %v9302, %v9462
      %v9577 = vadd.f32 %v9303, %v9465
      %v9578 = vadd.f32 %v9304, %v9470
      %v9579 = vadd.f32 %v9305, %v9473
      %v9580 = vadd.f32 %v9306, %v9478
      %v9581 = vadd.f32 %v9307, %v9481
      %v9582 = vadd.f32 %v9308, %v9486
      %v9583 = vadd.f32 %v9309, %v9489
      %v9584 = vadd.f32 %v9310, %v9494
      %v9585 = vadd.f32 %v9311, %v9497
      %v9586 = vadd.f32 %v9312, %v9502
      %v9587 = vadd.f32 %v9313, %v9505
      %v9588 = vadd.f32 %v9314, %v9510
      %v9589 = vadd.f32 %v9315, %v9513
      %v9590 = vadd.f32 %v9316, %v9518
      %v9591 = vadd.f32 %v9317, %v9521
      %v9592 = vadd.f32 %v9318, %v9526
      %v9593 = vadd.f32 %v9319, %v9529
      %v9594 = vadd.f32 %v9320, %v9534
      %v9595 = vadd.f32 %v9321, %v9537
      %v9596 = vadd.f32 %v9322, %v9542
      %v9597 = vadd.f32 %v9323, %v9545
      %v9598 = vadd.f32 %v9324, %v9550
      %v9599 = vadd.f32 %v9325, %v9553
      %v9600 = vadd.f32 %v9326, %v9558
      %v9601 = vadd.f32 %v9327, %v9561
      %v9602 = vadd.f32 %v9328, %v9566
      %v9603 = vadd.f32 %v9329, %v9569
      %9604 = vst [vmem:[#allocation3] sm:$0xff] %v9572
      %9605 = vst [vmem:[#allocation3 + $0x8] sm:$0xff] %v9573
      %9606 = vst [vmem:[#allocation3 + $0x10] sm:$0xff] %v9574
      %9607 = vst [vmem:[#allocation3 + $0x18] sm:$0xff] %v9575
      %9608 = vst [vmem:[#allocation3 + $0x20] sm:$0xff] %v9576
      %9609 = vst [vmem:[#allocation3 + $0x28] sm:$0xff] %v9577
      %9610 = vst [vmem:[#allocation3 + $0x30] sm:$0xff] %v9578
      %9611 = vst [vmem:[#allocation3 + $0x38] sm:$0xff] %v9579
      %9612 = vst [vmem:[#allocation3 + $0x40] sm:$0xff] %v9580
      %9613 = vst [vmem:[#allocation3 + $0x48] sm:$0xff] %v9581
      %9614 = vst [vmem:[#allocation3 + $0x50] sm:$0xff] %v9582
      %9615 = vst [vmem:[#allocation3 + $0x58] sm:$0xff] %v9583
      %9616 = vst [vmem:[#allocation3 + $0x60] sm:$0xff] %v9584
      %9617 = vst [vmem:[#allocation3 + $0x68] sm:$0xff] %v9585
      %9618 = vst [vmem:[#allocation3 + $0x70] sm:$0xff] %v9586
      %9619 = vst [vmem:[#allocation3 + $0x78] sm:$0xff] %v9587
      %9620 = vst [vmem:[#allocation3 + $0x80] sm:$0xff] %v9588
      %9621 = vst [vmem:[#allocation3 + $0x88] sm:$0xff] %v9589
      %9622 = vst [vmem:[#allocation3 + $0x90] sm:$0xff] %v9590
      %9623 = vst [vmem:[#allocation3 + $0x98] sm:$0xff] %v9591
      %9624 = vst [vmem:[#allocation3 + $0xa0] sm:$0xff] %v9592
      %9625 = vst [vmem:[#allocation3 + $0xa8] sm:$0xff] %v9593
      %9626 = vst [vmem:[#allocation3 + $0xb0] sm:$0xff] %v9594
      %9627 = vst [vmem:[#allocation3 + $0xb8] sm:$0xff] %v9595
      %9628 = vst [vmem:[#allocation3 + $0xc0] sm:$0xff] %v9596
      %9629 = vst [vmem:[#allocation3 + $0xc8] sm:$0xff] %v9597
      %9630 = vst [vmem:[#allocation3 + $0xd0] sm:$0xff] %v9598
      %9631 = vst [vmem:[#allocation3 + $0xd8] sm:$0xff] %v9599
      %9632 = vst [vmem:[#allocation3 + $0xe0] sm:$0xff] %v9600
      %9633 = vst [vmem:[#allocation3 + $0xe8] sm:$0xff] %v9601
      %9634 = vst [vmem:[#allocation3 + $0xf0] sm:$0xff] %v9602
      %9635 = vst [vmem:[#allocation3 + $0xf8] sm:$0xff] %v9603
      %v9636 = vrot.slane %v8640, 1
      %v9637 = vrot.slane %v8641, 1
      %v9638 = vrot.slane %v8642, 1
      %v9639 = vrot.slane %v8643, 1
      %v9640 = vrot.slane %v8644, 1
      %v9641 = vrot.slane %v8645, 1
      %v9642 = vrot.slane %v8646, 1
      %v9643 = vrot.slane %v8647, 1
      %v9644 = vrot.slane %v8648, 1
      %v9645 = vrot.slane %v8649, 1
      %v9646 = vrot.slane %v8650, 1
      %v9647 = vrot.slane %v8651, 1
      %v9648 = vrot.slane %v8652, 1
      %v9649 = vrot.slane %v8653, 1
      %v9650 = vrot.slane %v8654, 1
      %v9651 = vrot.slane %v8655, 1
      %v9652 = vrot.slane %v8656, 1
      %v9653 = vrot.slane %v8657, 1
      %v9654 = vrot.slane %v8658, 1
      %v9655 = vrot.slane %v8659, 1
      %v9656 = vrot.slane %v8660, 1
      %v9657 = vrot.slane %v8661, 1
      %v9658 = vrot.slane %v8662, 1
      %v9659 = vrot.slane %v8663, 1
      %v9660 = vrot.slane %v8664, 1
      %v9661 = vrot.slane %v8665, 1
      %v9662 = vrot.slane %v8666, 1
      %v9663 = vrot.slane %v8667, 1
      %v9664 = vrot.slane %v8668, 1
      %v9665 = vrot.slane %v8669, 1
      %v9666 = vrot.slane %v8670, 1
      %v9667 = vrot.slane %v8671, 1
      %v9668 = vsel %vm1422, %v9666, %v9667
      %v9669 = vsel %vm1422, %v9665, %v9666
      %v9670 = vsel %vm1422, %v9664, %v9665
      %v9671 = vsel %vm1422, %v9663, %v9664
      %v9672 = vsel %vm1422, %v9662, %v9663
      %v9673 = vsel %vm1422, %v9661, %v9662
      %v9674 = vsel %vm1422, %v9660, %v9661
      %v9675 = vsel %vm1422, %v9659, %v9660
      %v9676 = vsel %vm1422, %v9658, %v9659
      %v9677 = vsel %vm1422, %v9657, %v9658
      %v9678 = vsel %vm1422, %v9656, %v9657
      %v9679 = vsel %vm1422, %v9655, %v9656
      %v9680 = vsel %vm1422, %v9654, %v9655
      %v9681 = vsel %vm1422, %v9653, %v9654
      %v9682 = vsel %vm1422, %v9652, %v9653
      %v9683 = vsel %vm1422, %v9651, %v9652
      %v9684 = vsel %vm1422, %v9650, %v9651
      %v9685 = vsel %vm1422, %v9649, %v9650
      %v9686 = vsel %vm1422, %v9648, %v9649
      %v9687 = vsel %vm1422, %v9647, %v9648
      %v9688 = vsel %vm1422, %v9646, %v9647
      %v9689 = vsel %vm1422, %v9645, %v9646
      %v9690 = vsel %vm1422, %v9644, %v9645
      %v9691 = vsel %vm1422, %v9643, %v9644
      %v9692 = vsel %vm1422, %v9642, %v9643
      %v9693 = vsel %vm1422, %v9641, %v9642
      %v9694 = vsel %vm1422, %v9640, %v9641
      %v9695 = vsel %vm1422, %v9639, %v9640
      %v9696 = vsel %vm1422, %v9638, %v9639
      %v9697 = vsel %vm1422, %v9637, %v9638
      %v9698 = vsel %vm1422, %v9636, %v9637
      %v9699 = vsel %vm1422, %v9667, %v9636
      %v9700 = vld [vmem:[%s1455] sm:$0xff]
      %v9701 = vld [vmem:[%s1455 + $0x8] sm:$0xff]
      %v9702 = vld [vmem:[%s1455 + $0x10] sm:$0xff]
      %v9703 = vld [vmem:[%s1455 + $0x18] sm:$0xff]
      %v9704 = vld [vmem:[%s1455 + $0x20] sm:$0xff]
      %v9705 = vld [vmem:[%s1455 + $0x28] sm:$0xff]
      %v9706 = vld [vmem:[%s1455 + $0x30] sm:$0xff]
      %v9707 = vld [vmem:[%s1455 + $0x38] sm:$0xff]
      %v9708 = vld [vmem:[%s1455 + $0x40] sm:$0xff]
      %v9709 = vld [vmem:[%s1455 + $0x48] sm:$0xff]
      %v9710 = vld [vmem:[%s1455 + $0x50] sm:$0xff]
      %v9711 = vld [vmem:[%s1455 + $0x58] sm:$0xff]
      %v9712 = vld [vmem:[%s1455 + $0x60] sm:$0xff]
      %v9713 = vld [vmem:[%s1455 + $0x68] sm:$0xff]
      %v9714 = vld [vmem:[%s1455 + $0x70] sm:$0xff]
      %v9715 = vld [vmem:[%s1455 + $0x78] sm:$0xff]
      %v9716 = vld [vmem:[%s1455 + $0x80] sm:$0xff]
      %v9717 = vld [vmem:[%s1455 + $0x88] sm:$0xff]
      %v9718 = vld [vmem:[%s1455 + $0x90] sm:$0xff]
      %v9719 = vld [vmem:[%s1455 + $0x98] sm:$0xff]
      %v9720 = vld [vmem:[%s1455 + $0xa0] sm:$0xff]
      %v9721 = vld [vmem:[%s1455 + $0xa8] sm:$0xff]
      %v9722 = vld [vmem:[%s1455 + $0xb0] sm:$0xff]
      %v9723 = vld [vmem:[%s1455 + $0xb8] sm:$0xff]
      %v9724 = vld [vmem:[%s1455 + $0xc0] sm:$0xff]
      %v9725 = vld [vmem:[%s1455 + $0xc8] sm:$0xff]
      %v9726 = vld [vmem:[%s1455 + $0xd0] sm:$0xff]
      %v9727 = vld [vmem:[%s1455 + $0xd8] sm:$0xff]
      %v9728 = vld [vmem:[%s1455 + $0xe0] sm:$0xff]
      %v9729 = vld [vmem:[%s1455 + $0xe8] sm:$0xff]
      %v9730 = vld [vmem:[%s1455 + $0xf0] sm:$0xff]
      %v9731 = vld [vmem:[%s1455 + $0xf8] sm:$0xff]
      %9733 = vset.pattern.permute.xlu0 0
      %9734 = vperm.xlu0 %9733, %v9700
      %v9735 = vpop.permute.xlu0 %9734
      %9738 = vset.pattern.permute.xlu0 0
      %9739 = vperm.xlu0 %9738, %v9701
      %v9740 = vpop.permute.xlu0 %9739
      %9743 = vset.pattern.permute.xlu0 0
      %9744 = vperm.xlu0 %9743, %v9702
      %v9745 = vpop.permute.xlu0 %9744
      %9748 = vset.pattern.permute.xlu0 0
      %9749 = vperm.xlu0 %9748, %v9703
      %v9750 = vpop.permute.xlu0 %9749
      %9753 = vset.pattern.permute.xlu0 0
      %9754 = vperm.xlu0 %9753, %v9704
      %v9755 = vpop.permute.xlu0 %9754
      %9758 = vset.pattern.permute.xlu0 0
      %9759 = vperm.xlu0 %9758, %v9705
      %v9760 = vpop.permute.xlu0 %9759
      %9763 = vset.pattern.permute.xlu0 0
      %9764 = vperm.xlu0 %9763, %v9706
      %v9765 = vpop.permute.xlu0 %9764
      %9768 = vset.pattern.permute.xlu0 0
      %9769 = vperm.xlu0 %9768, %v9707
      %v9770 = vpop.permute.xlu0 %9769
      %9773 = vset.pattern.permute.xlu0 0
      %9774 = vperm.xlu0 %9773, %v9708
      %v9775 = vpop.permute.xlu0 %9774
      %9778 = vset.pattern.permute.xlu0 0
      %9779 = vperm.xlu0 %9778, %v9709
      %v9780 = vpop.permute.xlu0 %9779
      %9783 = vset.pattern.permute.xlu0 0
      %9784 = vperm.xlu0 %9783, %v9710
      %v9785 = vpop.permute.xlu0 %9784
      %9788 = vset.pattern.permute.xlu0 0
      %9789 = vperm.xlu0 %9788, %v9711
      %v9790 = vpop.permute.xlu0 %9789
      %9793 = vset.pattern.permute.xlu0 0
      %9794 = vperm.xlu0 %9793, %v9712
      %v9795 = vpop.permute.xlu0 %9794
      %9798 = vset.pattern.permute.xlu0 0
      %9799 = vperm.xlu0 %9798, %v9713
      %v9800 = vpop.permute.xlu0 %9799
      %9803 = vset.pattern.permute.xlu0 0
      %9804 = vperm.xlu0 %9803, %v9714
      %v9805 = vpop.permute.xlu0 %9804
      %9808 = vset.pattern.permute.xlu0 0
      %9809 = vperm.xlu0 %9808, %v9715
      %v9810 = vpop.permute.xlu0 %9809
      %9813 = vset.pattern.permute.xlu0 0
      %9814 = vperm.xlu0 %9813, %v9716
      %v9815 = vpop.permute.xlu0 %9814
      %9818 = vset.pattern.permute.xlu0 0
      %9819 = vperm.xlu0 %9818, %v9717
      %v9820 = vpop.permute.xlu0 %9819
      %9823 = vset.pattern.permute.xlu0 0
      %9824 = vperm.xlu0 %9823, %v9718
      %v9825 = vpop.permute.xlu0 %9824
      %9828 = vset.pattern.permute.xlu0 0
      %9829 = vperm.xlu0 %9828, %v9719
      %v9830 = vpop.permute.xlu0 %9829
      %9833 = vset.pattern.permute.xlu0 0
      %9834 = vperm.xlu0 %9833, %v9720
      %v9835 = vpop.permute.xlu0 %9834
      %9838 = vset.pattern.permute.xlu0 0
      %9839 = vperm.xlu0 %9838, %v9721
      %v9840 = vpop.permute.xlu0 %9839
      %9843 = vset.pattern.permute.xlu0 0
      %9844 = vperm.xlu0 %9843, %v9722
      %v9845 = vpop.permute.xlu0 %9844
      %9848 = vset.pattern.permute.xlu0 0
      %9849 = vperm.xlu0 %9848, %v9723
      %v9850 = vpop.permute.xlu0 %9849
      %9853 = vset.pattern.permute.xlu0 0
      %9854 = vperm.xlu0 %9853, %v9724
      %v9855 = vpop.permute.xlu0 %9854
      %9858 = vset.pattern.permute.xlu0 0
      %9859 = vperm.xlu0 %9858, %v9725
      %v9860 = vpop.permute.xlu0 %9859
      %9863 = vset.pattern.permute.xlu0 0
      %9864 = vperm.xlu0 %9863, %v9726
      %v9865 = vpop.permute.xlu0 %9864
      %9868 = vset.pattern.permute.xlu0 0
      %9869 = vperm.xlu0 %9868, %v9727
      %v9870 = vpop.permute.xlu0 %9869
      %9873 = vset.pattern.permute.xlu0 0
      %9874 = vperm.xlu0 %9873, %v9728
      %v9875 = vpop.permute.xlu0 %9874
      %9878 = vset.pattern.permute.xlu0 0
      %9879 = vperm.xlu0 %9878, %v9729
      %v9880 = vpop.permute.xlu0 %9879
      %9883 = vset.pattern.permute.xlu0 0
      %9884 = vperm.xlu0 %9883, %v9730
      %v9885 = vpop.permute.xlu0 %9884
      %9888 = vset.pattern.permute.xlu0 0
      %9889 = vperm.xlu0 %9888, %v9731
      %v9890 = vpop.permute.xlu0 %9889
      %v9892 = vmul.f32 %v9698, %v9735
      %v9893 = vmul.f32 %v9697, %v9740
      %v9894 = vmul.f32 %v9696, %v9745
      %v9895 = vmul.f32 %v9695, %v9750
      %v9896 = vmul.f32 %v9694, %v9755
      %v9897 = vmul.f32 %v9693, %v9760
      %v9898 = vmul.f32 %v9692, %v9765
      %v9899 = vmul.f32 %v9691, %v9770
      %v9900 = vmul.f32 %v9690, %v9775
      %v9901 = vmul.f32 %v9689, %v9780
      %v9902 = vmul.f32 %v9688, %v9785
      %v9903 = vmul.f32 %v9687, %v9790
      %v9904 = vmul.f32 %v9686, %v9795
      %v9905 = vmul.f32 %v9685, %v9800
      %v9906 = vmul.f32 %v9684, %v9805
      %v9907 = vmul.f32 %v9683, %v9810
      %v9908 = vmul.f32 %v9682, %v9815
      %v9909 = vmul.f32 %v9681, %v9820
      %v9910 = vmul.f32 %v9680, %v9825
      %v9911 = vmul.f32 %v9679, %v9830
      %v9912 = vmul.f32 %v9678, %v9835
      %v9913 = vmul.f32 %v9677, %v9840
      %v9914 = vmul.f32 %v9676, %v9845
      %v9915 = vmul.f32 %v9675, %v9850
      %v9916 = vmul.f32 %v9674, %v9855
      %v9917 = vmul.f32 %v9673, %v9860
      %v9918 = vmul.f32 %v9672, %v9865
      %v9919 = vmul.f32 %v9671, %v9870
      %v9920 = vmul.f32 %v9670, %v9875
      %v9921 = vmul.f32 %v9669, %v9880
      %v9922 = vmul.f32 %v9668, %v9885
      %v9923 = vmul.f32 %v9699, %v9890
      %v9924 = vld [vmem:[#allocation3] sm:$0xff]
      %v9925 = vld [vmem:[#allocation3 + $0x8] sm:$0xff]
      %v9926 = vld [vmem:[#allocation3 + $0x10] sm:$0xff]
      %v9927 = vld [vmem:[#allocation3 + $0x18] sm:$0xff]
      %v9928 = vld [vmem:[#allocation3 + $0x20] sm:$0xff]
      %v9929 = vld [vmem:[#allocation3 + $0x28] sm:$0xff]
      %v9930 = vld [vmem:[#allocation3 + $0x30] sm:$0xff]
      %v9931 = vld [vmem:[#allocation3 + $0x38] sm:$0xff]
      %v9932 = vld [vmem:[#allocation3 + $0x40] sm:$0xff]
      %v9933 = vld [vmem:[#allocation3 + $0x48] sm:$0xff]
      %v9934 = vld [vmem:[#allocation3 + $0x50] sm:$0xff]
      %v9935 = vld [vmem:[#allocation3 + $0x58] sm:$0xff]
      %v9936 = vld [vmem:[#allocation3 + $0x60] sm:$0xff]
      %v9937 = vld [vmem:[#allocation3 + $0x68] sm:$0xff]
      %v9938 = vld [vmem:[#allocation3 + $0x70] sm:$0xff]
      %v9939 = vld [vmem:[#allocation3 + $0x78] sm:$0xff]
      %v9940 = vld [vmem:[#allocation3 + $0x80] sm:$0xff]
      %v9941 = vld [vmem:[#allocation3 + $0x88] sm:$0xff]
      %v9942 = vld [vmem:[#allocation3 + $0x90] sm:$0xff]
      %v9943 = vld [vmem:[#allocation3 + $0x98] sm:$0xff]
      %v9944 = vld [vmem:[#allocation3 + $0xa0] sm:$0xff]
      %v9945 = vld [vmem:[#allocation3 + $0xa8] sm:$0xff]
      %v9946 = vld [vmem:[#allocation3 + $0xb0] sm:$0xff]
      %v9947 = vld [vmem:[#allocation3 + $0xb8] sm:$0xff]
      %v9948 = vld [vmem:[#allocation3 + $0xc0] sm:$0xff]
      %v9949 = vld [vmem:[#allocation3 + $0xc8] sm:$0xff]
      %v9950 = vld [vmem:[#allocation3 + $0xd0] sm:$0xff]
      %v9951 = vld [vmem:[#allocation3 + $0xd8] sm:$0xff]
      %v9952 = vld [vmem:[#allocation3 + $0xe0] sm:$0xff]
      %v9953 = vld [vmem:[#allocation3 + $0xe8] sm:$0xff]
      %v9954 = vld [vmem:[#allocation3 + $0xf0] sm:$0xff]
      %v9955 = vld [vmem:[#allocation3 + $0xf8] sm:$0xff]
      %v9956 = vpack.c.bf16 %v9893, %v9892
      %v9957 = vpack.c.bf16 %v9895, %v9894
      %v9958 = vpack.c.bf16 %v9897, %v9896
      %v9959 = vpack.c.bf16 %v9899, %v9898
      %v9960 = vpack.c.bf16 %v9901, %v9900
      %v9961 = vpack.c.bf16 %v9903, %v9902
      %v9962 = vpack.c.bf16 %v9905, %v9904
      %v9963 = vpack.c.bf16 %v9907, %v9906
      %v9964 = vpack.c.bf16 %v9909, %v9908
      %v9965 = vpack.c.bf16 %v9911, %v9910
      %v9966 = vpack.c.bf16 %v9913, %v9912
      %v9967 = vpack.c.bf16 %v9915, %v9914
      %v9968 = vpack.c.bf16 %v9917, %v9916
      %v9969 = vpack.c.bf16 %v9919, %v9918
      %v9970 = vpack.c.bf16 %v9921, %v9920
      %v9971 = vpack.c.bf16 %v9923, %v9922
      %s9972 = scalar_lea.vmem %s3, 512
      %v9973 = vld [vmem:[%s9972] sm:$0xf]
      %v9974 = vld [vmem:[%s9972 + $0x4] sm:$0xf]
      %v9975 = vld [vmem:[%s9972 + $0x8] sm:$0xf]
      %v9976 = vld [vmem:[%s9972 + $0xc] sm:$0xf]
      %v9977 = vld [vmem:[%s9972 + $0x10] sm:$0xf]
      %v9978 = vld [vmem:[%s9972 + $0x14] sm:$0xf]
      %v9979 = vld [vmem:[%s9972 + $0x18] sm:$0xf]
      %v9980 = vld [vmem:[%s9972 + $0x1c] sm:$0xf]
      %v9981 = vld [vmem:[%s9972 + $0x20] sm:$0xf]
      %v9982 = vld [vmem:[%s9972 + $0x24] sm:$0xf]
      %v9983 = vld [vmem:[%s9972 + $0x28] sm:$0xf]
      %v9984 = vld [vmem:[%s9972 + $0x2c] sm:$0xf]
      %v9985 = vld [vmem:[%s9972 + $0x30] sm:$0xf]
      %v9986 = vld [vmem:[%s9972 + $0x34] sm:$0xf]
      %v9987 = vld [vmem:[%s9972 + $0x38] sm:$0xf]
      %v9988 = vld [vmem:[%s9972 + $0x3c] sm:$0xf]
      %v10005 = vunpack.c.l.b16 %v9973
      %v10006 = vunpack.c.l.b16 %v9974
      %v10007 = vunpack.c.l.b16 %v9975
      %v10008 = vunpack.c.l.b16 %v9976
      %v10009 = vunpack.c.l.b16 %v9977
      %v10010 = vunpack.c.l.b16 %v9978
      %v10011 = vunpack.c.l.b16 %v9979
      %v10012 = vunpack.c.l.b16 %v9980
      %v10013 = vunpack.c.l.b16 %v9981
      %v10014 = vunpack.c.l.b16 %v9982
      %v10015 = vunpack.c.l.b16 %v9983
      %v10016 = vunpack.c.l.b16 %v9984
      %v10017 = vunpack.c.l.b16 %v9985
      %v10018 = vunpack.c.l.b16 %v9986
      %v10019 = vunpack.c.l.b16 %v9987
      %v10020 = vunpack.c.l.b16 %v9988
      %v10021 = vpack.c.b16 %v10006, %v10005
      %v10022 = vpack.c.b16 %v10008, %v10007
      %v10023 = vpack.c.b16 %v10010, %v10009
      %v10024 = vpack.c.b16 %v10012, %v10011
      %v10025 = vpack.c.b16 %v10014, %v10013
      %v10026 = vpack.c.b16 %v10016, %v10015
      %v10027 = vpack.c.b16 %v10018, %v10017
      %v10028 = vpack.c.b16 %v10020, %v10019
      %10037 = vmatprep.subr.bf16.mxu0 0
      %10038 = vmatpush1.bf16.msra.mxu0 %v10028
      %10039 = vmatprep.subr.bf16.mxu0 0
      %10040 = vmatpush1.bf16.msra.mxu0 %v10027
      %10041 = vmatprep.subr.bf16.mxu0 0
      %10042 = vmatpush1.bf16.msra.mxu0 %v10026
      %10043 = vmatprep.subr.bf16.mxu0 0
      %10044 = vmatpush1.bf16.msra.mxu0 %v10025
      %10045 = vmatprep.subr.bf16.mxu0 0
      %10046 = vmatpush1.bf16.msra.mxu0 %v10024
      %10047 = vmatprep.subr.bf16.mxu0 0
      %10048 = vmatpush1.bf16.msra.mxu0 %v10023
      %10049 = vmatprep.subr.bf16.mxu0 0
      %10050 = vmatpush1.bf16.msra.mxu0 %v10022
      %10051 = vmatprep.subr.bf16.mxu0 0
      %10052 = vmatpush1.bf16.msra.mxu0 %v10021
      %10053 = vmatprep.subr.bf16.mxu0 0
      %10054 = vmatpush2.bf16.msra.mxu0 0
      %10055 = vmatprep.subr.bf16.mxu0 0
      %10056 = vmatpush2.bf16.msra.mxu0 0
      %10057 = vmatprep.subr.bf16.mxu0 0
      %10058 = vmatpush2.bf16.msra.mxu0 0
      %10059 = vmatprep.subr.bf16.mxu0 0
      %10060 = vmatpush2.bf16.msra.mxu0 0
      %10061 = vmatprep.subr.bf16.mxu0 0
      %10062 = vmatpush2.bf16.msra.mxu0 0
      %10063 = vmatprep.subr.bf16.mxu0 0
      %10064 = vmatpush2.bf16.msra.mxu0 0
      %10065 = vmatprep.subr.bf16.mxu0 0
      %10066 = vmatpush2.bf16.msra.mxu0 0
      %10067 = vmatprep.subr.bf16.mxu0 0
      %10068 = vmatpush2.bf16.msra.mxu0 0
      %10069 = vmatprep.mubr.bf16.mxu0 0
      %10070 = vmatmul.mubr.bf16.gmra.mxu0 %v9956
      %v10071 = vpop.f32.mrf.mxu0
      %v10072 = vadd.f32 0.0, %v10071
      %v10073 = vpop.f32.mrf.mxu0
      %v10074 = vpop.f32.mrf.mxu0
      %v10075 = vadd.f32 0.0, %v10074
      %v10076 = vpop.f32.mrf.mxu0
      %10077 = vmatprep.mubr.bf16.mxu0 0
      %10078 = vmatmul.mubr.bf16.gmra.mxu0 %v9957
      %v10079 = vpop.f32.mrf.mxu0
      %v10080 = vadd.f32 0.0, %v10079
      %v10081 = vpop.f32.mrf.mxu0
      %v10082 = vpop.f32.mrf.mxu0
      %v10083 = vadd.f32 0.0, %v10082
      %v10084 = vpop.f32.mrf.mxu0
      %10085 = vmatprep.mubr.bf16.mxu0 0
      %10086 = vmatmul.mubr.bf16.gmra.mxu0 %v9958
      %v10087 = vpop.f32.mrf.mxu0
      %v10088 = vadd.f32 0.0, %v10087
      %v10089 = vpop.f32.mrf.mxu0
      %v10090 = vpop.f32.mrf.mxu0
      %v10091 = vadd.f32 0.0, %v10090
      %v10092 = vpop.f32.mrf.mxu0
      %10093 = vmatprep.mubr.bf16.mxu0 0
      %10094 = vmatmul.mubr.bf16.gmra.mxu0 %v9959
      %v10095 = vpop.f32.mrf.mxu0
      %v10096 = vadd.f32 0.0, %v10095
      %v10097 = vpop.f32.mrf.mxu0
      %v10098 = vpop.f32.mrf.mxu0
      %v10099 = vadd.f32 0.0, %v10098
      %v10100 = vpop.f32.mrf.mxu0
      %10101 = vmatprep.mubr.bf16.mxu0 0
      %10102 = vmatmul.mubr.bf16.gmra.mxu0 %v9960
      %v10103 = vpop.f32.mrf.mxu0
      %v10104 = vadd.f32 0.0, %v10103
      %v10105 = vpop.f32.mrf.mxu0
      %v10106 = vpop.f32.mrf.mxu0
      %v10107 = vadd.f32 0.0, %v10106
      %v10108 = vpop.f32.mrf.mxu0
      %10109 = vmatprep.mubr.bf16.mxu0 0
      %10110 = vmatmul.mubr.bf16.gmra.mxu0 %v9961
      %v10111 = vpop.f32.mrf.mxu0
      %v10112 = vadd.f32 0.0, %v10111
      %v10113 = vpop.f32.mrf.mxu0
      %v10114 = vpop.f32.mrf.mxu0
      %v10115 = vadd.f32 0.0, %v10114
      %v10116 = vpop.f32.mrf.mxu0
      %10117 = vmatprep.mubr.bf16.mxu0 0
      %10118 = vmatmul.mubr.bf16.gmra.mxu0 %v9962
      %v10119 = vpop.f32.mrf.mxu0
      %v10120 = vadd.f32 0.0, %v10119
      %v10121 = vpop.f32.mrf.mxu0
      %v10122 = vpop.f32.mrf.mxu0
      %v10123 = vadd.f32 0.0, %v10122
      %v10124 = vpop.f32.mrf.mxu0
      %10125 = vmatprep.mubr.bf16.mxu0 0
      %10126 = vmatmul.mubr.bf16.gmra.mxu0 %v9963
      %v10127 = vpop.f32.mrf.mxu0
      %v10128 = vadd.f32 0.0, %v10127
      %v10129 = vpop.f32.mrf.mxu0
      %v10130 = vpop.f32.mrf.mxu0
      %v10131 = vadd.f32 0.0, %v10130
      %v10132 = vpop.f32.mrf.mxu0
      %10133 = vmatprep.mubr.bf16.mxu0 0
      %10134 = vmatmul.mubr.bf16.gmra.mxu0 %v9964
      %v10135 = vpop.f32.mrf.mxu0
      %v10136 = vadd.f32 0.0, %v10135
      %v10137 = vpop.f32.mrf.mxu0
      %v10138 = vpop.f32.mrf.mxu0
      %v10139 = vadd.f32 0.0, %v10138
      %v10140 = vpop.f32.mrf.mxu0
      %10141 = vmatprep.mubr.bf16.mxu0 0
      %10142 = vmatmul.mubr.bf16.gmra.mxu0 %v9965
      %v10143 = vpop.f32.mrf.mxu0
      %v10144 = vadd.f32 0.0, %v10143
      %v10145 = vpop.f32.mrf.mxu0
      %v10146 = vpop.f32.mrf.mxu0
      %v10147 = vadd.f32 0.0, %v10146
      %v10148 = vpop.f32.mrf.mxu0
      %10149 = vmatprep.mubr.bf16.mxu0 0
      %10150 = vmatmul.mubr.bf16.gmra.mxu0 %v9966
      %v10151 = vpop.f32.mrf.mxu0
      %v10152 = vadd.f32 0.0, %v10151
      %v10153 = vpop.f32.mrf.mxu0
      %v10154 = vpop.f32.mrf.mxu0
      %v10155 = vadd.f32 0.0, %v10154
      %v10156 = vpop.f32.mrf.mxu0
      %10157 = vmatprep.mubr.bf16.mxu0 0
      %10158 = vmatmul.mubr.bf16.gmra.mxu0 %v9967
      %v10159 = vpop.f32.mrf.mxu0
      %v10160 = vadd.f32 0.0, %v10159
      %v10161 = vpop.f32.mrf.mxu0
      %v10162 = vpop.f32.mrf.mxu0
      %v10163 = vadd.f32 0.0, %v10162
      %v10164 = vpop.f32.mrf.mxu0
      %10165 = vmatprep.mubr.bf16.mxu0 0
      %10166 = vmatmul.mubr.bf16.gmra.mxu0 %v9968
      %v10167 = vpop.f32.mrf.mxu0
      %v10168 = vadd.f32 0.0, %v10167
      %v10169 = vpop.f32.mrf.mxu0
      %v10170 = vpop.f32.mrf.mxu0
      %v10171 = vadd.f32 0.0, %v10170
      %v10172 = vpop.f32.mrf.mxu0
      %10173 = vmatprep.mubr.bf16.mxu0 0
      %10174 = vmatmul.mubr.bf16.gmra.mxu0 %v9969
      %v10175 = vpop.f32.mrf.mxu0
      %v10176 = vadd.f32 0.0, %v10175
      %v10177 = vpop.f32.mrf.mxu0
      %v10178 = vpop.f32.mrf.mxu0
      %v10179 = vadd.f32 0.0, %v10178
      %v10180 = vpop.f32.mrf.mxu0
      %10181 = vmatprep.mubr.bf16.mxu0 0
      %10182 = vmatmul.mubr.bf16.gmra.mxu0 %v9970
      %v10183 = vpop.f32.mrf.mxu0
      %v10184 = vadd.f32 0.0, %v10183
      %v10185 = vpop.f32.mrf.mxu0
      %v10186 = vpop.f32.mrf.mxu0
      %v10187 = vadd.f32 0.0, %v10186
      %v10188 = vpop.f32.mrf.mxu0
      %10189 = vmatprep.mubr.bf16.mxu0 0
      %10190 = vmatmul.mubr.bf16.gmra.mxu0 %v9971
      %v10191 = vpop.f32.mrf.mxu0
      %v10192 = vadd.f32 0.0, %v10191
      %v10193 = vpop.f32.mrf.mxu0
      %v10194 = vpop.f32.mrf.mxu0
      %v10195 = vadd.f32 0.0, %v10194
      %v10196 = vpop.f32.mrf.mxu0
      %10197 = vdwg.mxu0
      %v10198 = vadd.f32 %v9924, %v10072
      %v10199 = vadd.f32 %v9925, %v10075
      %v10200 = vadd.f32 %v9926, %v10080
      %v10201 = vadd.f32 %v9927, %v10083
      %v10202 = vadd.f32 %v9928, %v10088
      %v10203 = vadd.f32 %v9929, %v10091
      %v10204 = vadd.f32 %v9930, %v10096
      %v10205 = vadd.f32 %v9931, %v10099
      %v10206 = vadd.f32 %v9932, %v10104
      %v10207 = vadd.f32 %v9933, %v10107
      %v10208 = vadd.f32 %v9934, %v10112
      %v10209 = vadd.f32 %v9935, %v10115
      %v10210 = vadd.f32 %v9936, %v10120
      %v10211 = vadd.f32 %v9937, %v10123
      %v10212 = vadd.f32 %v9938, %v10128
      %v10213 = vadd.f32 %v9939, %v10131
      %v10214 = vadd.f32 %v9940, %v10136
      %v10215 = vadd.f32 %v9941, %v10139
      %v10216 = vadd.f32 %v9942, %v10144
      %v10217 = vadd.f32 %v9943, %v10147
      %v10218 = vadd.f32 %v9944, %v10152
      %v10219 = vadd.f32 %v9945, %v10155
      %v10220 = vadd.f32 %v9946, %v10160
      %v10221 = vadd.f32 %v9947, %v10163
      %v10222 = vadd.f32 %v9948, %v10168
      %v10223 = vadd.f32 %v9949, %v10171
      %v10224 = vadd.f32 %v9950, %v10176
      %v10225 = vadd.f32 %v9951, %v10179
      %v10226 = vadd.f32 %v9952, %v10184
      %v10227 = vadd.f32 %v9953, %v10187
      %v10228 = vadd.f32 %v9954, %v10192
      %v10229 = vadd.f32 %v9955, %v10195
      %10230 = vst [vmem:[#allocation3] sm:$0xff] %v10198
      %10231 = vst [vmem:[#allocation3 + $0x8] sm:$0xff] %v10199
      %10232 = vst [vmem:[#allocation3 + $0x10] sm:$0xff] %v10200
      %10233 = vst [vmem:[#allocation3 + $0x18] sm:$0xff] %v10201
      %10234 = vst [vmem:[#allocation3 + $0x20] sm:$0xff] %v10202
      %10235 = vst [vmem:[#allocation3 + $0x28] sm:$0xff] %v10203
      %10236 = vst [vmem:[#allocation3 + $0x30] sm:$0xff] %v10204
      %10237 = vst [vmem:[#allocation3 + $0x38] sm:$0xff] %v10205
      %10238 = vst [vmem:[#allocation3 + $0x40] sm:$0xff] %v10206
      %10239 = vst [vmem:[#allocation3 + $0x48] sm:$0xff] %v10207
      %10240 = vst [vmem:[#allocation3 + $0x50] sm:$0xff] %v10208
      %10241 = vst [vmem:[#allocation3 + $0x58] sm:$0xff] %v10209
      %10242 = vst [vmem:[#allocation3 + $0x60] sm:$0xff] %v10210
      %10243 = vst [vmem:[#allocation3 + $0x68] sm:$0xff] %v10211
      %10244 = vst [vmem:[#allocation3 + $0x70] sm:$0xff] %v10212
      %10245 = vst [vmem:[#allocation3 + $0x78] sm:$0xff] %v10213
      %10246 = vst [vmem:[#allocation3 + $0x80] sm:$0xff] %v10214
      %10247 = vst [vmem:[#allocation3 + $0x88] sm:$0xff] %v10215
      %10248 = vst [vmem:[#allocation3 + $0x90] sm:$0xff] %v10216
      %10249 = vst [vmem:[#allocation3 + $0x98] sm:$0xff] %v10217
      %10250 = vst [vmem:[#allocation3 + $0xa0] sm:$0xff] %v10218
      %10251 = vst [vmem:[#allocation3 + $0xa8] sm:$0xff] %v10219
      %10252 = vst [vmem:[#allocation3 + $0xb0] sm:$0xff] %v10220
      %10253 = vst [vmem:[#allocation3 + $0xb8] sm:$0xff] %v10221
      %10254 = vst [vmem:[#allocation3 + $0xc0] sm:$0xff] %v10222
      %10255 = vst [vmem:[#allocation3 + $0xc8] sm:$0xff] %v10223
      %10256 = vst [vmem:[#allocation3 + $0xd0] sm:$0xff] %v10224
      %10257 = vst [vmem:[#allocation3 + $0xd8] sm:$0xff] %v10225
      %10258 = vst [vmem:[#allocation3 + $0xe0] sm:$0xff] %v10226
      %10259 = vst [vmem:[#allocation3 + $0xe8] sm:$0xff] %v10227
      %10260 = vst [vmem:[#allocation3 + $0xf0] sm:$0xff] %v10228
      %10261 = vst [vmem:[#allocation3 + $0xf8] sm:$0xff] %v10229
      %v10262 = vld [vmem:[#allocation3] sm:$0xff]
      %v10263 = vld [vmem:[#allocation3 + $0x8] sm:$0xff]
      %v10264 = vld [vmem:[#allocation3 + $0x10] sm:$0xff]
      %v10265 = vld [vmem:[#allocation3 + $0x18] sm:$0xff]
      %v10266 = vld [vmem:[#allocation3 + $0x20] sm:$0xff]
      %v10267 = vld [vmem:[#allocation3 + $0x28] sm:$0xff]
      %v10268 = vld [vmem:[#allocation3 + $0x30] sm:$0xff]
      %v10269 = vld [vmem:[#allocation3 + $0x38] sm:$0xff]
      %v10270 = vld [vmem:[#allocation3 + $0x40] sm:$0xff]
      %v10271 = vld [vmem:[#allocation3 + $0x48] sm:$0xff]
      %v10272 = vld [vmem:[#allocation3 + $0x50] sm:$0xff]
      %v10273 = vld [vmem:[#allocation3 + $0x58] sm:$0xff]
      %v10274 = vld [vmem:[#allocation3 + $0x60] sm:$0xff]
      %v10275 = vld [vmem:[#allocation3 + $0x68] sm:$0xff]
      %v10276 = vld [vmem:[#allocation3 + $0x70] sm:$0xff]
      %v10277 = vld [vmem:[#allocation3 + $0x78] sm:$0xff]
      %v10278 = vld [vmem:[#allocation3 + $0x80] sm:$0xff]
      %v10279 = vld [vmem:[#allocation3 + $0x88] sm:$0xff]
      %v10280 = vld [vmem:[#allocation3 + $0x90] sm:$0xff]
      %v10281 = vld [vmem:[#allocation3 + $0x98] sm:$0xff]
      %v10282 = vld [vmem:[#allocation3 + $0xa0] sm:$0xff]
      %v10283 = vld [vmem:[#allocation3 + $0xa8] sm:$0xff]
      %v10284 = vld [vmem:[#allocation3 + $0xb0] sm:$0xff]
      %v10285 = vld [vmem:[#allocation3 + $0xb8] sm:$0xff]
      %v10286 = vld [vmem:[#allocation3 + $0xc0] sm:$0xff]
      %v10287 = vld [vmem:[#allocation3 + $0xc8] sm:$0xff]
      %v10288 = vld [vmem:[#allocation3 + $0xd0] sm:$0xff]
      %v10289 = vld [vmem:[#allocation3 + $0xd8] sm:$0xff]
      %v10290 = vld [vmem:[#allocation3 + $0xe0] sm:$0xff]
      %v10291 = vld [vmem:[#allocation3 + $0xe8] sm:$0xff]
      %v10292 = vld [vmem:[#allocation3 + $0xf0] sm:$0xff]
      %v10293 = vld [vmem:[#allocation3 + $0xf8] sm:$0xff]
      %v10294 = vld [vmem:[%s246] sm:$0xf]
      %v10295 = vld [vmem:[%s246 + $0x4] sm:$0xf]
      %v10296 = vld [vmem:[%s246 + $0x8] sm:$0xf]
      %v10297 = vld [vmem:[%s246 + $0xc] sm:$0xf]
      %v10298 = vld [vmem:[%s246 + $0x10] sm:$0xf]
      %v10299 = vld [vmem:[%s246 + $0x14] sm:$0xf]
      %v10300 = vld [vmem:[%s246 + $0x18] sm:$0xf]
      %v10301 = vld [vmem:[%s246 + $0x1c] sm:$0xf]
      %v10302 = vld [vmem:[%s246 + $0x20] sm:$0xf]
      %v10303 = vld [vmem:[%s246 + $0x24] sm:$0xf]
      %v10304 = vld [vmem:[%s246 + $0x28] sm:$0xf]
      %v10305 = vld [vmem:[%s246 + $0x2c] sm:$0xf]
      %v10306 = vld [vmem:[%s246 + $0x30] sm:$0xf]
      %v10307 = vld [vmem:[%s246 + $0x34] sm:$0xf]
      %v10308 = vld [vmem:[%s246 + $0x38] sm:$0xf]
      %v10309 = vld [vmem:[%s246 + $0x3c] sm:$0xf]
      %v10310 = vld [vmem:[%s246 + $0x40] sm:$0xf]
      %v10311 = vld [vmem:[%s246 + $0x44] sm:$0xf]
      %v10312 = vld [vmem:[%s246 + $0x48] sm:$0xf]
      %v10313 = vld [vmem:[%s246 + $0x4c] sm:$0xf]
      %v10314 = vld [vmem:[%s246 + $0x50] sm:$0xf]
      %v10315 = vld [vmem:[%s246 + $0x54] sm:$0xf]
      %v10316 = vld [vmem:[%s246 + $0x58] sm:$0xf]
      %v10317 = vld [vmem:[%s246 + $0x5c] sm:$0xf]
      %v10318 = vld [vmem:[%s246 + $0x60] sm:$0xf]
      %v10319 = vld [vmem:[%s246 + $0x64] sm:$0xf]
      %v10320 = vld [vmem:[%s246 + $0x68] sm:$0xf]
      %v10321 = vld [vmem:[%s246 + $0x6c] sm:$0xf]
      %v10322 = vld [vmem:[%s246 + $0x70] sm:$0xf]
      %v10323 = vld [vmem:[%s246 + $0x74] sm:$0xf]
      %v10324 = vld [vmem:[%s246 + $0x78] sm:$0xf]
      %v10325 = vld [vmem:[%s246 + $0x7c] sm:$0xf]
      %v10326 = vunpack.c.l.bf16 %v10294
      %v10327 = vunpack.c.l.bf16 %v10295
      %v10328 = vunpack.c.l.bf16 %v10296
      %v10329 = vunpack.c.l.bf16 %v10297
      %v10330 = vunpack.c.l.bf16 %v10298
      %v10331 = vunpack.c.l.bf16 %v10299
      %v10332 = vunpack.c.l.bf16 %v10300
      %v10333 = vunpack.c.l.bf16 %v10301
      %v10334 = vunpack.c.l.bf16 %v10302
      %v10335 = vunpack.c.l.bf16 %v10303
      %v10336 = vunpack.c.l.bf16 %v10304
      %v10337 = vunpack.c.l.bf16 %v10305
      %v10338 = vunpack.c.l.bf16 %v10306
      %v10339 = vunpack.c.l.bf16 %v10307
      %v10340 = vunpack.c.l.bf16 %v10308
      %v10341 = vunpack.c.l.bf16 %v10309
      %v10342 = vunpack.c.l.bf16 %v10310
      %v10343 = vunpack.c.l.bf16 %v10311
      %v10344 = vunpack.c.l.bf16 %v10312
      %v10345 = vunpack.c.l.bf16 %v10313
      %v10346 = vunpack.c.l.bf16 %v10314
      %v10347 = vunpack.c.l.bf16 %v10315
      %v10348 = vunpack.c.l.bf16 %v10316
      %v10349 = vunpack.c.l.bf16 %v10317
      %v10350 = vunpack.c.l.bf16 %v10318
      %v10351 = vunpack.c.l.bf16 %v10319
      %v10352 = vunpack.c.l.bf16 %v10320
      %v10353 = vunpack.c.l.bf16 %v10321
      %v10354 = vunpack.c.l.bf16 %v10322
      %v10355 = vunpack.c.l.bf16 %v10323
      %v10356 = vunpack.c.l.bf16 %v10324
      %v10357 = vunpack.c.l.bf16 %v10325
      %v10358 = vadd.f32 %v10262, %v10326
      %v10359 = vadd.f32 %v10263, %v10327
      %v10360 = vadd.f32 %v10264, %v10328
      %v10361 = vadd.f32 %v10265, %v10329
      %v10362 = vadd.f32 %v10266, %v10330
      %v10363 = vadd.f32 %v10267, %v10331
      %v10364 = vadd.f32 %v10268, %v10332
      %v10365 = vadd.f32 %v10269, %v10333
      %v10366 = vadd.f32 %v10270, %v10334
      %v10367 = vadd.f32 %v10271, %v10335
      %v10368 = vadd.f32 %v10272, %v10336
      %v10369 = vadd.f32 %v10273, %v10337
      %v10370 = vadd.f32 %v10274, %v10338
      %v10371 = vadd.f32 %v10275, %v10339
      %v10372 = vadd.f32 %v10276, %v10340
      %v10373 = vadd.f32 %v10277, %v10341
      %v10374 = vadd.f32 %v10278, %v10342
      %v10375 = vadd.f32 %v10279, %v10343
      %v10376 = vadd.f32 %v10280, %v10344
      %v10377 = vadd.f32 %v10281, %v10345
      %v10378 = vadd.f32 %v10282, %v10346
      %v10379 = vadd.f32 %v10283, %v10347
      %v10380 = vadd.f32 %v10284, %v10348
      %v10381 = vadd.f32 %v10285, %v10349
      %v10382 = vadd.f32 %v10286, %v10350
      %v10383 = vadd.f32 %v10287, %v10351
      %v10384 = vadd.f32 %v10288, %v10352
      %v10385 = vadd.f32 %v10289, %v10353
      %v10386 = vadd.f32 %v10290, %v10354
      %v10387 = vadd.f32 %v10291, %v10355
      %v10388 = vadd.f32 %v10292, %v10356
      %v10389 = vadd.f32 %v10293, %v10357
      %v10390 = vmax.f32 %v10358, 0.0
      %v10391 = vmax.f32 %v10359, 0.0
      %v10392 = vmax.f32 %v10360, 0.0
      %v10393 = vmax.f32 %v10361, 0.0
      %v10394 = vmax.f32 %v10362, 0.0
      %v10395 = vmax.f32 %v10363, 0.0
      %v10396 = vmax.f32 %v10364, 0.0
      %v10397 = vmax.f32 %v10365, 0.0
      %v10398 = vmax.f32 %v10366, 0.0
      %v10399 = vmax.f32 %v10367, 0.0
      %v10400 = vmax.f32 %v10368, 0.0
      %v10401 = vmax.f32 %v10369, 0.0
      %v10402 = vmax.f32 %v10370, 0.0
      %v10403 = vmax.f32 %v10371, 0.0
      %v10404 = vmax.f32 %v10372, 0.0
      %v10405 = vmax.f32 %v10373, 0.0
      %v10406 = vmax.f32 %v10374, 0.0
      %v10407 = vmax.f32 %v10375, 0.0
      %v10408 = vmax.f32 %v10376, 0.0
      %v10409 = vmax.f32 %v10377, 0.0
      %v10410 = vmax.f32 %v10378, 0.0
      %v10411 = vmax.f32 %v10379, 0.0
      %v10412 = vmax.f32 %v10380, 0.0
      %v10413 = vmax.f32 %v10381, 0.0
      %v10414 = vmax.f32 %v10382, 0.0
      %v10415 = vmax.f32 %v10383, 0.0
      %v10416 = vmax.f32 %v10384, 0.0
      %v10417 = vmax.f32 %v10385, 0.0
      %v10418 = vmax.f32 %v10386, 0.0
      %v10419 = vmax.f32 %v10387, 0.0
      %v10420 = vmax.f32 %v10388, 0.0
      %v10421 = vmax.f32 %v10389, 0.0
      %10422 = vst [vmem:[%s251] sm:$0xff] %v10390
      %10423 = vst [vmem:[%s251 + $0x8] sm:$0xff] %v10391
      %10424 = vst [vmem:[%s251 + $0x10] sm:$0xff] %v10392
      %10425 = vst [vmem:[%s251 + $0x18] sm:$0xff] %v10393
      %10426 = vst [vmem:[%s251 + $0x20] sm:$0xff] %v10394
      %10427 = vst [vmem:[%s251 + $0x28] sm:$0xff] %v10395
      %10428 = vst [vmem:[%s251 + $0x30] sm:$0xff] %v10396
      %10429 = vst [vmem:[%s251 + $0x38] sm:$0xff] %v10397
      %10430 = vst [vmem:[%s251 + $0x40] sm:$0xff] %v10398
      %10431 = vst [vmem:[%s251 + $0x48] sm:$0xff] %v10399
      %10432 = vst [vmem:[%s251 + $0x50] sm:$0xff] %v10400
      %10433 = vst [vmem:[%s251 + $0x58] sm:$0xff] %v10401
      %10434 = vst [vmem:[%s251 + $0x60] sm:$0xff] %v10402
      %10435 = vst [vmem:[%s251 + $0x68] sm:$0xff] %v10403
      %10436 = vst [vmem:[%s251 + $0x70] sm:$0xff] %v10404
      %10437 = vst [vmem:[%s251 + $0x78] sm:$0xff] %v10405
      %10438 = vst [vmem:[%s251 + $0x80] sm:$0xff] %v10406
      %10439 = vst [vmem:[%s251 + $0x88] sm:$0xff] %v10407
      %10440 = vst [vmem:[%s251 + $0x90] sm:$0xff] %v10408
      %10441 = vst [vmem:[%s251 + $0x98] sm:$0xff] %v10409
      %10442 = vst [vmem:[%s251 + $0xa0] sm:$0xff] %v10410
      %10443 = vst [vmem:[%s251 + $0xa8] sm:$0xff] %v10411
      %10444 = vst [vmem:[%s251 + $0xb0] sm:$0xff] %v10412
      %10445 = vst [vmem:[%s251 + $0xb8] sm:$0xff] %v10413
      %10446 = vst [vmem:[%s251 + $0xc0] sm:$0xff] %v10414
      %10447 = vst [vmem:[%s251 + $0xc8] sm:$0xff] %v10415
      %10448 = vst [vmem:[%s251 + $0xd0] sm:$0xff] %v10416
      %10449 = vst [vmem:[%s251 + $0xd8] sm:$0xff] %v10417
      %10450 = vst [vmem:[%s251 + $0xe0] sm:$0xff] %v10418
      %10451 = vst [vmem:[%s251 + $0xe8] sm:$0xff] %v10419
      %10452 = vst [vmem:[%s251 + $0xf0] sm:$0xff] %v10420
      %10453 = vst [vmem:[%s251 + $0xf8] sm:$0xff] %v10421
      %p10454 = scmp.lt.s32.totalorder %s17, 1
      %s10455 = scalar_select %p10454, %s17, 1
      %s10456 = smul.addr %s10455, 32
      %s10457 = smul.addr %s10456, 8
      %s10458 = scalar_lea.vmem %s6, %s10457
      // Predicated region
      $region45: #{resnet_block.1} parent=43 // pred_check
        %p10459 = pneg %p166
      $region46: #{resnet_block.1} parent=43 // pred_check_branch
        %10461 = sbr.rel (%p10459) target = $region48
      $region47: #{resnet_block.1} parent=43 // pred_region
        _
      $region48: #{resnet_block.1} parent=43 // pred_fallthru
        _
    $region44: #{resnet_block.1} parent=5 // pred_fallthru
      _
    %p10462 = scmp.le.s32.totalorder 2, %s12
    // Predicated region
    $region49: #{resnet_block.1} parent=5 // pred_check
      %p10463 = pneg %p10462
    $region50: #{resnet_block.1} parent=5 // pred_check_branch
      %10465 = sbr.rel (%p10463) target = $region52
    $region51: #{resnet_block.1} parent=5 // pred_region
      %s10466 = ssub.s32 %s12, 2
      // Predicated region
      $region53: #{resnet_block.1} parent=51 // pred_check
        %p10467 = pneg %p172
      $region54: #{resnet_block.1} parent=51 // pred_check_branch
        %10469 = sbr.rel (%p10467) target = $region56
      $region55: #{resnet_block.1} parent=51 // pred_region
        %p10470 = scmp.lt.s32.totalorder %s18, 1
        %s10471 = scalar_select %p10470, %s18, 1
        %s10472 = smul.addr %s10471, 32
        %s10473 = smul.addr %s10472, 8
        %s10474 = scalar_lea.vmem %s6, %s10473
      $region56: #{resnet_block.1} parent=51 // pred_fallthru
        _
    $region52: #{resnet_block.1} parent=5 // pred_fallthru
      _
  $region6: #{resnet_block.1} parent=0 // loop_footer
    %s16 = sadd.s32 1, %s12
  $region7: #{resnet_block.1} parent=0 // loop_footer_branch
    %11 = sbr.rel target = $region3
  $region8: #{resnet_block.1} parent=0 // loop_exit
    _

</llo_original>
